<compile_context>
chip_gen: v7x
topology: tpu7x:2x2x1
jax: 0.10.0
libtpu: 0.0.40
codegen_flags: <defaults>
</compile_context>

<pallas_src>
import jax
import jax.numpy as jnp
from jax.experimental import pallas as pl
from jax.experimental.pallas import tpu as pltpu


def _circular_pad_hw(h):
    # [H, W, C] -> [H+2, W+2, C] with wrap-around (PyTorch padding_mode='circular').
    h = jnp.concatenate([h[-1:, :, :], h, h[:1, :, :]], axis=0)
    h = jnp.concatenate([h[:, -1:, :], h, h[:, :1, :]], axis=1)
    return h


def _conv3x3_circular(h, w_ref):
    # h: [H, W, Ci] f32;  w_ref: (9, Ci, Co) per-tap weights (tap = kh*3 + kw).
    # Bias is folded into the following affine by the wrapper.
    H, W, Ci = h.shape
    Co = w_ref.shape[-1]
    hpad = _circular_pad_hw(h)                        # [H+2, W+2, Ci], VMEM only
    acc = None
    for kh in range(3):
        for kw in range(3):
            patch = hpad[kh:kh + H, kw:kw + W, :].reshape(H * W, Ci)
            part = jnp.dot(patch, w_ref[kh * 3 + kw],
                           preferred_element_type=jnp.float32)
            acc = part if acc is None else acc + part
    return acc.reshape(H, W, Co)


def _body(x, s1_ref, t1_ref, w1_ref, s2_ref, t2_ref, w2_ref, w3_ref, b3_ref):
    # x: [H, W, Cin] f32.  Returns residual branch output [H, W, Cout].
    H, W, _ = x.shape
    h = jnp.maximum(x * s1_ref[...] + t1_ref[...], 0.0)      # BN1 + ReLU
    f = _conv3x3_circular(h, w1_ref)                         # conv1 (bias folded)
    h2 = jnp.maximum(f * s2_ref[...] + t2_ref[...], 0.0)     # BN2(+b1) + ReLU
    f2 = _conv3x3_circular(h2, w2_ref)                       # conv2 (bias folded)
    med = f2.shape[-1]
    Cout = w3_ref.shape[-1]
    out = jnp.dot(f2.reshape(H * W, med), w3_ref[...],
                  preferred_element_type=jnp.float32) + b3_ref[...]   # outconv(+b2)
    return out.reshape(H, W, Cout)


def _kernel_identity(x_ref, s1_ref, t1_ref, w1_ref, s2_ref, t2_ref, w2_ref,
                     w3_ref, b3_ref, o_ref):
    x = x_ref[0].astype(jnp.float32)
    out = _body(x, s1_ref, t1_ref, w1_ref, s2_ref, t2_ref, w2_ref, w3_ref, b3_ref)
    o_ref[0] = (out + x).astype(o_ref.dtype)


def _kernel_skipconv(x_ref, s1_ref, t1_ref, w1_ref, s2_ref, t2_ref, w2_ref,
                     w3_ref, b3_ref, ws_ref, bs_ref, o_ref):
    x = x_ref[0].astype(jnp.float32)
    H, W, Cin = x.shape
    out = _body(x, s1_ref, t1_ref, w1_ref, s2_ref, t2_ref, w2_ref, w3_ref, b3_ref)
    Cout = ws_ref.shape[-1]
    skip = jnp.dot(x.reshape(H * W, Cin), ws_ref[...],
                   preferred_element_type=jnp.float32) + bs_ref[...]
    o_ref[0] = (out + skip.reshape(H, W, Cout)).astype(o_ref.dtype)


def pre_res_block(x, *, bn1, conv1, bn2, conv2, outconv, skipconv=None, eps=1e-5):
    """Fused PreResBlock forward (eval-mode BatchNorm, ReLU activation).

    x:        [B, Cin, H, W] (NCHW, PyTorch layout)
    bn1/bn2:  (gamma, beta, running_mean, running_var)
    conv1:    (weight [med, Cin, 3, 3],  bias [med])
    conv2:    (weight [med, med, 3, 3],  bias [med])
    outconv:  (weight [Cout, med, 1, 1], bias [Cout])
    skipconv: None -> identity skip (out_ch=None); else (weight [Cout,Cin,1,1], bias [Cout])
    """
    B, Cin, H, W = x.shape
    g1, be1, m1, v1 = [jnp.asarray(a, jnp.float32) for a in bn1]
    g2, be2, m2, v2 = [jnp.asarray(a, jnp.float32) for a in bn2]
    w1, b1 = [jnp.asarray(a, jnp.float32) for a in conv1]
    w2, b2 = [jnp.asarray(a, jnp.float32) for a in conv2]
    w3, b3 = [jnp.asarray(a, jnp.float32) for a in outconv]
    med = w1.shape[0]
    Cout = w3.shape[0]
    if skipconv is None:
        assert Cout == Cin, "identity skip requires out_ch == in_ch"
    else:
        ws, bs = [jnp.asarray(a, jnp.float32) for a in skipconv]
        assert ws.shape == (Cout, Cin, 1, 1)

    # ---- parameter folding (once, in the wrapper; never per grid step) -----
    inv1 = g1 * jax.lax.rsqrt(v1 + eps)
    inv2 = g2 * jax.lax.rsqrt(v2 + eps)
    s1 = inv1.reshape(1, 1, Cin)
    t1 = (be1 - m1 * inv1).reshape(1, 1, Cin)
    s2 = inv2.reshape(1, 1, med)
    # conv1 bias folded into the BN2 shift:  BN2(conv1_raw + b1) = s2*conv1_raw + t2
    t2 = (be2 + (b1 - m2) * inv2).reshape(1, 1, med)

    # OIHW -> per-tap [9, Ci, Co] (tap = kh*3 + kw): each tap is a channel matmul.
    w1_t = jnp.transpose(w1, (2, 3, 1, 0)).reshape(9, Cin, med)
    w2_t = jnp.transpose(w2, (2, 3, 1, 0)).reshape(9, med, med)
    w3_t = jnp.transpose(w3.reshape(Cout, med), (1, 0))             # [med, Cout]
    # conv2 bias folded through the 1x1 outconv:  (conv2_raw + b2)@W3 + b3
    b3_eff = (b3 + jnp.dot(b2, w3_t)).reshape(1, Cout)

    x_nhwc = jnp.transpose(x, (0, 2, 3, 1)).astype(jnp.float32)     # layout plumbing

    def full(shape):
        return pl.BlockSpec(shape, lambda b, _n=len(shape): (0,) * _n)

    in_specs = [
        pl.BlockSpec((1, H, W, Cin), lambda b: (b, 0, 0, 0)),
        full((1, 1, Cin)), full((1, 1, Cin)),
        full((9, Cin, med)),
        full((1, 1, med)), full((1, 1, med)),
        full((9, med, med)),
        full((med, Cout)), full((1, Cout)),
    ]
    args = [x_nhwc, s1, t1, w1_t, s2, t2, w2_t, w3_t, b3_eff]
    kernel = _kernel_identity
    if skipconv is not None:
        ws_t = jnp.transpose(ws.reshape(Cout, Cin), (1, 0))         # [Cin, Cout]
        in_specs += [full((Cin, Cout)), full((1, Cout))]
        args += [ws_t, bs.reshape(1, Cout)]
        kernel = _kernel_skipconv

    out_nhwc = pl.pallas_call(
        kernel,
        out_shape=jax.ShapeDtypeStruct((B, H, W, Cout), jnp.float32),
        grid_spec=pltpu.PrefetchScalarGridSpec(
            num_scalar_prefetch=0,
            grid=(B,),
            in_specs=in_specs,
            out_specs=pl.BlockSpec((1, H, W, Cout), lambda b: (b, 0, 0, 0)),
        ),
        compiler_params=pltpu.CompilerParams(
            dimension_semantics=("parallel",)),
    )(*args)

    return jnp.transpose(out_nhwc, (0, 3, 1, 2)).astype(x.dtype)


def _reference(x, *, bn1, conv1, bn2, conv2, outconv, skipconv=None, eps=1e-5):
    """Independent pure-JAX reference matching PyTorch eval-mode semantics."""
    def bn(h, p):
        g, b, m, v = p
        inv = g / jnp.sqrt(v + eps)
        return (h - m[None, :, None, None]) * inv[None, :, None, None] \
               + b[None, :, None, None]

    def conv(h, w, b, circular):
        if circular:
            h = jnp.pad(h, ((0, 0), (0, 0), (1, 1), (1, 1)), mode="wrap")
        y = jax.lax.conv_general_dilated(
            h, w, window_strides=(1, 1), padding="VALID",
            dimension_numbers=("NCHW", "OIHW", "NCHW"))
        return y + b[None, :, None, None]

    relu = jax.nn.relu
    f = conv(relu(bn(x, bn1)), conv1[0], conv1[1], circular=True)
    f = conv(relu(bn(f, bn2)), conv2[0], conv2[1], circular=True)
    f = conv(f, outconv[0], outconv[1], circular=False)
    skip = x if skipconv is None else conv(x, skipconv[0], skipconv[1], circular=False)
    return f + skip


if __name__ == "__main__":
    key = jax.random.PRNGKey(0)
    keys = jax.random.split(key, 20)

    B, Cin, H, W = 2, 4, 16, 16
    med = Cin // 2

    x = jax.random.normal(keys[0], (B, Cin, H, W), dtype=jnp.float32)
    bn1 = (jax.random.uniform(keys[1], (Cin,), minval=0.5, maxval=1.5),
           jax.random.normal(keys[2], (Cin,)) * 0.1,
           jax.random.normal(keys[3], (Cin,)) * 0.1,
           jax.random.uniform(keys[4], (Cin,), minval=0.5, maxval=1.5))
    bn2 = (jax.random.uniform(keys[5], (med,), minval=0.5, maxval=1.5),
           jax.random.normal(keys[6], (med,)) * 0.1,
           jax.random.normal(keys[7], (med,)) * 0.1,
           jax.random.uniform(keys[8], (med,), minval=0.5, maxval=1.5))
    conv1 = (jax.random.normal(keys[9], (med, Cin, 3, 3)) * 0.1,
             jax.random.normal(keys[10], (med,)) * 0.1)
    conv2 = (jax.random.normal(keys[11], (med, med, 3, 3)) * 0.1,
             jax.random.normal(keys[12], (med,)) * 0.1)

    # Case 1: default constructor (out_ch=None) -> identity skip.
    outconv_id = (jax.random.normal(keys[13], (Cin, med, 1, 1)) * 0.1,
                  jax.random.normal(keys[14], (Cin,)) * 0.1)
    y = jax.block_until_ready(pre_res_block(
        x, bn1=bn1, conv1=conv1, bn2=bn2, conv2=conv2, outconv=outconv_id))
    y_ref = _reference(x, bn1=bn1, conv1=conv1, bn2=bn2, conv2=conv2,
                       outconv=outconv_id)
    err = float(jnp.max(jnp.abs(y - y_ref)))
    assert jnp.allclose(y, y_ref, rtol=1e-4, atol=1e-4), err

    # Case 2: out_ch != in_ch -> 1x1 skipconv.
    Cout = 8
    outconv_sk = (jax.random.normal(keys[15], (Cout, med, 1, 1)) * 0.1,
                  jax.random.normal(keys[16], (Cout,)) * 0.1)
    skipconv = (jax.random.normal(keys[17], (Cout, Cin, 1, 1)) * 0.1,
                jax.random.normal(keys[18], (Cout,)) * 0.1)
    y2 = jax.block_until_ready(pre_res_block(
        x, bn1=bn1, conv1=conv1, bn2=bn2, conv2=conv2, outconv=outconv_sk,
        skipconv=skipconv))
    y2_ref = _reference(x, bn1=bn1, conv1=conv1, bn2=bn2, conv2=conv2,
                        outconv=outconv_sk, skipconv=skipconv)
    err2 = float(jnp.max(jnp.abs(y2 - y2_ref)))
    assert jnp.allclose(y2, y2_ref, rtol=1e-4, atol=1e-4), err2

    print("KERNEL_OK")
</pallas_src>

<mosaic_0001>
module attributes {stable_mosaic.version = 11 : i64} {
  func.func @_kernel_identity(%arg0: i32, %arg1: memref<1x16x16x4xf32, #tpu.memory_space<vmem>>, %arg2: memref<1x1x4xf32, #tpu.memory_space<vmem>>, %arg3: memref<1x1x4xf32, #tpu.memory_space<vmem>>, %arg4: memref<9x4x2xf32, #tpu.memory_space<vmem>>, %arg5: memref<1x1x2xf32, #tpu.memory_space<vmem>>, %arg6: memref<1x1x2xf32, #tpu.memory_space<vmem>>, %arg7: memref<9x2x2xf32, #tpu.memory_space<vmem>>, %arg8: memref<2x4xf32, #tpu.memory_space<vmem>>, %arg9: memref<1x4xf32, #tpu.memory_space<vmem>>, %arg10: memref<1x16x16x4xf32, #tpu.memory_space<vmem>>) attributes {dimension_semantics = [#tpu.dimension_semantics<parallel>], iteration_bounds = array<i64: 2>, scalar_prefetch = 0 : i64, scratch_operands = 0 : i64, tpu.core_type = #tpu.core_type<tc>, window_params = [{transform_indices = @transform_0, window_bounds = array<i64: 1, 16, 16, 4>}, {pipeline_mode = #tpu.pipeline_mode<synchronous>, transform_indices = @transform_1, window_bounds = array<i64: 1, 1, 4>}, {pipeline_mode = #tpu.pipeline_mode<synchronous>, transform_indices = @transform_2, window_bounds = array<i64: 1, 1, 4>}, {pipeline_mode = #tpu.pipeline_mode<synchronous>, transform_indices = @transform_3, window_bounds = array<i64: 9, 4, 2>}, {pipeline_mode = #tpu.pipeline_mode<synchronous>, transform_indices = @transform_4, window_bounds = array<i64: 1, 1, 2>}, {pipeline_mode = #tpu.pipeline_mode<synchronous>, transform_indices = @transform_5, window_bounds = array<i64: 1, 1, 2>}, {pipeline_mode = #tpu.pipeline_mode<synchronous>, transform_indices = @transform_6, window_bounds = array<i64: 9, 2, 2>}, {pipeline_mode = #tpu.pipeline_mode<synchronous>, transform_indices = @transform_7, window_bounds = array<i64: 2, 4>}, {pipeline_mode = #tpu.pipeline_mode<synchronous>, transform_indices = @transform_8, window_bounds = array<i64: 1, 4>}, {transform_indices = @transform_9, window_bounds = array<i64: 1, 16, 16, 4>}]} {
    %c0 = arith.constant 0 : index
    %c0_0 = arith.constant 0 : index
    %c0_1 = arith.constant 0 : index
    %c0_2 = arith.constant 0 : index
    %0 = vector.load %arg1[%c0, %c0_0, %c0_1, %c0_2] : memref<1x16x16x4xf32, #tpu.memory_space<vmem>>, vector<1x16x16x4xf32>
    %1 = vector.shape_cast %0 : vector<1x16x16x4xf32> to vector<16x16x4xf32>
    %c0_3 = arith.constant 0 : index
    %c0_4 = arith.constant 0 : index
    %c0_5 = arith.constant 0 : index
    %2 = vector.load %arg2[%c0_3, %c0_4, %c0_5] : memref<1x1x4xf32, #tpu.memory_space<vmem>>, vector<1x1x4xf32>
    %3 = vector.broadcast %2 : vector<1x1x4xf32> to vector<16x16x4xf32>
    %4 = arith.mulf %1, %3 : vector<16x16x4xf32>
    %c0_6 = arith.constant 0 : index
    %c0_7 = arith.constant 0 : index
    %c0_8 = arith.constant 0 : index
    %5 = vector.load %arg3[%c0_6, %c0_7, %c0_8] : memref<1x1x4xf32, #tpu.memory_space<vmem>>, vector<1x1x4xf32>
    %6 = vector.broadcast %5 : vector<1x1x4xf32> to vector<16x16x4xf32>
    %7 = arith.addf %4, %6 : vector<16x16x4xf32>
    %cst = arith.constant 0.000000e+00 : f32
    %8 = vector.broadcast %cst : f32 to vector<16x16x4xf32>
    %9 = arith.maximumf %7, %8 : vector<16x16x4xf32>
    %10 = vector.extract_strided_slice %9 {offsets = [15, 0, 0], sizes = [1, 16, 4], strides = [1, 1, 1]} : vector<16x16x4xf32> to vector<1x16x4xf32>
    %11 = vector.extract_strided_slice %9 {offsets = [0, 0, 0], sizes = [1, 16, 4], strides = [1, 1, 1]} : vector<16x16x4xf32> to vector<1x16x4xf32>
    %12 = tpu.concatenate %10, %9, %11 in 0 : vector<1x16x4xf32>, vector<16x16x4xf32>, vector<1x16x4xf32> -> vector<18x16x4xf32>
    %13 = vector.extract_strided_slice %12 {offsets = [0, 15, 0], sizes = [18, 1, 4], strides = [1, 1, 1]} : vector<18x16x4xf32> to vector<18x1x4xf32>
    %14 = vector.extract_strided_slice %12 {offsets = [0, 0, 0], sizes = [18, 1, 4], strides = [1, 1, 1]} : vector<18x16x4xf32> to vector<18x1x4xf32>
    %15 = tpu.concatenate %13, %12, %14 in 1 : vector<18x1x4xf32>, vector<18x16x4xf32>, vector<18x1x4xf32> -> vector<18x18x4xf32>
    %16 = vector.extract_strided_slice %15 {offsets = [0, 0, 0], sizes = [16, 16, 4], strides = [1, 1, 1]} : vector<18x18x4xf32> to vector<16x16x4xf32>
    %17 = vector.shape_cast %16 : vector<16x16x4xf32> to vector<256x4xf32>
    %c0_9 = arith.constant 0 : index
    %c0_10 = arith.constant 0 : index
    %c0_11 = arith.constant 0 : index
    %18 = vector.load %arg4[%c0_9, %c0_10, %c0_11] : memref<9x4x2xf32, #tpu.memory_space<vmem>>, vector<1x4x2xf32>
    %19 = vector.shape_cast %18 : vector<1x4x2xf32> to vector<4x2xf32>
    %cst_12 = arith.constant dense<0.000000e+00> : vector<256x2xf32>
    %20 = tpu.matmul %17, %19, %cst_12 {dimension_numbers = #tpu.dot_dimension_numbers<[1], [0], [0], [1], [0, 0, 1, 1], [], []>} : vector<256x4xf32>, vector<4x2xf32>, vector<256x2xf32> -> vector<256x2xf32>
    %21 = vector.extract_strided_slice %15 {offsets = [0, 1, 0], sizes = [16, 16, 4], strides = [1, 1, 1]} : vector<18x18x4xf32> to vector<16x16x4xf32>
    %22 = vector.shape_cast %21 : vector<16x16x4xf32> to vector<256x4xf32>
    %c1 = arith.constant 1 : index
    %c0_13 = arith.constant 0 : index
    %c0_14 = arith.constant 0 : index
    %23 = vector.load %arg4[%c1, %c0_13, %c0_14] : memref<9x4x2xf32, #tpu.memory_space<vmem>>, vector<1x4x2xf32>
    %24 = vector.shape_cast %23 : vector<1x4x2xf32> to vector<4x2xf32>
    %cst_15 = arith.constant dense<0.000000e+00> : vector<256x2xf32>
    %25 = tpu.matmul %22, %24, %cst_15 {dimension_numbers = #tpu.dot_dimension_numbers<[1], [0], [0], [1], [0, 0, 1, 1], [], []>} : vector<256x4xf32>, vector<4x2xf32>, vector<256x2xf32> -> vector<256x2xf32>
    %26 = arith.addf %20, %25 : vector<256x2xf32>
    %27 = vector.extract_strided_slice %15 {offsets = [0, 2, 0], sizes = [16, 16, 4], strides = [1, 1, 1]} : vector<18x18x4xf32> to vector<16x16x4xf32>
    %28 = vector.shape_cast %27 : vector<16x16x4xf32> to vector<256x4xf32>
    %c2 = arith.constant 2 : index
    %c0_16 = arith.constant 0 : index
    %c0_17 = arith.constant 0 : index
    %29 = vector.load %arg4[%c2, %c0_16, %c0_17] : memref<9x4x2xf32, #tpu.memory_space<vmem>>, vector<1x4x2xf32>
    %30 = vector.shape_cast %29 : vector<1x4x2xf32> to vector<4x2xf32>
    %cst_18 = arith.constant dense<0.000000e+00> : vector<256x2xf32>
    %31 = tpu.matmul %28, %30, %cst_18 {dimension_numbers = #tpu.dot_dimension_numbers<[1], [0], [0], [1], [0, 0, 1, 1], [], []>} : vector<256x4xf32>, vector<4x2xf32>, vector<256x2xf32> -> vector<256x2xf32>
    %32 = arith.addf %26, %31 : vector<256x2xf32>
    %33 = vector.extract_strided_slice %15 {offsets = [1, 0, 0], sizes = [16, 16, 4], strides = [1, 1, 1]} : vector<18x18x4xf32> to vector<16x16x4xf32>
    %34 = vector.shape_cast %33 : vector<16x16x4xf32> to vector<256x4xf32>
    %c3 = arith.constant 3 : index
    %c0_19 = arith.constant 0 : index
    %c0_20 = arith.constant 0 : index
    %35 = vector.load %arg4[%c3, %c0_19, %c0_20] : memref<9x4x2xf32, #tpu.memory_space<vmem>>, vector<1x4x2xf32>
    %36 = vector.shape_cast %35 : vector<1x4x2xf32> to vector<4x2xf32>
    %cst_21 = arith.constant dense<0.000000e+00> : vector<256x2xf32>
    %37 = tpu.matmul %34, %36, %cst_21 {dimension_numbers = #tpu.dot_dimension_numbers<[1], [0], [0], [1], [0, 0, 1, 1], [], []>} : vector<256x4xf32>, vector<4x2xf32>, vector<256x2xf32> -> vector<256x2xf32>
    %38 = arith.addf %32, %37 : vector<256x2xf32>
    %39 = vector.extract_strided_slice %15 {offsets = [1, 1, 0], sizes = [16, 16, 4], strides = [1, 1, 1]} : vector<18x18x4xf32> to vector<16x16x4xf32>
    %40 = vector.shape_cast %39 : vector<16x16x4xf32> to vector<256x4xf32>
    %c4 = arith.constant 4 : index
    %c0_22 = arith.constant 0 : index
    %c0_23 = arith.constant 0 : index
    %41 = vector.load %arg4[%c4, %c0_22, %c0_23] : memref<9x4x2xf32, #tpu.memory_space<vmem>>, vector<1x4x2xf32>
    %42 = vector.shape_cast %41 : vector<1x4x2xf32> to vector<4x2xf32>
    %cst_24 = arith.constant dense<0.000000e+00> : vector<256x2xf32>
    %43 = tpu.matmul %40, %42, %cst_24 {dimension_numbers = #tpu.dot_dimension_numbers<[1], [0], [0], [1], [0, 0, 1, 1], [], []>} : vector<256x4xf32>, vector<4x2xf32>, vector<256x2xf32> -> vector<256x2xf32>
    %44 = arith.addf %38, %43 : vector<256x2xf32>
    %45 = vector.extract_strided_slice %15 {offsets = [1, 2, 0], sizes = [16, 16, 4], strides = [1, 1, 1]} : vector<18x18x4xf32> to vector<16x16x4xf32>
    %46 = vector.shape_cast %45 : vector<16x16x4xf32> to vector<256x4xf32>
    %c5 = arith.constant 5 : index
    %c0_25 = arith.constant 0 : index
    %c0_26 = arith.constant 0 : index
    %47 = vector.load %arg4[%c5, %c0_25, %c0_26] : memref<9x4x2xf32, #tpu.memory_space<vmem>>, vector<1x4x2xf32>
    %48 = vector.shape_cast %47 : vector<1x4x2xf32> to vector<4x2xf32>
    %cst_27 = arith.constant dense<0.000000e+00> : vector<256x2xf32>
    %49 = tpu.matmul %46, %48, %cst_27 {dimension_numbers = #tpu.dot_dimension_numbers<[1], [0], [0], [1], [0, 0, 1, 1], [], []>} : vector<256x4xf32>, vector<4x2xf32>, vector<256x2xf32> -> vector<256x2xf32>
    %50 = arith.addf %44, %49 : vector<256x2xf32>
    %51 = vector.extract_strided_slice %15 {offsets = [2, 0, 0], sizes = [16, 16, 4], strides = [1, 1, 1]} : vector<18x18x4xf32> to vector<16x16x4xf32>
    %52 = vector.shape_cast %51 : vector<16x16x4xf32> to vector<256x4xf32>
    %c6 = arith.constant 6 : index
    %c0_28 = arith.constant 0 : index
    %c0_29 = arith.constant 0 : index
    %53 = vector.load %arg4[%c6, %c0_28, %c0_29] : memref<9x4x2xf32, #tpu.memory_space<vmem>>, vector<1x4x2xf32>
    %54 = vector.shape_cast %53 : vector<1x4x2xf32> to vector<4x2xf32>
    %cst_30 = arith.constant dense<0.000000e+00> : vector<256x2xf32>
    %55 = tpu.matmul %52, %54, %cst_30 {dimension_numbers = #tpu.dot_dimension_numbers<[1], [0], [0], [1], [0, 0, 1, 1], [], []>} : vector<256x4xf32>, vector<4x2xf32>, vector<256x2xf32> -> vector<256x2xf32>
    %56 = arith.addf %50, %55 : vector<256x2xf32>
    %57 = vector.extract_strided_slice %15 {offsets = [2, 1, 0], sizes = [16, 16, 4], strides = [1, 1, 1]} : vector<18x18x4xf32> to vector<16x16x4xf32>
    %58 = vector.shape_cast %57 : vector<16x16x4xf32> to vector<256x4xf32>
    %c7 = arith.constant 7 : index
    %c0_31 = arith.constant 0 : index
    %c0_32 = arith.constant 0 : index
    %59 = vector.load %arg4[%c7, %c0_31, %c0_32] : memref<9x4x2xf32, #tpu.memory_space<vmem>>, vector<1x4x2xf32>
    %60 = vector.shape_cast %59 : vector<1x4x2xf32> to vector<4x2xf32>
    %cst_33 = arith.constant dense<0.000000e+00> : vector<256x2xf32>
    %61 = tpu.matmul %58, %60, %cst_33 {dimension_numbers = #tpu.dot_dimension_numbers<[1], [0], [0], [1], [0, 0, 1, 1], [], []>} : vector<256x4xf32>, vector<4x2xf32>, vector<256x2xf32> -> vector<256x2xf32>
    %62 = arith.addf %56, %61 : vector<256x2xf32>
    %63 = vector.extract_strided_slice %15 {offsets = [2, 2, 0], sizes = [16, 16, 4], strides = [1, 1, 1]} : vector<18x18x4xf32> to vector<16x16x4xf32>
    %64 = vector.shape_cast %63 : vector<16x16x4xf32> to vector<256x4xf32>
    %c8 = arith.constant 8 : index
    %c0_34 = arith.constant 0 : index
    %c0_35 = arith.constant 0 : index
    %65 = vector.load %arg4[%c8, %c0_34, %c0_35] : memref<9x4x2xf32, #tpu.memory_space<vmem>>, vector<1x4x2xf32>
    %66 = vector.shape_cast %65 : vector<1x4x2xf32> to vector<4x2xf32>
    %cst_36 = arith.constant dense<0.000000e+00> : vector<256x2xf32>
    %67 = tpu.matmul %64, %66, %cst_36 {dimension_numbers = #tpu.dot_dimension_numbers<[1], [0], [0], [1], [0, 0, 1, 1], [], []>} : vector<256x4xf32>, vector<4x2xf32>, vector<256x2xf32> -> vector<256x2xf32>
    %68 = arith.addf %62, %67 : vector<256x2xf32>
    %69 = vector.shape_cast %68 : vector<256x2xf32> to vector<16x16x2xf32>
    %c0_37 = arith.constant 0 : index
    %c0_38 = arith.constant 0 : index
    %c0_39 = arith.constant 0 : index
    %70 = vector.load %arg5[%c0_37, %c0_38, %c0_39] : memref<1x1x2xf32, #tpu.memory_space<vmem>>, vector<1x1x2xf32>
    %71 = vector.broadcast %70 : vector<1x1x2xf32> to vector<16x16x2xf32>
    %72 = arith.mulf %69, %71 : vector<16x16x2xf32>
    %c0_40 = arith.constant 0 : index
    %c0_41 = arith.constant 0 : index
    %c0_42 = arith.constant 0 : index
    %73 = vector.load %arg6[%c0_40, %c0_41, %c0_42] : memref<1x1x2xf32, #tpu.memory_space<vmem>>, vector<1x1x2xf32>
    %74 = vector.broadcast %73 : vector<1x1x2xf32> to vector<16x16x2xf32>
    %75 = arith.addf %72, %74 : vector<16x16x2xf32>
    %cst_43 = arith.constant 0.000000e+00 : f32
    %76 = vector.broadcast %cst_43 : f32 to vector<16x16x2xf32>
    %77 = arith.maximumf %75, %76 : vector<16x16x2xf32>
    %78 = vector.extract_strided_slice %77 {offsets = [15, 0, 0], sizes = [1, 16, 2], strides = [1, 1, 1]} : vector<16x16x2xf32> to vector<1x16x2xf32>
    %79 = vector.extract_strided_slice %77 {offsets = [0, 0, 0], sizes = [1, 16, 2], strides = [1, 1, 1]} : vector<16x16x2xf32> to vector<1x16x2xf32>
    %80 = tpu.concatenate %78, %77, %79 in 0 : vector<1x16x2xf32>, vector<16x16x2xf32>, vector<1x16x2xf32> -> vector<18x16x2xf32>
    %81 = vector.extract_strided_slice %80 {offsets = [0, 15, 0], sizes = [18, 1, 2], strides = [1, 1, 1]} : vector<18x16x2xf32> to vector<18x1x2xf32>
    %82 = vector.extract_strided_slice %80 {offsets = [0, 0, 0], sizes = [18, 1, 2], strides = [1, 1, 1]} : vector<18x16x2xf32> to vector<18x1x2xf32>
    %83 = tpu.concatenate %81, %80, %82 in 1 : vector<18x1x2xf32>, vector<18x16x2xf32>, vector<18x1x2xf32> -> vector<18x18x2xf32>
    %84 = vector.extract_strided_slice %83 {offsets = [0, 0, 0], sizes = [16, 16, 2], strides = [1, 1, 1]} : vector<18x18x2xf32> to vector<16x16x2xf32>
    %85 = vector.shape_cast %84 : vector<16x16x2xf32> to vector<256x2xf32>
    %c0_44 = arith.constant 0 : index
    %c0_45 = arith.constant 0 : index
    %c0_46 = arith.constant 0 : index
    %86 = vector.load %arg7[%c0_44, %c0_45, %c0_46] : memref<9x2x2xf32, #tpu.memory_space<vmem>>, vector<1x2x2xf32>
    %87 = vector.shape_cast %86 : vector<1x2x2xf32> to vector<2x2xf32>
    %cst_47 = arith.constant dense<0.000000e+00> : vector<256x2xf32>
    %88 = tpu.matmul %85, %87, %cst_47 {dimension_numbers = #tpu.dot_dimension_numbers<[1], [0], [0], [1], [0, 0, 1, 1], [], []>} : vector<256x2xf32>, vector<2x2xf32>, vector<256x2xf32> -> vector<256x2xf32>
    %89 = vector.extract_strided_slice %83 {offsets = [0, 1, 0], sizes = [16, 16, 2], strides = [1, 1, 1]} : vector<18x18x2xf32> to vector<16x16x2xf32>
    %90 = vector.shape_cast %89 : vector<16x16x2xf32> to vector<256x2xf32>
    %c1_48 = arith.constant 1 : index
    %c0_49 = arith.constant 0 : index
    %c0_50 = arith.constant 0 : index
    %91 = vector.load %arg7[%c1_48, %c0_49, %c0_50] : memref<9x2x2xf32, #tpu.memory_space<vmem>>, vector<1x2x2xf32>
    %92 = vector.shape_cast %91 : vector<1x2x2xf32> to vector<2x2xf32>
    %cst_51 = arith.constant dense<0.000000e+00> : vector<256x2xf32>
    %93 = tpu.matmul %90, %92, %cst_51 {dimension_numbers = #tpu.dot_dimension_numbers<[1], [0], [0], [1], [0, 0, 1, 1], [], []>} : vector<256x2xf32>, vector<2x2xf32>, vector<256x2xf32> -> vector<256x2xf32>
    %94 = arith.addf %88, %93 : vector<256x2xf32>
    %95 = vector.extract_strided_slice %83 {offsets = [0, 2, 0], sizes = [16, 16, 2], strides = [1, 1, 1]} : vector<18x18x2xf32> to vector<16x16x2xf32>
    %96 = vector.shape_cast %95 : vector<16x16x2xf32> to vector<256x2xf32>
    %c2_52 = arith.constant 2 : index
    %c0_53 = arith.constant 0 : index
    %c0_54 = arith.constant 0 : index
    %97 = vector.load %arg7[%c2_52, %c0_53, %c0_54] : memref<9x2x2xf32, #tpu.memory_space<vmem>>, vector<1x2x2xf32>
    %98 = vector.shape_cast %97 : vector<1x2x2xf32> to vector<2x2xf32>
    %cst_55 = arith.constant dense<0.000000e+00> : vector<256x2xf32>
    %99 = tpu.matmul %96, %98, %cst_55 {dimension_numbers = #tpu.dot_dimension_numbers<[1], [0], [0], [1], [0, 0, 1, 1], [], []>} : vector<256x2xf32>, vector<2x2xf32>, vector<256x2xf32> -> vector<256x2xf32>
    %100 = arith.addf %94, %99 : vector<256x2xf32>
    %101 = vector.extract_strided_slice %83 {offsets = [1, 0, 0], sizes = [16, 16, 2], strides = [1, 1, 1]} : vector<18x18x2xf32> to vector<16x16x2xf32>
    %102 = vector.shape_cast %101 : vector<16x16x2xf32> to vector<256x2xf32>
    %c3_56 = arith.constant 3 : index
    %c0_57 = arith.constant 0 : index
    %c0_58 = arith.constant 0 : index
    %103 = vector.load %arg7[%c3_56, %c0_57, %c0_58] : memref<9x2x2xf32, #tpu.memory_space<vmem>>, vector<1x2x2xf32>
    %104 = vector.shape_cast %103 : vector<1x2x2xf32> to vector<2x2xf32>
    %cst_59 = arith.constant dense<0.000000e+00> : vector<256x2xf32>
    %105 = tpu.matmul %102, %104, %cst_59 {dimension_numbers = #tpu.dot_dimension_numbers<[1], [0], [0], [1], [0, 0, 1, 1], [], []>} : vector<256x2xf32>, vector<2x2xf32>, vector<256x2xf32> -> vector<256x2xf32>
    %106 = arith.addf %100, %105 : vector<256x2xf32>
    %107 = vector.extract_strided_slice %83 {offsets = [1, 1, 0], sizes = [16, 16, 2], strides = [1, 1, 1]} : vector<18x18x2xf32> to vector<16x16x2xf32>
    %108 = vector.shape_cast %107 : vector<16x16x2xf32> to vector<256x2xf32>
    %c4_60 = arith.constant 4 : index
    %c0_61 = arith.constant 0 : index
    %c0_62 = arith.constant 0 : index
    %109 = vector.load %arg7[%c4_60, %c0_61, %c0_62] : memref<9x2x2xf32, #tpu.memory_space<vmem>>, vector<1x2x2xf32>
    %110 = vector.shape_cast %109 : vector<1x2x2xf32> to vector<2x2xf32>
    %cst_63 = arith.constant dense<0.000000e+00> : vector<256x2xf32>
    %111 = tpu.matmul %108, %110, %cst_63 {dimension_numbers = #tpu.dot_dimension_numbers<[1], [0], [0], [1], [0, 0, 1, 1], [], []>} : vector<256x2xf32>, vector<2x2xf32>, vector<256x2xf32> -> vector<256x2xf32>
    %112 = arith.addf %106, %111 : vector<256x2xf32>
    %113 = vector.extract_strided_slice %83 {offsets = [1, 2, 0], sizes = [16, 16, 2], strides = [1, 1, 1]} : vector<18x18x2xf32> to vector<16x16x2xf32>
    %114 = vector.shape_cast %113 : vector<16x16x2xf32> to vector<256x2xf32>
    %c5_64 = arith.constant 5 : index
    %c0_65 = arith.constant 0 : index
    %c0_66 = arith.constant 0 : index
    %115 = vector.load %arg7[%c5_64, %c0_65, %c0_66] : memref<9x2x2xf32, #tpu.memory_space<vmem>>, vector<1x2x2xf32>
    %116 = vector.shape_cast %115 : vector<1x2x2xf32> to vector<2x2xf32>
    %cst_67 = arith.constant dense<0.000000e+00> : vector<256x2xf32>
    %117 = tpu.matmul %114, %116, %cst_67 {dimension_numbers = #tpu.dot_dimension_numbers<[1], [0], [0], [1], [0, 0, 1, 1], [], []>} : vector<256x2xf32>, vector<2x2xf32>, vector<256x2xf32> -> vector<256x2xf32>
    %118 = arith.addf %112, %117 : vector<256x2xf32>
    %119 = vector.extract_strided_slice %83 {offsets = [2, 0, 0], sizes = [16, 16, 2], strides = [1, 1, 1]} : vector<18x18x2xf32> to vector<16x16x2xf32>
    %120 = vector.shape_cast %119 : vector<16x16x2xf32> to vector<256x2xf32>
    %c6_68 = arith.constant 6 : index
    %c0_69 = arith.constant 0 : index
    %c0_70 = arith.constant 0 : index
    %121 = vector.load %arg7[%c6_68, %c0_69, %c0_70] : memref<9x2x2xf32, #tpu.memory_space<vmem>>, vector<1x2x2xf32>
    %122 = vector.shape_cast %121 : vector<1x2x2xf32> to vector<2x2xf32>
    %cst_71 = arith.constant dense<0.000000e+00> : vector<256x2xf32>
    %123 = tpu.matmul %120, %122, %cst_71 {dimension_numbers = #tpu.dot_dimension_numbers<[1], [0], [0], [1], [0, 0, 1, 1], [], []>} : vector<256x2xf32>, vector<2x2xf32>, vector<256x2xf32> -> vector<256x2xf32>
    %124 = arith.addf %118, %123 : vector<256x2xf32>
    %125 = vector.extract_strided_slice %83 {offsets = [2, 1, 0], sizes = [16, 16, 2], strides = [1, 1, 1]} : vector<18x18x2xf32> to vector<16x16x2xf32>
    %126 = vector.shape_cast %125 : vector<16x16x2xf32> to vector<256x2xf32>
    %c7_72 = arith.constant 7 : index
    %c0_73 = arith.constant 0 : index
    %c0_74 = arith.constant 0 : index
    %127 = vector.load %arg7[%c7_72, %c0_73, %c0_74] : memref<9x2x2xf32, #tpu.memory_space<vmem>>, vector<1x2x2xf32>
    %128 = vector.shape_cast %127 : vector<1x2x2xf32> to vector<2x2xf32>
    %cst_75 = arith.constant dense<0.000000e+00> : vector<256x2xf32>
    %129 = tpu.matmul %126, %128, %cst_75 {dimension_numbers = #tpu.dot_dimension_numbers<[1], [0], [0], [1], [0, 0, 1, 1], [], []>} : vector<256x2xf32>, vector<2x2xf32>, vector<256x2xf32> -> vector<256x2xf32>
    %130 = arith.addf %124, %129 : vector<256x2xf32>
    %131 = vector.extract_strided_slice %83 {offsets = [2, 2, 0], sizes = [16, 16, 2], strides = [1, 1, 1]} : vector<18x18x2xf32> to vector<16x16x2xf32>
    %132 = vector.shape_cast %131 : vector<16x16x2xf32> to vector<256x2xf32>
    %c8_76 = arith.constant 8 : index
    %c0_77 = arith.constant 0 : index
    %c0_78 = arith.constant 0 : index
    %133 = vector.load %arg7[%c8_76, %c0_77, %c0_78] : memref<9x2x2xf32, #tpu.memory_space<vmem>>, vector<1x2x2xf32>
    %134 = vector.shape_cast %133 : vector<1x2x2xf32> to vector<2x2xf32>
    %cst_79 = arith.constant dense<0.000000e+00> : vector<256x2xf32>
    %135 = tpu.matmul %132, %134, %cst_79 {dimension_numbers = #tpu.dot_dimension_numbers<[1], [0], [0], [1], [0, 0, 1, 1], [], []>} : vector<256x2xf32>, vector<2x2xf32>, vector<256x2xf32> -> vector<256x2xf32>
    %136 = arith.addf %130, %135 : vector<256x2xf32>
    %137 = vector.shape_cast %136 : vector<256x2xf32> to vector<16x16x2xf32>
    %138 = vector.shape_cast %137 : vector<16x16x2xf32> to vector<256x2xf32>
    %c0_80 = arith.constant 0 : index
    %c0_81 = arith.constant 0 : index
    %139 = vector.load %arg8[%c0_80, %c0_81] : memref<2x4xf32, #tpu.memory_space<vmem>>, vector<2x4xf32>
    %cst_82 = arith.constant dense<0.000000e+00> : vector<256x4xf32>
    %140 = tpu.matmul %138, %139, %cst_82 {dimension_numbers = #tpu.dot_dimension_numbers<[1], [0], [0], [1], [0, 0, 1, 1], [], []>} : vector<256x2xf32>, vector<2x4xf32>, vector<256x4xf32> -> vector<256x4xf32>
    %c0_83 = arith.constant 0 : index
    %c0_84 = arith.constant 0 : index
    %141 = vector.load %arg9[%c0_83, %c0_84] : memref<1x4xf32, #tpu.memory_space<vmem>>, vector<1x4xf32>
    %142 = vector.broadcast %141 : vector<1x4xf32> to vector<256x4xf32>
    %143 = arith.addf %140, %142 : vector<256x4xf32>
    %144 = vector.shape_cast %143 : vector<256x4xf32> to vector<16x16x4xf32>
    %145 = arith.addf %144, %1 : vector<16x16x4xf32>
    %c0_85 = arith.constant 0 : index
    %c0_86 = arith.constant 0 : index
    %c0_87 = arith.constant 0 : index
    %c0_88 = arith.constant 0 : index
    %146 = vector.load %arg10[%c0_85, %c0_86, %c0_87, %c0_88] : memref<1x16x16x4xf32, #tpu.memory_space<vmem>>, vector<1x16x16x4xf32>
    %147 = vector.shape_cast %146 : vector<1x16x16x4xf32> to vector<16x16x4xf32>
    %148 = vector.shape_cast %145 : vector<16x16x4xf32> to vector<1x16x16x4xf32>
    tpu.vector_store %arg10[%c0_85, %c0_86, %c0_87, %c0_88], %148 {strides = array<i32>} : memref<1x16x16x4xf32, #tpu.memory_space<vmem>>, vector<1x16x16x4xf32>,
    return
  }
  func.func @transform_0(%arg0: i32) -> (i32, i32, i32, i32) {
    %c0_i32 = arith.constant 0 : i32
    %c0_i32_0 = arith.constant 0 : i32
    %c0_i32_1 = arith.constant 0 : i32
    %c0_i32_2 = arith.constant 0 : i32
    return %arg0, %c0_i32, %c0_i32_0, %c0_i32_1 : i32, i32, i32, i32
  }
  func.func @transform_1(%arg0: i32) -> (i32, i32, i32) {
    %c0_i32 = arith.constant 0 : i32
    %c0_i32_0 = arith.constant 0 : i32
    %c0_i32_1 = arith.constant 0 : i32
    %c0_i32_2 = arith.constant 0 : i32
    return %c0_i32, %c0_i32_0, %c0_i32_1 : i32, i32, i32
  }
  func.func @transform_2(%arg0: i32) -> (i32, i32, i32) {
    %c0_i32 = arith.constant 0 : i32
    %c0_i32_0 = arith.constant 0 : i32
    %c0_i32_1 = arith.constant 0 : i32
    %c0_i32_2 = arith.constant 0 : i32
    return %c0_i32, %c0_i32_0, %c0_i32_1 : i32, i32, i32
  }
  func.func @transform_3(%arg0: i32) -> (i32, i32, i32) {
    %c0_i32 = arith.constant 0 : i32
    %c0_i32_0 = arith.constant 0 : i32
    %c0_i32_1 = arith.constant 0 : i32
    %c0_i32_2 = arith.constant 0 : i32
    return %c0_i32, %c0_i32_0, %c0_i32_1 : i32, i32, i32
  }
  func.func @transform_4(%arg0: i32) -> (i32, i32, i32) {
    %c0_i32 = arith.constant 0 : i32
    %c0_i32_0 = arith.constant 0 : i32
    %c0_i32_1 = arith.constant 0 : i32
    %c0_i32_2 = arith.constant 0 : i32
    return %c0_i32, %c0_i32_0, %c0_i32_1 : i32, i32, i32
  }
  func.func @transform_5(%arg0: i32) -> (i32, i32, i32) {
    %c0_i32 = arith.constant 0 : i32
    %c0_i32_0 = arith.constant 0 : i32
    %c0_i32_1 = arith.constant 0 : i32
    %c0_i32_2 = arith.constant 0 : i32
    return %c0_i32, %c0_i32_0, %c0_i32_1 : i32, i32, i32
  }
  func.func @transform_6(%arg0: i32) -> (i32, i32, i32) {
    %c0_i32 = arith.constant 0 : i32
    %c0_i32_0 = arith.constant 0 : i32
    %c0_i32_1 = arith.constant 0 : i32
    %c0_i32_2 = arith.constant 0 : i32
    return %c0_i32, %c0_i32_0, %c0_i32_1 : i32, i32, i32
  }
  func.func @transform_7(%arg0: i32) -> (i32, i32) {
    %c0_i32 = arith.constant 0 : i32
    %c0_i32_0 = arith.constant 0 : i32
    %c0_i32_1 = arith.constant 0 : i32
    return %c0_i32, %c0_i32_0 : i32, i32
  }
  func.func @transform_8(%arg0: i32) -> (i32, i32) {
    %c0_i32 = arith.constant 0 : i32
    %c0_i32_0 = arith.constant 0 : i32
    %c0_i32_1 = arith.constant 0 : i32
    return %c0_i32, %c0_i32_0 : i32, i32
  }
  func.func @transform_9(%arg0: i32) -> (i32, i32, i32, i32) {
    %c0_i32 = arith.constant 0 : i32
    %c0_i32_0 = arith.constant 0 : i32
    %c0_i32_1 = arith.constant 0 : i32
    %c0_i32_2 = arith.constant 0 : i32
    return %arg0, %c0_i32, %c0_i32_0, %c0_i32_1 : i32, i32, i32, i32
  }
}

</mosaic_0001>

<llo_original>
// kernel: tpu_custom_call.1
$region0: #{tpu_custom_call.1}
  #allocation0 [shape = 'u32[]', space=smem, size = 0x4, offset = 0x4, fixed_abs, tag = 'smem constant byte address 0x4 - core index']
  #allocation1 [shape = 'u32[144,128]{1,0:T(1,128)}', space=vmem, size = 0x12000, scoped, tag = 'internal scratch']
  %s0 = inlined_call_operand.vmem [shape: f32[2,16,16,4], index: 0, kind: input, shape index: {}]
  %s1 = inlined_call_operand.vmem [shape: f32[1,1,4], index: 1, kind: input, shape index: {}]
  %s2 = inlined_call_operand.vmem [shape: f32[1,1,4], index: 2, kind: input, shape index: {}]
  %s3 = inlined_call_operand.vmem [shape: f32[9,4,2], index: 3, kind: input, shape index: {}]
  %s4 = inlined_call_operand.vmem [shape: f32[1,1,2], index: 4, kind: input, shape index: {}]
  %s5 = inlined_call_operand.vmem [shape: f32[1,1,2], index: 5, kind: input, shape index: {}]
  %s6 = inlined_call_operand.vmem [shape: f32[9,2,2], index: 6, kind: input, shape index: {}]
  %s7 = inlined_call_operand.vmem [shape: f32[2,4], index: 7, kind: input, shape index: {}]
  %s8 = inlined_call_operand.vmem [shape: f32[1,4], index: 8, kind: input, shape index: {}]
  %s9 = inlined_call_operand.vmem [shape: f32[2,16,16,4], index: 9, kind: output, shape index: {}]
  %s10 = sld [smem:[#allocation0]]
  $region69: #{tpu_custom_call.1} parent=0
    _
  %s12 = ssub.s32 1, %s10
  %s13 = scalar_select 0, %s12, %s10
  loop: start=0, step=1, limit=4
  $region2: #{tpu_custom_call.1} parent=0 // loop_pre_header
    _
  $region3: #{tpu_custom_call.1} parent=0 // loop_header
    %s15 = sphi 0, %s19
    %p16 = scmp.ge.s32.totalorder %s15, 4
    %s25 = sphi 0, %s27
    %s28 = sphi 0, %s25
    %s29 = sphi 0, %s28
    %s45 = sphi 0, %s29
    %s49 = sphi 0, %s49
    %s51 = sphi 0, %s49
    %s52 = sphi 0, %s51
    %s66 = sphi 0, %s52
    %s70 = sphi 0, %s70
    %s72 = sphi 0, %s70
    %s73 = sphi 0, %s72
    %s87 = sphi 0, %s73
    %s91 = sphi 0, %s91
    %s93 = sphi 0, %s91
    %s94 = sphi 0, %s93
    %s108 = sphi 0, %s94
    %s112 = sphi 0, %s112
    %s114 = sphi 0, %s112
    %s115 = sphi 0, %s114
    %s129 = sphi 0, %s115
    %s133 = sphi 0, %s133
    %s135 = sphi 0, %s133
    %s136 = sphi 0, %s135
    %s150 = sphi 0, %s136
    %s154 = sphi 0, %s154
    %s156 = sphi 0, %s154
    %s157 = sphi 0, %s156
    %s171 = sphi 0, %s157
    %s175 = sphi 0, %s175
    %s177 = sphi 0, %s175
    %s178 = sphi 0, %s177
    %s192 = sphi 0, %s178
    %s196 = sphi 0, %s196
    %s198 = sphi 0, %s196
    %s199 = sphi 0, %s198
    %s213 = sphi 0, %s199
    %s219 = sphi 0, %s221
    %s222 = sphi 0, %s219
    %s223 = sphi 0, %s222
    %s239 = sphi 0, %s223
  $region4: #{tpu_custom_call.1} parent=0 // loop_header_branch
    %18 = sbr.rel (%p16) target = $region8
  $region5: #{tpu_custom_call.1} parent=0 // loop_body
    %s20 = ssub.s32 %s15, 1
    %s21 = ssub.s32 %s15, 2
    %s22 = sadd.s32 %s15, 1
    %s23 = ssub.s32 %s15, %s22
    %p24 = scmp.eq.s32.totalorder %s23, 0
    %s26 = sadd.s32 %s25, 1
    %s27 = scalar_select %p24, %s25, %s26
    %p30 = pneg %p24
    %p31 = scmp.eq.s32.totalorder %s15, 1
    %p32 = por %p30, %p31
    %p33 = scmp.ne.s32.totalorder %s25, %s28
    %p34 = scmp.eq.s32.totalorder %s15, 0
    %p35 = por %p33, %p34
    %p36 = scmp.ne.s32.totalorder %s25, %s28
    %p37 = scmp.eq.s32.totalorder %s20, 1
    %p38 = por %p36, %p37
    %p39 = scmp.ne.s32.totalorder %s28, %s29
    %p40 = scmp.eq.s32.totalorder %s20, 0
    %p41 = por %p39, %p40
    %p42 = scmp.ne.s32.totalorder %s28, %s29
    %p43 = scmp.eq.s32.totalorder %s21, 1
    %p44 = por %p42, %p43
    %p46 = scmp.ne.s32.totalorder %s29, %s45
    %p47 = scmp.eq.s32.totalorder %s21, 0
    %p48 = por %p46, %p47
    %s50 = sadd.s32 %s49, 1
    %p53 = scmp.eq.s32.totalorder %s15, 1
    %p54 = scmp.ne.s32.totalorder %s49, %s51
    %p55 = scmp.eq.s32.totalorder %s15, 0
    %p56 = por %p54, %p55
    %p57 = scmp.ne.s32.totalorder %s49, %s51
    %p58 = scmp.eq.s32.totalorder %s20, 1
    %p59 = por %p57, %p58
    %p60 = scmp.ne.s32.totalorder %s51, %s52
    %p61 = scmp.eq.s32.totalorder %s20, 0
    %p62 = por %p60, %p61
    %p63 = scmp.ne.s32.totalorder %s51, %s52
    %p64 = scmp.eq.s32.totalorder %s21, 1
    %p65 = por %p63, %p64
    %p67 = scmp.ne.s32.totalorder %s52, %s66
    %p68 = scmp.eq.s32.totalorder %s21, 0
    %p69 = por %p67, %p68
    %s71 = sadd.s32 %s70, 1
    %p74 = scmp.eq.s32.totalorder %s15, 1
    %p75 = scmp.ne.s32.totalorder %s70, %s72
    %p76 = scmp.eq.s32.totalorder %s15, 0
    %p77 = por %p75, %p76
    %p78 = scmp.ne.s32.totalorder %s70, %s72
    %p79 = scmp.eq.s32.totalorder %s20, 1
    %p80 = por %p78, %p79
    %p81 = scmp.ne.s32.totalorder %s72, %s73
    %p82 = scmp.eq.s32.totalorder %s20, 0
    %p83 = por %p81, %p82
    %p84 = scmp.ne.s32.totalorder %s72, %s73
    %p85 = scmp.eq.s32.totalorder %s21, 1
    %p86 = por %p84, %p85
    %p88 = scmp.ne.s32.totalorder %s73, %s87
    %p89 = scmp.eq.s32.totalorder %s21, 0
    %p90 = por %p88, %p89
    %s92 = sadd.s32 %s91, 1
    %p95 = scmp.eq.s32.totalorder %s15, 1
    %p96 = scmp.ne.s32.totalorder %s91, %s93
    %p97 = scmp.eq.s32.totalorder %s15, 0
    %p98 = por %p96, %p97
    %p99 = scmp.ne.s32.totalorder %s91, %s93
    %p100 = scmp.eq.s32.totalorder %s20, 1
    %p101 = por %p99, %p100
    %p102 = scmp.ne.s32.totalorder %s93, %s94
    %p103 = scmp.eq.s32.totalorder %s20, 0
    %p104 = por %p102, %p103
    %p105 = scmp.ne.s32.totalorder %s93, %s94
    %p106 = scmp.eq.s32.totalorder %s21, 1
    %p107 = por %p105, %p106
    %p109 = scmp.ne.s32.totalorder %s94, %s108
    %p110 = scmp.eq.s32.totalorder %s21, 0
    %p111 = por %p109, %p110
    %s113 = sadd.s32 %s112, 1
    %p116 = scmp.eq.s32.totalorder %s15, 1
    %p117 = scmp.ne.s32.totalorder %s112, %s114
    %p118 = scmp.eq.s32.totalorder %s15, 0
    %p119 = por %p117, %p118
    %p120 = scmp.ne.s32.totalorder %s112, %s114
    %p121 = scmp.eq.s32.totalorder %s20, 1
    %p122 = por %p120, %p121
    %p123 = scmp.ne.s32.totalorder %s114, %s115
    %p124 = scmp.eq.s32.totalorder %s20, 0
    %p125 = por %p123, %p124
    %p126 = scmp.ne.s32.totalorder %s114, %s115
    %p127 = scmp.eq.s32.totalorder %s21, 1
    %p128 = por %p126, %p127
    %p130 = scmp.ne.s32.totalorder %s115, %s129
    %p131 = scmp.eq.s32.totalorder %s21, 0
    %p132 = por %p130, %p131
    %s134 = sadd.s32 %s133, 1
    %p137 = scmp.eq.s32.totalorder %s15, 1
    %p138 = scmp.ne.s32.totalorder %s133, %s135
    %p139 = scmp.eq.s32.totalorder %s15, 0
    %p140 = por %p138, %p139
    %p141 = scmp.ne.s32.totalorder %s133, %s135
    %p142 = scmp.eq.s32.totalorder %s20, 1
    %p143 = por %p141, %p142
    %p144 = scmp.ne.s32.totalorder %s135, %s136
    %p145 = scmp.eq.s32.totalorder %s20, 0
    %p146 = por %p144, %p145
    %p147 = scmp.ne.s32.totalorder %s135, %s136
    %p148 = scmp.eq.s32.totalorder %s21, 1
    %p149 = por %p147, %p148
    %p151 = scmp.ne.s32.totalorder %s136, %s150
    %p152 = scmp.eq.s32.totalorder %s21, 0
    %p153 = por %p151, %p152
    %s155 = sadd.s32 %s154, 1
    %p158 = scmp.eq.s32.totalorder %s15, 1
    %p159 = scmp.ne.s32.totalorder %s154, %s156
    %p160 = scmp.eq.s32.totalorder %s15, 0
    %p161 = por %p159, %p160
    %p162 = scmp.ne.s32.totalorder %s154, %s156
    %p163 = scmp.eq.s32.totalorder %s20, 1
    %p164 = por %p162, %p163
    %p165 = scmp.ne.s32.totalorder %s156, %s157
    %p166 = scmp.eq.s32.totalorder %s20, 0
    %p167 = por %p165, %p166
    %p168 = scmp.ne.s32.totalorder %s156, %s157
    %p169 = scmp.eq.s32.totalorder %s21, 1
    %p170 = por %p168, %p169
    %p172 = scmp.ne.s32.totalorder %s157, %s171
    %p173 = scmp.eq.s32.totalorder %s21, 0
    %p174 = por %p172, %p173
    %s176 = sadd.s32 %s175, 1
    %p179 = scmp.eq.s32.totalorder %s15, 1
    %p180 = scmp.ne.s32.totalorder %s175, %s177
    %p181 = scmp.eq.s32.totalorder %s15, 0
    %p182 = por %p180, %p181
    %p183 = scmp.ne.s32.totalorder %s175, %s177
    %p184 = scmp.eq.s32.totalorder %s20, 1
    %p185 = por %p183, %p184
    %p186 = scmp.ne.s32.totalorder %s177, %s178
    %p187 = scmp.eq.s32.totalorder %s20, 0
    %p188 = por %p186, %p187
    %p189 = scmp.ne.s32.totalorder %s177, %s178
    %p190 = scmp.eq.s32.totalorder %s21, 1
    %p191 = por %p189, %p190
    %p193 = scmp.ne.s32.totalorder %s178, %s192
    %p194 = scmp.eq.s32.totalorder %s21, 0
    %p195 = por %p193, %p194
    %s197 = sadd.s32 %s196, 1
    %p200 = scmp.eq.s32.totalorder %s15, 1
    %p201 = scmp.ne.s32.totalorder %s196, %s198
    %p202 = scmp.eq.s32.totalorder %s15, 0
    %p203 = por %p201, %p202
    %p204 = scmp.ne.s32.totalorder %s196, %s198
    %p205 = scmp.eq.s32.totalorder %s20, 1
    %p206 = por %p204, %p205
    %p207 = scmp.ne.s32.totalorder %s198, %s199
    %p208 = scmp.eq.s32.totalorder %s20, 0
    %p209 = por %p207, %p208
    %p210 = scmp.ne.s32.totalorder %s198, %s199
    %p211 = scmp.eq.s32.totalorder %s21, 1
    %p212 = por %p210, %p211
    %p214 = scmp.ne.s32.totalorder %s199, %s213
    %p215 = scmp.eq.s32.totalorder %s21, 0
    %p216 = por %p214, %p215
    %s217 = ssub.s32 %s15, %s22
    %p218 = scmp.eq.s32.totalorder %s217, 0
    %s220 = sadd.s32 %s219, 1
    %s221 = scalar_select %p218, %s219, %s220
    %p224 = pneg %p218
    %p225 = scmp.eq.s32.totalorder %s15, 1
    %p226 = por %p224, %p225
    %p227 = scmp.ne.s32.totalorder %s219, %s222
    %p228 = scmp.eq.s32.totalorder %s15, 0
    %p229 = por %p227, %p228
    %p230 = scmp.ne.s32.totalorder %s219, %s222
    %p231 = scmp.eq.s32.totalorder %s20, 1
    %p232 = por %p230, %p231
    %p233 = scmp.ne.s32.totalorder %s222, %s223
    %p234 = scmp.eq.s32.totalorder %s20, 0
    %p235 = por %p233, %p234
    %p236 = scmp.ne.s32.totalorder %s222, %s223
    %p237 = scmp.eq.s32.totalorder %s21, 1
    %p238 = por %p236, %p237
    %p240 = scmp.ne.s32.totalorder %s223, %s239
    %p241 = scmp.eq.s32.totalorder %s21, 0
    %p242 = por %p240, %p241
    %p243 = scmp.le.s32.totalorder 1, %s15
    %p244 = scmp.lt.s32.totalorder %s15, 3
    %p245 = pnand %p243, %p244
    %p246 = pneg %p245
    // Predicated region
    $region9: #{tpu_custom_call.1} parent=5 // pred_check
      _
    $region10: #{tpu_custom_call.1} parent=5 // pred_check_branch
      %248 = sbr.rel (%p245) target = $region12
    $region11: #{tpu_custom_call.1} parent=5 // pred_region
      %s249 = ssub.s32 %s15, 1
      // Predicated region
      $region13: #{tpu_custom_call.1} parent=11 // pred_check
        %p250 = pneg %p62
      $region14: #{tpu_custom_call.1} parent=11 // pred_check_branch
        %252 = sbr.rel (%p250) target = $region16
      $region15: #{tpu_custom_call.1} parent=11 // pred_region
        _
      $region16: #{tpu_custom_call.1} parent=11 // pred_fallthru
        _
      // Predicated region
      $region17: #{tpu_custom_call.1} parent=11 // pred_check
        %p253 = pneg %p83
      $region18: #{tpu_custom_call.1} parent=11 // pred_check_branch
        %255 = sbr.rel (%p253) target = $region20
      $region19: #{tpu_custom_call.1} parent=11 // pred_region
        _
      $region20: #{tpu_custom_call.1} parent=11 // pred_fallthru
        _
      // Predicated region
      $region21: #{tpu_custom_call.1} parent=11 // pred_check
        %p256 = pneg %p104
      $region22: #{tpu_custom_call.1} parent=11 // pred_check_branch
        %258 = sbr.rel (%p256) target = $region24
      $region23: #{tpu_custom_call.1} parent=11 // pred_region
        _
      $region24: #{tpu_custom_call.1} parent=11 // pred_fallthru
        _
      // Predicated region
      $region25: #{tpu_custom_call.1} parent=11 // pred_check
        %p259 = pneg %p125
      $region26: #{tpu_custom_call.1} parent=11 // pred_check_branch
        %261 = sbr.rel (%p259) target = $region28
      $region27: #{tpu_custom_call.1} parent=11 // pred_region
        _
      $region28: #{tpu_custom_call.1} parent=11 // pred_fallthru
        _
      // Predicated region
      $region29: #{tpu_custom_call.1} parent=11 // pred_check
        %p262 = pneg %p146
      $region30: #{tpu_custom_call.1} parent=11 // pred_check_branch
        %264 = sbr.rel (%p262) target = $region32
      $region31: #{tpu_custom_call.1} parent=11 // pred_region
        _
      $region32: #{tpu_custom_call.1} parent=11 // pred_fallthru
        _
      // Predicated region
      $region33: #{tpu_custom_call.1} parent=11 // pred_check
        %p265 = pneg %p167
      $region34: #{tpu_custom_call.1} parent=11 // pred_check_branch
        %267 = sbr.rel (%p265) target = $region36
      $region35: #{tpu_custom_call.1} parent=11 // pred_region
        _
      $region36: #{tpu_custom_call.1} parent=11 // pred_fallthru
        _
      // Predicated region
      $region37: #{tpu_custom_call.1} parent=11 // pred_check
        %p268 = pneg %p188
      $region38: #{tpu_custom_call.1} parent=11 // pred_check_branch
        %270 = sbr.rel (%p268) target = $region40
      $region39: #{tpu_custom_call.1} parent=11 // pred_region
        _
      $region40: #{tpu_custom_call.1} parent=11 // pred_fallthru
        _
      // Predicated region
      $region41: #{tpu_custom_call.1} parent=11 // pred_check
        %p271 = pneg %p209
      $region42: #{tpu_custom_call.1} parent=11 // pred_check_branch
        %273 = sbr.rel (%p271) target = $region44
      $region43: #{tpu_custom_call.1} parent=11 // pred_region
        _
      $region44: #{tpu_custom_call.1} parent=11 // pred_fallthru
        _
    $region12: #{tpu_custom_call.1} parent=5 // pred_fallthru
      _
    %p274 = scmp.lt.s32.totalorder %s15, 2
    // Predicated region
    $region45: #{tpu_custom_call.1} parent=5 // pred_check
      %p275 = pneg %p274
    $region46: #{tpu_custom_call.1} parent=5 // pred_check_branch
      %277 = sbr.rel (%p275) target = $region48
    $region47: #{tpu_custom_call.1} parent=5 // pred_region
      // Predicated region
      $region49: #{tpu_custom_call.1} parent=47 // pred_check
        %p278 = pneg %p35
      $region50: #{tpu_custom_call.1} parent=47 // pred_check_branch
        %280 = sbr.rel (%p278) target = $region52
      $region51: #{tpu_custom_call.1} parent=47 // pred_region
        %p281 = scmp.lt.s32.totalorder %s15, 1
        %s282 = scalar_select %p281, %s15, 1
        %s283 = smul.addr %s282, 32
        %s284 = smul.addr %s283, 8
        %s285 = scalar_lea.vmem %s0, %s284
      $region52: #{tpu_custom_call.1} parent=47 // pred_fallthru
        _
    $region48: #{tpu_custom_call.1} parent=5 // pred_fallthru
      _
    %p286 = scmp.le.s32.totalorder 1, %s15
    %p287 = scmp.lt.s32.totalorder %s15, 3
    %p288 = pnand %p286, %p287
    %p289 = pneg %p288
    // Predicated region
    $region53: #{tpu_custom_call.1} parent=5 // pred_check
      _
    $region54: #{tpu_custom_call.1} parent=5 // pred_check_branch
      %291 = sbr.rel (%p288) target = $region56
    $region55: #{tpu_custom_call.1} parent=5 // pred_region
      %s292 = ssub.s32 %s15, 1
      %p293 = scmp.lt.s32.totalorder %s20, 1
      %s294 = scalar_select %p293, %s20, 1
      %s295 = smul.addr %s294, 32
      %s296 = smul.addr %s295, 8
      %s297 = scalar_lea.vmem %s0, %s296
      %p298 = pneg %p41
      %p299 = pneg %p38
      %p300 = pneg %p62
      %p301 = pneg %p59
      %p302 = pneg %p83
      %p303 = pneg %p80
      %p304 = pneg %p104
      %p305 = pneg %p101
      %p306 = pneg %p125
      %p307 = pneg %p122
      %p308 = pneg %p146
      %p309 = pneg %p143
      %p310 = pneg %p167
      %p311 = pneg %p164
      %p312 = pneg %p188
      %p313 = pneg %p185
      %p314 = pneg %p209
      %p315 = pneg %p206
      %p316 = pneg %p235
      %p317 = pneg %p232
      %p318 = scmp.lt.s32.totalorder %s20, 1
      %s319 = scalar_select %p318, %s20, 1
      %s320 = smul.addr %s319, 32
      %s321 = smul.addr %s320, 8
      %s322 = scalar_lea.vmem %s9, %s321
      %p323 = scmp.lt.s32.totalorder %s20, 1
      %s324 = scalar_select %p323, %s20, 1
      %s325 = smul.addr %s324, 32
      %s326 = smul.addr %s325, 8
      %s327 = scalar_lea.vmem %s0, %s326
      %p328 = scmp.lt.s32.totalorder %s20, 1
      %s329 = scalar_select %p328, %s20, 1
      %s330 = smul.addr %s329, 32
      %s331 = smul.addr %s330, 8
      %s332 = scalar_lea.vmem %s9, %s331
      %v333 = vld [vmem:[%s327] sm:$0xff]
      %v334 = vld [vmem:[%s327 + $0x8] sm:$0xff]
      %v335 = vld [vmem:[%s327 + $0x10] sm:$0xff]
      %v336 = vld [vmem:[%s327 + $0x18] sm:$0xff]
      %v337 = vld [vmem:[%s327 + $0x20] sm:$0xff]
      %v338 = vld [vmem:[%s327 + $0x28] sm:$0xff]
      %v339 = vld [vmem:[%s327 + $0x30] sm:$0xff]
      %v340 = vld [vmem:[%s327 + $0x38] sm:$0xff]
      %v341 = vld [vmem:[%s327 + $0x40] sm:$0xff]
      %v342 = vld [vmem:[%s327 + $0x48] sm:$0xff]
      %v343 = vld [vmem:[%s327 + $0x50] sm:$0xff]
      %v344 = vld [vmem:[%s327 + $0x58] sm:$0xff]
      %v345 = vld [vmem:[%s327 + $0x60] sm:$0xff]
      %v346 = vld [vmem:[%s327 + $0x68] sm:$0xff]
      %v347 = vld [vmem:[%s327 + $0x70] sm:$0xff]
      %v348 = vld [vmem:[%s327 + $0x78] sm:$0xff]
      %v349 = vld [vmem:[%s327 + $0x80] sm:$0xff]
      %v350 = vld [vmem:[%s327 + $0x88] sm:$0xff]
      %v351 = vld [vmem:[%s327 + $0x90] sm:$0xff]
      %v352 = vld [vmem:[%s327 + $0x98] sm:$0xff]
      %v353 = vld [vmem:[%s327 + $0xa0] sm:$0xff]
      %v354 = vld [vmem:[%s327 + $0xa8] sm:$0xff]
      %v355 = vld [vmem:[%s327 + $0xb0] sm:$0xff]
      %v356 = vld [vmem:[%s327 + $0xb8] sm:$0xff]
      %v357 = vld [vmem:[%s327 + $0xc0] sm:$0xff]
      %v358 = vld [vmem:[%s327 + $0xc8] sm:$0xff]
      %v359 = vld [vmem:[%s327 + $0xd0] sm:$0xff]
      %v360 = vld [vmem:[%s327 + $0xd8] sm:$0xff]
      %v361 = vld [vmem:[%s327 + $0xe0] sm:$0xff]
      %v362 = vld [vmem:[%s327 + $0xe8] sm:$0xff]
      %v363 = vld [vmem:[%s327 + $0xf0] sm:$0xff]
      %v364 = vld [vmem:[%s327 + $0xf8] sm:$0xff]
      %v365 = vld [vmem:[%s1] sm:$0x1]
      %v367 = vlaneseq
      %v368 = vshrl.u32 %v367, 7
      %v369 = vsub.s32 0, %v368
      %v370 = vrot.slane %v365, %v369
      %v372 = vmul.f32 %v333, %v370
      %v373 = vmul.f32 %v334, %v370
      %v374 = vmul.f32 %v335, %v370
      %v375 = vmul.f32 %v336, %v370
      %v376 = vmul.f32 %v337, %v370
      %v377 = vmul.f32 %v338, %v370
      %v378 = vmul.f32 %v339, %v370
      %v379 = vmul.f32 %v340, %v370
      %v380 = vmul.f32 %v341, %v370
      %v381 = vmul.f32 %v342, %v370
      %v382 = vmul.f32 %v343, %v370
      %v383 = vmul.f32 %v344, %v370
      %v384 = vmul.f32 %v345, %v370
      %v385 = vmul.f32 %v346, %v370
      %v386 = vmul.f32 %v347, %v370
      %v387 = vmul.f32 %v348, %v370
      %v388 = vmul.f32 %v349, %v370
      %v389 = vmul.f32 %v350, %v370
      %v390 = vmul.f32 %v351, %v370
      %v391 = vmul.f32 %v352, %v370
      %v392 = vmul.f32 %v353, %v370
      %v393 = vmul.f32 %v354, %v370
      %v394 = vmul.f32 %v355, %v370
      %v395 = vmul.f32 %v356, %v370
      %v396 = vmul.f32 %v357, %v370
      %v397 = vmul.f32 %v358, %v370
      %v398 = vmul.f32 %v359, %v370
      %v399 = vmul.f32 %v360, %v370
      %v400 = vmul.f32 %v361, %v370
      %v401 = vmul.f32 %v362, %v370
      %v402 = vmul.f32 %v363, %v370
      %v403 = vmul.f32 %v364, %v370
      %v404 = vld [vmem:[%s2] sm:$0x1]
      %v406 = vlaneseq
      %v407 = vshrl.u32 %v406, 7
      %v408 = vsub.s32 0, %v407
      %v409 = vrot.slane %v404, %v408
      %v411 = vadd.f32 %v372, %v409
      %v412 = vadd.f32 %v373, %v409
      %v413 = vadd.f32 %v374, %v409
      %v414 = vadd.f32 %v375, %v409
      %v415 = vadd.f32 %v376, %v409
      %v416 = vadd.f32 %v377, %v409
      %v417 = vadd.f32 %v378, %v409
      %v418 = vadd.f32 %v379, %v409
      %v419 = vadd.f32 %v380, %v409
      %v420 = vadd.f32 %v381, %v409
      %v421 = vadd.f32 %v382, %v409
      %v422 = vadd.f32 %v383, %v409
      %v423 = vadd.f32 %v384, %v409
      %v424 = vadd.f32 %v385, %v409
      %v425 = vadd.f32 %v386, %v409
      %v426 = vadd.f32 %v387, %v409
      %v427 = vadd.f32 %v388, %v409
      %v428 = vadd.f32 %v389, %v409
      %v429 = vadd.f32 %v390, %v409
      %v430 = vadd.f32 %v391, %v409
      %v431 = vadd.f32 %v392, %v409
      %v432 = vadd.f32 %v393, %v409
      %v433 = vadd.f32 %v394, %v409
      %v434 = vadd.f32 %v395, %v409
      %v435 = vadd.f32 %v396, %v409
      %v436 = vadd.f32 %v397, %v409
      %v437 = vadd.f32 %v398, %v409
      %v438 = vadd.f32 %v399, %v409
      %v439 = vadd.f32 %v400, %v409
      %v440 = vadd.f32 %v401, %v409
      %v441 = vadd.f32 %v402, %v409
      %v442 = vadd.f32 %v403, %v409
      %v443 = vmax.f32 %v411, 0.0
      %v444 = vmax.f32 %v412, 0.0
      %v445 = vmax.f32 %v413, 0.0
      %v446 = vmax.f32 %v414, 0.0
      %v447 = vmax.f32 %v415, 0.0
      %v448 = vmax.f32 %v416, 0.0
      %v449 = vmax.f32 %v417, 0.0
      %v450 = vmax.f32 %v418, 0.0
      %v451 = vmax.f32 %v419, 0.0
      %v452 = vmax.f32 %v420, 0.0
      %v453 = vmax.f32 %v421, 0.0
      %v454 = vmax.f32 %v422, 0.0
      %v455 = vmax.f32 %v423, 0.0
      %v456 = vmax.f32 %v424, 0.0
      %v457 = vmax.f32 %v425, 0.0
      %v458 = vmax.f32 %v426, 0.0
      %v459 = vmax.f32 %v427, 0.0
      %v460 = vmax.f32 %v428, 0.0
      %v461 = vmax.f32 %v429, 0.0
      %v462 = vmax.f32 %v430, 0.0
      %v463 = vmax.f32 %v431, 0.0
      %v464 = vmax.f32 %v432, 0.0
      %v465 = vmax.f32 %v433, 0.0
      %v466 = vmax.f32 %v434, 0.0
      %v467 = vmax.f32 %v435, 0.0
      %v468 = vmax.f32 %v436, 0.0
      %v469 = vmax.f32 %v437, 0.0
      %v470 = vmax.f32 %v438, 0.0
      %v471 = vmax.f32 %v439, 0.0
      %v472 = vmax.f32 %v440, 0.0
      %v473 = vmax.f32 %v441, 0.0
      %v474 = vmax.f32 %v442, 0.0
      %v491 = vrot.slane %v474, 7
      %v492 = vrot.slane %v444, 7
      %v493 = vrot.slane %v446, 7
      %v494 = vrot.slane %v448, 7
      %v495 = vrot.slane %v450, 7
      %v496 = vrot.slane %v452, 7
      %v497 = vrot.slane %v454, 7
      %v498 = vrot.slane %v456, 7
      %v499 = vrot.slane %v458, 7
      %v500 = vrot.slane %v460, 7
      %v501 = vrot.slane %v462, 7
      %v502 = vrot.slane %v464, 7
      %v503 = vrot.slane %v466, 7
      %v504 = vrot.slane %v468, 7
      %v505 = vrot.slane %v470, 7
      %v506 = vrot.slane %v472, 7
      %vm539 = vcmask 1040384
      %v540 = vrot.slane %v473, 7
      %v541 = vsel %vm539, %v540, %v491
      %v542 = vrot.slane %v443, 7
      %v543 = vsel %vm539, %v542, %v492
      %v544 = vrot.slane %v445, 7
      %v545 = vsel %vm539, %v544, %v493
      %v546 = vrot.slane %v447, 7
      %v547 = vsel %vm539, %v546, %v494
      %v548 = vrot.slane %v449, 7
      %v549 = vsel %vm539, %v548, %v495
      %v550 = vrot.slane %v451, 7
      %v551 = vsel %vm539, %v550, %v496
      %v552 = vrot.slane %v453, 7
      %v553 = vsel %vm539, %v552, %v497
      %v554 = vrot.slane %v455, 7
      %v555 = vsel %vm539, %v554, %v498
      %v556 = vrot.slane %v457, 7
      %v557 = vsel %vm539, %v556, %v499
      %v558 = vrot.slane %v459, 7
      %v559 = vsel %vm539, %v558, %v500
      %v560 = vrot.slane %v461, 7
      %v561 = vsel %vm539, %v560, %v501
      %v562 = vrot.slane %v463, 7
      %v563 = vsel %vm539, %v562, %v502
      %v564 = vrot.slane %v465, 7
      %v565 = vsel %vm539, %v564, %v503
      %v566 = vrot.slane %v467, 7
      %v567 = vsel %vm539, %v566, %v504
      %v568 = vrot.slane %v469, 7
      %v569 = vsel %vm539, %v568, %v505
      %v570 = vrot.slane %v471, 7
      %v571 = vsel %vm539, %v570, %v506
      %v588 = vsel %vm539, %v491, %v540
      %v589 = vsel %vm539, %v492, %v542
      %v590 = vsel %vm539, %v493, %v544
      %v591 = vsel %vm539, %v494, %v546
      %v592 = vsel %vm539, %v495, %v548
      %v593 = vsel %vm539, %v496, %v550
      %v594 = vsel %vm539, %v497, %v552
      %v595 = vsel %vm539, %v498, %v554
      %v596 = vsel %vm539, %v499, %v556
      %v597 = vsel %vm539, %v500, %v558
      %v598 = vsel %vm539, %v501, %v560
      %v599 = vsel %vm539, %v502, %v562
      %v600 = vsel %vm539, %v503, %v564
      %v601 = vsel %vm539, %v504, %v566
      %v602 = vsel %vm539, %v505, %v568
      %v603 = vsel %vm539, %v506, %v570
      %v604 = vld [vmem:[%s3] sm:$0xf]
      %vm621 = vcmask 1046528
      %v622 = vrot.slane %v588, 1
      %v623 = vrot.slane %v541, 1
      %v624 = vsel %vm621, %v622, %v623
      %v625 = vsel %vm621, %v623, %v622
      %v626 = vrot.slane %v589, 1
      %v627 = vrot.slane %v543, 1
      %v628 = vsel %vm621, %v626, %v627
      %v629 = vsel %vm621, %v627, %v626
      %v630 = vrot.slane %v590, 1
      %v631 = vrot.slane %v545, 1
      %v632 = vsel %vm621, %v630, %v631
      %v633 = vsel %vm621, %v631, %v630
      %v634 = vrot.slane %v591, 1
      %v635 = vrot.slane %v547, 1
      %v636 = vsel %vm621, %v634, %v635
      %v637 = vsel %vm621, %v635, %v634
      %v638 = vrot.slane %v592, 1
      %v639 = vrot.slane %v549, 1
      %v640 = vsel %vm621, %v638, %v639
      %v641 = vsel %vm621, %v639, %v638
      %v642 = vrot.slane %v593, 1
      %v643 = vrot.slane %v551, 1
      %v644 = vsel %vm621, %v642, %v643
      %v645 = vsel %vm621, %v643, %v642
      %v646 = vrot.slane %v594, 1
      %v647 = vrot.slane %v553, 1
      %v648 = vsel %vm621, %v646, %v647
      %v649 = vsel %vm621, %v647, %v646
      %v650 = vrot.slane %v595, 1
      %v651 = vrot.slane %v555, 1
      %v652 = vsel %vm621, %v650, %v651
      %v653 = vsel %vm621, %v651, %v650
      %v654 = vrot.slane %v596, 1
      %v655 = vrot.slane %v557, 1
      %v656 = vsel %vm621, %v654, %v655
      %v657 = vsel %vm621, %v655, %v654
      %v658 = vrot.slane %v597, 1
      %v659 = vrot.slane %v559, 1
      %v660 = vsel %vm621, %v658, %v659
      %v661 = vsel %vm621, %v659, %v658
      %v662 = vrot.slane %v598, 1
      %v663 = vrot.slane %v561, 1
      %v664 = vsel %vm621, %v662, %v663
      %v665 = vsel %vm621, %v663, %v662
      %v666 = vrot.slane %v599, 1
      %v667 = vrot.slane %v563, 1
      %v668 = vsel %vm621, %v666, %v667
      %v669 = vsel %vm621, %v667, %v666
      %v670 = vrot.slane %v600, 1
      %v671 = vrot.slane %v565, 1
      %v672 = vsel %vm621, %v670, %v671
      %v673 = vsel %vm621, %v671, %v670
      %v674 = vrot.slane %v601, 1
      %v675 = vrot.slane %v567, 1
      %v676 = vsel %vm621, %v674, %v675
      %v677 = vsel %vm621, %v675, %v674
      %v678 = vrot.slane %v602, 1
      %v679 = vrot.slane %v569, 1
      %v680 = vsel %vm621, %v678, %v679
      %v681 = vsel %vm621, %v679, %v678
      %v682 = vrot.slane %v603, 1
      %v683 = vrot.slane %v571, 1
      %v684 = vsel %vm621, %v682, %v683
      %v685 = vsel %vm621, %v683, %v682
      %s686 = scalar_lea.vmem %s3, 4
      %v687 = vld [vmem:[%s686] sm:$0xf]
      %vm688 = vcmask 31744
      %v689 = vsel %vm688, %v624, 0
      %v691 = vsel %vm688, %v625, 0
      %v693 = vsel %vm688, %v628, 0
      %v695 = vsel %vm688, %v629, 0
      %v697 = vsel %vm688, %v632, 0
      %v699 = vsel %vm688, %v633, 0
      %v701 = vsel %vm688, %v636, 0
      %v703 = vsel %vm688, %v637, 0
      %v705 = vsel %vm688, %v640, 0
      %v707 = vsel %vm688, %v641, 0
      %v709 = vsel %vm688, %v644, 0
      %v711 = vsel %vm688, %v645, 0
      %v713 = vsel %vm688, %v648, 0
      %v715 = vsel %vm688, %v649, 0
      %v717 = vsel %vm688, %v652, 0
      %v719 = vsel %vm688, %v653, 0
      %v721 = vsel %vm688, %v656, 0
      %v723 = vsel %vm688, %v657, 0
      %v725 = vsel %vm688, %v660, 0
      %v727 = vsel %vm688, %v661, 0
      %v729 = vsel %vm688, %v664, 0
      %v731 = vsel %vm688, %v665, 0
      %v733 = vsel %vm688, %v668, 0
      %v735 = vsel %vm688, %v669, 0
      %v737 = vsel %vm688, %v672, 0
      %v739 = vsel %vm688, %v673, 0
      %v741 = vsel %vm688, %v676, 0
      %v743 = vsel %vm688, %v677, 0
      %v745 = vsel %vm688, %v680, 0
      %v747 = vsel %vm688, %v681, 0
      %v749 = vsel %vm688, %v684, 0
      %v751 = vsel %vm688, %v685, 0
      %vm753 = vcmask 1043456
      %v755 = vsel %vm753, %v687, 0
      %757 = vmatprep.subr.mxu0 0.0
      %758 = vmatpush1.msra.mxu0 %v755
      %759 = vmatprep.subr.mxu0 0.0
      %760 = vmatpush1.msra.mxu0 0.0
      %761 = vmatprep.subr.mxu0 0.0
      %762 = vmatpush1.msra.mxu0 0.0
      %763 = vmatprep.subr.mxu0 0.0
      %764 = vmatpush1.msra.mxu0 0.0
      %765 = vmatprep.subr.mxu0 0.0
      %766 = vmatpush1.msra.mxu0 0.0
      %767 = vmatprep.subr.mxu0 0.0
      %768 = vmatpush1.msra.mxu0 0.0
      %769 = vmatprep.subr.mxu0 0.0
      %770 = vmatpush1.msra.mxu0 0.0
      %771 = vmatprep.subr.mxu0 0.0
      %772 = vmatpush1.msra.mxu0 0.0
      %773 = vmatprep.subr.mxu0 0.0
      %774 = vmatpush1.msra.mxu0 0.0
      %775 = vmatprep.subr.mxu0 0.0
      %776 = vmatpush1.msra.mxu0 0.0
      %777 = vmatprep.subr.mxu0 0.0
      %778 = vmatpush1.msra.mxu0 0.0
      %779 = vmatprep.subr.mxu0 0.0
      %780 = vmatpush1.msra.mxu0 0.0
      %781 = vmatprep.subr.mxu0 0.0
      %782 = vmatpush1.msra.mxu0 0.0
      %783 = vmatprep.subr.mxu0 0.0
      %784 = vmatpush1.msra.mxu0 0.0
      %785 = vmatprep.subr.mxu0 0.0
      %786 = vmatpush1.msra.mxu0 0.0
      %787 = vmatprep.subr.mxu0 0.0
      %788 = vmatpush1.msra.mxu0 0.0
      %789 = vmatprep.subr.mxu0 0.0
      %790 = vmatpush1.msra.mxu0 0.0
      %791 = vmatprep.subr.mxu0 0.0
      %792 = vmatpush1.msra.mxu0 0.0
      %793 = vmatprep.subr.mxu0 0.0
      %794 = vmatpush1.msra.mxu0 0.0
      %795 = vmatprep.subr.mxu0 0.0
      %796 = vmatpush1.msra.mxu0 0.0
      %797 = vmatprep.subr.mxu0 0.0
      %798 = vmatpush1.msra.mxu0 0.0
      %799 = vmatprep.subr.mxu0 0.0
      %800 = vmatpush1.msra.mxu0 0.0
      %801 = vmatprep.subr.mxu0 0.0
      %802 = vmatpush1.msra.mxu0 0.0
      %803 = vmatprep.subr.mxu0 0.0
      %804 = vmatpush1.msra.mxu0 0.0
      %805 = vmatprep.subr.mxu0 0.0
      %806 = vmatpush1.msra.mxu0 0.0
      %807 = vmatprep.subr.mxu0 0.0
      %808 = vmatpush1.msra.mxu0 0.0
      %809 = vmatprep.subr.mxu0 0.0
      %810 = vmatpush1.msra.mxu0 0.0
      %811 = vmatprep.subr.mxu0 0.0
      %812 = vmatpush1.msra.mxu0 0.0
      %813 = vmatprep.subr.mxu0 0.0
      %814 = vmatpush1.msra.mxu0 0.0
      %815 = vmatprep.subr.mxu0 0.0
      %816 = vmatpush1.msra.mxu0 0.0
      %817 = vmatprep.subr.mxu0 0.0
      %818 = vmatpush1.msra.mxu0 0.0
      %819 = vmatprep.subr.mxu0 0.0
      %820 = vmatpush1.msra.mxu0 0.0
      %821 = vmatprep.mubr.f32.mxu0 0.0
      %822 = vmatmul.mubr.f32.gmra.mrb[0].mxu0 %v689
      %v823 = vpop.f32.mrb[0].mxu0
      %v824 = vadd.f32 0.0, %v823
      %v825 = vpop.f32.mrb[0].mxu0
      %826 = vmatprep.mubr.f32.mxu0 0.0
      %827 = vmatmul.mubr.f32.gmra.mrb[0].mxu0 %v691
      %v828 = vpop.f32.mrb[0].mxu0
      %v829 = vadd.f32 0.0, %v828
      %v830 = vpop.f32.mrb[0].mxu0
      %831 = vmatprep.mubr.f32.mxu0 0.0
      %832 = vmatmul.mubr.f32.gmra.mrb[0].mxu0 %v693
      %v833 = vpop.f32.mrb[0].mxu0
      %v834 = vadd.f32 0.0, %v833
      %v835 = vpop.f32.mrb[0].mxu0
      %836 = vmatprep.mubr.f32.mxu0 0.0
      %837 = vmatmul.mubr.f32.gmra.mrb[0].mxu0 %v695
      %v838 = vpop.f32.mrb[0].mxu0
      %v839 = vadd.f32 0.0, %v838
      %v840 = vpop.f32.mrb[0].mxu0
      %841 = vmatprep.mubr.f32.mxu0 0.0
      %842 = vmatmul.mubr.f32.gmra.mrb[0].mxu0 %v697
      %v843 = vpop.f32.mrb[0].mxu0
      %v844 = vadd.f32 0.0, %v843
      %v845 = vpop.f32.mrb[0].mxu0
      %846 = vmatprep.mubr.f32.mxu0 0.0
      %847 = vmatmul.mubr.f32.gmra.mrb[0].mxu0 %v699
      %v848 = vpop.f32.mrb[0].mxu0
      %v849 = vadd.f32 0.0, %v848
      %v850 = vpop.f32.mrb[0].mxu0
      %851 = vmatprep.mubr.f32.mxu0 0.0
      %852 = vmatmul.mubr.f32.gmra.mrb[0].mxu0 %v701
      %v853 = vpop.f32.mrb[0].mxu0
      %v854 = vadd.f32 0.0, %v853
      %v855 = vpop.f32.mrb[0].mxu0
      %856 = vmatprep.mubr.f32.mxu0 0.0
      %857 = vmatmul.mubr.f32.gmra.mrb[0].mxu0 %v703
      %v858 = vpop.f32.mrb[0].mxu0
      %v859 = vadd.f32 0.0, %v858
      %v860 = vpop.f32.mrb[0].mxu0
      %861 = vmatprep.mubr.f32.mxu0 0.0
      %862 = vmatmul.mubr.f32.gmra.mrb[0].mxu0 %v705
      %v863 = vpop.f32.mrb[0].mxu0
      %v864 = vadd.f32 0.0, %v863
      %v865 = vpop.f32.mrb[0].mxu0
      %866 = vmatprep.mubr.f32.mxu0 0.0
      %867 = vmatmul.mubr.f32.gmra.mrb[0].mxu0 %v707
      %v868 = vpop.f32.mrb[0].mxu0
      %v869 = vadd.f32 0.0, %v868
      %v870 = vpop.f32.mrb[0].mxu0
      %871 = vmatprep.mubr.f32.mxu0 0.0
      %872 = vmatmul.mubr.f32.gmra.mrb[0].mxu0 %v709
      %v873 = vpop.f32.mrb[0].mxu0
      %v874 = vadd.f32 0.0, %v873
      %v875 = vpop.f32.mrb[0].mxu0
      %876 = vmatprep.mubr.f32.mxu0 0.0
      %877 = vmatmul.mubr.f32.gmra.mrb[0].mxu0 %v711
      %v878 = vpop.f32.mrb[0].mxu0
      %v879 = vadd.f32 0.0, %v878
      %v880 = vpop.f32.mrb[0].mxu0
      %881 = vmatprep.mubr.f32.mxu0 0.0
      %882 = vmatmul.mubr.f32.gmra.mrb[0].mxu0 %v713
      %v883 = vpop.f32.mrb[0].mxu0
      %v884 = vadd.f32 0.0, %v883
      %v885 = vpop.f32.mrb[0].mxu0
      %886 = vmatprep.mubr.f32.mxu0 0.0
      %887 = vmatmul.mubr.f32.gmra.mrb[0].mxu0 %v715
      %v888 = vpop.f32.mrb[0].mxu0
      %v889 = vadd.f32 0.0, %v888
      %v890 = vpop.f32.mrb[0].mxu0
      %891 = vmatprep.mubr.f32.mxu0 0.0
      %892 = vmatmul.mubr.f32.gmra.mrb[0].mxu0 %v717
      %v893 = vpop.f32.mrb[0].mxu0
      %v894 = vadd.f32 0.0, %v893
      %v895 = vpop.f32.mrb[0].mxu0
      %896 = vmatprep.mubr.f32.mxu0 0.0
      %897 = vmatmul.mubr.f32.gmra.mrb[0].mxu0 %v719
      %v898 = vpop.f32.mrb[0].mxu0
      %v899 = vadd.f32 0.0, %v898
      %v900 = vpop.f32.mrb[0].mxu0
      %901 = vmatprep.mubr.f32.mxu0 0.0
      %902 = vmatmul.mubr.f32.gmra.mrb[0].mxu0 %v721
      %v903 = vpop.f32.mrb[0].mxu0
      %v904 = vadd.f32 0.0, %v903
      %v905 = vpop.f32.mrb[0].mxu0
      %906 = vmatprep.mubr.f32.mxu0 0.0
      %907 = vmatmul.mubr.f32.gmra.mrb[0].mxu0 %v723
      %v908 = vpop.f32.mrb[0].mxu0
      %v909 = vadd.f32 0.0, %v908
      %v910 = vpop.f32.mrb[0].mxu0
      %911 = vmatprep.mubr.f32.mxu0 0.0
      %912 = vmatmul.mubr.f32.gmra.mrb[0].mxu0 %v725
      %v913 = vpop.f32.mrb[0].mxu0
      %v914 = vadd.f32 0.0, %v913
      %v915 = vpop.f32.mrb[0].mxu0
      %916 = vmatprep.mubr.f32.mxu0 0.0
      %917 = vmatmul.mubr.f32.gmra.mrb[0].mxu0 %v727
      %v918 = vpop.f32.mrb[0].mxu0
      %v919 = vadd.f32 0.0, %v918
      %v920 = vpop.f32.mrb[0].mxu0
      %921 = vmatprep.mubr.f32.mxu0 0.0
      %922 = vmatmul.mubr.f32.gmra.mrb[0].mxu0 %v729
      %v923 = vpop.f32.mrb[0].mxu0
      %v924 = vadd.f32 0.0, %v923
      %v925 = vpop.f32.mrb[0].mxu0
      %926 = vmatprep.mubr.f32.mxu0 0.0
      %927 = vmatmul.mubr.f32.gmra.mrb[0].mxu0 %v731
      %v928 = vpop.f32.mrb[0].mxu0
      %v929 = vadd.f32 0.0, %v928
      %v930 = vpop.f32.mrb[0].mxu0
      %931 = vmatprep.mubr.f32.mxu0 0.0
      %932 = vmatmul.mubr.f32.gmra.mrb[0].mxu0 %v733
      %v933 = vpop.f32.mrb[0].mxu0
      %v934 = vadd.f32 0.0, %v933
      %v935 = vpop.f32.mrb[0].mxu0
      %936 = vmatprep.mubr.f32.mxu0 0.0
      %937 = vmatmul.mubr.f32.gmra.mrb[0].mxu0 %v735
      %v938 = vpop.f32.mrb[0].mxu0
      %v939 = vadd.f32 0.0, %v938
      %v940 = vpop.f32.mrb[0].mxu0
      %941 = vmatprep.mubr.f32.mxu0 0.0
      %942 = vmatmul.mubr.f32.gmra.mrb[0].mxu0 %v737
      %v943 = vpop.f32.mrb[0].mxu0
      %v944 = vadd.f32 0.0, %v943
      %v945 = vpop.f32.mrb[0].mxu0
      %946 = vmatprep.mubr.f32.mxu0 0.0
      %947 = vmatmul.mubr.f32.gmra.mrb[0].mxu0 %v739
      %v948 = vpop.f32.mrb[0].mxu0
      %v949 = vadd.f32 0.0, %v948
      %v950 = vpop.f32.mrb[0].mxu0
      %951 = vmatprep.mubr.f32.mxu0 0.0
      %952 = vmatmul.mubr.f32.gmra.mrb[0].mxu0 %v741
      %v953 = vpop.f32.mrb[0].mxu0
      %v954 = vadd.f32 0.0, %v953
      %v955 = vpop.f32.mrb[0].mxu0
      %956 = vmatprep.mubr.f32.mxu0 0.0
      %957 = vmatmul.mubr.f32.gmra.mrb[0].mxu0 %v743
      %v958 = vpop.f32.mrb[0].mxu0
      %v959 = vadd.f32 0.0, %v958
      %v960 = vpop.f32.mrb[0].mxu0
      %961 = vmatprep.mubr.f32.mxu0 0.0
      %962 = vmatmul.mubr.f32.gmra.mrb[0].mxu0 %v745
      %v963 = vpop.f32.mrb[0].mxu0
      %v964 = vadd.f32 0.0, %v963
      %v965 = vpop.f32.mrb[0].mxu0
      %966 = vmatprep.mubr.f32.mxu0 0.0
      %967 = vmatmul.mubr.f32.gmra.mrb[0].mxu0 %v747
      %v968 = vpop.f32.mrb[0].mxu0
      %v969 = vadd.f32 0.0, %v968
      %v970 = vpop.f32.mrb[0].mxu0
      %971 = vmatprep.mubr.f32.mxu0 0.0
      %972 = vmatmul.mubr.f32.gmra.mrb[0].mxu0 %v749
      %v973 = vpop.f32.mrb[0].mxu0
      %v974 = vadd.f32 0.0, %v973
      %v975 = vpop.f32.mrb[0].mxu0
      %976 = vmatprep.mubr.f32.mxu0 0.0
      %977 = vmatmul.mubr.f32.gmra.mrb[0].mxu0 %v751
      %v978 = vpop.f32.mrb[0].mxu0
      %v979 = vadd.f32 0.0, %v978
      %v980 = vpop.f32.mrb[0].mxu0
      %981 = vdwg.mxu0
      %v982 = vsel %vm688, %v588, 0
      %v984 = vsel %vm688, %v541, 0
      %v986 = vsel %vm688, %v589, 0
      %v988 = vsel %vm688, %v543, 0
      %v990 = vsel %vm688, %v590, 0
      %v992 = vsel %vm688, %v545, 0
      %v994 = vsel %vm688, %v591, 0
      %v996 = vsel %vm688, %v547, 0
      %v998 = vsel %vm688, %v592, 0
      %v1000 = vsel %vm688, %v549, 0
      %v1002 = vsel %vm688, %v593, 0
      %v1004 = vsel %vm688, %v551, 0
      %v1006 = vsel %vm688, %v594, 0
      %v1008 = vsel %vm688, %v553, 0
      %v1010 = vsel %vm688, %v595, 0
      %v1012 = vsel %vm688, %v555, 0
      %v1014 = vsel %vm688, %v596, 0
      %v1016 = vsel %vm688, %v557, 0
      %v1018 = vsel %vm688, %v597, 0
      %v1020 = vsel %vm688, %v559, 0
      %v1022 = vsel %vm688, %v598, 0
      %v1024 = vsel %vm688, %v561, 0
      %v1026 = vsel %vm688, %v599, 0
      %v1028 = vsel %vm688, %v563, 0
      %v1030 = vsel %vm688, %v600, 0
      %v1032 = vsel %vm688, %v565, 0
      %v1034 = vsel %vm688, %v601, 0
      %v1036 = vsel %vm688, %v567, 0
      %v1038 = vsel %vm688, %v602, 0
      %v1040 = vsel %vm688, %v569, 0
      %v1042 = vsel %vm688, %v603, 0
      %v1044 = vsel %vm688, %v571, 0
      %v1047 = vsel %vm753, %v604, 0
      %1049 = vmatprep.subr.mxu0 0.0
      %1050 = vmatpush1.msra.mxu0 %v1047
      %1051 = vmatprep.subr.mxu0 0.0
      %1052 = vmatpush1.msra.mxu0 0.0
      %1053 = vmatprep.subr.mxu0 0.0
      %1054 = vmatpush1.msra.mxu0 0.0
      %1055 = vmatprep.subr.mxu0 0.0
      %1056 = vmatpush1.msra.mxu0 0.0
      %1057 = vmatprep.subr.mxu0 0.0
      %1058 = vmatpush1.msra.mxu0 0.0
      %1059 = vmatprep.subr.mxu0 0.0
      %1060 = vmatpush1.msra.mxu0 0.0
      %1061 = vmatprep.subr.mxu0 0.0
      %1062 = vmatpush1.msra.mxu0 0.0
      %1063 = vmatprep.subr.mxu0 0.0
      %1064 = vmatpush1.msra.mxu0 0.0
      %1065 = vmatprep.subr.mxu0 0.0
      %1066 = vmatpush1.msra.mxu0 0.0
      %1067 = vmatprep.subr.mxu0 0.0
      %1068 = vmatpush1.msra.mxu0 0.0
      %1069 = vmatprep.subr.mxu0 0.0
      %1070 = vmatpush1.msra.mxu0 0.0
      %1071 = vmatprep.subr.mxu0 0.0
      %1072 = vmatpush1.msra.mxu0 0.0
      %1073 = vmatprep.subr.mxu0 0.0
      %1074 = vmatpush1.msra.mxu0 0.0
      %1075 = vmatprep.subr.mxu0 0.0
      %1076 = vmatpush1.msra.mxu0 0.0
      %1077 = vmatprep.subr.mxu0 0.0
      %1078 = vmatpush1.msra.mxu0 0.0
      %1079 = vmatprep.subr.mxu0 0.0
      %1080 = vmatpush1.msra.mxu0 0.0
      %1081 = vmatprep.subr.mxu0 0.0
      %1082 = vmatpush1.msra.mxu0 0.0
      %1083 = vmatprep.subr.mxu0 0.0
      %1084 = vmatpush1.msra.mxu0 0.0
      %1085 = vmatprep.subr.mxu0 0.0
      %1086 = vmatpush1.msra.mxu0 0.0
      %1087 = vmatprep.subr.mxu0 0.0
      %1088 = vmatpush1.msra.mxu0 0.0
      %1089 = vmatprep.subr.mxu0 0.0
      %1090 = vmatpush1.msra.mxu0 0.0
      %1091 = vmatprep.subr.mxu0 0.0
      %1092 = vmatpush1.msra.mxu0 0.0
      %1093 = vmatprep.subr.mxu0 0.0
      %1094 = vmatpush1.msra.mxu0 0.0
      %1095 = vmatprep.subr.mxu0 0.0
      %1096 = vmatpush1.msra.mxu0 0.0
      %1097 = vmatprep.subr.mxu0 0.0
      %1098 = vmatpush1.msra.mxu0 0.0
      %1099 = vmatprep.subr.mxu0 0.0
      %1100 = vmatpush1.msra.mxu0 0.0
      %1101 = vmatprep.subr.mxu0 0.0
      %1102 = vmatpush1.msra.mxu0 0.0
      %1103 = vmatprep.subr.mxu0 0.0
      %1104 = vmatpush1.msra.mxu0 0.0
      %1105 = vmatprep.subr.mxu0 0.0
      %1106 = vmatpush1.msra.mxu0 0.0
      %1107 = vmatprep.subr.mxu0 0.0
      %1108 = vmatpush1.msra.mxu0 0.0
      %1109 = vmatprep.subr.mxu0 0.0
      %1110 = vmatpush1.msra.mxu0 0.0
      %1111 = vmatprep.subr.mxu0 0.0
      %1112 = vmatpush1.msra.mxu0 0.0
      %1113 = vmatprep.mubr.f32.mxu0 0.0
      %1114 = vmatmul.mubr.f32.gmra.mrb[0].mxu0 %v982
      %v1115 = vpop.f32.mrb[0].mxu0
      %v1116 = vadd.f32 %v824, %v1115
      %v1117 = vpop.f32.mrb[0].mxu0
      %1118 = vmatprep.mubr.f32.mxu0 0.0
      %1119 = vmatmul.mubr.f32.gmra.mrb[0].mxu0 %v984
      %v1120 = vpop.f32.mrb[0].mxu0
      %v1121 = vadd.f32 %v829, %v1120
      %v1122 = vpop.f32.mrb[0].mxu0
      %1123 = vmatprep.mubr.f32.mxu0 0.0
      %1124 = vmatmul.mubr.f32.gmra.mrb[0].mxu0 %v986
      %v1125 = vpop.f32.mrb[0].mxu0
      %v1126 = vadd.f32 %v834, %v1125
      %v1127 = vpop.f32.mrb[0].mxu0
      %1128 = vmatprep.mubr.f32.mxu0 0.0
      %1129 = vmatmul.mubr.f32.gmra.mrb[0].mxu0 %v988
      %v1130 = vpop.f32.mrb[0].mxu0
      %v1131 = vadd.f32 %v839, %v1130
      %v1132 = vpop.f32.mrb[0].mxu0
      %1133 = vmatprep.mubr.f32.mxu0 0.0
      %1134 = vmatmul.mubr.f32.gmra.mrb[0].mxu0 %v990
      %v1135 = vpop.f32.mrb[0].mxu0
      %v1136 = vadd.f32 %v844, %v1135
      %v1137 = vpop.f32.mrb[0].mxu0
      %1138 = vmatprep.mubr.f32.mxu0 0.0
      %1139 = vmatmul.mubr.f32.gmra.mrb[0].mxu0 %v992
      %v1140 = vpop.f32.mrb[0].mxu0
      %v1141 = vadd.f32 %v849, %v1140
      %v1142 = vpop.f32.mrb[0].mxu0
      %1143 = vmatprep.mubr.f32.mxu0 0.0
      %1144 = vmatmul.mubr.f32.gmra.mrb[0].mxu0 %v994
      %v1145 = vpop.f32.mrb[0].mxu0
      %v1146 = vadd.f32 %v854, %v1145
      %v1147 = vpop.f32.mrb[0].mxu0
      %1148 = vmatprep.mubr.f32.mxu0 0.0
      %1149 = vmatmul.mubr.f32.gmra.mrb[0].mxu0 %v996
      %v1150 = vpop.f32.mrb[0].mxu0
      %v1151 = vadd.f32 %v859, %v1150
      %v1152 = vpop.f32.mrb[0].mxu0
      %1153 = vmatprep.mubr.f32.mxu0 0.0
      %1154 = vmatmul.mubr.f32.gmra.mrb[0].mxu0 %v998
      %v1155 = vpop.f32.mrb[0].mxu0
      %v1156 = vadd.f32 %v864, %v1155
      %v1157 = vpop.f32.mrb[0].mxu0
      %1158 = vmatprep.mubr.f32.mxu0 0.0
      %1159 = vmatmul.mubr.f32.gmra.mrb[0].mxu0 %v1000
      %v1160 = vpop.f32.mrb[0].mxu0
      %v1161 = vadd.f32 %v869, %v1160
      %v1162 = vpop.f32.mrb[0].mxu0
      %1163 = vmatprep.mubr.f32.mxu0 0.0
      %1164 = vmatmul.mubr.f32.gmra.mrb[0].mxu0 %v1002
      %v1165 = vpop.f32.mrb[0].mxu0
      %v1166 = vadd.f32 %v874, %v1165
      %v1167 = vpop.f32.mrb[0].mxu0
      %1168 = vmatprep.mubr.f32.mxu0 0.0
      %1169 = vmatmul.mubr.f32.gmra.mrb[0].mxu0 %v1004
      %v1170 = vpop.f32.mrb[0].mxu0
      %v1171 = vadd.f32 %v879, %v1170
      %v1172 = vpop.f32.mrb[0].mxu0
      %1173 = vmatprep.mubr.f32.mxu0 0.0
      %1174 = vmatmul.mubr.f32.gmra.mrb[0].mxu0 %v1006
      %v1175 = vpop.f32.mrb[0].mxu0
      %v1176 = vadd.f32 %v884, %v1175
      %v1177 = vpop.f32.mrb[0].mxu0
      %1178 = vmatprep.mubr.f32.mxu0 0.0
      %1179 = vmatmul.mubr.f32.gmra.mrb[0].mxu0 %v1008
      %v1180 = vpop.f32.mrb[0].mxu0
      %v1181 = vadd.f32 %v889, %v1180
      %v1182 = vpop.f32.mrb[0].mxu0
      %1183 = vmatprep.mubr.f32.mxu0 0.0
      %1184 = vmatmul.mubr.f32.gmra.mrb[0].mxu0 %v1010
      %v1185 = vpop.f32.mrb[0].mxu0
      %v1186 = vadd.f32 %v894, %v1185
      %v1187 = vpop.f32.mrb[0].mxu0
      %1188 = vmatprep.mubr.f32.mxu0 0.0
      %1189 = vmatmul.mubr.f32.gmra.mrb[0].mxu0 %v1012
      %v1190 = vpop.f32.mrb[0].mxu0
      %v1191 = vadd.f32 %v899, %v1190
      %v1192 = vpop.f32.mrb[0].mxu0
      %1193 = vmatprep.mubr.f32.mxu0 0.0
      %1194 = vmatmul.mubr.f32.gmra.mrb[0].mxu0 %v1014
      %v1195 = vpop.f32.mrb[0].mxu0
      %v1196 = vadd.f32 %v904, %v1195
      %v1197 = vpop.f32.mrb[0].mxu0
      %1198 = vmatprep.mubr.f32.mxu0 0.0
      %1199 = vmatmul.mubr.f32.gmra.mrb[0].mxu0 %v1016
      %v1200 = vpop.f32.mrb[0].mxu0
      %v1201 = vadd.f32 %v909, %v1200
      %v1202 = vpop.f32.mrb[0].mxu0
      %1203 = vmatprep.mubr.f32.mxu0 0.0
      %1204 = vmatmul.mubr.f32.gmra.mrb[0].mxu0 %v1018
      %v1205 = vpop.f32.mrb[0].mxu0
      %v1206 = vadd.f32 %v914, %v1205
      %v1207 = vpop.f32.mrb[0].mxu0
      %1208 = vmatprep.mubr.f32.mxu0 0.0
      %1209 = vmatmul.mubr.f32.gmra.mrb[0].mxu0 %v1020
      %v1210 = vpop.f32.mrb[0].mxu0
      %v1211 = vadd.f32 %v919, %v1210
      %v1212 = vpop.f32.mrb[0].mxu0
      %1213 = vmatprep.mubr.f32.mxu0 0.0
      %1214 = vmatmul.mubr.f32.gmra.mrb[0].mxu0 %v1022
      %v1215 = vpop.f32.mrb[0].mxu0
      %v1216 = vadd.f32 %v924, %v1215
      %v1217 = vpop.f32.mrb[0].mxu0
      %1218 = vmatprep.mubr.f32.mxu0 0.0
      %1219 = vmatmul.mubr.f32.gmra.mrb[0].mxu0 %v1024
      %v1220 = vpop.f32.mrb[0].mxu0
      %v1221 = vadd.f32 %v929, %v1220
      %v1222 = vpop.f32.mrb[0].mxu0
      %1223 = vmatprep.mubr.f32.mxu0 0.0
      %1224 = vmatmul.mubr.f32.gmra.mrb[0].mxu0 %v1026
      %v1225 = vpop.f32.mrb[0].mxu0
      %v1226 = vadd.f32 %v934, %v1225
      %v1227 = vpop.f32.mrb[0].mxu0
      %1228 = vmatprep.mubr.f32.mxu0 0.0
      %1229 = vmatmul.mubr.f32.gmra.mrb[0].mxu0 %v1028
      %v1230 = vpop.f32.mrb[0].mxu0
      %v1231 = vadd.f32 %v939, %v1230
      %v1232 = vpop.f32.mrb[0].mxu0
      %1233 = vmatprep.mubr.f32.mxu0 0.0
      %1234 = vmatmul.mubr.f32.gmra.mrb[0].mxu0 %v1030
      %v1235 = vpop.f32.mrb[0].mxu0
      %v1236 = vadd.f32 %v944, %v1235
      %v1237 = vpop.f32.mrb[0].mxu0
      %1238 = vmatprep.mubr.f32.mxu0 0.0
      %1239 = vmatmul.mubr.f32.gmra.mrb[0].mxu0 %v1032
      %v1240 = vpop.f32.mrb[0].mxu0
      %v1241 = vadd.f32 %v949, %v1240
      %v1242 = vpop.f32.mrb[0].mxu0
      %1243 = vmatprep.mubr.f32.mxu0 0.0
      %1244 = vmatmul.mubr.f32.gmra.mrb[0].mxu0 %v1034
      %v1245 = vpop.f32.mrb[0].mxu0
      %v1246 = vadd.f32 %v954, %v1245
      %v1247 = vpop.f32.mrb[0].mxu0
      %1248 = vmatprep.mubr.f32.mxu0 0.0
      %1249 = vmatmul.mubr.f32.gmra.mrb[0].mxu0 %v1036
      %v1250 = vpop.f32.mrb[0].mxu0
      %v1251 = vadd.f32 %v959, %v1250
      %v1252 = vpop.f32.mrb[0].mxu0
      %1253 = vmatprep.mubr.f32.mxu0 0.0
      %1254 = vmatmul.mubr.f32.gmra.mrb[0].mxu0 %v1038
      %v1255 = vpop.f32.mrb[0].mxu0
      %v1256 = vadd.f32 %v964, %v1255
      %v1257 = vpop.f32.mrb[0].mxu0
      %1258 = vmatprep.mubr.f32.mxu0 0.0
      %1259 = vmatmul.mubr.f32.gmra.mrb[0].mxu0 %v1040
      %v1260 = vpop.f32.mrb[0].mxu0
      %v1261 = vadd.f32 %v969, %v1260
      %v1262 = vpop.f32.mrb[0].mxu0
      %1263 = vmatprep.mubr.f32.mxu0 0.0
      %1264 = vmatmul.mubr.f32.gmra.mrb[0].mxu0 %v1042
      %v1265 = vpop.f32.mrb[0].mxu0
      %v1266 = vadd.f32 %v974, %v1265
      %v1267 = vpop.f32.mrb[0].mxu0
      %1268 = vmatprep.mubr.f32.mxu0 0.0
      %1269 = vmatmul.mubr.f32.gmra.mrb[0].mxu0 %v1044
      %v1270 = vpop.f32.mrb[0].mxu0
      %v1271 = vadd.f32 %v979, %v1270
      %v1272 = vpop.f32.mrb[0].mxu0
      %1273 = vdwg.mxu0
      %vm1274 = vcmask 1045504
      %v1275 = vrot.slane %v588, 2
      %v1276 = vrot.slane %v541, 2
      %v1277 = vsel %vm1274, %v1275, %v1276
      %v1278 = vsel %vm1274, %v1276, %v1275
      %v1279 = vrot.slane %v589, 2
      %v1280 = vrot.slane %v543, 2
      %v1281 = vsel %vm1274, %v1279, %v1280
      %v1282 = vsel %vm1274, %v1280, %v1279
      %v1283 = vrot.slane %v590, 2
      %v1284 = vrot.slane %v545, 2
      %v1285 = vsel %vm1274, %v1283, %v1284
      %v1286 = vsel %vm1274, %v1284, %v1283
      %v1287 = vrot.slane %v591, 2
      %v1288 = vrot.slane %v547, 2
      %v1289 = vsel %vm1274, %v1287, %v1288
      %v1290 = vsel %vm1274, %v1288, %v1287
      %v1291 = vrot.slane %v592, 2
      %v1292 = vrot.slane %v549, 2
      %v1293 = vsel %vm1274, %v1291, %v1292
      %v1294 = vsel %vm1274, %v1292, %v1291
      %v1295 = vrot.slane %v593, 2
      %v1296 = vrot.slane %v551, 2
      %v1297 = vsel %vm1274, %v1295, %v1296
      %v1298 = vsel %vm1274, %v1296, %v1295
      %v1299 = vrot.slane %v594, 2
      %v1300 = vrot.slane %v553, 2
      %v1301 = vsel %vm1274, %v1299, %v1300
      %v1302 = vsel %vm1274, %v1300, %v1299
      %v1303 = vrot.slane %v595, 2
      %v1304 = vrot.slane %v555, 2
      %v1305 = vsel %vm1274, %v1303, %v1304
      %v1306 = vsel %vm1274, %v1304, %v1303
      %v1307 = vrot.slane %v596, 2
      %v1308 = vrot.slane %v557, 2
      %v1309 = vsel %vm1274, %v1307, %v1308
      %v1310 = vsel %vm1274, %v1308, %v1307
      %v1311 = vrot.slane %v597, 2
      %v1312 = vrot.slane %v559, 2
      %v1313 = vsel %vm1274, %v1311, %v1312
      %v1314 = vsel %vm1274, %v1312, %v1311
      %v1315 = vrot.slane %v598, 2
      %v1316 = vrot.slane %v561, 2
      %v1317 = vsel %vm1274, %v1315, %v1316
      %v1318 = vsel %vm1274, %v1316, %v1315
      %v1319 = vrot.slane %v599, 2
      %v1320 = vrot.slane %v563, 2
      %v1321 = vsel %vm1274, %v1319, %v1320
      %v1322 = vsel %vm1274, %v1320, %v1319
      %v1323 = vrot.slane %v600, 2
      %v1324 = vrot.slane %v565, 2
      %v1325 = vsel %vm1274, %v1323, %v1324
      %v1326 = vsel %vm1274, %v1324, %v1323
      %v1327 = vrot.slane %v601, 2
      %v1328 = vrot.slane %v567, 2
      %v1329 = vsel %vm1274, %v1327, %v1328
      %v1330 = vsel %vm1274, %v1328, %v1327
      %v1331 = vrot.slane %v602, 2
      %v1332 = vrot.slane %v569, 2
      %v1333 = vsel %vm1274, %v1331, %v1332
      %v1334 = vsel %vm1274, %v1332, %v1331
      %v1335 = vrot.slane %v603, 2
      %v1336 = vrot.slane %v571, 2
      %v1337 = vsel %vm1274, %v1335, %v1336
      %v1338 = vsel %vm1274, %v1336, %v1335
      %s1339 = scalar_lea.vmem %s3, 8
      %v1340 = vld [vmem:[%s1339] sm:$0xf]
      %v1341 = vsel %vm688, %v1277, 0
      %v1343 = vsel %vm688, %v1278, 0
      %v1345 = vsel %vm688, %v1281, 0
      %v1347 = vsel %vm688, %v1282, 0
      %v1349 = vsel %vm688, %v1285, 0
      %v1351 = vsel %vm688, %v1286, 0
      %v1353 = vsel %vm688, %v1289, 0
      %v1355 = vsel %vm688, %v1290, 0
      %v1357 = vsel %vm688, %v1293, 0
      %v1359 = vsel %vm688, %v1294, 0
      %v1361 = vsel %vm688, %v1297, 0
      %v1363 = vsel %vm688, %v1298, 0
      %v1365 = vsel %vm688, %v1301, 0
      %v1367 = vsel %vm688, %v1302, 0
      %v1369 = vsel %vm688, %v1305, 0
      %v1371 = vsel %vm688, %v1306, 0
      %v1373 = vsel %vm688, %v1309, 0
      %v1375 = vsel %vm688, %v1310, 0
      %v1377 = vsel %vm688, %v1313, 0
      %v1379 = vsel %vm688, %v1314, 0
      %v1381 = vsel %vm688, %v1317, 0
      %v1383 = vsel %vm688, %v1318, 0
      %v1385 = vsel %vm688, %v1321, 0
      %v1387 = vsel %vm688, %v1322, 0
      %v1389 = vsel %vm688, %v1325, 0
      %v1391 = vsel %vm688, %v1326, 0
      %v1393 = vsel %vm688, %v1329, 0
      %v1395 = vsel %vm688, %v1330, 0
      %v1397 = vsel %vm688, %v1333, 0
      %v1399 = vsel %vm688, %v1334, 0
      %v1401 = vsel %vm688, %v1337, 0
      %v1403 = vsel %vm688, %v1338, 0
      %v1406 = vsel %vm753, %v1340, 0
      %1408 = vmatprep.subr.mxu0 0.0
      %1409 = vmatpush1.msra.mxu0 %v1406
      %1410 = vmatprep.subr.mxu0 0.0
      %1411 = vmatpush1.msra.mxu0 0.0
      %1412 = vmatprep.subr.mxu0 0.0
      %1413 = vmatpush1.msra.mxu0 0.0
      %1414 = vmatprep.subr.mxu0 0.0
      %1415 = vmatpush1.msra.mxu0 0.0
      %1416 = vmatprep.subr.mxu0 0.0
      %1417 = vmatpush1.msra.mxu0 0.0
      %1418 = vmatprep.subr.mxu0 0.0
      %1419 = vmatpush1.msra.mxu0 0.0
      %1420 = vmatprep.subr.mxu0 0.0
      %1421 = vmatpush1.msra.mxu0 0.0
      %1422 = vmatprep.subr.mxu0 0.0
      %1423 = vmatpush1.msra.mxu0 0.0
      %1424 = vmatprep.subr.mxu0 0.0
      %1425 = vmatpush1.msra.mxu0 0.0
      %1426 = vmatprep.subr.mxu0 0.0
      %1427 = vmatpush1.msra.mxu0 0.0
      %1428 = vmatprep.subr.mxu0 0.0
      %1429 = vmatpush1.msra.mxu0 0.0
      %1430 = vmatprep.subr.mxu0 0.0
      %1431 = vmatpush1.msra.mxu0 0.0
      %1432 = vmatprep.subr.mxu0 0.0
      %1433 = vmatpush1.msra.mxu0 0.0
      %1434 = vmatprep.subr.mxu0 0.0
      %1435 = vmatpush1.msra.mxu0 0.0
      %1436 = vmatprep.subr.mxu0 0.0
      %1437 = vmatpush1.msra.mxu0 0.0
      %1438 = vmatprep.subr.mxu0 0.0
      %1439 = vmatpush1.msra.mxu0 0.0
      %1440 = vmatprep.subr.mxu0 0.0
      %1441 = vmatpush1.msra.mxu0 0.0
      %1442 = vmatprep.subr.mxu0 0.0
      %1443 = vmatpush1.msra.mxu0 0.0
      %1444 = vmatprep.subr.mxu0 0.0
      %1445 = vmatpush1.msra.mxu0 0.0
      %1446 = vmatprep.subr.mxu0 0.0
      %1447 = vmatpush1.msra.mxu0 0.0
      %1448 = vmatprep.subr.mxu0 0.0
      %1449 = vmatpush1.msra.mxu0 0.0
      %1450 = vmatprep.subr.mxu0 0.0
      %1451 = vmatpush1.msra.mxu0 0.0
      %1452 = vmatprep.subr.mxu0 0.0
      %1453 = vmatpush1.msra.mxu0 0.0
      %1454 = vmatprep.subr.mxu0 0.0
      %1455 = vmatpush1.msra.mxu0 0.0
      %1456 = vmatprep.subr.mxu0 0.0
      %1457 = vmatpush1.msra.mxu0 0.0
      %1458 = vmatprep.subr.mxu0 0.0
      %1459 = vmatpush1.msra.mxu0 0.0
      %1460 = vmatprep.subr.mxu0 0.0
      %1461 = vmatpush1.msra.mxu0 0.0
      %1462 = vmatprep.subr.mxu0 0.0
      %1463 = vmatpush1.msra.mxu0 0.0
      %1464 = vmatprep.subr.mxu0 0.0
      %1465 = vmatpush1.msra.mxu0 0.0
      %1466 = vmatprep.subr.mxu0 0.0
      %1467 = vmatpush1.msra.mxu0 0.0
      %1468 = vmatprep.subr.mxu0 0.0
      %1469 = vmatpush1.msra.mxu0 0.0
      %1470 = vmatprep.subr.mxu0 0.0
      %1471 = vmatpush1.msra.mxu0 0.0
      %1472 = vmatprep.mubr.f32.mxu0 0.0
      %1473 = vmatmul.mubr.f32.gmra.mrb[0].mxu0 %v1341
      %v1474 = vpop.f32.mrb[0].mxu0
      %v1475 = vadd.f32 0.0, %v1474
      %v1476 = vpop.f32.mrb[0].mxu0
      %1477 = vmatprep.mubr.f32.mxu0 0.0
      %1478 = vmatmul.mubr.f32.gmra.mrb[0].mxu0 %v1343
      %v1479 = vpop.f32.mrb[0].mxu0
      %v1480 = vadd.f32 0.0, %v1479
      %v1481 = vpop.f32.mrb[0].mxu0
      %1482 = vmatprep.mubr.f32.mxu0 0.0
      %1483 = vmatmul.mubr.f32.gmra.mrb[0].mxu0 %v1345
      %v1484 = vpop.f32.mrb[0].mxu0
      %v1485 = vadd.f32 0.0, %v1484
      %v1486 = vpop.f32.mrb[0].mxu0
      %1487 = vmatprep.mubr.f32.mxu0 0.0
      %1488 = vmatmul.mubr.f32.gmra.mrb[0].mxu0 %v1347
      %v1489 = vpop.f32.mrb[0].mxu0
      %v1490 = vadd.f32 0.0, %v1489
      %v1491 = vpop.f32.mrb[0].mxu0
      %1492 = vmatprep.mubr.f32.mxu0 0.0
      %1493 = vmatmul.mubr.f32.gmra.mrb[0].mxu0 %v1349
      %v1494 = vpop.f32.mrb[0].mxu0
      %v1495 = vadd.f32 0.0, %v1494
      %v1496 = vpop.f32.mrb[0].mxu0
      %1497 = vmatprep.mubr.f32.mxu0 0.0
      %1498 = vmatmul.mubr.f32.gmra.mrb[0].mxu0 %v1351
      %v1499 = vpop.f32.mrb[0].mxu0
      %v1500 = vadd.f32 0.0, %v1499
      %v1501 = vpop.f32.mrb[0].mxu0
      %1502 = vmatprep.mubr.f32.mxu0 0.0
      %1503 = vmatmul.mubr.f32.gmra.mrb[0].mxu0 %v1353
      %v1504 = vpop.f32.mrb[0].mxu0
      %v1505 = vadd.f32 0.0, %v1504
      %v1506 = vpop.f32.mrb[0].mxu0
      %1507 = vmatprep.mubr.f32.mxu0 0.0
      %1508 = vmatmul.mubr.f32.gmra.mrb[0].mxu0 %v1355
      %v1509 = vpop.f32.mrb[0].mxu0
      %v1510 = vadd.f32 0.0, %v1509
      %v1511 = vpop.f32.mrb[0].mxu0
      %1512 = vmatprep.mubr.f32.mxu0 0.0
      %1513 = vmatmul.mubr.f32.gmra.mrb[0].mxu0 %v1357
      %v1514 = vpop.f32.mrb[0].mxu0
      %v1515 = vadd.f32 0.0, %v1514
      %v1516 = vpop.f32.mrb[0].mxu0
      %1517 = vmatprep.mubr.f32.mxu0 0.0
      %1518 = vmatmul.mubr.f32.gmra.mrb[0].mxu0 %v1359
      %v1519 = vpop.f32.mrb[0].mxu0
      %v1520 = vadd.f32 0.0, %v1519
      %v1521 = vpop.f32.mrb[0].mxu0
      %1522 = vmatprep.mubr.f32.mxu0 0.0
      %1523 = vmatmul.mubr.f32.gmra.mrb[0].mxu0 %v1361
      %v1524 = vpop.f32.mrb[0].mxu0
      %v1525 = vadd.f32 0.0, %v1524
      %v1526 = vpop.f32.mrb[0].mxu0
      %1527 = vmatprep.mubr.f32.mxu0 0.0
      %1528 = vmatmul.mubr.f32.gmra.mrb[0].mxu0 %v1363
      %v1529 = vpop.f32.mrb[0].mxu0
      %v1530 = vadd.f32 0.0, %v1529
      %v1531 = vpop.f32.mrb[0].mxu0
      %1532 = vmatprep.mubr.f32.mxu0 0.0
      %1533 = vmatmul.mubr.f32.gmra.mrb[0].mxu0 %v1365
      %v1534 = vpop.f32.mrb[0].mxu0
      %v1535 = vadd.f32 0.0, %v1534
      %v1536 = vpop.f32.mrb[0].mxu0
      %1537 = vmatprep.mubr.f32.mxu0 0.0
      %1538 = vmatmul.mubr.f32.gmra.mrb[0].mxu0 %v1367
      %v1539 = vpop.f32.mrb[0].mxu0
      %v1540 = vadd.f32 0.0, %v1539
      %v1541 = vpop.f32.mrb[0].mxu0
      %1542 = vmatprep.mubr.f32.mxu0 0.0
      %1543 = vmatmul.mubr.f32.gmra.mrb[0].mxu0 %v1369
      %v1544 = vpop.f32.mrb[0].mxu0
      %v1545 = vadd.f32 0.0, %v1544
      %v1546 = vpop.f32.mrb[0].mxu0
      %1547 = vmatprep.mubr.f32.mxu0 0.0
      %1548 = vmatmul.mubr.f32.gmra.mrb[0].mxu0 %v1371
      %v1549 = vpop.f32.mrb[0].mxu0
      %v1550 = vadd.f32 0.0, %v1549
      %v1551 = vpop.f32.mrb[0].mxu0
      %1552 = vmatprep.mubr.f32.mxu0 0.0
      %1553 = vmatmul.mubr.f32.gmra.mrb[0].mxu0 %v1373
      %v1554 = vpop.f32.mrb[0].mxu0
      %v1555 = vadd.f32 0.0, %v1554
      %v1556 = vpop.f32.mrb[0].mxu0
      %1557 = vmatprep.mubr.f32.mxu0 0.0
      %1558 = vmatmul.mubr.f32.gmra.mrb[0].mxu0 %v1375
      %v1559 = vpop.f32.mrb[0].mxu0
      %v1560 = vadd.f32 0.0, %v1559
      %v1561 = vpop.f32.mrb[0].mxu0
      %1562 = vmatprep.mubr.f32.mxu0 0.0
      %1563 = vmatmul.mubr.f32.gmra.mrb[0].mxu0 %v1377
      %v1564 = vpop.f32.mrb[0].mxu0
      %v1565 = vadd.f32 0.0, %v1564
      %v1566 = vpop.f32.mrb[0].mxu0
      %1567 = vmatprep.mubr.f32.mxu0 0.0
      %1568 = vmatmul.mubr.f32.gmra.mrb[0].mxu0 %v1379
      %v1569 = vpop.f32.mrb[0].mxu0
      %v1570 = vadd.f32 0.0, %v1569
      %v1571 = vpop.f32.mrb[0].mxu0
      %1572 = vmatprep.mubr.f32.mxu0 0.0
      %1573 = vmatmul.mubr.f32.gmra.mrb[0].mxu0 %v1381
      %v1574 = vpop.f32.mrb[0].mxu0
      %v1575 = vadd.f32 0.0, %v1574
      %v1576 = vpop.f32.mrb[0].mxu0
      %1577 = vmatprep.mubr.f32.mxu0 0.0
      %1578 = vmatmul.mubr.f32.gmra.mrb[0].mxu0 %v1383
      %v1579 = vpop.f32.mrb[0].mxu0
      %v1580 = vadd.f32 0.0, %v1579
      %v1581 = vpop.f32.mrb[0].mxu0
      %1582 = vmatprep.mubr.f32.mxu0 0.0
      %1583 = vmatmul.mubr.f32.gmra.mrb[0].mxu0 %v1385
      %v1584 = vpop.f32.mrb[0].mxu0
      %v1585 = vadd.f32 0.0, %v1584
      %v1586 = vpop.f32.mrb[0].mxu0
      %1587 = vmatprep.mubr.f32.mxu0 0.0
      %1588 = vmatmul.mubr.f32.gmra.mrb[0].mxu0 %v1387
      %v1589 = vpop.f32.mrb[0].mxu0
      %v1590 = vadd.f32 0.0, %v1589
      %v1591 = vpop.f32.mrb[0].mxu0
      %1592 = vmatprep.mubr.f32.mxu0 0.0
      %1593 = vmatmul.mubr.f32.gmra.mrb[0].mxu0 %v1389
      %v1594 = vpop.f32.mrb[0].mxu0
      %v1595 = vadd.f32 0.0, %v1594
      %v1596 = vpop.f32.mrb[0].mxu0
      %1597 = vmatprep.mubr.f32.mxu0 0.0
      %1598 = vmatmul.mubr.f32.gmra.mrb[0].mxu0 %v1391
      %v1599 = vpop.f32.mrb[0].mxu0
      %v1600 = vadd.f32 0.0, %v1599
      %v1601 = vpop.f32.mrb[0].mxu0
      %1602 = vmatprep.mubr.f32.mxu0 0.0
      %1603 = vmatmul.mubr.f32.gmra.mrb[0].mxu0 %v1393
      %v1604 = vpop.f32.mrb[0].mxu0
      %v1605 = vadd.f32 0.0, %v1604
      %v1606 = vpop.f32.mrb[0].mxu0
      %1607 = vmatprep.mubr.f32.mxu0 0.0
      %1608 = vmatmul.mubr.f32.gmra.mrb[0].mxu0 %v1395
      %v1609 = vpop.f32.mrb[0].mxu0
      %v1610 = vadd.f32 0.0, %v1609
      %v1611 = vpop.f32.mrb[0].mxu0
      %1612 = vmatprep.mubr.f32.mxu0 0.0
      %1613 = vmatmul.mubr.f32.gmra.mrb[0].mxu0 %v1397
      %v1614 = vpop.f32.mrb[0].mxu0
      %v1615 = vadd.f32 0.0, %v1614
      %v1616 = vpop.f32.mrb[0].mxu0
      %1617 = vmatprep.mubr.f32.mxu0 0.0
      %1618 = vmatmul.mubr.f32.gmra.mrb[0].mxu0 %v1399
      %v1619 = vpop.f32.mrb[0].mxu0
      %v1620 = vadd.f32 0.0, %v1619
      %v1621 = vpop.f32.mrb[0].mxu0
      %1622 = vmatprep.mubr.f32.mxu0 0.0
      %1623 = vmatmul.mubr.f32.gmra.mrb[0].mxu0 %v1401
      %v1624 = vpop.f32.mrb[0].mxu0
      %v1625 = vadd.f32 0.0, %v1624
      %v1626 = vpop.f32.mrb[0].mxu0
      %1627 = vmatprep.mubr.f32.mxu0 0.0
      %1628 = vmatmul.mubr.f32.gmra.mrb[0].mxu0 %v1403
      %v1629 = vpop.f32.mrb[0].mxu0
      %v1630 = vadd.f32 0.0, %v1629
      %v1631 = vpop.f32.mrb[0].mxu0
      %1632 = vdwg.mxu0
      %v1633 = vadd.f32 %v1116, %v1475
      %v1634 = vadd.f32 %v1121, %v1480
      %v1635 = vadd.f32 %v1126, %v1485
      %v1636 = vadd.f32 %v1131, %v1490
      %v1637 = vadd.f32 %v1136, %v1495
      %v1638 = vadd.f32 %v1141, %v1500
      %v1639 = vadd.f32 %v1146, %v1505
      %v1640 = vadd.f32 %v1151, %v1510
      %v1641 = vadd.f32 %v1156, %v1515
      %v1642 = vadd.f32 %v1161, %v1520
      %v1643 = vadd.f32 %v1166, %v1525
      %v1644 = vadd.f32 %v1171, %v1530
      %v1645 = vadd.f32 %v1176, %v1535
      %v1646 = vadd.f32 %v1181, %v1540
      %v1647 = vadd.f32 %v1186, %v1545
      %v1648 = vadd.f32 %v1191, %v1550
      %v1649 = vadd.f32 %v1196, %v1555
      %v1650 = vadd.f32 %v1201, %v1560
      %v1651 = vadd.f32 %v1206, %v1565
      %v1652 = vadd.f32 %v1211, %v1570
      %v1653 = vadd.f32 %v1216, %v1575
      %v1654 = vadd.f32 %v1221, %v1580
      %v1655 = vadd.f32 %v1226, %v1585
      %v1656 = vadd.f32 %v1231, %v1590
      %v1657 = vadd.f32 %v1236, %v1595
      %v1658 = vadd.f32 %v1241, %v1600
      %v1659 = vadd.f32 %v1246, %v1605
      %v1660 = vadd.f32 %v1251, %v1610
      %v1661 = vadd.f32 %v1256, %v1615
      %v1662 = vadd.f32 %v1261, %v1620
      %v1663 = vadd.f32 %v1266, %v1625
      %v1664 = vadd.f32 %v1271, %v1630
      %s1665 = scalar_lea.vmem %s3, 12
      %v1666 = vld [vmem:[%s1665] sm:$0xf]
      %v1668 = vsel %vm753, %v1666, 0
      %1670 = vmatprep.subr.mxu0 0.0
      %1671 = vmatpush1.msra.mxu0 %v1668
      %1672 = vmatprep.subr.mxu0 0.0
      %1673 = vmatpush1.msra.mxu0 0.0
      %1674 = vmatprep.subr.mxu0 0.0
      %1675 = vmatpush1.msra.mxu0 0.0
      %1676 = vmatprep.subr.mxu0 0.0
      %1677 = vmatpush1.msra.mxu0 0.0
      %1678 = vmatprep.subr.mxu0 0.0
      %1679 = vmatpush1.msra.mxu0 0.0
      %1680 = vmatprep.subr.mxu0 0.0
      %1681 = vmatpush1.msra.mxu0 0.0
      %1682 = vmatprep.subr.mxu0 0.0
      %1683 = vmatpush1.msra.mxu0 0.0
      %1684 = vmatprep.subr.mxu0 0.0
      %1685 = vmatpush1.msra.mxu0 0.0
      %1686 = vmatprep.subr.mxu0 0.0
      %1687 = vmatpush1.msra.mxu0 0.0
      %1688 = vmatprep.subr.mxu0 0.0
      %1689 = vmatpush1.msra.mxu0 0.0
      %1690 = vmatprep.subr.mxu0 0.0
      %1691 = vmatpush1.msra.mxu0 0.0
      %1692 = vmatprep.subr.mxu0 0.0
      %1693 = vmatpush1.msra.mxu0 0.0
      %1694 = vmatprep.subr.mxu0 0.0
      %1695 = vmatpush1.msra.mxu0 0.0
      %1696 = vmatprep.subr.mxu0 0.0
      %1697 = vmatpush1.msra.mxu0 0.0
      %1698 = vmatprep.subr.mxu0 0.0
      %1699 = vmatpush1.msra.mxu0 0.0
      %1700 = vmatprep.subr.mxu0 0.0
      %1701 = vmatpush1.msra.mxu0 0.0
      %1702 = vmatprep.subr.mxu0 0.0
      %1703 = vmatpush1.msra.mxu0 0.0
      %1704 = vmatprep.subr.mxu0 0.0
      %1705 = vmatpush1.msra.mxu0 0.0
      %1706 = vmatprep.subr.mxu0 0.0
      %1707 = vmatpush1.msra.mxu0 0.0
      %1708 = vmatprep.subr.mxu0 0.0
      %1709 = vmatpush1.msra.mxu0 0.0
      %1710 = vmatprep.subr.mxu0 0.0
      %1711 = vmatpush1.msra.mxu0 0.0
      %1712 = vmatprep.subr.mxu0 0.0
      %1713 = vmatpush1.msra.mxu0 0.0
      %1714 = vmatprep.subr.mxu0 0.0
      %1715 = vmatpush1.msra.mxu0 0.0
      %1716 = vmatprep.subr.mxu0 0.0
      %1717 = vmatpush1.msra.mxu0 0.0
      %1718 = vmatprep.subr.mxu0 0.0
      %1719 = vmatpush1.msra.mxu0 0.0
      %1720 = vmatprep.subr.mxu0 0.0
      %1721 = vmatpush1.msra.mxu0 0.0
      %1722 = vmatprep.subr.mxu0 0.0
      %1723 = vmatpush1.msra.mxu0 0.0
      %1724 = vmatprep.subr.mxu0 0.0
      %1725 = vmatpush1.msra.mxu0 0.0
      %1726 = vmatprep.subr.mxu0 0.0
      %1727 = vmatpush1.msra.mxu0 0.0
      %1728 = vmatprep.subr.mxu0 0.0
      %1729 = vmatpush1.msra.mxu0 0.0
      %1730 = vmatprep.subr.mxu0 0.0
      %1731 = vmatpush1.msra.mxu0 0.0
      %1732 = vmatprep.subr.mxu0 0.0
      %1733 = vmatpush1.msra.mxu0 0.0
      %1734 = vmatprep.mubr.f32.mxu0 0.0
      %1735 = vmatmul.mubr.f32.gmra.mrb[0].mxu0 %v986
      %v1736 = vpop.f32.mrb[0].mxu0
      %v1737 = vadd.f32 0.0, %v1736
      %v1738 = vpop.f32.mrb[0].mxu0
      %1739 = vmatprep.mubr.f32.mxu0 0.0
      %1740 = vmatmul.mubr.f32.gmra.mrb[0].mxu0 %v988
      %v1741 = vpop.f32.mrb[0].mxu0
      %v1742 = vadd.f32 0.0, %v1741
      %v1743 = vpop.f32.mrb[0].mxu0
      %1744 = vmatprep.mubr.f32.mxu0 0.0
      %1745 = vmatmul.mubr.f32.gmra.mrb[0].mxu0 %v990
      %v1746 = vpop.f32.mrb[0].mxu0
      %v1747 = vadd.f32 0.0, %v1746
      %v1748 = vpop.f32.mrb[0].mxu0
      %1749 = vmatprep.mubr.f32.mxu0 0.0
      %1750 = vmatmul.mubr.f32.gmra.mrb[0].mxu0 %v992
      %v1751 = vpop.f32.mrb[0].mxu0
      %v1752 = vadd.f32 0.0, %v1751
      %v1753 = vpop.f32.mrb[0].mxu0
      %1754 = vmatprep.mubr.f32.mxu0 0.0
      %1755 = vmatmul.mubr.f32.gmra.mrb[0].mxu0 %v994
      %v1756 = vpop.f32.mrb[0].mxu0
      %v1757 = vadd.f32 0.0, %v1756
      %v1758 = vpop.f32.mrb[0].mxu0
      %1759 = vmatprep.mubr.f32.mxu0 0.0
      %1760 = vmatmul.mubr.f32.gmra.mrb[0].mxu0 %v996
      %v1761 = vpop.f32.mrb[0].mxu0
      %v1762 = vadd.f32 0.0, %v1761
      %v1763 = vpop.f32.mrb[0].mxu0
      %1764 = vmatprep.mubr.f32.mxu0 0.0
      %1765 = vmatmul.mubr.f32.gmra.mrb[0].mxu0 %v998
      %v1766 = vpop.f32.mrb[0].mxu0
      %v1767 = vadd.f32 0.0, %v1766
      %v1768 = vpop.f32.mrb[0].mxu0
      %1769 = vmatprep.mubr.f32.mxu0 0.0
      %1770 = vmatmul.mubr.f32.gmra.mrb[0].mxu0 %v1000
      %v1771 = vpop.f32.mrb[0].mxu0
      %v1772 = vadd.f32 0.0, %v1771
      %v1773 = vpop.f32.mrb[0].mxu0
      %1774 = vmatprep.mubr.f32.mxu0 0.0
      %1775 = vmatmul.mubr.f32.gmra.mrb[0].mxu0 %v1002
      %v1776 = vpop.f32.mrb[0].mxu0
      %v1777 = vadd.f32 0.0, %v1776
      %v1778 = vpop.f32.mrb[0].mxu0
      %1779 = vmatprep.mubr.f32.mxu0 0.0
      %1780 = vmatmul.mubr.f32.gmra.mrb[0].mxu0 %v1004
      %v1781 = vpop.f32.mrb[0].mxu0
      %v1782 = vadd.f32 0.0, %v1781
      %v1783 = vpop.f32.mrb[0].mxu0
      %1784 = vmatprep.mubr.f32.mxu0 0.0
      %1785 = vmatmul.mubr.f32.gmra.mrb[0].mxu0 %v1006
      %v1786 = vpop.f32.mrb[0].mxu0
      %v1787 = vadd.f32 0.0, %v1786
      %v1788 = vpop.f32.mrb[0].mxu0
      %1789 = vmatprep.mubr.f32.mxu0 0.0
      %1790 = vmatmul.mubr.f32.gmra.mrb[0].mxu0 %v1008
      %v1791 = vpop.f32.mrb[0].mxu0
      %v1792 = vadd.f32 0.0, %v1791
      %v1793 = vpop.f32.mrb[0].mxu0
      %1794 = vmatprep.mubr.f32.mxu0 0.0
      %1795 = vmatmul.mubr.f32.gmra.mrb[0].mxu0 %v1010
      %v1796 = vpop.f32.mrb[0].mxu0
      %v1797 = vadd.f32 0.0, %v1796
      %v1798 = vpop.f32.mrb[0].mxu0
      %1799 = vmatprep.mubr.f32.mxu0 0.0
      %1800 = vmatmul.mubr.f32.gmra.mrb[0].mxu0 %v1012
      %v1801 = vpop.f32.mrb[0].mxu0
      %v1802 = vadd.f32 0.0, %v1801
      %v1803 = vpop.f32.mrb[0].mxu0
      %1804 = vmatprep.mubr.f32.mxu0 0.0
      %1805 = vmatmul.mubr.f32.gmra.mrb[0].mxu0 %v1014
      %v1806 = vpop.f32.mrb[0].mxu0
      %v1807 = vadd.f32 0.0, %v1806
      %v1808 = vpop.f32.mrb[0].mxu0
      %1809 = vmatprep.mubr.f32.mxu0 0.0
      %1810 = vmatmul.mubr.f32.gmra.mrb[0].mxu0 %v1016
      %v1811 = vpop.f32.mrb[0].mxu0
      %v1812 = vadd.f32 0.0, %v1811
      %v1813 = vpop.f32.mrb[0].mxu0
      %1814 = vmatprep.mubr.f32.mxu0 0.0
      %1815 = vmatmul.mubr.f32.gmra.mrb[0].mxu0 %v1018
      %v1816 = vpop.f32.mrb[0].mxu0
      %v1817 = vadd.f32 0.0, %v1816
      %v1818 = vpop.f32.mrb[0].mxu0
      %1819 = vmatprep.mubr.f32.mxu0 0.0
      %1820 = vmatmul.mubr.f32.gmra.mrb[0].mxu0 %v1020
      %v1821 = vpop.f32.mrb[0].mxu0
      %v1822 = vadd.f32 0.0, %v1821
      %v1823 = vpop.f32.mrb[0].mxu0
      %1824 = vmatprep.mubr.f32.mxu0 0.0
      %1825 = vmatmul.mubr.f32.gmra.mrb[0].mxu0 %v1022
      %v1826 = vpop.f32.mrb[0].mxu0
      %v1827 = vadd.f32 0.0, %v1826
      %v1828 = vpop.f32.mrb[0].mxu0
      %1829 = vmatprep.mubr.f32.mxu0 0.0
      %1830 = vmatmul.mubr.f32.gmra.mrb[0].mxu0 %v1024
      %v1831 = vpop.f32.mrb[0].mxu0
      %v1832 = vadd.f32 0.0, %v1831
      %v1833 = vpop.f32.mrb[0].mxu0
      %1834 = vmatprep.mubr.f32.mxu0 0.0
      %1835 = vmatmul.mubr.f32.gmra.mrb[0].mxu0 %v1026
      %v1836 = vpop.f32.mrb[0].mxu0
      %v1837 = vadd.f32 0.0, %v1836
      %v1838 = vpop.f32.mrb[0].mxu0
      %1839 = vmatprep.mubr.f32.mxu0 0.0
      %1840 = vmatmul.mubr.f32.gmra.mrb[0].mxu0 %v1028
      %v1841 = vpop.f32.mrb[0].mxu0
      %v1842 = vadd.f32 0.0, %v1841
      %v1843 = vpop.f32.mrb[0].mxu0
      %1844 = vmatprep.mubr.f32.mxu0 0.0
      %1845 = vmatmul.mubr.f32.gmra.mrb[0].mxu0 %v1030
      %v1846 = vpop.f32.mrb[0].mxu0
      %v1847 = vadd.f32 0.0, %v1846
      %v1848 = vpop.f32.mrb[0].mxu0
      %1849 = vmatprep.mubr.f32.mxu0 0.0
      %1850 = vmatmul.mubr.f32.gmra.mrb[0].mxu0 %v1032
      %v1851 = vpop.f32.mrb[0].mxu0
      %v1852 = vadd.f32 0.0, %v1851
      %v1853 = vpop.f32.mrb[0].mxu0
      %1854 = vmatprep.mubr.f32.mxu0 0.0
      %1855 = vmatmul.mubr.f32.gmra.mrb[0].mxu0 %v1034
      %v1856 = vpop.f32.mrb[0].mxu0
      %v1857 = vadd.f32 0.0, %v1856
      %v1858 = vpop.f32.mrb[0].mxu0
      %1859 = vmatprep.mubr.f32.mxu0 0.0
      %1860 = vmatmul.mubr.f32.gmra.mrb[0].mxu0 %v1036
      %v1861 = vpop.f32.mrb[0].mxu0
      %v1862 = vadd.f32 0.0, %v1861
      %v1863 = vpop.f32.mrb[0].mxu0
      %1864 = vmatprep.mubr.f32.mxu0 0.0
      %1865 = vmatmul.mubr.f32.gmra.mrb[0].mxu0 %v1038
      %v1866 = vpop.f32.mrb[0].mxu0
      %v1867 = vadd.f32 0.0, %v1866
      %v1868 = vpop.f32.mrb[0].mxu0
      %1869 = vmatprep.mubr.f32.mxu0 0.0
      %1870 = vmatmul.mubr.f32.gmra.mrb[0].mxu0 %v1040
      %v1871 = vpop.f32.mrb[0].mxu0
      %v1872 = vadd.f32 0.0, %v1871
      %v1873 = vpop.f32.mrb[0].mxu0
      %1874 = vmatprep.mubr.f32.mxu0 0.0
      %1875 = vmatmul.mubr.f32.gmra.mrb[0].mxu0 %v1042
      %v1876 = vpop.f32.mrb[0].mxu0
      %v1877 = vadd.f32 0.0, %v1876
      %v1878 = vpop.f32.mrb[0].mxu0
      %1879 = vmatprep.mubr.f32.mxu0 0.0
      %1880 = vmatmul.mubr.f32.gmra.mrb[0].mxu0 %v1044
      %v1881 = vpop.f32.mrb[0].mxu0
      %v1882 = vadd.f32 0.0, %v1881
      %v1883 = vpop.f32.mrb[0].mxu0
      %1884 = vmatprep.mubr.f32.mxu0 0.0
      %1885 = vmatmul.mubr.f32.gmra.mrb[0].mxu0 %v982
      %v1886 = vpop.f32.mrb[0].mxu0
      %v1887 = vadd.f32 0.0, %v1886
      %v1888 = vpop.f32.mrb[0].mxu0
      %1889 = vmatprep.mubr.f32.mxu0 0.0
      %1890 = vmatmul.mubr.f32.gmra.mrb[0].mxu0 %v984
      %v1891 = vpop.f32.mrb[0].mxu0
      %v1892 = vadd.f32 0.0, %v1891
      %v1893 = vpop.f32.mrb[0].mxu0
      %1894 = vdwg.mxu0
      %v1895 = vadd.f32 %v1633, %v1737
      %v1896 = vadd.f32 %v1634, %v1742
      %v1897 = vadd.f32 %v1635, %v1747
      %v1898 = vadd.f32 %v1636, %v1752
      %v1899 = vadd.f32 %v1637, %v1757
      %v1900 = vadd.f32 %v1638, %v1762
      %v1901 = vadd.f32 %v1639, %v1767
      %v1902 = vadd.f32 %v1640, %v1772
      %v1903 = vadd.f32 %v1641, %v1777
      %v1904 = vadd.f32 %v1642, %v1782
      %v1905 = vadd.f32 %v1643, %v1787
      %v1906 = vadd.f32 %v1644, %v1792
      %v1907 = vadd.f32 %v1645, %v1797
      %v1908 = vadd.f32 %v1646, %v1802
      %v1909 = vadd.f32 %v1647, %v1807
      %v1910 = vadd.f32 %v1648, %v1812
      %v1911 = vadd.f32 %v1649, %v1817
      %v1912 = vadd.f32 %v1650, %v1822
      %v1913 = vadd.f32 %v1651, %v1827
      %v1914 = vadd.f32 %v1652, %v1832
      %v1915 = vadd.f32 %v1653, %v1837
      %v1916 = vadd.f32 %v1654, %v1842
      %v1917 = vadd.f32 %v1655, %v1847
      %v1918 = vadd.f32 %v1656, %v1852
      %v1919 = vadd.f32 %v1657, %v1857
      %v1920 = vadd.f32 %v1658, %v1862
      %v1921 = vadd.f32 %v1659, %v1867
      %v1922 = vadd.f32 %v1660, %v1872
      %v1923 = vadd.f32 %v1661, %v1877
      %v1924 = vadd.f32 %v1662, %v1882
      %v1925 = vadd.f32 %v1663, %v1887
      %v1926 = vadd.f32 %v1664, %v1892
      %s1927 = scalar_lea.vmem %s3, 16
      %v1928 = vld [vmem:[%s1927] sm:$0xf]
      %v1930 = vsel %vm753, %v1928, 0
      %1932 = vmatprep.subr.mxu0 0.0
      %1933 = vmatpush1.msra.mxu0 %v1930
      %1934 = vmatprep.subr.mxu0 0.0
      %1935 = vmatpush1.msra.mxu0 0.0
      %1936 = vmatprep.subr.mxu0 0.0
      %1937 = vmatpush1.msra.mxu0 0.0
      %1938 = vmatprep.subr.mxu0 0.0
      %1939 = vmatpush1.msra.mxu0 0.0
      %1940 = vmatprep.subr.mxu0 0.0
      %1941 = vmatpush1.msra.mxu0 0.0
      %1942 = vmatprep.subr.mxu0 0.0
      %1943 = vmatpush1.msra.mxu0 0.0
      %1944 = vmatprep.subr.mxu0 0.0
      %1945 = vmatpush1.msra.mxu0 0.0
      %1946 = vmatprep.subr.mxu0 0.0
      %1947 = vmatpush1.msra.mxu0 0.0
      %1948 = vmatprep.subr.mxu0 0.0
      %1949 = vmatpush1.msra.mxu0 0.0
      %1950 = vmatprep.subr.mxu0 0.0
      %1951 = vmatpush1.msra.mxu0 0.0
      %1952 = vmatprep.subr.mxu0 0.0
      %1953 = vmatpush1.msra.mxu0 0.0
      %1954 = vmatprep.subr.mxu0 0.0
      %1955 = vmatpush1.msra.mxu0 0.0
      %1956 = vmatprep.subr.mxu0 0.0
      %1957 = vmatpush1.msra.mxu0 0.0
      %1958 = vmatprep.subr.mxu0 0.0
      %1959 = vmatpush1.msra.mxu0 0.0
      %1960 = vmatprep.subr.mxu0 0.0
      %1961 = vmatpush1.msra.mxu0 0.0
      %1962 = vmatprep.subr.mxu0 0.0
      %1963 = vmatpush1.msra.mxu0 0.0
      %1964 = vmatprep.subr.mxu0 0.0
      %1965 = vmatpush1.msra.mxu0 0.0
      %1966 = vmatprep.subr.mxu0 0.0
      %1967 = vmatpush1.msra.mxu0 0.0
      %1968 = vmatprep.subr.mxu0 0.0
      %1969 = vmatpush1.msra.mxu0 0.0
      %1970 = vmatprep.subr.mxu0 0.0
      %1971 = vmatpush1.msra.mxu0 0.0
      %1972 = vmatprep.subr.mxu0 0.0
      %1973 = vmatpush1.msra.mxu0 0.0
      %1974 = vmatprep.subr.mxu0 0.0
      %1975 = vmatpush1.msra.mxu0 0.0
      %1976 = vmatprep.subr.mxu0 0.0
      %1977 = vmatpush1.msra.mxu0 0.0
      %1978 = vmatprep.subr.mxu0 0.0
      %1979 = vmatpush1.msra.mxu0 0.0
      %1980 = vmatprep.subr.mxu0 0.0
      %1981 = vmatpush1.msra.mxu0 0.0
      %1982 = vmatprep.subr.mxu0 0.0
      %1983 = vmatpush1.msra.mxu0 0.0
      %1984 = vmatprep.subr.mxu0 0.0
      %1985 = vmatpush1.msra.mxu0 0.0
      %1986 = vmatprep.subr.mxu0 0.0
      %1987 = vmatpush1.msra.mxu0 0.0
      %1988 = vmatprep.subr.mxu0 0.0
      %1989 = vmatpush1.msra.mxu0 0.0
      %1990 = vmatprep.subr.mxu0 0.0
      %1991 = vmatpush1.msra.mxu0 0.0
      %1992 = vmatprep.subr.mxu0 0.0
      %1993 = vmatpush1.msra.mxu0 0.0
      %1994 = vmatprep.subr.mxu0 0.0
      %1995 = vmatpush1.msra.mxu0 0.0
      %1996 = vmatprep.mubr.f32.mxu0 0.0
      %1997 = vmatmul.mubr.f32.gmra.mrb[0].mxu0 %v693
      %v1998 = vpop.f32.mrb[0].mxu0
      %v1999 = vadd.f32 0.0, %v1998
      %v2000 = vpop.f32.mrb[0].mxu0
      %2001 = vmatprep.mubr.f32.mxu0 0.0
      %2002 = vmatmul.mubr.f32.gmra.mrb[0].mxu0 %v695
      %v2003 = vpop.f32.mrb[0].mxu0
      %v2004 = vadd.f32 0.0, %v2003
      %v2005 = vpop.f32.mrb[0].mxu0
      %2006 = vmatprep.mubr.f32.mxu0 0.0
      %2007 = vmatmul.mubr.f32.gmra.mrb[0].mxu0 %v697
      %v2008 = vpop.f32.mrb[0].mxu0
      %v2009 = vadd.f32 0.0, %v2008
      %v2010 = vpop.f32.mrb[0].mxu0
      %2011 = vmatprep.mubr.f32.mxu0 0.0
      %2012 = vmatmul.mubr.f32.gmra.mrb[0].mxu0 %v699
      %v2013 = vpop.f32.mrb[0].mxu0
      %v2014 = vadd.f32 0.0, %v2013
      %v2015 = vpop.f32.mrb[0].mxu0
      %2016 = vmatprep.mubr.f32.mxu0 0.0
      %2017 = vmatmul.mubr.f32.gmra.mrb[0].mxu0 %v701
      %v2018 = vpop.f32.mrb[0].mxu0
      %v2019 = vadd.f32 0.0, %v2018
      %v2020 = vpop.f32.mrb[0].mxu0
      %2021 = vmatprep.mubr.f32.mxu0 0.0
      %2022 = vmatmul.mubr.f32.gmra.mrb[0].mxu0 %v703
      %v2023 = vpop.f32.mrb[0].mxu0
      %v2024 = vadd.f32 0.0, %v2023
      %v2025 = vpop.f32.mrb[0].mxu0
      %2026 = vmatprep.mubr.f32.mxu0 0.0
      %2027 = vmatmul.mubr.f32.gmra.mrb[0].mxu0 %v705
      %v2028 = vpop.f32.mrb[0].mxu0
      %v2029 = vadd.f32 0.0, %v2028
      %v2030 = vpop.f32.mrb[0].mxu0
      %2031 = vmatprep.mubr.f32.mxu0 0.0
      %2032 = vmatmul.mubr.f32.gmra.mrb[0].mxu0 %v707
      %v2033 = vpop.f32.mrb[0].mxu0
      %v2034 = vadd.f32 0.0, %v2033
      %v2035 = vpop.f32.mrb[0].mxu0
      %2036 = vmatprep.mubr.f32.mxu0 0.0
      %2037 = vmatmul.mubr.f32.gmra.mrb[0].mxu0 %v709
      %v2038 = vpop.f32.mrb[0].mxu0
      %v2039 = vadd.f32 0.0, %v2038
      %v2040 = vpop.f32.mrb[0].mxu0
      %2041 = vmatprep.mubr.f32.mxu0 0.0
      %2042 = vmatmul.mubr.f32.gmra.mrb[0].mxu0 %v711
      %v2043 = vpop.f32.mrb[0].mxu0
      %v2044 = vadd.f32 0.0, %v2043
      %v2045 = vpop.f32.mrb[0].mxu0
      %2046 = vmatprep.mubr.f32.mxu0 0.0
      %2047 = vmatmul.mubr.f32.gmra.mrb[0].mxu0 %v713
      %v2048 = vpop.f32.mrb[0].mxu0
      %v2049 = vadd.f32 0.0, %v2048
      %v2050 = vpop.f32.mrb[0].mxu0
      %2051 = vmatprep.mubr.f32.mxu0 0.0
      %2052 = vmatmul.mubr.f32.gmra.mrb[0].mxu0 %v715
      %v2053 = vpop.f32.mrb[0].mxu0
      %v2054 = vadd.f32 0.0, %v2053
      %v2055 = vpop.f32.mrb[0].mxu0
      %2056 = vmatprep.mubr.f32.mxu0 0.0
      %2057 = vmatmul.mubr.f32.gmra.mrb[0].mxu0 %v717
      %v2058 = vpop.f32.mrb[0].mxu0
      %v2059 = vadd.f32 0.0, %v2058
      %v2060 = vpop.f32.mrb[0].mxu0
      %2061 = vmatprep.mubr.f32.mxu0 0.0
      %2062 = vmatmul.mubr.f32.gmra.mrb[0].mxu0 %v719
      %v2063 = vpop.f32.mrb[0].mxu0
      %v2064 = vadd.f32 0.0, %v2063
      %v2065 = vpop.f32.mrb[0].mxu0
      %2066 = vmatprep.mubr.f32.mxu0 0.0
      %2067 = vmatmul.mubr.f32.gmra.mrb[0].mxu0 %v721
      %v2068 = vpop.f32.mrb[0].mxu0
      %v2069 = vadd.f32 0.0, %v2068
      %v2070 = vpop.f32.mrb[0].mxu0
      %2071 = vmatprep.mubr.f32.mxu0 0.0
      %2072 = vmatmul.mubr.f32.gmra.mrb[0].mxu0 %v723
      %v2073 = vpop.f32.mrb[0].mxu0
      %v2074 = vadd.f32 0.0, %v2073
      %v2075 = vpop.f32.mrb[0].mxu0
      %2076 = vmatprep.mubr.f32.mxu0 0.0
      %2077 = vmatmul.mubr.f32.gmra.mrb[0].mxu0 %v725
      %v2078 = vpop.f32.mrb[0].mxu0
      %v2079 = vadd.f32 0.0, %v2078
      %v2080 = vpop.f32.mrb[0].mxu0
      %2081 = vmatprep.mubr.f32.mxu0 0.0
      %2082 = vmatmul.mubr.f32.gmra.mrb[0].mxu0 %v727
      %v2083 = vpop.f32.mrb[0].mxu0
      %v2084 = vadd.f32 0.0, %v2083
      %v2085 = vpop.f32.mrb[0].mxu0
      %2086 = vmatprep.mubr.f32.mxu0 0.0
      %2087 = vmatmul.mubr.f32.gmra.mrb[0].mxu0 %v729
      %v2088 = vpop.f32.mrb[0].mxu0
      %v2089 = vadd.f32 0.0, %v2088
      %v2090 = vpop.f32.mrb[0].mxu0
      %2091 = vmatprep.mubr.f32.mxu0 0.0
      %2092 = vmatmul.mubr.f32.gmra.mrb[0].mxu0 %v731
      %v2093 = vpop.f32.mrb[0].mxu0
      %v2094 = vadd.f32 0.0, %v2093
      %v2095 = vpop.f32.mrb[0].mxu0
      %2096 = vmatprep.mubr.f32.mxu0 0.0
      %2097 = vmatmul.mubr.f32.gmra.mrb[0].mxu0 %v733
      %v2098 = vpop.f32.mrb[0].mxu0
      %v2099 = vadd.f32 0.0, %v2098
      %v2100 = vpop.f32.mrb[0].mxu0
      %2101 = vmatprep.mubr.f32.mxu0 0.0
      %2102 = vmatmul.mubr.f32.gmra.mrb[0].mxu0 %v735
      %v2103 = vpop.f32.mrb[0].mxu0
      %v2104 = vadd.f32 0.0, %v2103
      %v2105 = vpop.f32.mrb[0].mxu0
      %2106 = vmatprep.mubr.f32.mxu0 0.0
      %2107 = vmatmul.mubr.f32.gmra.mrb[0].mxu0 %v737
      %v2108 = vpop.f32.mrb[0].mxu0
      %v2109 = vadd.f32 0.0, %v2108
      %v2110 = vpop.f32.mrb[0].mxu0
      %2111 = vmatprep.mubr.f32.mxu0 0.0
      %2112 = vmatmul.mubr.f32.gmra.mrb[0].mxu0 %v739
      %v2113 = vpop.f32.mrb[0].mxu0
      %v2114 = vadd.f32 0.0, %v2113
      %v2115 = vpop.f32.mrb[0].mxu0
      %2116 = vmatprep.mubr.f32.mxu0 0.0
      %2117 = vmatmul.mubr.f32.gmra.mrb[0].mxu0 %v741
      %v2118 = vpop.f32.mrb[0].mxu0
      %v2119 = vadd.f32 0.0, %v2118
      %v2120 = vpop.f32.mrb[0].mxu0
      %2121 = vmatprep.mubr.f32.mxu0 0.0
      %2122 = vmatmul.mubr.f32.gmra.mrb[0].mxu0 %v743
      %v2123 = vpop.f32.mrb[0].mxu0
      %v2124 = vadd.f32 0.0, %v2123
      %v2125 = vpop.f32.mrb[0].mxu0
      %2126 = vmatprep.mubr.f32.mxu0 0.0
      %2127 = vmatmul.mubr.f32.gmra.mrb[0].mxu0 %v745
      %v2128 = vpop.f32.mrb[0].mxu0
      %v2129 = vadd.f32 0.0, %v2128
      %v2130 = vpop.f32.mrb[0].mxu0
      %2131 = vmatprep.mubr.f32.mxu0 0.0
      %2132 = vmatmul.mubr.f32.gmra.mrb[0].mxu0 %v747
      %v2133 = vpop.f32.mrb[0].mxu0
      %v2134 = vadd.f32 0.0, %v2133
      %v2135 = vpop.f32.mrb[0].mxu0
      %2136 = vmatprep.mubr.f32.mxu0 0.0
      %2137 = vmatmul.mubr.f32.gmra.mrb[0].mxu0 %v749
      %v2138 = vpop.f32.mrb[0].mxu0
      %v2139 = vadd.f32 0.0, %v2138
      %v2140 = vpop.f32.mrb[0].mxu0
      %2141 = vmatprep.mubr.f32.mxu0 0.0
      %2142 = vmatmul.mubr.f32.gmra.mrb[0].mxu0 %v751
      %v2143 = vpop.f32.mrb[0].mxu0
      %v2144 = vadd.f32 0.0, %v2143
      %v2145 = vpop.f32.mrb[0].mxu0
      %2146 = vmatprep.mubr.f32.mxu0 0.0
      %2147 = vmatmul.mubr.f32.gmra.mrb[0].mxu0 %v689
      %v2148 = vpop.f32.mrb[0].mxu0
      %v2149 = vadd.f32 0.0, %v2148
      %v2150 = vpop.f32.mrb[0].mxu0
      %2151 = vmatprep.mubr.f32.mxu0 0.0
      %2152 = vmatmul.mubr.f32.gmra.mrb[0].mxu0 %v691
      %v2153 = vpop.f32.mrb[0].mxu0
      %v2154 = vadd.f32 0.0, %v2153
      %v2155 = vpop.f32.mrb[0].mxu0
      %2156 = vdwg.mxu0
      %v2157 = vadd.f32 %v1895, %v1999
      %v2158 = vadd.f32 %v1896, %v2004
      %v2159 = vadd.f32 %v1897, %v2009
      %v2160 = vadd.f32 %v1898, %v2014
      %v2161 = vadd.f32 %v1899, %v2019
      %v2162 = vadd.f32 %v1900, %v2024
      %v2163 = vadd.f32 %v1901, %v2029
      %v2164 = vadd.f32 %v1902, %v2034
      %v2165 = vadd.f32 %v1903, %v2039
      %v2166 = vadd.f32 %v1904, %v2044
      %v2167 = vadd.f32 %v1905, %v2049
      %v2168 = vadd.f32 %v1906, %v2054
      %v2169 = vadd.f32 %v1907, %v2059
      %v2170 = vadd.f32 %v1908, %v2064
      %v2171 = vadd.f32 %v1909, %v2069
      %v2172 = vadd.f32 %v1910, %v2074
      %v2173 = vadd.f32 %v1911, %v2079
      %v2174 = vadd.f32 %v1912, %v2084
      %v2175 = vadd.f32 %v1913, %v2089
      %v2176 = vadd.f32 %v1914, %v2094
      %v2177 = vadd.f32 %v1915, %v2099
      %v2178 = vadd.f32 %v1916, %v2104
      %v2179 = vadd.f32 %v1917, %v2109
      %v2180 = vadd.f32 %v1918, %v2114
      %v2181 = vadd.f32 %v1919, %v2119
      %v2182 = vadd.f32 %v1920, %v2124
      %v2183 = vadd.f32 %v1921, %v2129
      %v2184 = vadd.f32 %v1922, %v2134
      %v2185 = vadd.f32 %v1923, %v2139
      %v2186 = vadd.f32 %v1924, %v2144
      %v2187 = vadd.f32 %v1925, %v2149
      %v2188 = vadd.f32 %v1926, %v2154
      %s2189 = scalar_lea.vmem %s3, 20
      %v2190 = vld [vmem:[%s2189] sm:$0xf]
      %v2192 = vsel %vm753, %v2190, 0
      %2194 = vmatprep.subr.mxu0 0.0
      %2195 = vmatpush1.msra.mxu0 %v2192
      %2196 = vmatprep.subr.mxu0 0.0
      %2197 = vmatpush1.msra.mxu0 0.0
      %2198 = vmatprep.subr.mxu0 0.0
      %2199 = vmatpush1.msra.mxu0 0.0
      %2200 = vmatprep.subr.mxu0 0.0
      %2201 = vmatpush1.msra.mxu0 0.0
      %2202 = vmatprep.subr.mxu0 0.0
      %2203 = vmatpush1.msra.mxu0 0.0
      %2204 = vmatprep.subr.mxu0 0.0
      %2205 = vmatpush1.msra.mxu0 0.0
      %2206 = vmatprep.subr.mxu0 0.0
      %2207 = vmatpush1.msra.mxu0 0.0
      %2208 = vmatprep.subr.mxu0 0.0
      %2209 = vmatpush1.msra.mxu0 0.0
      %2210 = vmatprep.subr.mxu0 0.0
      %2211 = vmatpush1.msra.mxu0 0.0
      %2212 = vmatprep.subr.mxu0 0.0
      %2213 = vmatpush1.msra.mxu0 0.0
      %2214 = vmatprep.subr.mxu0 0.0
      %2215 = vmatpush1.msra.mxu0 0.0
      %2216 = vmatprep.subr.mxu0 0.0
      %2217 = vmatpush1.msra.mxu0 0.0
      %2218 = vmatprep.subr.mxu0 0.0
      %2219 = vmatpush1.msra.mxu0 0.0
      %2220 = vmatprep.subr.mxu0 0.0
      %2221 = vmatpush1.msra.mxu0 0.0
      %2222 = vmatprep.subr.mxu0 0.0
      %2223 = vmatpush1.msra.mxu0 0.0
      %2224 = vmatprep.subr.mxu0 0.0
      %2225 = vmatpush1.msra.mxu0 0.0
      %2226 = vmatprep.subr.mxu0 0.0
      %2227 = vmatpush1.msra.mxu0 0.0
      %2228 = vmatprep.subr.mxu0 0.0
      %2229 = vmatpush1.msra.mxu0 0.0
      %2230 = vmatprep.subr.mxu0 0.0
      %2231 = vmatpush1.msra.mxu0 0.0
      %2232 = vmatprep.subr.mxu0 0.0
      %2233 = vmatpush1.msra.mxu0 0.0
      %2234 = vmatprep.subr.mxu0 0.0
      %2235 = vmatpush1.msra.mxu0 0.0
      %2236 = vmatprep.subr.mxu0 0.0
      %2237 = vmatpush1.msra.mxu0 0.0
      %2238 = vmatprep.subr.mxu0 0.0
      %2239 = vmatpush1.msra.mxu0 0.0
      %2240 = vmatprep.subr.mxu0 0.0
      %2241 = vmatpush1.msra.mxu0 0.0
      %2242 = vmatprep.subr.mxu0 0.0
      %2243 = vmatpush1.msra.mxu0 0.0
      %2244 = vmatprep.subr.mxu0 0.0
      %2245 = vmatpush1.msra.mxu0 0.0
      %2246 = vmatprep.subr.mxu0 0.0
      %2247 = vmatpush1.msra.mxu0 0.0
      %2248 = vmatprep.subr.mxu0 0.0
      %2249 = vmatpush1.msra.mxu0 0.0
      %2250 = vmatprep.subr.mxu0 0.0
      %2251 = vmatpush1.msra.mxu0 0.0
      %2252 = vmatprep.subr.mxu0 0.0
      %2253 = vmatpush1.msra.mxu0 0.0
      %2254 = vmatprep.subr.mxu0 0.0
      %2255 = vmatpush1.msra.mxu0 0.0
      %2256 = vmatprep.subr.mxu0 0.0
      %2257 = vmatpush1.msra.mxu0 0.0
      %2258 = vmatprep.mubr.f32.mxu0 0.0
      %2259 = vmatmul.mubr.f32.gmra.mrb[0].mxu0 %v1345
      %v2260 = vpop.f32.mrb[0].mxu0
      %v2261 = vadd.f32 0.0, %v2260
      %v2262 = vpop.f32.mrb[0].mxu0
      %2263 = vmatprep.mubr.f32.mxu0 0.0
      %2264 = vmatmul.mubr.f32.gmra.mrb[0].mxu0 %v1347
      %v2265 = vpop.f32.mrb[0].mxu0
      %v2266 = vadd.f32 0.0, %v2265
      %v2267 = vpop.f32.mrb[0].mxu0
      %2268 = vmatprep.mubr.f32.mxu0 0.0
      %2269 = vmatmul.mubr.f32.gmra.mrb[0].mxu0 %v1349
      %v2270 = vpop.f32.mrb[0].mxu0
      %v2271 = vadd.f32 0.0, %v2270
      %v2272 = vpop.f32.mrb[0].mxu0
      %2273 = vmatprep.mubr.f32.mxu0 0.0
      %2274 = vmatmul.mubr.f32.gmra.mrb[0].mxu0 %v1351
      %v2275 = vpop.f32.mrb[0].mxu0
      %v2276 = vadd.f32 0.0, %v2275
      %v2277 = vpop.f32.mrb[0].mxu0
      %2278 = vmatprep.mubr.f32.mxu0 0.0
      %2279 = vmatmul.mubr.f32.gmra.mrb[0].mxu0 %v1353
      %v2280 = vpop.f32.mrb[0].mxu0
      %v2281 = vadd.f32 0.0, %v2280
      %v2282 = vpop.f32.mrb[0].mxu0
      %2283 = vmatprep.mubr.f32.mxu0 0.0
      %2284 = vmatmul.mubr.f32.gmra.mrb[0].mxu0 %v1355
      %v2285 = vpop.f32.mrb[0].mxu0
      %v2286 = vadd.f32 0.0, %v2285
      %v2287 = vpop.f32.mrb[0].mxu0
      %2288 = vmatprep.mubr.f32.mxu0 0.0
      %2289 = vmatmul.mubr.f32.gmra.mrb[0].mxu0 %v1357
      %v2290 = vpop.f32.mrb[0].mxu0
      %v2291 = vadd.f32 0.0, %v2290
      %v2292 = vpop.f32.mrb[0].mxu0
      %2293 = vmatprep.mubr.f32.mxu0 0.0
      %2294 = vmatmul.mubr.f32.gmra.mrb[0].mxu0 %v1359
      %v2295 = vpop.f32.mrb[0].mxu0
      %v2296 = vadd.f32 0.0, %v2295
      %v2297 = vpop.f32.mrb[0].mxu0
      %2298 = vmatprep.mubr.f32.mxu0 0.0
      %2299 = vmatmul.mubr.f32.gmra.mrb[0].mxu0 %v1361
      %v2300 = vpop.f32.mrb[0].mxu0
      %v2301 = vadd.f32 0.0, %v2300
      %v2302 = vpop.f32.mrb[0].mxu0
      %2303 = vmatprep.mubr.f32.mxu0 0.0
      %2304 = vmatmul.mubr.f32.gmra.mrb[0].mxu0 %v1363
      %v2305 = vpop.f32.mrb[0].mxu0
      %v2306 = vadd.f32 0.0, %v2305
      %v2307 = vpop.f32.mrb[0].mxu0
      %2308 = vmatprep.mubr.f32.mxu0 0.0
      %2309 = vmatmul.mubr.f32.gmra.mrb[0].mxu0 %v1365
      %v2310 = vpop.f32.mrb[0].mxu0
      %v2311 = vadd.f32 0.0, %v2310
      %v2312 = vpop.f32.mrb[0].mxu0
      %2313 = vmatprep.mubr.f32.mxu0 0.0
      %2314 = vmatmul.mubr.f32.gmra.mrb[0].mxu0 %v1367
      %v2315 = vpop.f32.mrb[0].mxu0
      %v2316 = vadd.f32 0.0, %v2315
      %v2317 = vpop.f32.mrb[0].mxu0
      %2318 = vmatprep.mubr.f32.mxu0 0.0
      %2319 = vmatmul.mubr.f32.gmra.mrb[0].mxu0 %v1369
      %v2320 = vpop.f32.mrb[0].mxu0
      %v2321 = vadd.f32 0.0, %v2320
      %v2322 = vpop.f32.mrb[0].mxu0
      %2323 = vmatprep.mubr.f32.mxu0 0.0
      %2324 = vmatmul.mubr.f32.gmra.mrb[0].mxu0 %v1371
      %v2325 = vpop.f32.mrb[0].mxu0
      %v2326 = vadd.f32 0.0, %v2325
      %v2327 = vpop.f32.mrb[0].mxu0
      %2328 = vmatprep.mubr.f32.mxu0 0.0
      %2329 = vmatmul.mubr.f32.gmra.mrb[0].mxu0 %v1373
      %v2330 = vpop.f32.mrb[0].mxu0
      %v2331 = vadd.f32 0.0, %v2330
      %v2332 = vpop.f32.mrb[0].mxu0
      %2333 = vmatprep.mubr.f32.mxu0 0.0
      %2334 = vmatmul.mubr.f32.gmra.mrb[0].mxu0 %v1375
      %v2335 = vpop.f32.mrb[0].mxu0
      %v2336 = vadd.f32 0.0, %v2335
      %v2337 = vpop.f32.mrb[0].mxu0
      %2338 = vmatprep.mubr.f32.mxu0 0.0
      %2339 = vmatmul.mubr.f32.gmra.mrb[0].mxu0 %v1377
      %v2340 = vpop.f32.mrb[0].mxu0
      %v2341 = vadd.f32 0.0, %v2340
      %v2342 = vpop.f32.mrb[0].mxu0
      %2343 = vmatprep.mubr.f32.mxu0 0.0
      %2344 = vmatmul.mubr.f32.gmra.mrb[0].mxu0 %v1379
      %v2345 = vpop.f32.mrb[0].mxu0
      %v2346 = vadd.f32 0.0, %v2345
      %v2347 = vpop.f32.mrb[0].mxu0
      %2348 = vmatprep.mubr.f32.mxu0 0.0
      %2349 = vmatmul.mubr.f32.gmra.mrb[0].mxu0 %v1381
      %v2350 = vpop.f32.mrb[0].mxu0
      %v2351 = vadd.f32 0.0, %v2350
      %v2352 = vpop.f32.mrb[0].mxu0
      %2353 = vmatprep.mubr.f32.mxu0 0.0
      %2354 = vmatmul.mubr.f32.gmra.mrb[0].mxu0 %v1383
      %v2355 = vpop.f32.mrb[0].mxu0
      %v2356 = vadd.f32 0.0, %v2355
      %v2357 = vpop.f32.mrb[0].mxu0
      %2358 = vmatprep.mubr.f32.mxu0 0.0
      %2359 = vmatmul.mubr.f32.gmra.mrb[0].mxu0 %v1385
      %v2360 = vpop.f32.mrb[0].mxu0
      %v2361 = vadd.f32 0.0, %v2360
      %v2362 = vpop.f32.mrb[0].mxu0
      %2363 = vmatprep.mubr.f32.mxu0 0.0
      %2364 = vmatmul.mubr.f32.gmra.mrb[0].mxu0 %v1387
      %v2365 = vpop.f32.mrb[0].mxu0
      %v2366 = vadd.f32 0.0, %v2365
      %v2367 = vpop.f32.mrb[0].mxu0
      %2368 = vmatprep.mubr.f32.mxu0 0.0
      %2369 = vmatmul.mubr.f32.gmra.mrb[0].mxu0 %v1389
      %v2370 = vpop.f32.mrb[0].mxu0
      %v2371 = vadd.f32 0.0, %v2370
      %v2372 = vpop.f32.mrb[0].mxu0
      %2373 = vmatprep.mubr.f32.mxu0 0.0
      %2374 = vmatmul.mubr.f32.gmra.mrb[0].mxu0 %v1391
      %v2375 = vpop.f32.mrb[0].mxu0
      %v2376 = vadd.f32 0.0, %v2375
      %v2377 = vpop.f32.mrb[0].mxu0
      %2378 = vmatprep.mubr.f32.mxu0 0.0
      %2379 = vmatmul.mubr.f32.gmra.mrb[0].mxu0 %v1393
      %v2380 = vpop.f32.mrb[0].mxu0
      %v2381 = vadd.f32 0.0, %v2380
      %v2382 = vpop.f32.mrb[0].mxu0
      %2383 = vmatprep.mubr.f32.mxu0 0.0
      %2384 = vmatmul.mubr.f32.gmra.mrb[0].mxu0 %v1395
      %v2385 = vpop.f32.mrb[0].mxu0
      %v2386 = vadd.f32 0.0, %v2385
      %v2387 = vpop.f32.mrb[0].mxu0
      %2388 = vmatprep.mubr.f32.mxu0 0.0
      %2389 = vmatmul.mubr.f32.gmra.mrb[0].mxu0 %v1397
      %v2390 = vpop.f32.mrb[0].mxu0
      %v2391 = vadd.f32 0.0, %v2390
      %v2392 = vpop.f32.mrb[0].mxu0
      %2393 = vmatprep.mubr.f32.mxu0 0.0
      %2394 = vmatmul.mubr.f32.gmra.mrb[0].mxu0 %v1399
      %v2395 = vpop.f32.mrb[0].mxu0
      %v2396 = vadd.f32 0.0, %v2395
      %v2397 = vpop.f32.mrb[0].mxu0
      %2398 = vmatprep.mubr.f32.mxu0 0.0
      %2399 = vmatmul.mubr.f32.gmra.mrb[0].mxu0 %v1401
      %v2400 = vpop.f32.mrb[0].mxu0
      %v2401 = vadd.f32 0.0, %v2400
      %v2402 = vpop.f32.mrb[0].mxu0
      %2403 = vmatprep.mubr.f32.mxu0 0.0
      %2404 = vmatmul.mubr.f32.gmra.mrb[0].mxu0 %v1403
      %v2405 = vpop.f32.mrb[0].mxu0
      %v2406 = vadd.f32 0.0, %v2405
      %v2407 = vpop.f32.mrb[0].mxu0
      %2408 = vmatprep.mubr.f32.mxu0 0.0
      %2409 = vmatmul.mubr.f32.gmra.mrb[0].mxu0 %v1341
      %v2410 = vpop.f32.mrb[0].mxu0
      %v2411 = vadd.f32 0.0, %v2410
      %v2412 = vpop.f32.mrb[0].mxu0
      %2413 = vmatprep.mubr.f32.mxu0 0.0
      %2414 = vmatmul.mubr.f32.gmra.mrb[0].mxu0 %v1343
      %v2415 = vpop.f32.mrb[0].mxu0
      %v2416 = vadd.f32 0.0, %v2415
      %v2417 = vpop.f32.mrb[0].mxu0
      %2418 = vdwg.mxu0
      %v2419 = vadd.f32 %v2157, %v2261
      %v2420 = vadd.f32 %v2158, %v2266
      %v2421 = vadd.f32 %v2159, %v2271
      %v2422 = vadd.f32 %v2160, %v2276
      %v2423 = vadd.f32 %v2161, %v2281
      %v2424 = vadd.f32 %v2162, %v2286
      %v2425 = vadd.f32 %v2163, %v2291
      %v2426 = vadd.f32 %v2164, %v2296
      %v2427 = vadd.f32 %v2165, %v2301
      %v2428 = vadd.f32 %v2166, %v2306
      %v2429 = vadd.f32 %v2167, %v2311
      %v2430 = vadd.f32 %v2168, %v2316
      %v2431 = vadd.f32 %v2169, %v2321
      %v2432 = vadd.f32 %v2170, %v2326
      %v2433 = vadd.f32 %v2171, %v2331
      %v2434 = vadd.f32 %v2172, %v2336
      %v2435 = vadd.f32 %v2173, %v2341
      %v2436 = vadd.f32 %v2174, %v2346
      %v2437 = vadd.f32 %v2175, %v2351
      %v2438 = vadd.f32 %v2176, %v2356
      %v2439 = vadd.f32 %v2177, %v2361
      %v2440 = vadd.f32 %v2178, %v2366
      %v2441 = vadd.f32 %v2179, %v2371
      %v2442 = vadd.f32 %v2180, %v2376
      %v2443 = vadd.f32 %v2181, %v2381
      %v2444 = vadd.f32 %v2182, %v2386
      %v2445 = vadd.f32 %v2183, %v2391
      %v2446 = vadd.f32 %v2184, %v2396
      %v2447 = vadd.f32 %v2185, %v2401
      %v2448 = vadd.f32 %v2186, %v2406
      %v2449 = vadd.f32 %v2187, %v2411
      %v2450 = vadd.f32 %v2188, %v2416
      %s2451 = scalar_lea.vmem %s3, 24
      %v2452 = vld [vmem:[%s2451] sm:$0xf]
      %v2454 = vsel %vm753, %v2452, 0
      %2456 = vmatprep.subr.mxu0 0.0
      %2457 = vmatpush1.msra.mxu0 %v2454
      %2458 = vmatprep.subr.mxu0 0.0
      %2459 = vmatpush1.msra.mxu0 0.0
      %2460 = vmatprep.subr.mxu0 0.0
      %2461 = vmatpush1.msra.mxu0 0.0
      %2462 = vmatprep.subr.mxu0 0.0
      %2463 = vmatpush1.msra.mxu0 0.0
      %2464 = vmatprep.subr.mxu0 0.0
      %2465 = vmatpush1.msra.mxu0 0.0
      %2466 = vmatprep.subr.mxu0 0.0
      %2467 = vmatpush1.msra.mxu0 0.0
      %2468 = vmatprep.subr.mxu0 0.0
      %2469 = vmatpush1.msra.mxu0 0.0
      %2470 = vmatprep.subr.mxu0 0.0
      %2471 = vmatpush1.msra.mxu0 0.0
      %2472 = vmatprep.subr.mxu0 0.0
      %2473 = vmatpush1.msra.mxu0 0.0
      %2474 = vmatprep.subr.mxu0 0.0
      %2475 = vmatpush1.msra.mxu0 0.0
      %2476 = vmatprep.subr.mxu0 0.0
      %2477 = vmatpush1.msra.mxu0 0.0
      %2478 = vmatprep.subr.mxu0 0.0
      %2479 = vmatpush1.msra.mxu0 0.0
      %2480 = vmatprep.subr.mxu0 0.0
      %2481 = vmatpush1.msra.mxu0 0.0
      %2482 = vmatprep.subr.mxu0 0.0
      %2483 = vmatpush1.msra.mxu0 0.0
      %2484 = vmatprep.subr.mxu0 0.0
      %2485 = vmatpush1.msra.mxu0 0.0
      %2486 = vmatprep.subr.mxu0 0.0
      %2487 = vmatpush1.msra.mxu0 0.0
      %2488 = vmatprep.subr.mxu0 0.0
      %2489 = vmatpush1.msra.mxu0 0.0
      %2490 = vmatprep.subr.mxu0 0.0
      %2491 = vmatpush1.msra.mxu0 0.0
      %2492 = vmatprep.subr.mxu0 0.0
      %2493 = vmatpush1.msra.mxu0 0.0
      %2494 = vmatprep.subr.mxu0 0.0
      %2495 = vmatpush1.msra.mxu0 0.0
      %2496 = vmatprep.subr.mxu0 0.0
      %2497 = vmatpush1.msra.mxu0 0.0
      %2498 = vmatprep.subr.mxu0 0.0
      %2499 = vmatpush1.msra.mxu0 0.0
      %2500 = vmatprep.subr.mxu0 0.0
      %2501 = vmatpush1.msra.mxu0 0.0
      %2502 = vmatprep.subr.mxu0 0.0
      %2503 = vmatpush1.msra.mxu0 0.0
      %2504 = vmatprep.subr.mxu0 0.0
      %2505 = vmatpush1.msra.mxu0 0.0
      %2506 = vmatprep.subr.mxu0 0.0
      %2507 = vmatpush1.msra.mxu0 0.0
      %2508 = vmatprep.subr.mxu0 0.0
      %2509 = vmatpush1.msra.mxu0 0.0
      %2510 = vmatprep.subr.mxu0 0.0
      %2511 = vmatpush1.msra.mxu0 0.0
      %2512 = vmatprep.subr.mxu0 0.0
      %2513 = vmatpush1.msra.mxu0 0.0
      %2514 = vmatprep.subr.mxu0 0.0
      %2515 = vmatpush1.msra.mxu0 0.0
      %2516 = vmatprep.subr.mxu0 0.0
      %2517 = vmatpush1.msra.mxu0 0.0
      %2518 = vmatprep.subr.mxu0 0.0
      %2519 = vmatpush1.msra.mxu0 0.0
      %2520 = vmatprep.mubr.f32.mxu0 0.0
      %2521 = vmatmul.mubr.f32.gmra.mrb[0].mxu0 %v990
      %v2522 = vpop.f32.mrb[0].mxu0
      %v2523 = vadd.f32 0.0, %v2522
      %v2524 = vpop.f32.mrb[0].mxu0
      %2525 = vmatprep.mubr.f32.mxu0 0.0
      %2526 = vmatmul.mubr.f32.gmra.mrb[0].mxu0 %v992
      %v2527 = vpop.f32.mrb[0].mxu0
      %v2528 = vadd.f32 0.0, %v2527
      %v2529 = vpop.f32.mrb[0].mxu0
      %2530 = vmatprep.mubr.f32.mxu0 0.0
      %2531 = vmatmul.mubr.f32.gmra.mrb[0].mxu0 %v994
      %v2532 = vpop.f32.mrb[0].mxu0
      %v2533 = vadd.f32 0.0, %v2532
      %v2534 = vpop.f32.mrb[0].mxu0
      %2535 = vmatprep.mubr.f32.mxu0 0.0
      %2536 = vmatmul.mubr.f32.gmra.mrb[0].mxu0 %v996
      %v2537 = vpop.f32.mrb[0].mxu0
      %v2538 = vadd.f32 0.0, %v2537
      %v2539 = vpop.f32.mrb[0].mxu0
      %2540 = vmatprep.mubr.f32.mxu0 0.0
      %2541 = vmatmul.mubr.f32.gmra.mrb[0].mxu0 %v998
      %v2542 = vpop.f32.mrb[0].mxu0
      %v2543 = vadd.f32 0.0, %v2542
      %v2544 = vpop.f32.mrb[0].mxu0
      %2545 = vmatprep.mubr.f32.mxu0 0.0
      %2546 = vmatmul.mubr.f32.gmra.mrb[0].mxu0 %v1000
      %v2547 = vpop.f32.mrb[0].mxu0
      %v2548 = vadd.f32 0.0, %v2547
      %v2549 = vpop.f32.mrb[0].mxu0
      %2550 = vmatprep.mubr.f32.mxu0 0.0
      %2551 = vmatmul.mubr.f32.gmra.mrb[0].mxu0 %v1002
      %v2552 = vpop.f32.mrb[0].mxu0
      %v2553 = vadd.f32 0.0, %v2552
      %v2554 = vpop.f32.mrb[0].mxu0
      %2555 = vmatprep.mubr.f32.mxu0 0.0
      %2556 = vmatmul.mubr.f32.gmra.mrb[0].mxu0 %v1004
      %v2557 = vpop.f32.mrb[0].mxu0
      %v2558 = vadd.f32 0.0, %v2557
      %v2559 = vpop.f32.mrb[0].mxu0
      %2560 = vmatprep.mubr.f32.mxu0 0.0
      %2561 = vmatmul.mubr.f32.gmra.mrb[0].mxu0 %v1006
      %v2562 = vpop.f32.mrb[0].mxu0
      %v2563 = vadd.f32 0.0, %v2562
      %v2564 = vpop.f32.mrb[0].mxu0
      %2565 = vmatprep.mubr.f32.mxu0 0.0
      %2566 = vmatmul.mubr.f32.gmra.mrb[0].mxu0 %v1008
      %v2567 = vpop.f32.mrb[0].mxu0
      %v2568 = vadd.f32 0.0, %v2567
      %v2569 = vpop.f32.mrb[0].mxu0
      %2570 = vmatprep.mubr.f32.mxu0 0.0
      %2571 = vmatmul.mubr.f32.gmra.mrb[0].mxu0 %v1010
      %v2572 = vpop.f32.mrb[0].mxu0
      %v2573 = vadd.f32 0.0, %v2572
      %v2574 = vpop.f32.mrb[0].mxu0
      %2575 = vmatprep.mubr.f32.mxu0 0.0
      %2576 = vmatmul.mubr.f32.gmra.mrb[0].mxu0 %v1012
      %v2577 = vpop.f32.mrb[0].mxu0
      %v2578 = vadd.f32 0.0, %v2577
      %v2579 = vpop.f32.mrb[0].mxu0
      %2580 = vmatprep.mubr.f32.mxu0 0.0
      %2581 = vmatmul.mubr.f32.gmra.mrb[0].mxu0 %v1014
      %v2582 = vpop.f32.mrb[0].mxu0
      %v2583 = vadd.f32 0.0, %v2582
      %v2584 = vpop.f32.mrb[0].mxu0
      %2585 = vmatprep.mubr.f32.mxu0 0.0
      %2586 = vmatmul.mubr.f32.gmra.mrb[0].mxu0 %v1016
      %v2587 = vpop.f32.mrb[0].mxu0
      %v2588 = vadd.f32 0.0, %v2587
      %v2589 = vpop.f32.mrb[0].mxu0
      %2590 = vmatprep.mubr.f32.mxu0 0.0
      %2591 = vmatmul.mubr.f32.gmra.mrb[0].mxu0 %v1018
      %v2592 = vpop.f32.mrb[0].mxu0
      %v2593 = vadd.f32 0.0, %v2592
      %v2594 = vpop.f32.mrb[0].mxu0
      %2595 = vmatprep.mubr.f32.mxu0 0.0
      %2596 = vmatmul.mubr.f32.gmra.mrb[0].mxu0 %v1020
      %v2597 = vpop.f32.mrb[0].mxu0
      %v2598 = vadd.f32 0.0, %v2597
      %v2599 = vpop.f32.mrb[0].mxu0
      %2600 = vmatprep.mubr.f32.mxu0 0.0
      %2601 = vmatmul.mubr.f32.gmra.mrb[0].mxu0 %v1022
      %v2602 = vpop.f32.mrb[0].mxu0
      %v2603 = vadd.f32 0.0, %v2602
      %v2604 = vpop.f32.mrb[0].mxu0
      %2605 = vmatprep.mubr.f32.mxu0 0.0
      %2606 = vmatmul.mubr.f32.gmra.mrb[0].mxu0 %v1024
      %v2607 = vpop.f32.mrb[0].mxu0
      %v2608 = vadd.f32 0.0, %v2607
      %v2609 = vpop.f32.mrb[0].mxu0
      %2610 = vmatprep.mubr.f32.mxu0 0.0
      %2611 = vmatmul.mubr.f32.gmra.mrb[0].mxu0 %v1026
      %v2612 = vpop.f32.mrb[0].mxu0
      %v2613 = vadd.f32 0.0, %v2612
      %v2614 = vpop.f32.mrb[0].mxu0
      %2615 = vmatprep.mubr.f32.mxu0 0.0
      %2616 = vmatmul.mubr.f32.gmra.mrb[0].mxu0 %v1028
      %v2617 = vpop.f32.mrb[0].mxu0
      %v2618 = vadd.f32 0.0, %v2617
      %v2619 = vpop.f32.mrb[0].mxu0
      %2620 = vmatprep.mubr.f32.mxu0 0.0
      %2621 = vmatmul.mubr.f32.gmra.mrb[0].mxu0 %v1030
      %v2622 = vpop.f32.mrb[0].mxu0
      %v2623 = vadd.f32 0.0, %v2622
      %v2624 = vpop.f32.mrb[0].mxu0
      %2625 = vmatprep.mubr.f32.mxu0 0.0
      %2626 = vmatmul.mubr.f32.gmra.mrb[0].mxu0 %v1032
      %v2627 = vpop.f32.mrb[0].mxu0
      %v2628 = vadd.f32 0.0, %v2627
      %v2629 = vpop.f32.mrb[0].mxu0
      %2630 = vmatprep.mubr.f32.mxu0 0.0
      %2631 = vmatmul.mubr.f32.gmra.mrb[0].mxu0 %v1034
      %v2632 = vpop.f32.mrb[0].mxu0
      %v2633 = vadd.f32 0.0, %v2632
      %v2634 = vpop.f32.mrb[0].mxu0
      %2635 = vmatprep.mubr.f32.mxu0 0.0
      %2636 = vmatmul.mubr.f32.gmra.mrb[0].mxu0 %v1036
      %v2637 = vpop.f32.mrb[0].mxu0
      %v2638 = vadd.f32 0.0, %v2637
      %v2639 = vpop.f32.mrb[0].mxu0
      %2640 = vmatprep.mubr.f32.mxu0 0.0
      %2641 = vmatmul.mubr.f32.gmra.mrb[0].mxu0 %v1038
      %v2642 = vpop.f32.mrb[0].mxu0
      %v2643 = vadd.f32 0.0, %v2642
      %v2644 = vpop.f32.mrb[0].mxu0
      %2645 = vmatprep.mubr.f32.mxu0 0.0
      %2646 = vmatmul.mubr.f32.gmra.mrb[0].mxu0 %v1040
      %v2647 = vpop.f32.mrb[0].mxu0
      %v2648 = vadd.f32 0.0, %v2647
      %v2649 = vpop.f32.mrb[0].mxu0
      %2650 = vmatprep.mubr.f32.mxu0 0.0
      %2651 = vmatmul.mubr.f32.gmra.mrb[0].mxu0 %v1042
      %v2652 = vpop.f32.mrb[0].mxu0
      %v2653 = vadd.f32 0.0, %v2652
      %v2654 = vpop.f32.mrb[0].mxu0
      %2655 = vmatprep.mubr.f32.mxu0 0.0
      %2656 = vmatmul.mubr.f32.gmra.mrb[0].mxu0 %v1044
      %v2657 = vpop.f32.mrb[0].mxu0
      %v2658 = vadd.f32 0.0, %v2657
      %v2659 = vpop.f32.mrb[0].mxu0
      %2660 = vmatprep.mubr.f32.mxu0 0.0
      %2661 = vmatmul.mubr.f32.gmra.mrb[0].mxu0 %v982
      %v2662 = vpop.f32.mrb[0].mxu0
      %v2663 = vadd.f32 0.0, %v2662
      %v2664 = vpop.f32.mrb[0].mxu0
      %2665 = vmatprep.mubr.f32.mxu0 0.0
      %2666 = vmatmul.mubr.f32.gmra.mrb[0].mxu0 %v984
      %v2667 = vpop.f32.mrb[0].mxu0
      %v2668 = vadd.f32 0.0, %v2667
      %v2669 = vpop.f32.mrb[0].mxu0
      %2670 = vmatprep.mubr.f32.mxu0 0.0
      %2671 = vmatmul.mubr.f32.gmra.mrb[0].mxu0 %v986
      %v2672 = vpop.f32.mrb[0].mxu0
      %v2673 = vadd.f32 0.0, %v2672
      %v2674 = vpop.f32.mrb[0].mxu0
      %2675 = vmatprep.mubr.f32.mxu0 0.0
      %2676 = vmatmul.mubr.f32.gmra.mrb[0].mxu0 %v988
      %v2677 = vpop.f32.mrb[0].mxu0
      %v2678 = vadd.f32 0.0, %v2677
      %v2679 = vpop.f32.mrb[0].mxu0
      %2680 = vdwg.mxu0
      %v2681 = vadd.f32 %v2419, %v2523
      %v2682 = vadd.f32 %v2420, %v2528
      %v2683 = vadd.f32 %v2421, %v2533
      %v2684 = vadd.f32 %v2422, %v2538
      %v2685 = vadd.f32 %v2423, %v2543
      %v2686 = vadd.f32 %v2424, %v2548
      %v2687 = vadd.f32 %v2425, %v2553
      %v2688 = vadd.f32 %v2426, %v2558
      %v2689 = vadd.f32 %v2427, %v2563
      %v2690 = vadd.f32 %v2428, %v2568
      %v2691 = vadd.f32 %v2429, %v2573
      %v2692 = vadd.f32 %v2430, %v2578
      %v2693 = vadd.f32 %v2431, %v2583
      %v2694 = vadd.f32 %v2432, %v2588
      %v2695 = vadd.f32 %v2433, %v2593
      %v2696 = vadd.f32 %v2434, %v2598
      %v2697 = vadd.f32 %v2435, %v2603
      %v2698 = vadd.f32 %v2436, %v2608
      %v2699 = vadd.f32 %v2437, %v2613
      %v2700 = vadd.f32 %v2438, %v2618
      %v2701 = vadd.f32 %v2439, %v2623
      %v2702 = vadd.f32 %v2440, %v2628
      %v2703 = vadd.f32 %v2441, %v2633
      %v2704 = vadd.f32 %v2442, %v2638
      %v2705 = vadd.f32 %v2443, %v2643
      %v2706 = vadd.f32 %v2444, %v2648
      %v2707 = vadd.f32 %v2445, %v2653
      %v2708 = vadd.f32 %v2446, %v2658
      %v2709 = vadd.f32 %v2447, %v2663
      %v2710 = vadd.f32 %v2448, %v2668
      %v2711 = vadd.f32 %v2449, %v2673
      %v2712 = vadd.f32 %v2450, %v2678
      %s2713 = scalar_lea.vmem %s3, 28
      %v2714 = vld [vmem:[%s2713] sm:$0xf]
      %v2716 = vsel %vm753, %v2714, 0
      %2718 = vmatprep.subr.mxu0 0.0
      %2719 = vmatpush1.msra.mxu0 %v2716
      %2720 = vmatprep.subr.mxu0 0.0
      %2721 = vmatpush1.msra.mxu0 0.0
      %2722 = vmatprep.subr.mxu0 0.0
      %2723 = vmatpush1.msra.mxu0 0.0
      %2724 = vmatprep.subr.mxu0 0.0
      %2725 = vmatpush1.msra.mxu0 0.0
      %2726 = vmatprep.subr.mxu0 0.0
      %2727 = vmatpush1.msra.mxu0 0.0
      %2728 = vmatprep.subr.mxu0 0.0
      %2729 = vmatpush1.msra.mxu0 0.0
      %2730 = vmatprep.subr.mxu0 0.0
      %2731 = vmatpush1.msra.mxu0 0.0
      %2732 = vmatprep.subr.mxu0 0.0
      %2733 = vmatpush1.msra.mxu0 0.0
      %2734 = vmatprep.subr.mxu0 0.0
      %2735 = vmatpush1.msra.mxu0 0.0
      %2736 = vmatprep.subr.mxu0 0.0
      %2737 = vmatpush1.msra.mxu0 0.0
      %2738 = vmatprep.subr.mxu0 0.0
      %2739 = vmatpush1.msra.mxu0 0.0
      %2740 = vmatprep.subr.mxu0 0.0
      %2741 = vmatpush1.msra.mxu0 0.0
      %2742 = vmatprep.subr.mxu0 0.0
      %2743 = vmatpush1.msra.mxu0 0.0
      %2744 = vmatprep.subr.mxu0 0.0
      %2745 = vmatpush1.msra.mxu0 0.0
      %2746 = vmatprep.subr.mxu0 0.0
      %2747 = vmatpush1.msra.mxu0 0.0
      %2748 = vmatprep.subr.mxu0 0.0
      %2749 = vmatpush1.msra.mxu0 0.0
      %2750 = vmatprep.subr.mxu0 0.0
      %2751 = vmatpush1.msra.mxu0 0.0
      %2752 = vmatprep.subr.mxu0 0.0
      %2753 = vmatpush1.msra.mxu0 0.0
      %2754 = vmatprep.subr.mxu0 0.0
      %2755 = vmatpush1.msra.mxu0 0.0
      %2756 = vmatprep.subr.mxu0 0.0
      %2757 = vmatpush1.msra.mxu0 0.0
      %2758 = vmatprep.subr.mxu0 0.0
      %2759 = vmatpush1.msra.mxu0 0.0
      %2760 = vmatprep.subr.mxu0 0.0
      %2761 = vmatpush1.msra.mxu0 0.0
      %2762 = vmatprep.subr.mxu0 0.0
      %2763 = vmatpush1.msra.mxu0 0.0
      %2764 = vmatprep.subr.mxu0 0.0
      %2765 = vmatpush1.msra.mxu0 0.0
      %2766 = vmatprep.subr.mxu0 0.0
      %2767 = vmatpush1.msra.mxu0 0.0
      %2768 = vmatprep.subr.mxu0 0.0
      %2769 = vmatpush1.msra.mxu0 0.0
      %2770 = vmatprep.subr.mxu0 0.0
      %2771 = vmatpush1.msra.mxu0 0.0
      %2772 = vmatprep.subr.mxu0 0.0
      %2773 = vmatpush1.msra.mxu0 0.0
      %2774 = vmatprep.subr.mxu0 0.0
      %2775 = vmatpush1.msra.mxu0 0.0
      %2776 = vmatprep.subr.mxu0 0.0
      %2777 = vmatpush1.msra.mxu0 0.0
      %2778 = vmatprep.subr.mxu0 0.0
      %2779 = vmatpush1.msra.mxu0 0.0
      %2780 = vmatprep.subr.mxu0 0.0
      %2781 = vmatpush1.msra.mxu0 0.0
      %2782 = vmatprep.mubr.f32.mxu0 0.0
      %2783 = vmatmul.mubr.f32.gmra.mrb[0].mxu0 %v697
      %v2784 = vpop.f32.mrb[0].mxu0
      %v2785 = vadd.f32 0.0, %v2784
      %v2786 = vpop.f32.mrb[0].mxu0
      %2787 = vmatprep.mubr.f32.mxu0 0.0
      %2788 = vmatmul.mubr.f32.gmra.mrb[0].mxu0 %v699
      %v2789 = vpop.f32.mrb[0].mxu0
      %v2790 = vadd.f32 0.0, %v2789
      %v2791 = vpop.f32.mrb[0].mxu0
      %2792 = vmatprep.mubr.f32.mxu0 0.0
      %2793 = vmatmul.mubr.f32.gmra.mrb[0].mxu0 %v701
      %v2794 = vpop.f32.mrb[0].mxu0
      %v2795 = vadd.f32 0.0, %v2794
      %v2796 = vpop.f32.mrb[0].mxu0
      %2797 = vmatprep.mubr.f32.mxu0 0.0
      %2798 = vmatmul.mubr.f32.gmra.mrb[0].mxu0 %v703
      %v2799 = vpop.f32.mrb[0].mxu0
      %v2800 = vadd.f32 0.0, %v2799
      %v2801 = vpop.f32.mrb[0].mxu0
      %2802 = vmatprep.mubr.f32.mxu0 0.0
      %2803 = vmatmul.mubr.f32.gmra.mrb[0].mxu0 %v705
      %v2804 = vpop.f32.mrb[0].mxu0
      %v2805 = vadd.f32 0.0, %v2804
      %v2806 = vpop.f32.mrb[0].mxu0
      %2807 = vmatprep.mubr.f32.mxu0 0.0
      %2808 = vmatmul.mubr.f32.gmra.mrb[0].mxu0 %v707
      %v2809 = vpop.f32.mrb[0].mxu0
      %v2810 = vadd.f32 0.0, %v2809
      %v2811 = vpop.f32.mrb[0].mxu0
      %2812 = vmatprep.mubr.f32.mxu0 0.0
      %2813 = vmatmul.mubr.f32.gmra.mrb[0].mxu0 %v709
      %v2814 = vpop.f32.mrb[0].mxu0
      %v2815 = vadd.f32 0.0, %v2814
      %v2816 = vpop.f32.mrb[0].mxu0
      %2817 = vmatprep.mubr.f32.mxu0 0.0
      %2818 = vmatmul.mubr.f32.gmra.mrb[0].mxu0 %v711
      %v2819 = vpop.f32.mrb[0].mxu0
      %v2820 = vadd.f32 0.0, %v2819
      %v2821 = vpop.f32.mrb[0].mxu0
      %2822 = vmatprep.mubr.f32.mxu0 0.0
      %2823 = vmatmul.mubr.f32.gmra.mrb[0].mxu0 %v713
      %v2824 = vpop.f32.mrb[0].mxu0
      %v2825 = vadd.f32 0.0, %v2824
      %v2826 = vpop.f32.mrb[0].mxu0
      %2827 = vmatprep.mubr.f32.mxu0 0.0
      %2828 = vmatmul.mubr.f32.gmra.mrb[0].mxu0 %v715
      %v2829 = vpop.f32.mrb[0].mxu0
      %v2830 = vadd.f32 0.0, %v2829
      %v2831 = vpop.f32.mrb[0].mxu0
      %2832 = vmatprep.mubr.f32.mxu0 0.0
      %2833 = vmatmul.mubr.f32.gmra.mrb[0].mxu0 %v717
      %v2834 = vpop.f32.mrb[0].mxu0
      %v2835 = vadd.f32 0.0, %v2834
      %v2836 = vpop.f32.mrb[0].mxu0
      %2837 = vmatprep.mubr.f32.mxu0 0.0
      %2838 = vmatmul.mubr.f32.gmra.mrb[0].mxu0 %v719
      %v2839 = vpop.f32.mrb[0].mxu0
      %v2840 = vadd.f32 0.0, %v2839
      %v2841 = vpop.f32.mrb[0].mxu0
      %2842 = vmatprep.mubr.f32.mxu0 0.0
      %2843 = vmatmul.mubr.f32.gmra.mrb[0].mxu0 %v721
      %v2844 = vpop.f32.mrb[0].mxu0
      %v2845 = vadd.f32 0.0, %v2844
      %v2846 = vpop.f32.mrb[0].mxu0
      %2847 = vmatprep.mubr.f32.mxu0 0.0
      %2848 = vmatmul.mubr.f32.gmra.mrb[0].mxu0 %v723
      %v2849 = vpop.f32.mrb[0].mxu0
      %v2850 = vadd.f32 0.0, %v2849
      %v2851 = vpop.f32.mrb[0].mxu0
      %2852 = vmatprep.mubr.f32.mxu0 0.0
      %2853 = vmatmul.mubr.f32.gmra.mrb[0].mxu0 %v725
      %v2854 = vpop.f32.mrb[0].mxu0
      %v2855 = vadd.f32 0.0, %v2854
      %v2856 = vpop.f32.mrb[0].mxu0
      %2857 = vmatprep.mubr.f32.mxu0 0.0
      %2858 = vmatmul.mubr.f32.gmra.mrb[0].mxu0 %v727
      %v2859 = vpop.f32.mrb[0].mxu0
      %v2860 = vadd.f32 0.0, %v2859
      %v2861 = vpop.f32.mrb[0].mxu0
      %2862 = vmatprep.mubr.f32.mxu0 0.0
      %2863 = vmatmul.mubr.f32.gmra.mrb[0].mxu0 %v729
      %v2864 = vpop.f32.mrb[0].mxu0
      %v2865 = vadd.f32 0.0, %v2864
      %v2866 = vpop.f32.mrb[0].mxu0
      %2867 = vmatprep.mubr.f32.mxu0 0.0
      %2868 = vmatmul.mubr.f32.gmra.mrb[0].mxu0 %v731
      %v2869 = vpop.f32.mrb[0].mxu0
      %v2870 = vadd.f32 0.0, %v2869
      %v2871 = vpop.f32.mrb[0].mxu0
      %2872 = vmatprep.mubr.f32.mxu0 0.0
      %2873 = vmatmul.mubr.f32.gmra.mrb[0].mxu0 %v733
      %v2874 = vpop.f32.mrb[0].mxu0
      %v2875 = vadd.f32 0.0, %v2874
      %v2876 = vpop.f32.mrb[0].mxu0
      %2877 = vmatprep.mubr.f32.mxu0 0.0
      %2878 = vmatmul.mubr.f32.gmra.mrb[0].mxu0 %v735
      %v2879 = vpop.f32.mrb[0].mxu0
      %v2880 = vadd.f32 0.0, %v2879
      %v2881 = vpop.f32.mrb[0].mxu0
      %2882 = vmatprep.mubr.f32.mxu0 0.0
      %2883 = vmatmul.mubr.f32.gmra.mrb[0].mxu0 %v737
      %v2884 = vpop.f32.mrb[0].mxu0
      %v2885 = vadd.f32 0.0, %v2884
      %v2886 = vpop.f32.mrb[0].mxu0
      %2887 = vmatprep.mubr.f32.mxu0 0.0
      %2888 = vmatmul.mubr.f32.gmra.mrb[0].mxu0 %v739
      %v2889 = vpop.f32.mrb[0].mxu0
      %v2890 = vadd.f32 0.0, %v2889
      %v2891 = vpop.f32.mrb[0].mxu0
      %2892 = vmatprep.mubr.f32.mxu0 0.0
      %2893 = vmatmul.mubr.f32.gmra.mrb[0].mxu0 %v741
      %v2894 = vpop.f32.mrb[0].mxu0
      %v2895 = vadd.f32 0.0, %v2894
      %v2896 = vpop.f32.mrb[0].mxu0
      %2897 = vmatprep.mubr.f32.mxu0 0.0
      %2898 = vmatmul.mubr.f32.gmra.mrb[0].mxu0 %v743
      %v2899 = vpop.f32.mrb[0].mxu0
      %v2900 = vadd.f32 0.0, %v2899
      %v2901 = vpop.f32.mrb[0].mxu0
      %2902 = vmatprep.mubr.f32.mxu0 0.0
      %2903 = vmatmul.mubr.f32.gmra.mrb[0].mxu0 %v745
      %v2904 = vpop.f32.mrb[0].mxu0
      %v2905 = vadd.f32 0.0, %v2904
      %v2906 = vpop.f32.mrb[0].mxu0
      %2907 = vmatprep.mubr.f32.mxu0 0.0
      %2908 = vmatmul.mubr.f32.gmra.mrb[0].mxu0 %v747
      %v2909 = vpop.f32.mrb[0].mxu0
      %v2910 = vadd.f32 0.0, %v2909
      %v2911 = vpop.f32.mrb[0].mxu0
      %2912 = vmatprep.mubr.f32.mxu0 0.0
      %2913 = vmatmul.mubr.f32.gmra.mrb[0].mxu0 %v749
      %v2914 = vpop.f32.mrb[0].mxu0
      %v2915 = vadd.f32 0.0, %v2914
      %v2916 = vpop.f32.mrb[0].mxu0
      %2917 = vmatprep.mubr.f32.mxu0 0.0
      %2918 = vmatmul.mubr.f32.gmra.mrb[0].mxu0 %v751
      %v2919 = vpop.f32.mrb[0].mxu0
      %v2920 = vadd.f32 0.0, %v2919
      %v2921 = vpop.f32.mrb[0].mxu0
      %2922 = vmatprep.mubr.f32.mxu0 0.0
      %2923 = vmatmul.mubr.f32.gmra.mrb[0].mxu0 %v689
      %v2924 = vpop.f32.mrb[0].mxu0
      %v2925 = vadd.f32 0.0, %v2924
      %v2926 = vpop.f32.mrb[0].mxu0
      %2927 = vmatprep.mubr.f32.mxu0 0.0
      %2928 = vmatmul.mubr.f32.gmra.mrb[0].mxu0 %v691
      %v2929 = vpop.f32.mrb[0].mxu0
      %v2930 = vadd.f32 0.0, %v2929
      %v2931 = vpop.f32.mrb[0].mxu0
      %2932 = vmatprep.mubr.f32.mxu0 0.0
      %2933 = vmatmul.mubr.f32.gmra.mrb[0].mxu0 %v693
      %v2934 = vpop.f32.mrb[0].mxu0
      %v2935 = vadd.f32 0.0, %v2934
      %v2936 = vpop.f32.mrb[0].mxu0
      %2937 = vmatprep.mubr.f32.mxu0 0.0
      %2938 = vmatmul.mubr.f32.gmra.mrb[0].mxu0 %v695
      %v2939 = vpop.f32.mrb[0].mxu0
      %v2940 = vadd.f32 0.0, %v2939
      %v2941 = vpop.f32.mrb[0].mxu0
      %2942 = vdwg.mxu0
      %v2943 = vadd.f32 %v2681, %v2785
      %v2944 = vadd.f32 %v2682, %v2790
      %v2945 = vadd.f32 %v2683, %v2795
      %v2946 = vadd.f32 %v2684, %v2800
      %v2947 = vadd.f32 %v2685, %v2805
      %v2948 = vadd.f32 %v2686, %v2810
      %v2949 = vadd.f32 %v2687, %v2815
      %v2950 = vadd.f32 %v2688, %v2820
      %v2951 = vadd.f32 %v2689, %v2825
      %v2952 = vadd.f32 %v2690, %v2830
      %v2953 = vadd.f32 %v2691, %v2835
      %v2954 = vadd.f32 %v2692, %v2840
      %v2955 = vadd.f32 %v2693, %v2845
      %v2956 = vadd.f32 %v2694, %v2850
      %v2957 = vadd.f32 %v2695, %v2855
      %v2958 = vadd.f32 %v2696, %v2860
      %v2959 = vadd.f32 %v2697, %v2865
      %v2960 = vadd.f32 %v2698, %v2870
      %v2961 = vadd.f32 %v2699, %v2875
      %v2962 = vadd.f32 %v2700, %v2880
      %v2963 = vadd.f32 %v2701, %v2885
      %v2964 = vadd.f32 %v2702, %v2890
      %v2965 = vadd.f32 %v2703, %v2895
      %v2966 = vadd.f32 %v2704, %v2900
      %v2967 = vadd.f32 %v2705, %v2905
      %v2968 = vadd.f32 %v2706, %v2910
      %v2969 = vadd.f32 %v2707, %v2915
      %v2970 = vadd.f32 %v2708, %v2920
      %v2971 = vadd.f32 %v2709, %v2925
      %v2972 = vadd.f32 %v2710, %v2930
      %v2973 = vadd.f32 %v2711, %v2935
      %v2974 = vadd.f32 %v2712, %v2940
      %s2975 = scalar_lea.vmem %s3, 32
      %v2976 = vld [vmem:[%s2975] sm:$0xf]
      %v2978 = vsel %vm753, %v2976, 0
      %2980 = vmatprep.subr.mxu0 0.0
      %2981 = vmatpush1.msra.mxu0 %v2978
      %2982 = vmatprep.subr.mxu0 0.0
      %2983 = vmatpush1.msra.mxu0 0.0
      %2984 = vmatprep.subr.mxu0 0.0
      %2985 = vmatpush1.msra.mxu0 0.0
      %2986 = vmatprep.subr.mxu0 0.0
      %2987 = vmatpush1.msra.mxu0 0.0
      %2988 = vmatprep.subr.mxu0 0.0
      %2989 = vmatpush1.msra.mxu0 0.0
      %2990 = vmatprep.subr.mxu0 0.0
      %2991 = vmatpush1.msra.mxu0 0.0
      %2992 = vmatprep.subr.mxu0 0.0
      %2993 = vmatpush1.msra.mxu0 0.0
      %2994 = vmatprep.subr.mxu0 0.0
      %2995 = vmatpush1.msra.mxu0 0.0
      %2996 = vmatprep.subr.mxu0 0.0
      %2997 = vmatpush1.msra.mxu0 0.0
      %2998 = vmatprep.subr.mxu0 0.0
      %2999 = vmatpush1.msra.mxu0 0.0
      %3000 = vmatprep.subr.mxu0 0.0
      %3001 = vmatpush1.msra.mxu0 0.0
      %3002 = vmatprep.subr.mxu0 0.0
      %3003 = vmatpush1.msra.mxu0 0.0
      %3004 = vmatprep.subr.mxu0 0.0
      %3005 = vmatpush1.msra.mxu0 0.0
      %3006 = vmatprep.subr.mxu0 0.0
      %3007 = vmatpush1.msra.mxu0 0.0
      %3008 = vmatprep.subr.mxu0 0.0
      %3009 = vmatpush1.msra.mxu0 0.0
      %3010 = vmatprep.subr.mxu0 0.0
      %3011 = vmatpush1.msra.mxu0 0.0
      %3012 = vmatprep.subr.mxu0 0.0
      %3013 = vmatpush1.msra.mxu0 0.0
      %3014 = vmatprep.subr.mxu0 0.0
      %3015 = vmatpush1.msra.mxu0 0.0
      %3016 = vmatprep.subr.mxu0 0.0
      %3017 = vmatpush1.msra.mxu0 0.0
      %3018 = vmatprep.subr.mxu0 0.0
      %3019 = vmatpush1.msra.mxu0 0.0
      %3020 = vmatprep.subr.mxu0 0.0
      %3021 = vmatpush1.msra.mxu0 0.0
      %3022 = vmatprep.subr.mxu0 0.0
      %3023 = vmatpush1.msra.mxu0 0.0
      %3024 = vmatprep.subr.mxu0 0.0
      %3025 = vmatpush1.msra.mxu0 0.0
      %3026 = vmatprep.subr.mxu0 0.0
      %3027 = vmatpush1.msra.mxu0 0.0
      %3028 = vmatprep.subr.mxu0 0.0
      %3029 = vmatpush1.msra.mxu0 0.0
      %3030 = vmatprep.subr.mxu0 0.0
      %3031 = vmatpush1.msra.mxu0 0.0
      %3032 = vmatprep.subr.mxu0 0.0
      %3033 = vmatpush1.msra.mxu0 0.0
      %3034 = vmatprep.subr.mxu0 0.0
      %3035 = vmatpush1.msra.mxu0 0.0
      %3036 = vmatprep.subr.mxu0 0.0
      %3037 = vmatpush1.msra.mxu0 0.0
      %3038 = vmatprep.subr.mxu0 0.0
      %3039 = vmatpush1.msra.mxu0 0.0
      %3040 = vmatprep.subr.mxu0 0.0
      %3041 = vmatpush1.msra.mxu0 0.0
      %3042 = vmatprep.subr.mxu0 0.0
      %3043 = vmatpush1.msra.mxu0 0.0
      %3044 = vmatprep.mubr.f32.mxu0 0.0
      %3045 = vmatmul.mubr.f32.gmra.mrb[0].mxu0 %v1349
      %v3046 = vpop.f32.mrb[0].mxu0
      %v3047 = vadd.f32 0.0, %v3046
      %v3048 = vpop.f32.mrb[0].mxu0
      %3049 = vmatprep.mubr.f32.mxu0 0.0
      %3050 = vmatmul.mubr.f32.gmra.mrb[0].mxu0 %v1351
      %v3051 = vpop.f32.mrb[0].mxu0
      %v3052 = vadd.f32 0.0, %v3051
      %v3053 = vpop.f32.mrb[0].mxu0
      %3054 = vmatprep.mubr.f32.mxu0 0.0
      %3055 = vmatmul.mubr.f32.gmra.mrb[0].mxu0 %v1353
      %v3056 = vpop.f32.mrb[0].mxu0
      %v3057 = vadd.f32 0.0, %v3056
      %v3058 = vpop.f32.mrb[0].mxu0
      %3059 = vmatprep.mubr.f32.mxu0 0.0
      %3060 = vmatmul.mubr.f32.gmra.mrb[0].mxu0 %v1355
      %v3061 = vpop.f32.mrb[0].mxu0
      %v3062 = vadd.f32 0.0, %v3061
      %v3063 = vpop.f32.mrb[0].mxu0
      %3064 = vmatprep.mubr.f32.mxu0 0.0
      %3065 = vmatmul.mubr.f32.gmra.mrb[0].mxu0 %v1357
      %v3066 = vpop.f32.mrb[0].mxu0
      %v3067 = vadd.f32 0.0, %v3066
      %v3068 = vpop.f32.mrb[0].mxu0
      %3069 = vmatprep.mubr.f32.mxu0 0.0
      %3070 = vmatmul.mubr.f32.gmra.mrb[0].mxu0 %v1359
      %v3071 = vpop.f32.mrb[0].mxu0
      %v3072 = vadd.f32 0.0, %v3071
      %v3073 = vpop.f32.mrb[0].mxu0
      %3074 = vmatprep.mubr.f32.mxu0 0.0
      %3075 = vmatmul.mubr.f32.gmra.mrb[0].mxu0 %v1361
      %v3076 = vpop.f32.mrb[0].mxu0
      %v3077 = vadd.f32 0.0, %v3076
      %v3078 = vpop.f32.mrb[0].mxu0
      %3079 = vmatprep.mubr.f32.mxu0 0.0
      %3080 = vmatmul.mubr.f32.gmra.mrb[0].mxu0 %v1363
      %v3081 = vpop.f32.mrb[0].mxu0
      %v3082 = vadd.f32 0.0, %v3081
      %v3083 = vpop.f32.mrb[0].mxu0
      %3084 = vmatprep.mubr.f32.mxu0 0.0
      %3085 = vmatmul.mubr.f32.gmra.mrb[0].mxu0 %v1365
      %v3086 = vpop.f32.mrb[0].mxu0
      %v3087 = vadd.f32 0.0, %v3086
      %v3088 = vpop.f32.mrb[0].mxu0
      %3089 = vmatprep.mubr.f32.mxu0 0.0
      %3090 = vmatmul.mubr.f32.gmra.mrb[0].mxu0 %v1367
      %v3091 = vpop.f32.mrb[0].mxu0
      %v3092 = vadd.f32 0.0, %v3091
      %v3093 = vpop.f32.mrb[0].mxu0
      %3094 = vmatprep.mubr.f32.mxu0 0.0
      %3095 = vmatmul.mubr.f32.gmra.mrb[0].mxu0 %v1369
      %v3096 = vpop.f32.mrb[0].mxu0
      %v3097 = vadd.f32 0.0, %v3096
      %v3098 = vpop.f32.mrb[0].mxu0
      %3099 = vmatprep.mubr.f32.mxu0 0.0
      %3100 = vmatmul.mubr.f32.gmra.mrb[0].mxu0 %v1371
      %v3101 = vpop.f32.mrb[0].mxu0
      %v3102 = vadd.f32 0.0, %v3101
      %v3103 = vpop.f32.mrb[0].mxu0
      %3104 = vmatprep.mubr.f32.mxu0 0.0
      %3105 = vmatmul.mubr.f32.gmra.mrb[0].mxu0 %v1373
      %v3106 = vpop.f32.mrb[0].mxu0
      %v3107 = vadd.f32 0.0, %v3106
      %v3108 = vpop.f32.mrb[0].mxu0
      %3109 = vmatprep.mubr.f32.mxu0 0.0
      %3110 = vmatmul.mubr.f32.gmra.mrb[0].mxu0 %v1375
      %v3111 = vpop.f32.mrb[0].mxu0
      %v3112 = vadd.f32 0.0, %v3111
      %v3113 = vpop.f32.mrb[0].mxu0
      %3114 = vmatprep.mubr.f32.mxu0 0.0
      %3115 = vmatmul.mubr.f32.gmra.mrb[0].mxu0 %v1377
      %v3116 = vpop.f32.mrb[0].mxu0
      %v3117 = vadd.f32 0.0, %v3116
      %v3118 = vpop.f32.mrb[0].mxu0
      %3119 = vmatprep.mubr.f32.mxu0 0.0
      %3120 = vmatmul.mubr.f32.gmra.mrb[0].mxu0 %v1379
      %v3121 = vpop.f32.mrb[0].mxu0
      %v3122 = vadd.f32 0.0, %v3121
      %v3123 = vpop.f32.mrb[0].mxu0
      %3124 = vmatprep.mubr.f32.mxu0 0.0
      %3125 = vmatmul.mubr.f32.gmra.mrb[0].mxu0 %v1381
      %v3126 = vpop.f32.mrb[0].mxu0
      %v3127 = vadd.f32 0.0, %v3126
      %v3128 = vpop.f32.mrb[0].mxu0
      %3129 = vmatprep.mubr.f32.mxu0 0.0
      %3130 = vmatmul.mubr.f32.gmra.mrb[0].mxu0 %v1383
      %v3131 = vpop.f32.mrb[0].mxu0
      %v3132 = vadd.f32 0.0, %v3131
      %v3133 = vpop.f32.mrb[0].mxu0
      %3134 = vmatprep.mubr.f32.mxu0 0.0
      %3135 = vmatmul.mubr.f32.gmra.mrb[0].mxu0 %v1385
      %v3136 = vpop.f32.mrb[0].mxu0
      %v3137 = vadd.f32 0.0, %v3136
      %v3138 = vpop.f32.mrb[0].mxu0
      %3139 = vmatprep.mubr.f32.mxu0 0.0
      %3140 = vmatmul.mubr.f32.gmra.mrb[0].mxu0 %v1387
      %v3141 = vpop.f32.mrb[0].mxu0
      %v3142 = vadd.f32 0.0, %v3141
      %v3143 = vpop.f32.mrb[0].mxu0
      %3144 = vmatprep.mubr.f32.mxu0 0.0
      %3145 = vmatmul.mubr.f32.gmra.mrb[0].mxu0 %v1389
      %v3146 = vpop.f32.mrb[0].mxu0
      %v3147 = vadd.f32 0.0, %v3146
      %v3148 = vpop.f32.mrb[0].mxu0
      %3149 = vmatprep.mubr.f32.mxu0 0.0
      %3150 = vmatmul.mubr.f32.gmra.mrb[0].mxu0 %v1391
      %v3151 = vpop.f32.mrb[0].mxu0
      %v3152 = vadd.f32 0.0, %v3151
      %v3153 = vpop.f32.mrb[0].mxu0
      %3154 = vmatprep.mubr.f32.mxu0 0.0
      %3155 = vmatmul.mubr.f32.gmra.mrb[0].mxu0 %v1393
      %v3156 = vpop.f32.mrb[0].mxu0
      %v3157 = vadd.f32 0.0, %v3156
      %v3158 = vpop.f32.mrb[0].mxu0
      %3159 = vmatprep.mubr.f32.mxu0 0.0
      %3160 = vmatmul.mubr.f32.gmra.mrb[0].mxu0 %v1395
      %v3161 = vpop.f32.mrb[0].mxu0
      %v3162 = vadd.f32 0.0, %v3161
      %v3163 = vpop.f32.mrb[0].mxu0
      %3164 = vmatprep.mubr.f32.mxu0 0.0
      %3165 = vmatmul.mubr.f32.gmra.mrb[0].mxu0 %v1397
      %v3166 = vpop.f32.mrb[0].mxu0
      %v3167 = vadd.f32 0.0, %v3166
      %v3168 = vpop.f32.mrb[0].mxu0
      %3169 = vmatprep.mubr.f32.mxu0 0.0
      %3170 = vmatmul.mubr.f32.gmra.mrb[0].mxu0 %v1399
      %v3171 = vpop.f32.mrb[0].mxu0
      %v3172 = vadd.f32 0.0, %v3171
      %v3173 = vpop.f32.mrb[0].mxu0
      %3174 = vmatprep.mubr.f32.mxu0 0.0
      %3175 = vmatmul.mubr.f32.gmra.mrb[0].mxu0 %v1401
      %v3176 = vpop.f32.mrb[0].mxu0
      %v3177 = vadd.f32 0.0, %v3176
      %v3178 = vpop.f32.mrb[0].mxu0
      %3179 = vmatprep.mubr.f32.mxu0 0.0
      %3180 = vmatmul.mubr.f32.gmra.mrb[0].mxu0 %v1403
      %v3181 = vpop.f32.mrb[0].mxu0
      %v3182 = vadd.f32 0.0, %v3181
      %v3183 = vpop.f32.mrb[0].mxu0
      %3184 = vmatprep.mubr.f32.mxu0 0.0
      %3185 = vmatmul.mubr.f32.gmra.mrb[0].mxu0 %v1341
      %v3186 = vpop.f32.mrb[0].mxu0
      %v3187 = vadd.f32 0.0, %v3186
      %v3188 = vpop.f32.mrb[0].mxu0
      %3189 = vmatprep.mubr.f32.mxu0 0.0
      %3190 = vmatmul.mubr.f32.gmra.mrb[0].mxu0 %v1343
      %v3191 = vpop.f32.mrb[0].mxu0
      %v3192 = vadd.f32 0.0, %v3191
      %v3193 = vpop.f32.mrb[0].mxu0
      %3194 = vmatprep.mubr.f32.mxu0 0.0
      %3195 = vmatmul.mubr.f32.gmra.mrb[0].mxu0 %v1345
      %v3196 = vpop.f32.mrb[0].mxu0
      %v3197 = vadd.f32 0.0, %v3196
      %v3198 = vpop.f32.mrb[0].mxu0
      %3199 = vmatprep.mubr.f32.mxu0 0.0
      %3200 = vmatmul.mubr.f32.gmra.mrb[0].mxu0 %v1347
      %v3201 = vpop.f32.mrb[0].mxu0
      %v3202 = vadd.f32 0.0, %v3201
      %v3203 = vpop.f32.mrb[0].mxu0
      %3204 = vdwg.mxu0
      %v3205 = vadd.f32 %v2943, %v3047
      %v3206 = vadd.f32 %v2944, %v3052
      %v3207 = vadd.f32 %v2945, %v3057
      %v3208 = vadd.f32 %v2946, %v3062
      %v3209 = vadd.f32 %v2947, %v3067
      %v3210 = vadd.f32 %v2948, %v3072
      %v3211 = vadd.f32 %v2949, %v3077
      %v3212 = vadd.f32 %v2950, %v3082
      %v3213 = vadd.f32 %v2951, %v3087
      %v3214 = vadd.f32 %v2952, %v3092
      %v3215 = vadd.f32 %v2953, %v3097
      %v3216 = vadd.f32 %v2954, %v3102
      %v3217 = vadd.f32 %v2955, %v3107
      %v3218 = vadd.f32 %v2956, %v3112
      %v3219 = vadd.f32 %v2957, %v3117
      %v3220 = vadd.f32 %v2958, %v3122
      %v3221 = vadd.f32 %v2959, %v3127
      %v3222 = vadd.f32 %v2960, %v3132
      %v3223 = vadd.f32 %v2961, %v3137
      %v3224 = vadd.f32 %v2962, %v3142
      %v3225 = vadd.f32 %v2963, %v3147
      %v3226 = vadd.f32 %v2964, %v3152
      %v3227 = vadd.f32 %v2965, %v3157
      %v3228 = vadd.f32 %v2966, %v3162
      %v3229 = vadd.f32 %v2967, %v3167
      %v3230 = vadd.f32 %v2968, %v3172
      %v3231 = vadd.f32 %v2969, %v3177
      %v3232 = vadd.f32 %v2970, %v3182
      %v3233 = vadd.f32 %v2971, %v3187
      %v3234 = vadd.f32 %v2972, %v3192
      %v3235 = vadd.f32 %v2973, %v3197
      %v3236 = vadd.f32 %v2974, %v3202
      %v3237 = vld [vmem:[%s4] sm:$0x1]
      %v3239 = vlaneseq
      %v3240 = vshrl.u32 %v3239, 7
      %v3241 = vsub.s32 0, %v3240
      %v3242 = vrot.slane %v3237, %v3241
      %v3244 = vmul.f32 %v3205, %v3242
      %v3245 = vmul.f32 %v3206, %v3242
      %v3246 = vmul.f32 %v3207, %v3242
      %v3247 = vmul.f32 %v3208, %v3242
      %v3248 = vmul.f32 %v3209, %v3242
      %v3249 = vmul.f32 %v3210, %v3242
      %v3250 = vmul.f32 %v3211, %v3242
      %v3251 = vmul.f32 %v3212, %v3242
      %v3252 = vmul.f32 %v3213, %v3242
      %v3253 = vmul.f32 %v3214, %v3242
      %v3254 = vmul.f32 %v3215, %v3242
      %v3255 = vmul.f32 %v3216, %v3242
      %v3256 = vmul.f32 %v3217, %v3242
      %v3257 = vmul.f32 %v3218, %v3242
      %v3258 = vmul.f32 %v3219, %v3242
      %v3259 = vmul.f32 %v3220, %v3242
      %v3260 = vmul.f32 %v3221, %v3242
      %v3261 = vmul.f32 %v3222, %v3242
      %v3262 = vmul.f32 %v3223, %v3242
      %v3263 = vmul.f32 %v3224, %v3242
      %v3264 = vmul.f32 %v3225, %v3242
      %v3265 = vmul.f32 %v3226, %v3242
      %v3266 = vmul.f32 %v3227, %v3242
      %v3267 = vmul.f32 %v3228, %v3242
      %v3268 = vmul.f32 %v3229, %v3242
      %v3269 = vmul.f32 %v3230, %v3242
      %v3270 = vmul.f32 %v3231, %v3242
      %v3271 = vmul.f32 %v3232, %v3242
      %v3272 = vmul.f32 %v3233, %v3242
      %v3273 = vmul.f32 %v3234, %v3242
      %v3274 = vmul.f32 %v3235, %v3242
      %v3275 = vmul.f32 %v3236, %v3242
      %v3276 = vld [vmem:[%s5] sm:$0x1]
      %v3278 = vlaneseq
      %v3279 = vshrl.u32 %v3278, 7
      %v3280 = vsub.s32 0, %v3279
      %v3281 = vrot.slane %v3276, %v3280
      %v3283 = vadd.f32 %v3244, %v3281
      %v3284 = vadd.f32 %v3245, %v3281
      %v3285 = vadd.f32 %v3246, %v3281
      %v3286 = vadd.f32 %v3247, %v3281
      %v3287 = vadd.f32 %v3248, %v3281
      %v3288 = vadd.f32 %v3249, %v3281
      %v3289 = vadd.f32 %v3250, %v3281
      %v3290 = vadd.f32 %v3251, %v3281
      %v3291 = vadd.f32 %v3252, %v3281
      %v3292 = vadd.f32 %v3253, %v3281
      %v3293 = vadd.f32 %v3254, %v3281
      %v3294 = vadd.f32 %v3255, %v3281
      %v3295 = vadd.f32 %v3256, %v3281
      %v3296 = vadd.f32 %v3257, %v3281
      %v3297 = vadd.f32 %v3258, %v3281
      %v3298 = vadd.f32 %v3259, %v3281
      %v3299 = vadd.f32 %v3260, %v3281
      %v3300 = vadd.f32 %v3261, %v3281
      %v3301 = vadd.f32 %v3262, %v3281
      %v3302 = vadd.f32 %v3263, %v3281
      %v3303 = vadd.f32 %v3264, %v3281
      %v3304 = vadd.f32 %v3265, %v3281
      %v3305 = vadd.f32 %v3266, %v3281
      %v3306 = vadd.f32 %v3267, %v3281
      %v3307 = vadd.f32 %v3268, %v3281
      %v3308 = vadd.f32 %v3269, %v3281
      %v3309 = vadd.f32 %v3270, %v3281
      %v3310 = vadd.f32 %v3271, %v3281
      %v3311 = vadd.f32 %v3272, %v3281
      %v3312 = vadd.f32 %v3273, %v3281
      %v3313 = vadd.f32 %v3274, %v3281
      %v3314 = vadd.f32 %v3275, %v3281
      %v3315 = vmax.f32 %v3283, 0.0
      %v3316 = vmax.f32 %v3284, 0.0
      %v3317 = vmax.f32 %v3285, 0.0
      %v3318 = vmax.f32 %v3286, 0.0
      %v3319 = vmax.f32 %v3287, 0.0
      %v3320 = vmax.f32 %v3288, 0.0
      %v3321 = vmax.f32 %v3289, 0.0
      %v3322 = vmax.f32 %v3290, 0.0
      %v3323 = vmax.f32 %v3291, 0.0
      %v3324 = vmax.f32 %v3292, 0.0
      %v3325 = vmax.f32 %v3293, 0.0
      %v3326 = vmax.f32 %v3294, 0.0
      %v3327 = vmax.f32 %v3295, 0.0
      %v3328 = vmax.f32 %v3296, 0.0
      %v3329 = vmax.f32 %v3297, 0.0
      %v3330 = vmax.f32 %v3298, 0.0
      %v3331 = vmax.f32 %v3299, 0.0
      %v3332 = vmax.f32 %v3300, 0.0
      %v3333 = vmax.f32 %v3301, 0.0
      %v3334 = vmax.f32 %v3302, 0.0
      %v3335 = vmax.f32 %v3303, 0.0
      %v3336 = vmax.f32 %v3304, 0.0
      %v3337 = vmax.f32 %v3305, 0.0
      %v3338 = vmax.f32 %v3306, 0.0
      %v3339 = vmax.f32 %v3307, 0.0
      %v3340 = vmax.f32 %v3308, 0.0
      %v3341 = vmax.f32 %v3309, 0.0
      %v3342 = vmax.f32 %v3310, 0.0
      %v3343 = vmax.f32 %v3311, 0.0
      %v3344 = vmax.f32 %v3312, 0.0
      %v3345 = vmax.f32 %v3313, 0.0
      %v3346 = vmax.f32 %v3314, 0.0
      %v3363 = vrot.slane %v3346, 7
      %v3364 = vrot.slane %v3316, 7
      %v3365 = vrot.slane %v3318, 7
      %v3366 = vrot.slane %v3320, 7
      %v3367 = vrot.slane %v3322, 7
      %v3368 = vrot.slane %v3324, 7
      %v3369 = vrot.slane %v3326, 7
      %v3370 = vrot.slane %v3328, 7
      %v3371 = vrot.slane %v3330, 7
      %v3372 = vrot.slane %v3332, 7
      %v3373 = vrot.slane %v3334, 7
      %v3374 = vrot.slane %v3336, 7
      %v3375 = vrot.slane %v3338, 7
      %v3376 = vrot.slane %v3340, 7
      %v3377 = vrot.slane %v3342, 7
      %v3378 = vrot.slane %v3344, 7
      %v3411 = vrot.slane %v3345, 7
      %v3412 = vsel %vm539, %v3411, %v3363
      %v3413 = vrot.slane %v3315, 7
      %v3414 = vsel %vm539, %v3413, %v3364
      %v3415 = vrot.slane %v3317, 7
      %v3416 = vsel %vm539, %v3415, %v3365
      %v3417 = vrot.slane %v3319, 7
      %v3418 = vsel %vm539, %v3417, %v3366
      %v3419 = vrot.slane %v3321, 7
      %v3420 = vsel %vm539, %v3419, %v3367
      %v3421 = vrot.slane %v3323, 7
      %v3422 = vsel %vm539, %v3421, %v3368
      %v3423 = vrot.slane %v3325, 7
      %v3424 = vsel %vm539, %v3423, %v3369
      %v3425 = vrot.slane %v3327, 7
      %v3426 = vsel %vm539, %v3425, %v3370
      %v3427 = vrot.slane %v3329, 7
      %v3428 = vsel %vm539, %v3427, %v3371
      %v3429 = vrot.slane %v3331, 7
      %v3430 = vsel %vm539, %v3429, %v3372
      %v3431 = vrot.slane %v3333, 7
      %v3432 = vsel %vm539, %v3431, %v3373
      %v3433 = vrot.slane %v3335, 7
      %v3434 = vsel %vm539, %v3433, %v3374
      %v3435 = vrot.slane %v3337, 7
      %v3436 = vsel %vm539, %v3435, %v3375
      %v3437 = vrot.slane %v3339, 7
      %v3438 = vsel %vm539, %v3437, %v3376
      %v3439 = vrot.slane %v3341, 7
      %v3440 = vsel %vm539, %v3439, %v3377
      %v3441 = vrot.slane %v3343, 7
      %v3442 = vsel %vm539, %v3441, %v3378
      %v3459 = vsel %vm539, %v3363, %v3411
      %v3460 = vsel %vm539, %v3364, %v3413
      %v3461 = vsel %vm539, %v3365, %v3415
      %v3462 = vsel %vm539, %v3366, %v3417
      %v3463 = vsel %vm539, %v3367, %v3419
      %v3464 = vsel %vm539, %v3368, %v3421
      %v3465 = vsel %vm539, %v3369, %v3423
      %v3466 = vsel %vm539, %v3370, %v3425
      %v3467 = vsel %vm539, %v3371, %v3427
      %v3468 = vsel %vm539, %v3372, %v3429
      %v3469 = vsel %vm539, %v3373, %v3431
      %v3470 = vsel %vm539, %v3374, %v3433
      %v3471 = vsel %vm539, %v3375, %v3435
      %v3472 = vsel %vm539, %v3376, %v3437
      %v3473 = vsel %vm539, %v3377, %v3439
      %v3474 = vsel %vm539, %v3378, %v3441
      %v3475 = vld [vmem:[%s6] sm:$0x3]
      %v3492 = vrot.slane %v3459, 1
      %v3493 = vrot.slane %v3412, 1
      %v3494 = vsel %vm621, %v3492, %v3493
      %v3495 = vsel %vm621, %v3493, %v3492
      %v3496 = vrot.slane %v3460, 1
      %v3497 = vrot.slane %v3414, 1
      %v3498 = vsel %vm621, %v3496, %v3497
      %v3499 = vsel %vm621, %v3497, %v3496
      %v3500 = vrot.slane %v3461, 1
      %v3501 = vrot.slane %v3416, 1
      %v3502 = vsel %vm621, %v3500, %v3501
      %v3503 = vsel %vm621, %v3501, %v3500
      %v3504 = vrot.slane %v3462, 1
      %v3505 = vrot.slane %v3418, 1
      %v3506 = vsel %vm621, %v3504, %v3505
      %v3507 = vsel %vm621, %v3505, %v3504
      %v3508 = vrot.slane %v3463, 1
      %v3509 = vrot.slane %v3420, 1
      %v3510 = vsel %vm621, %v3508, %v3509
      %v3511 = vsel %vm621, %v3509, %v3508
      %v3512 = vrot.slane %v3464, 1
      %v3513 = vrot.slane %v3422, 1
      %v3514 = vsel %vm621, %v3512, %v3513
      %v3515 = vsel %vm621, %v3513, %v3512
      %v3516 = vrot.slane %v3465, 1
      %v3517 = vrot.slane %v3424, 1
      %v3518 = vsel %vm621, %v3516, %v3517
      %v3519 = vsel %vm621, %v3517, %v3516
      %v3520 = vrot.slane %v3466, 1
      %v3521 = vrot.slane %v3426, 1
      %v3522 = vsel %vm621, %v3520, %v3521
      %v3523 = vsel %vm621, %v3521, %v3520
      %v3524 = vrot.slane %v3467, 1
      %v3525 = vrot.slane %v3428, 1
      %v3526 = vsel %vm621, %v3524, %v3525
      %v3527 = vsel %vm621, %v3525, %v3524
      %v3528 = vrot.slane %v3468, 1
      %v3529 = vrot.slane %v3430, 1
      %v3530 = vsel %vm621, %v3528, %v3529
      %v3531 = vsel %vm621, %v3529, %v3528
      %v3532 = vrot.slane %v3469, 1
      %v3533 = vrot.slane %v3432, 1
      %v3534 = vsel %vm621, %v3532, %v3533
      %v3535 = vsel %vm621, %v3533, %v3532
      %v3536 = vrot.slane %v3470, 1
      %v3537 = vrot.slane %v3434, 1
      %v3538 = vsel %vm621, %v3536, %v3537
      %v3539 = vsel %vm621, %v3537, %v3536
      %v3540 = vrot.slane %v3471, 1
      %v3541 = vrot.slane %v3436, 1
      %v3542 = vsel %vm621, %v3540, %v3541
      %v3543 = vsel %vm621, %v3541, %v3540
      %v3544 = vrot.slane %v3472, 1
      %v3545 = vrot.slane %v3438, 1
      %v3546 = vsel %vm621, %v3544, %v3545
      %v3547 = vsel %vm621, %v3545, %v3544
      %v3548 = vrot.slane %v3473, 1
      %v3549 = vrot.slane %v3440, 1
      %v3550 = vsel %vm621, %v3548, %v3549
      %v3551 = vsel %vm621, %v3549, %v3548
      %v3552 = vrot.slane %v3474, 1
      %v3553 = vrot.slane %v3442, 1
      %v3554 = vsel %vm621, %v3552, %v3553
      %v3555 = vsel %vm621, %v3553, %v3552
      %s3556 = scalar_lea.vmem %s6, 2
      %v3557 = vld [vmem:[%s3556] sm:$0x3]
      %vm3558 = vcmask 15360
      %v3559 = vsel %vm3558, %v3494, 0
      %v3561 = vsel %vm3558, %v3495, 0
      %v3563 = vsel %vm3558, %v3498, 0
      %v3565 = vsel %vm3558, %v3499, 0
      %v3567 = vsel %vm3558, %v3502, 0
      %v3569 = vsel %vm3558, %v3503, 0
      %v3571 = vsel %vm3558, %v3506, 0
      %v3573 = vsel %vm3558, %v3507, 0
      %v3575 = vsel %vm3558, %v3510, 0
      %v3577 = vsel %vm3558, %v3511, 0
      %v3579 = vsel %vm3558, %v3514, 0
      %v3581 = vsel %vm3558, %v3515, 0
      %v3583 = vsel %vm3558, %v3518, 0
      %v3585 = vsel %vm3558, %v3519, 0
      %v3587 = vsel %vm3558, %v3522, 0
      %v3589 = vsel %vm3558, %v3523, 0
      %v3591 = vsel %vm3558, %v3526, 0
      %v3593 = vsel %vm3558, %v3527, 0
      %v3595 = vsel %vm3558, %v3530, 0
      %v3597 = vsel %vm3558, %v3531, 0
      %v3599 = vsel %vm3558, %v3534, 0
      %v3601 = vsel %vm3558, %v3535, 0
      %v3603 = vsel %vm3558, %v3538, 0
      %v3605 = vsel %vm3558, %v3539, 0
      %v3607 = vsel %vm3558, %v3542, 0
      %v3609 = vsel %vm3558, %v3543, 0
      %v3611 = vsel %vm3558, %v3546, 0
      %v3613 = vsel %vm3558, %v3547, 0
      %v3615 = vsel %vm3558, %v3550, 0
      %v3617 = vsel %vm3558, %v3551, 0
      %v3619 = vsel %vm3558, %v3554, 0
      %v3621 = vsel %vm3558, %v3555, 0
      %vm3623 = vcmask 1041408
      %v3625 = vsel %vm3623, %v3557, 0
      %3627 = vmatprep.subr.mxu0 0.0
      %3628 = vmatpush1.msra.mxu0 %v3625
      %3629 = vmatprep.subr.mxu0 0.0
      %3630 = vmatpush1.msra.mxu0 0.0
      %3631 = vmatprep.subr.mxu0 0.0
      %3632 = vmatpush1.msra.mxu0 0.0
      %3633 = vmatprep.subr.mxu0 0.0
      %3634 = vmatpush1.msra.mxu0 0.0
      %3635 = vmatprep.subr.mxu0 0.0
      %3636 = vmatpush1.msra.mxu0 0.0
      %3637 = vmatprep.subr.mxu0 0.0
      %3638 = vmatpush1.msra.mxu0 0.0
      %3639 = vmatprep.subr.mxu0 0.0
      %3640 = vmatpush1.msra.mxu0 0.0
      %3641 = vmatprep.subr.mxu0 0.0
      %3642 = vmatpush1.msra.mxu0 0.0
      %3643 = vmatprep.subr.mxu0 0.0
      %3644 = vmatpush1.msra.mxu0 0.0
      %3645 = vmatprep.subr.mxu0 0.0
      %3646 = vmatpush1.msra.mxu0 0.0
      %3647 = vmatprep.subr.mxu0 0.0
      %3648 = vmatpush1.msra.mxu0 0.0
      %3649 = vmatprep.subr.mxu0 0.0
      %3650 = vmatpush1.msra.mxu0 0.0
      %3651 = vmatprep.subr.mxu0 0.0
      %3652 = vmatpush1.msra.mxu0 0.0
      %3653 = vmatprep.subr.mxu0 0.0
      %3654 = vmatpush1.msra.mxu0 0.0
      %3655 = vmatprep.subr.mxu0 0.0
      %3656 = vmatpush1.msra.mxu0 0.0
      %3657 = vmatprep.subr.mxu0 0.0
      %3658 = vmatpush1.msra.mxu0 0.0
      %3659 = vmatprep.subr.mxu0 0.0
      %3660 = vmatpush1.msra.mxu0 0.0
      %3661 = vmatprep.subr.mxu0 0.0
      %3662 = vmatpush1.msra.mxu0 0.0
      %3663 = vmatprep.subr.mxu0 0.0
      %3664 = vmatpush1.msra.mxu0 0.0
      %3665 = vmatprep.subr.mxu0 0.0
      %3666 = vmatpush1.msra.mxu0 0.0
      %3667 = vmatprep.subr.mxu0 0.0
      %3668 = vmatpush1.msra.mxu0 0.0
      %3669 = vmatprep.subr.mxu0 0.0
      %3670 = vmatpush1.msra.mxu0 0.0
      %3671 = vmatprep.subr.mxu0 0.0
      %3672 = vmatpush1.msra.mxu0 0.0
      %3673 = vmatprep.subr.mxu0 0.0
      %3674 = vmatpush1.msra.mxu0 0.0
      %3675 = vmatprep.subr.mxu0 0.0
      %3676 = vmatpush1.msra.mxu0 0.0
      %3677 = vmatprep.subr.mxu0 0.0
      %3678 = vmatpush1.msra.mxu0 0.0
      %3679 = vmatprep.subr.mxu0 0.0
      %3680 = vmatpush1.msra.mxu0 0.0
      %3681 = vmatprep.subr.mxu0 0.0
      %3682 = vmatpush1.msra.mxu0 0.0
      %3683 = vmatprep.subr.mxu0 0.0
      %3684 = vmatpush1.msra.mxu0 0.0
      %3685 = vmatprep.subr.mxu0 0.0
      %3686 = vmatpush1.msra.mxu0 0.0
      %3687 = vmatprep.subr.mxu0 0.0
      %3688 = vmatpush1.msra.mxu0 0.0
      %3689 = vmatprep.subr.mxu0 0.0
      %3690 = vmatpush1.msra.mxu0 0.0
      %3691 = vmatprep.mubr.f32.mxu0 0.0
      %3692 = vmatmul.mubr.f32.gmra.mrb[0].mxu0 %v3559
      %v3693 = vpop.f32.mrb[0].mxu0
      %v3694 = vadd.f32 0.0, %v3693
      %v3695 = vpop.f32.mrb[0].mxu0
      %3696 = vmatprep.mubr.f32.mxu0 0.0
      %3697 = vmatmul.mubr.f32.gmra.mrb[0].mxu0 %v3561
      %v3698 = vpop.f32.mrb[0].mxu0
      %v3699 = vadd.f32 0.0, %v3698
      %v3700 = vpop.f32.mrb[0].mxu0
      %3701 = vmatprep.mubr.f32.mxu0 0.0
      %3702 = vmatmul.mubr.f32.gmra.mrb[0].mxu0 %v3563
      %v3703 = vpop.f32.mrb[0].mxu0
      %v3704 = vadd.f32 0.0, %v3703
      %v3705 = vpop.f32.mrb[0].mxu0
      %3706 = vmatprep.mubr.f32.mxu0 0.0
      %3707 = vmatmul.mubr.f32.gmra.mrb[0].mxu0 %v3565
      %v3708 = vpop.f32.mrb[0].mxu0
      %v3709 = vadd.f32 0.0, %v3708
      %v3710 = vpop.f32.mrb[0].mxu0
      %3711 = vmatprep.mubr.f32.mxu0 0.0
      %3712 = vmatmul.mubr.f32.gmra.mrb[0].mxu0 %v3567
      %v3713 = vpop.f32.mrb[0].mxu0
      %v3714 = vadd.f32 0.0, %v3713
      %v3715 = vpop.f32.mrb[0].mxu0
      %3716 = vmatprep.mubr.f32.mxu0 0.0
      %3717 = vmatmul.mubr.f32.gmra.mrb[0].mxu0 %v3569
      %v3718 = vpop.f32.mrb[0].mxu0
      %v3719 = vadd.f32 0.0, %v3718
      %v3720 = vpop.f32.mrb[0].mxu0
      %3721 = vmatprep.mubr.f32.mxu0 0.0
      %3722 = vmatmul.mubr.f32.gmra.mrb[0].mxu0 %v3571
      %v3723 = vpop.f32.mrb[0].mxu0
      %v3724 = vadd.f32 0.0, %v3723
      %v3725 = vpop.f32.mrb[0].mxu0
      %3726 = vmatprep.mubr.f32.mxu0 0.0
      %3727 = vmatmul.mubr.f32.gmra.mrb[0].mxu0 %v3573
      %v3728 = vpop.f32.mrb[0].mxu0
      %v3729 = vadd.f32 0.0, %v3728
      %v3730 = vpop.f32.mrb[0].mxu0
      %3731 = vmatprep.mubr.f32.mxu0 0.0
      %3732 = vmatmul.mubr.f32.gmra.mrb[0].mxu0 %v3575
      %v3733 = vpop.f32.mrb[0].mxu0
      %v3734 = vadd.f32 0.0, %v3733
      %v3735 = vpop.f32.mrb[0].mxu0
      %3736 = vmatprep.mubr.f32.mxu0 0.0
      %3737 = vmatmul.mubr.f32.gmra.mrb[0].mxu0 %v3577
      %v3738 = vpop.f32.mrb[0].mxu0
      %v3739 = vadd.f32 0.0, %v3738
      %v3740 = vpop.f32.mrb[0].mxu0
      %3741 = vmatprep.mubr.f32.mxu0 0.0
      %3742 = vmatmul.mubr.f32.gmra.mrb[0].mxu0 %v3579
      %v3743 = vpop.f32.mrb[0].mxu0
      %v3744 = vadd.f32 0.0, %v3743
      %v3745 = vpop.f32.mrb[0].mxu0
      %3746 = vmatprep.mubr.f32.mxu0 0.0
      %3747 = vmatmul.mubr.f32.gmra.mrb[0].mxu0 %v3581
      %v3748 = vpop.f32.mrb[0].mxu0
      %v3749 = vadd.f32 0.0, %v3748
      %v3750 = vpop.f32.mrb[0].mxu0
      %3751 = vmatprep.mubr.f32.mxu0 0.0
      %3752 = vmatmul.mubr.f32.gmra.mrb[0].mxu0 %v3583
      %v3753 = vpop.f32.mrb[0].mxu0
      %v3754 = vadd.f32 0.0, %v3753
      %v3755 = vpop.f32.mrb[0].mxu0
      %3756 = vmatprep.mubr.f32.mxu0 0.0
      %3757 = vmatmul.mubr.f32.gmra.mrb[0].mxu0 %v3585
      %v3758 = vpop.f32.mrb[0].mxu0
      %v3759 = vadd.f32 0.0, %v3758
      %v3760 = vpop.f32.mrb[0].mxu0
      %3761 = vmatprep.mubr.f32.mxu0 0.0
      %3762 = vmatmul.mubr.f32.gmra.mrb[0].mxu0 %v3587
      %v3763 = vpop.f32.mrb[0].mxu0
      %v3764 = vadd.f32 0.0, %v3763
      %v3765 = vpop.f32.mrb[0].mxu0
      %3766 = vmatprep.mubr.f32.mxu0 0.0
      %3767 = vmatmul.mubr.f32.gmra.mrb[0].mxu0 %v3589
      %v3768 = vpop.f32.mrb[0].mxu0
      %v3769 = vadd.f32 0.0, %v3768
      %v3770 = vpop.f32.mrb[0].mxu0
      %3771 = vmatprep.mubr.f32.mxu0 0.0
      %3772 = vmatmul.mubr.f32.gmra.mrb[0].mxu0 %v3591
      %v3773 = vpop.f32.mrb[0].mxu0
      %v3774 = vadd.f32 0.0, %v3773
      %v3775 = vpop.f32.mrb[0].mxu0
      %3776 = vmatprep.mubr.f32.mxu0 0.0
      %3777 = vmatmul.mubr.f32.gmra.mrb[0].mxu0 %v3593
      %v3778 = vpop.f32.mrb[0].mxu0
      %v3779 = vadd.f32 0.0, %v3778
      %v3780 = vpop.f32.mrb[0].mxu0
      %3781 = vmatprep.mubr.f32.mxu0 0.0
      %3782 = vmatmul.mubr.f32.gmra.mrb[0].mxu0 %v3595
      %v3783 = vpop.f32.mrb[0].mxu0
      %v3784 = vadd.f32 0.0, %v3783
      %v3785 = vpop.f32.mrb[0].mxu0
      %3786 = vmatprep.mubr.f32.mxu0 0.0
      %3787 = vmatmul.mubr.f32.gmra.mrb[0].mxu0 %v3597
      %v3788 = vpop.f32.mrb[0].mxu0
      %v3789 = vadd.f32 0.0, %v3788
      %v3790 = vpop.f32.mrb[0].mxu0
      %3791 = vmatprep.mubr.f32.mxu0 0.0
      %3792 = vmatmul.mubr.f32.gmra.mrb[0].mxu0 %v3599
      %v3793 = vpop.f32.mrb[0].mxu0
      %v3794 = vadd.f32 0.0, %v3793
      %v3795 = vpop.f32.mrb[0].mxu0
      %3796 = vmatprep.mubr.f32.mxu0 0.0
      %3797 = vmatmul.mubr.f32.gmra.mrb[0].mxu0 %v3601
      %v3798 = vpop.f32.mrb[0].mxu0
      %v3799 = vadd.f32 0.0, %v3798
      %v3800 = vpop.f32.mrb[0].mxu0
      %3801 = vmatprep.mubr.f32.mxu0 0.0
      %3802 = vmatmul.mubr.f32.gmra.mrb[0].mxu0 %v3603
      %v3803 = vpop.f32.mrb[0].mxu0
      %v3804 = vadd.f32 0.0, %v3803
      %v3805 = vpop.f32.mrb[0].mxu0
      %3806 = vmatprep.mubr.f32.mxu0 0.0
      %3807 = vmatmul.mubr.f32.gmra.mrb[0].mxu0 %v3605
      %v3808 = vpop.f32.mrb[0].mxu0
      %v3809 = vadd.f32 0.0, %v3808
      %v3810 = vpop.f32.mrb[0].mxu0
      %3811 = vmatprep.mubr.f32.mxu0 0.0
      %3812 = vmatmul.mubr.f32.gmra.mrb[0].mxu0 %v3607
      %v3813 = vpop.f32.mrb[0].mxu0
      %v3814 = vadd.f32 0.0, %v3813
      %v3815 = vpop.f32.mrb[0].mxu0
      %3816 = vmatprep.mubr.f32.mxu0 0.0
      %3817 = vmatmul.mubr.f32.gmra.mrb[0].mxu0 %v3609
      %v3818 = vpop.f32.mrb[0].mxu0
      %v3819 = vadd.f32 0.0, %v3818
      %v3820 = vpop.f32.mrb[0].mxu0
      %3821 = vmatprep.mubr.f32.mxu0 0.0
      %3822 = vmatmul.mubr.f32.gmra.mrb[0].mxu0 %v3611
      %v3823 = vpop.f32.mrb[0].mxu0
      %v3824 = vadd.f32 0.0, %v3823
      %v3825 = vpop.f32.mrb[0].mxu0
      %3826 = vmatprep.mubr.f32.mxu0 0.0
      %3827 = vmatmul.mubr.f32.gmra.mrb[0].mxu0 %v3613
      %v3828 = vpop.f32.mrb[0].mxu0
      %v3829 = vadd.f32 0.0, %v3828
      %v3830 = vpop.f32.mrb[0].mxu0
      %3831 = vmatprep.mubr.f32.mxu0 0.0
      %3832 = vmatmul.mubr.f32.gmra.mrb[0].mxu0 %v3615
      %v3833 = vpop.f32.mrb[0].mxu0
      %v3834 = vadd.f32 0.0, %v3833
      %v3835 = vpop.f32.mrb[0].mxu0
      %3836 = vmatprep.mubr.f32.mxu0 0.0
      %3837 = vmatmul.mubr.f32.gmra.mrb[0].mxu0 %v3617
      %v3838 = vpop.f32.mrb[0].mxu0
      %v3839 = vadd.f32 0.0, %v3838
      %v3840 = vpop.f32.mrb[0].mxu0
      %3841 = vmatprep.mubr.f32.mxu0 0.0
      %3842 = vmatmul.mubr.f32.gmra.mrb[0].mxu0 %v3619
      %v3843 = vpop.f32.mrb[0].mxu0
      %v3844 = vadd.f32 0.0, %v3843
      %v3845 = vpop.f32.mrb[0].mxu0
      %3846 = vmatprep.mubr.f32.mxu0 0.0
      %3847 = vmatmul.mubr.f32.gmra.mrb[0].mxu0 %v3621
      %v3848 = vpop.f32.mrb[0].mxu0
      %v3849 = vadd.f32 0.0, %v3848
      %v3850 = vpop.f32.mrb[0].mxu0
      %3851 = vdwg.mxu0
      %v3852 = vsel %vm3558, %v3459, 0
      %v3854 = vsel %vm3558, %v3412, 0
      %v3856 = vsel %vm3558, %v3460, 0
      %v3858 = vsel %vm3558, %v3414, 0
      %v3860 = vsel %vm3558, %v3461, 0
      %v3862 = vsel %vm3558, %v3416, 0
      %v3864 = vsel %vm3558, %v3462, 0
      %v3866 = vsel %vm3558, %v3418, 0
      %v3868 = vsel %vm3558, %v3463, 0
      %v3870 = vsel %vm3558, %v3420, 0
      %v3872 = vsel %vm3558, %v3464, 0
      %v3874 = vsel %vm3558, %v3422, 0
      %v3876 = vsel %vm3558, %v3465, 0
      %v3878 = vsel %vm3558, %v3424, 0
      %v3880 = vsel %vm3558, %v3466, 0
      %v3882 = vsel %vm3558, %v3426, 0
      %v3884 = vsel %vm3558, %v3467, 0
      %v3886 = vsel %vm3558, %v3428, 0
      %v3888 = vsel %vm3558, %v3468, 0
      %v3890 = vsel %vm3558, %v3430, 0
      %v3892 = vsel %vm3558, %v3469, 0
      %v3894 = vsel %vm3558, %v3432, 0
      %v3896 = vsel %vm3558, %v3470, 0
      %v3898 = vsel %vm3558, %v3434, 0
      %v3900 = vsel %vm3558, %v3471, 0
      %v3902 = vsel %vm3558, %v3436, 0
      %v3904 = vsel %vm3558, %v3472, 0
      %v3906 = vsel %vm3558, %v3438, 0
      %v3908 = vsel %vm3558, %v3473, 0
      %v3910 = vsel %vm3558, %v3440, 0
      %v3912 = vsel %vm3558, %v3474, 0
      %v3914 = vsel %vm3558, %v3442, 0
      %v3917 = vsel %vm3623, %v3475, 0
      %3919 = vmatprep.subr.mxu0 0.0
      %3920 = vmatpush1.msra.mxu0 %v3917
      %3921 = vmatprep.subr.mxu0 0.0
      %3922 = vmatpush1.msra.mxu0 0.0
      %3923 = vmatprep.subr.mxu0 0.0
      %3924 = vmatpush1.msra.mxu0 0.0
      %3925 = vmatprep.subr.mxu0 0.0
      %3926 = vmatpush1.msra.mxu0 0.0
      %3927 = vmatprep.subr.mxu0 0.0
      %3928 = vmatpush1.msra.mxu0 0.0
      %3929 = vmatprep.subr.mxu0 0.0
      %3930 = vmatpush1.msra.mxu0 0.0
      %3931 = vmatprep.subr.mxu0 0.0
      %3932 = vmatpush1.msra.mxu0 0.0
      %3933 = vmatprep.subr.mxu0 0.0
      %3934 = vmatpush1.msra.mxu0 0.0
      %3935 = vmatprep.subr.mxu0 0.0
      %3936 = vmatpush1.msra.mxu0 0.0
      %3937 = vmatprep.subr.mxu0 0.0
      %3938 = vmatpush1.msra.mxu0 0.0
      %3939 = vmatprep.subr.mxu0 0.0
      %3940 = vmatpush1.msra.mxu0 0.0
      %3941 = vmatprep.subr.mxu0 0.0
      %3942 = vmatpush1.msra.mxu0 0.0
      %3943 = vmatprep.subr.mxu0 0.0
      %3944 = vmatpush1.msra.mxu0 0.0
      %3945 = vmatprep.subr.mxu0 0.0
      %3946 = vmatpush1.msra.mxu0 0.0
      %3947 = vmatprep.subr.mxu0 0.0
      %3948 = vmatpush1.msra.mxu0 0.0
      %3949 = vmatprep.subr.mxu0 0.0
      %3950 = vmatpush1.msra.mxu0 0.0
      %3951 = vmatprep.subr.mxu0 0.0
      %3952 = vmatpush1.msra.mxu0 0.0
      %3953 = vmatprep.subr.mxu0 0.0
      %3954 = vmatpush1.msra.mxu0 0.0
      %3955 = vmatprep.subr.mxu0 0.0
      %3956 = vmatpush1.msra.mxu0 0.0
      %3957 = vmatprep.subr.mxu0 0.0
      %3958 = vmatpush1.msra.mxu0 0.0
      %3959 = vmatprep.subr.mxu0 0.0
      %3960 = vmatpush1.msra.mxu0 0.0
      %3961 = vmatprep.subr.mxu0 0.0
      %3962 = vmatpush1.msra.mxu0 0.0
      %3963 = vmatprep.subr.mxu0 0.0
      %3964 = vmatpush1.msra.mxu0 0.0
      %3965 = vmatprep.subr.mxu0 0.0
      %3966 = vmatpush1.msra.mxu0 0.0
      %3967 = vmatprep.subr.mxu0 0.0
      %3968 = vmatpush1.msra.mxu0 0.0
      %3969 = vmatprep.subr.mxu0 0.0
      %3970 = vmatpush1.msra.mxu0 0.0
      %3971 = vmatprep.subr.mxu0 0.0
      %3972 = vmatpush1.msra.mxu0 0.0
      %3973 = vmatprep.subr.mxu0 0.0
      %3974 = vmatpush1.msra.mxu0 0.0
      %3975 = vmatprep.subr.mxu0 0.0
      %3976 = vmatpush1.msra.mxu0 0.0
      %3977 = vmatprep.subr.mxu0 0.0
      %3978 = vmatpush1.msra.mxu0 0.0
      %3979 = vmatprep.subr.mxu0 0.0
      %3980 = vmatpush1.msra.mxu0 0.0
      %3981 = vmatprep.subr.mxu0 0.0
      %3982 = vmatpush1.msra.mxu0 0.0
      %3983 = vmatprep.mubr.f32.mxu0 0.0
      %3984 = vmatmul.mubr.f32.gmra.mrb[0].mxu0 %v3852
      %v3985 = vpop.f32.mrb[0].mxu0
      %v3986 = vadd.f32 %v3694, %v3985
      %v3987 = vpop.f32.mrb[0].mxu0
      %3988 = vmatprep.mubr.f32.mxu0 0.0
      %3989 = vmatmul.mubr.f32.gmra.mrb[0].mxu0 %v3854
      %v3990 = vpop.f32.mrb[0].mxu0
      %v3991 = vadd.f32 %v3699, %v3990
      %v3992 = vpop.f32.mrb[0].mxu0
      %3993 = vmatprep.mubr.f32.mxu0 0.0
      %3994 = vmatmul.mubr.f32.gmra.mrb[0].mxu0 %v3856
      %v3995 = vpop.f32.mrb[0].mxu0
      %v3996 = vadd.f32 %v3704, %v3995
      %v3997 = vpop.f32.mrb[0].mxu0
      %3998 = vmatprep.mubr.f32.mxu0 0.0
      %3999 = vmatmul.mubr.f32.gmra.mrb[0].mxu0 %v3858
      %v4000 = vpop.f32.mrb[0].mxu0
      %v4001 = vadd.f32 %v3709, %v4000
      %v4002 = vpop.f32.mrb[0].mxu0
      %4003 = vmatprep.mubr.f32.mxu0 0.0
      %4004 = vmatmul.mubr.f32.gmra.mrb[0].mxu0 %v3860
      %v4005 = vpop.f32.mrb[0].mxu0
      %v4006 = vadd.f32 %v3714, %v4005
      %v4007 = vpop.f32.mrb[0].mxu0
      %4008 = vmatprep.mubr.f32.mxu0 0.0
      %4009 = vmatmul.mubr.f32.gmra.mrb[0].mxu0 %v3862
      %v4010 = vpop.f32.mrb[0].mxu0
      %v4011 = vadd.f32 %v3719, %v4010
      %v4012 = vpop.f32.mrb[0].mxu0
      %4013 = vmatprep.mubr.f32.mxu0 0.0
      %4014 = vmatmul.mubr.f32.gmra.mrb[0].mxu0 %v3864
      %v4015 = vpop.f32.mrb[0].mxu0
      %v4016 = vadd.f32 %v3724, %v4015
      %v4017 = vpop.f32.mrb[0].mxu0
      %4018 = vmatprep.mubr.f32.mxu0 0.0
      %4019 = vmatmul.mubr.f32.gmra.mrb[0].mxu0 %v3866
      %v4020 = vpop.f32.mrb[0].mxu0
      %v4021 = vadd.f32 %v3729, %v4020
      %v4022 = vpop.f32.mrb[0].mxu0
      %4023 = vmatprep.mubr.f32.mxu0 0.0
      %4024 = vmatmul.mubr.f32.gmra.mrb[0].mxu0 %v3868
      %v4025 = vpop.f32.mrb[0].mxu0
      %v4026 = vadd.f32 %v3734, %v4025
      %v4027 = vpop.f32.mrb[0].mxu0
      %4028 = vmatprep.mubr.f32.mxu0 0.0
      %4029 = vmatmul.mubr.f32.gmra.mrb[0].mxu0 %v3870
      %v4030 = vpop.f32.mrb[0].mxu0
      %v4031 = vadd.f32 %v3739, %v4030
      %v4032 = vpop.f32.mrb[0].mxu0
      %4033 = vmatprep.mubr.f32.mxu0 0.0
      %4034 = vmatmul.mubr.f32.gmra.mrb[0].mxu0 %v3872
      %v4035 = vpop.f32.mrb[0].mxu0
      %v4036 = vadd.f32 %v3744, %v4035
      %v4037 = vpop.f32.mrb[0].mxu0
      %4038 = vmatprep.mubr.f32.mxu0 0.0
      %4039 = vmatmul.mubr.f32.gmra.mrb[0].mxu0 %v3874
      %v4040 = vpop.f32.mrb[0].mxu0
      %v4041 = vadd.f32 %v3749, %v4040
      %v4042 = vpop.f32.mrb[0].mxu0
      %4043 = vmatprep.mubr.f32.mxu0 0.0
      %4044 = vmatmul.mubr.f32.gmra.mrb[0].mxu0 %v3876
      %v4045 = vpop.f32.mrb[0].mxu0
      %v4046 = vadd.f32 %v3754, %v4045
      %v4047 = vpop.f32.mrb[0].mxu0
      %4048 = vmatprep.mubr.f32.mxu0 0.0
      %4049 = vmatmul.mubr.f32.gmra.mrb[0].mxu0 %v3878
      %v4050 = vpop.f32.mrb[0].mxu0
      %v4051 = vadd.f32 %v3759, %v4050
      %v4052 = vpop.f32.mrb[0].mxu0
      %4053 = vmatprep.mubr.f32.mxu0 0.0
      %4054 = vmatmul.mubr.f32.gmra.mrb[0].mxu0 %v3880
      %v4055 = vpop.f32.mrb[0].mxu0
      %v4056 = vadd.f32 %v3764, %v4055
      %v4057 = vpop.f32.mrb[0].mxu0
      %4058 = vmatprep.mubr.f32.mxu0 0.0
      %4059 = vmatmul.mubr.f32.gmra.mrb[0].mxu0 %v3882
      %v4060 = vpop.f32.mrb[0].mxu0
      %v4061 = vadd.f32 %v3769, %v4060
      %v4062 = vpop.f32.mrb[0].mxu0
      %4063 = vmatprep.mubr.f32.mxu0 0.0
      %4064 = vmatmul.mubr.f32.gmra.mrb[0].mxu0 %v3884
      %v4065 = vpop.f32.mrb[0].mxu0
      %v4066 = vadd.f32 %v3774, %v4065
      %v4067 = vpop.f32.mrb[0].mxu0
      %4068 = vmatprep.mubr.f32.mxu0 0.0
      %4069 = vmatmul.mubr.f32.gmra.mrb[0].mxu0 %v3886
      %v4070 = vpop.f32.mrb[0].mxu0
      %v4071 = vadd.f32 %v3779, %v4070
      %v4072 = vpop.f32.mrb[0].mxu0
      %4073 = vmatprep.mubr.f32.mxu0 0.0
      %4074 = vmatmul.mubr.f32.gmra.mrb[0].mxu0 %v3888
      %v4075 = vpop.f32.mrb[0].mxu0
      %v4076 = vadd.f32 %v3784, %v4075
      %v4077 = vpop.f32.mrb[0].mxu0
      %4078 = vmatprep.mubr.f32.mxu0 0.0
      %4079 = vmatmul.mubr.f32.gmra.mrb[0].mxu0 %v3890
      %v4080 = vpop.f32.mrb[0].mxu0
      %v4081 = vadd.f32 %v3789, %v4080
      %v4082 = vpop.f32.mrb[0].mxu0
      %4083 = vmatprep.mubr.f32.mxu0 0.0
      %4084 = vmatmul.mubr.f32.gmra.mrb[0].mxu0 %v3892
      %v4085 = vpop.f32.mrb[0].mxu0
      %v4086 = vadd.f32 %v3794, %v4085
      %v4087 = vpop.f32.mrb[0].mxu0
      %4088 = vmatprep.mubr.f32.mxu0 0.0
      %4089 = vmatmul.mubr.f32.gmra.mrb[0].mxu0 %v3894
      %v4090 = vpop.f32.mrb[0].mxu0
      %v4091 = vadd.f32 %v3799, %v4090
      %v4092 = vpop.f32.mrb[0].mxu0
      %4093 = vmatprep.mubr.f32.mxu0 0.0
      %4094 = vmatmul.mubr.f32.gmra.mrb[0].mxu0 %v3896
      %v4095 = vpop.f32.mrb[0].mxu0
      %v4096 = vadd.f32 %v3804, %v4095
      %v4097 = vpop.f32.mrb[0].mxu0
      %4098 = vmatprep.mubr.f32.mxu0 0.0
      %4099 = vmatmul.mubr.f32.gmra.mrb[0].mxu0 %v3898
      %v4100 = vpop.f32.mrb[0].mxu0
      %v4101 = vadd.f32 %v3809, %v4100
      %v4102 = vpop.f32.mrb[0].mxu0
      %4103 = vmatprep.mubr.f32.mxu0 0.0
      %4104 = vmatmul.mubr.f32.gmra.mrb[0].mxu0 %v3900
      %v4105 = vpop.f32.mrb[0].mxu0
      %v4106 = vadd.f32 %v3814, %v4105
      %v4107 = vpop.f32.mrb[0].mxu0
      %4108 = vmatprep.mubr.f32.mxu0 0.0
      %4109 = vmatmul.mubr.f32.gmra.mrb[0].mxu0 %v3902
      %v4110 = vpop.f32.mrb[0].mxu0
      %v4111 = vadd.f32 %v3819, %v4110
      %v4112 = vpop.f32.mrb[0].mxu0
      %4113 = vmatprep.mubr.f32.mxu0 0.0
      %4114 = vmatmul.mubr.f32.gmra.mrb[0].mxu0 %v3904
      %v4115 = vpop.f32.mrb[0].mxu0
      %v4116 = vadd.f32 %v3824, %v4115
      %v4117 = vpop.f32.mrb[0].mxu0
      %4118 = vmatprep.mubr.f32.mxu0 0.0
      %4119 = vmatmul.mubr.f32.gmra.mrb[0].mxu0 %v3906
      %v4120 = vpop.f32.mrb[0].mxu0
      %v4121 = vadd.f32 %v3829, %v4120
      %v4122 = vpop.f32.mrb[0].mxu0
      %4123 = vmatprep.mubr.f32.mxu0 0.0
      %4124 = vmatmul.mubr.f32.gmra.mrb[0].mxu0 %v3908
      %v4125 = vpop.f32.mrb[0].mxu0
      %v4126 = vadd.f32 %v3834, %v4125
      %v4127 = vpop.f32.mrb[0].mxu0
      %4128 = vmatprep.mubr.f32.mxu0 0.0
      %4129 = vmatmul.mubr.f32.gmra.mrb[0].mxu0 %v3910
      %v4130 = vpop.f32.mrb[0].mxu0
      %v4131 = vadd.f32 %v3839, %v4130
      %v4132 = vpop.f32.mrb[0].mxu0
      %4133 = vmatprep.mubr.f32.mxu0 0.0
      %4134 = vmatmul.mubr.f32.gmra.mrb[0].mxu0 %v3912
      %v4135 = vpop.f32.mrb[0].mxu0
      %v4136 = vadd.f32 %v3844, %v4135
      %v4137 = vpop.f32.mrb[0].mxu0
      %4138 = vmatprep.mubr.f32.mxu0 0.0
      %4139 = vmatmul.mubr.f32.gmra.mrb[0].mxu0 %v3914
      %v4140 = vpop.f32.mrb[0].mxu0
      %v4141 = vadd.f32 %v3849, %v4140
      %v4142 = vpop.f32.mrb[0].mxu0
      %4143 = vdwg.mxu0
      %v4144 = vrot.slane %v3459, 2
      %v4145 = vrot.slane %v3412, 2
      %v4146 = vsel %vm1274, %v4144, %v4145
      %v4147 = vsel %vm1274, %v4145, %v4144
      %v4148 = vrot.slane %v3460, 2
      %v4149 = vrot.slane %v3414, 2
      %v4150 = vsel %vm1274, %v4148, %v4149
      %v4151 = vsel %vm1274, %v4149, %v4148
      %v4152 = vrot.slane %v3461, 2
      %v4153 = vrot.slane %v3416, 2
      %v4154 = vsel %vm1274, %v4152, %v4153
      %v4155 = vsel %vm1274, %v4153, %v4152
      %v4156 = vrot.slane %v3462, 2
      %v4157 = vrot.slane %v3418, 2
      %v4158 = vsel %vm1274, %v4156, %v4157
      %v4159 = vsel %vm1274, %v4157, %v4156
      %v4160 = vrot.slane %v3463, 2
      %v4161 = vrot.slane %v3420, 2
      %v4162 = vsel %vm1274, %v4160, %v4161
      %v4163 = vsel %vm1274, %v4161, %v4160
      %v4164 = vrot.slane %v3464, 2
      %v4165 = vrot.slane %v3422, 2
      %v4166 = vsel %vm1274, %v4164, %v4165
      %v4167 = vsel %vm1274, %v4165, %v4164
      %v4168 = vrot.slane %v3465, 2
      %v4169 = vrot.slane %v3424, 2
      %v4170 = vsel %vm1274, %v4168, %v4169
      %v4171 = vsel %vm1274, %v4169, %v4168
      %v4172 = vrot.slane %v3466, 2
      %v4173 = vrot.slane %v3426, 2
      %v4174 = vsel %vm1274, %v4172, %v4173
      %v4175 = vsel %vm1274, %v4173, %v4172
      %v4176 = vrot.slane %v3467, 2
      %v4177 = vrot.slane %v3428, 2
      %v4178 = vsel %vm1274, %v4176, %v4177
      %v4179 = vsel %vm1274, %v4177, %v4176
      %v4180 = vrot.slane %v3468, 2
      %v4181 = vrot.slane %v3430, 2
      %v4182 = vsel %vm1274, %v4180, %v4181
      %v4183 = vsel %vm1274, %v4181, %v4180
      %v4184 = vrot.slane %v3469, 2
      %v4185 = vrot.slane %v3432, 2
      %v4186 = vsel %vm1274, %v4184, %v4185
      %v4187 = vsel %vm1274, %v4185, %v4184
      %v4188 = vrot.slane %v3470, 2
      %v4189 = vrot.slane %v3434, 2
      %v4190 = vsel %vm1274, %v4188, %v4189
      %v4191 = vsel %vm1274, %v4189, %v4188
      %v4192 = vrot.slane %v3471, 2
      %v4193 = vrot.slane %v3436, 2
      %v4194 = vsel %vm1274, %v4192, %v4193
      %v4195 = vsel %vm1274, %v4193, %v4192
      %v4196 = vrot.slane %v3472, 2
      %v4197 = vrot.slane %v3438, 2
      %v4198 = vsel %vm1274, %v4196, %v4197
      %v4199 = vsel %vm1274, %v4197, %v4196
      %v4200 = vrot.slane %v3473, 2
      %v4201 = vrot.slane %v3440, 2
      %v4202 = vsel %vm1274, %v4200, %v4201
      %v4203 = vsel %vm1274, %v4201, %v4200
      %v4204 = vrot.slane %v3474, 2
      %v4205 = vrot.slane %v3442, 2
      %v4206 = vsel %vm1274, %v4204, %v4205
      %v4207 = vsel %vm1274, %v4205, %v4204
      %s4208 = scalar_lea.vmem %s6, 4
      %v4209 = vld [vmem:[%s4208] sm:$0x3]
      %v4210 = vsel %vm3558, %v4146, 0
      %v4212 = vsel %vm3558, %v4147, 0
      %v4214 = vsel %vm3558, %v4150, 0
      %v4216 = vsel %vm3558, %v4151, 0
      %v4218 = vsel %vm3558, %v4154, 0
      %v4220 = vsel %vm3558, %v4155, 0
      %v4222 = vsel %vm3558, %v4158, 0
      %v4224 = vsel %vm3558, %v4159, 0
      %v4226 = vsel %vm3558, %v4162, 0
      %v4228 = vsel %vm3558, %v4163, 0
      %v4230 = vsel %vm3558, %v4166, 0
      %v4232 = vsel %vm3558, %v4167, 0
      %v4234 = vsel %vm3558, %v4170, 0
      %v4236 = vsel %vm3558, %v4171, 0
      %v4238 = vsel %vm3558, %v4174, 0
      %v4240 = vsel %vm3558, %v4175, 0
      %v4242 = vsel %vm3558, %v4178, 0
      %v4244 = vsel %vm3558, %v4179, 0
      %v4246 = vsel %vm3558, %v4182, 0
      %v4248 = vsel %vm3558, %v4183, 0
      %v4250 = vsel %vm3558, %v4186, 0
      %v4252 = vsel %vm3558, %v4187, 0
      %v4254 = vsel %vm3558, %v4190, 0
      %v4256 = vsel %vm3558, %v4191, 0
      %v4258 = vsel %vm3558, %v4194, 0
      %v4260 = vsel %vm3558, %v4195, 0
      %v4262 = vsel %vm3558, %v4198, 0
      %v4264 = vsel %vm3558, %v4199, 0
      %v4266 = vsel %vm3558, %v4202, 0
      %v4268 = vsel %vm3558, %v4203, 0
      %v4270 = vsel %vm3558, %v4206, 0
      %v4272 = vsel %vm3558, %v4207, 0
      %v4275 = vsel %vm3623, %v4209, 0
      %4277 = vmatprep.subr.mxu0 0.0
      %4278 = vmatpush1.msra.mxu0 %v4275
      %4279 = vmatprep.subr.mxu0 0.0
      %4280 = vmatpush1.msra.mxu0 0.0
      %4281 = vmatprep.subr.mxu0 0.0
      %4282 = vmatpush1.msra.mxu0 0.0
      %4283 = vmatprep.subr.mxu0 0.0
      %4284 = vmatpush1.msra.mxu0 0.0
      %4285 = vmatprep.subr.mxu0 0.0
      %4286 = vmatpush1.msra.mxu0 0.0
      %4287 = vmatprep.subr.mxu0 0.0
      %4288 = vmatpush1.msra.mxu0 0.0
      %4289 = vmatprep.subr.mxu0 0.0
      %4290 = vmatpush1.msra.mxu0 0.0
      %4291 = vmatprep.subr.mxu0 0.0
      %4292 = vmatpush1.msra.mxu0 0.0
      %4293 = vmatprep.subr.mxu0 0.0
      %4294 = vmatpush1.msra.mxu0 0.0
      %4295 = vmatprep.subr.mxu0 0.0
      %4296 = vmatpush1.msra.mxu0 0.0
      %4297 = vmatprep.subr.mxu0 0.0
      %4298 = vmatpush1.msra.mxu0 0.0
      %4299 = vmatprep.subr.mxu0 0.0
      %4300 = vmatpush1.msra.mxu0 0.0
      %4301 = vmatprep.subr.mxu0 0.0
      %4302 = vmatpush1.msra.mxu0 0.0
      %4303 = vmatprep.subr.mxu0 0.0
      %4304 = vmatpush1.msra.mxu0 0.0
      %4305 = vmatprep.subr.mxu0 0.0
      %4306 = vmatpush1.msra.mxu0 0.0
      %4307 = vmatprep.subr.mxu0 0.0
      %4308 = vmatpush1.msra.mxu0 0.0
      %4309 = vmatprep.subr.mxu0 0.0
      %4310 = vmatpush1.msra.mxu0 0.0
      %4311 = vmatprep.subr.mxu0 0.0
      %4312 = vmatpush1.msra.mxu0 0.0
      %4313 = vmatprep.subr.mxu0 0.0
      %4314 = vmatpush1.msra.mxu0 0.0
      %4315 = vmatprep.subr.mxu0 0.0
      %4316 = vmatpush1.msra.mxu0 0.0
      %4317 = vmatprep.subr.mxu0 0.0
      %4318 = vmatpush1.msra.mxu0 0.0
      %4319 = vmatprep.subr.mxu0 0.0
      %4320 = vmatpush1.msra.mxu0 0.0
      %4321 = vmatprep.subr.mxu0 0.0
      %4322 = vmatpush1.msra.mxu0 0.0
      %4323 = vmatprep.subr.mxu0 0.0
      %4324 = vmatpush1.msra.mxu0 0.0
      %4325 = vmatprep.subr.mxu0 0.0
      %4326 = vmatpush1.msra.mxu0 0.0
      %4327 = vmatprep.subr.mxu0 0.0
      %4328 = vmatpush1.msra.mxu0 0.0
      %4329 = vmatprep.subr.mxu0 0.0
      %4330 = vmatpush1.msra.mxu0 0.0
      %4331 = vmatprep.subr.mxu0 0.0
      %4332 = vmatpush1.msra.mxu0 0.0
      %4333 = vmatprep.subr.mxu0 0.0
      %4334 = vmatpush1.msra.mxu0 0.0
      %4335 = vmatprep.subr.mxu0 0.0
      %4336 = vmatpush1.msra.mxu0 0.0
      %4337 = vmatprep.subr.mxu0 0.0
      %4338 = vmatpush1.msra.mxu0 0.0
      %4339 = vmatprep.subr.mxu0 0.0
      %4340 = vmatpush1.msra.mxu0 0.0
      %4341 = vmatprep.mubr.f32.mxu0 0.0
      %4342 = vmatmul.mubr.f32.gmra.mrb[0].mxu0 %v4210
      %v4343 = vpop.f32.mrb[0].mxu0
      %v4344 = vadd.f32 0.0, %v4343
      %v4345 = vpop.f32.mrb[0].mxu0
      %4346 = vmatprep.mubr.f32.mxu0 0.0
      %4347 = vmatmul.mubr.f32.gmra.mrb[0].mxu0 %v4212
      %v4348 = vpop.f32.mrb[0].mxu0
      %v4349 = vadd.f32 0.0, %v4348
      %v4350 = vpop.f32.mrb[0].mxu0
      %4351 = vmatprep.mubr.f32.mxu0 0.0
      %4352 = vmatmul.mubr.f32.gmra.mrb[0].mxu0 %v4214
      %v4353 = vpop.f32.mrb[0].mxu0
      %v4354 = vadd.f32 0.0, %v4353
      %v4355 = vpop.f32.mrb[0].mxu0
      %4356 = vmatprep.mubr.f32.mxu0 0.0
      %4357 = vmatmul.mubr.f32.gmra.mrb[0].mxu0 %v4216
      %v4358 = vpop.f32.mrb[0].mxu0
      %v4359 = vadd.f32 0.0, %v4358
      %v4360 = vpop.f32.mrb[0].mxu0
      %4361 = vmatprep.mubr.f32.mxu0 0.0
      %4362 = vmatmul.mubr.f32.gmra.mrb[0].mxu0 %v4218
      %v4363 = vpop.f32.mrb[0].mxu0
      %v4364 = vadd.f32 0.0, %v4363
      %v4365 = vpop.f32.mrb[0].mxu0
      %4366 = vmatprep.mubr.f32.mxu0 0.0
      %4367 = vmatmul.mubr.f32.gmra.mrb[0].mxu0 %v4220
      %v4368 = vpop.f32.mrb[0].mxu0
      %v4369 = vadd.f32 0.0, %v4368
      %v4370 = vpop.f32.mrb[0].mxu0
      %4371 = vmatprep.mubr.f32.mxu0 0.0
      %4372 = vmatmul.mubr.f32.gmra.mrb[0].mxu0 %v4222
      %v4373 = vpop.f32.mrb[0].mxu0
      %v4374 = vadd.f32 0.0, %v4373
      %v4375 = vpop.f32.mrb[0].mxu0
      %4376 = vmatprep.mubr.f32.mxu0 0.0
      %4377 = vmatmul.mubr.f32.gmra.mrb[0].mxu0 %v4224
      %v4378 = vpop.f32.mrb[0].mxu0
      %v4379 = vadd.f32 0.0, %v4378
      %v4380 = vpop.f32.mrb[0].mxu0
      %4381 = vmatprep.mubr.f32.mxu0 0.0
      %4382 = vmatmul.mubr.f32.gmra.mrb[0].mxu0 %v4226
      %v4383 = vpop.f32.mrb[0].mxu0
      %v4384 = vadd.f32 0.0, %v4383
      %v4385 = vpop.f32.mrb[0].mxu0
      %4386 = vmatprep.mubr.f32.mxu0 0.0
      %4387 = vmatmul.mubr.f32.gmra.mrb[0].mxu0 %v4228
      %v4388 = vpop.f32.mrb[0].mxu0
      %v4389 = vadd.f32 0.0, %v4388
      %v4390 = vpop.f32.mrb[0].mxu0
      %4391 = vmatprep.mubr.f32.mxu0 0.0
      %4392 = vmatmul.mubr.f32.gmra.mrb[0].mxu0 %v4230
      %v4393 = vpop.f32.mrb[0].mxu0
      %v4394 = vadd.f32 0.0, %v4393
      %v4395 = vpop.f32.mrb[0].mxu0
      %4396 = vmatprep.mubr.f32.mxu0 0.0
      %4397 = vmatmul.mubr.f32.gmra.mrb[0].mxu0 %v4232
      %v4398 = vpop.f32.mrb[0].mxu0
      %v4399 = vadd.f32 0.0, %v4398
      %v4400 = vpop.f32.mrb[0].mxu0
      %4401 = vmatprep.mubr.f32.mxu0 0.0
      %4402 = vmatmul.mubr.f32.gmra.mrb[0].mxu0 %v4234
      %v4403 = vpop.f32.mrb[0].mxu0
      %v4404 = vadd.f32 0.0, %v4403
      %v4405 = vpop.f32.mrb[0].mxu0
      %4406 = vmatprep.mubr.f32.mxu0 0.0
      %4407 = vmatmul.mubr.f32.gmra.mrb[0].mxu0 %v4236
      %v4408 = vpop.f32.mrb[0].mxu0
      %v4409 = vadd.f32 0.0, %v4408
      %v4410 = vpop.f32.mrb[0].mxu0
      %4411 = vmatprep.mubr.f32.mxu0 0.0
      %4412 = vmatmul.mubr.f32.gmra.mrb[0].mxu0 %v4238
      %v4413 = vpop.f32.mrb[0].mxu0
      %v4414 = vadd.f32 0.0, %v4413
      %v4415 = vpop.f32.mrb[0].mxu0
      %4416 = vmatprep.mubr.f32.mxu0 0.0
      %4417 = vmatmul.mubr.f32.gmra.mrb[0].mxu0 %v4240
      %v4418 = vpop.f32.mrb[0].mxu0
      %v4419 = vadd.f32 0.0, %v4418
      %v4420 = vpop.f32.mrb[0].mxu0
      %4421 = vmatprep.mubr.f32.mxu0 0.0
      %4422 = vmatmul.mubr.f32.gmra.mrb[0].mxu0 %v4242
      %v4423 = vpop.f32.mrb[0].mxu0
      %v4424 = vadd.f32 0.0, %v4423
      %v4425 = vpop.f32.mrb[0].mxu0
      %4426 = vmatprep.mubr.f32.mxu0 0.0
      %4427 = vmatmul.mubr.f32.gmra.mrb[0].mxu0 %v4244
      %v4428 = vpop.f32.mrb[0].mxu0
      %v4429 = vadd.f32 0.0, %v4428
      %v4430 = vpop.f32.mrb[0].mxu0
      %4431 = vmatprep.mubr.f32.mxu0 0.0
      %4432 = vmatmul.mubr.f32.gmra.mrb[0].mxu0 %v4246
      %v4433 = vpop.f32.mrb[0].mxu0
      %v4434 = vadd.f32 0.0, %v4433
      %v4435 = vpop.f32.mrb[0].mxu0
      %4436 = vmatprep.mubr.f32.mxu0 0.0
      %4437 = vmatmul.mubr.f32.gmra.mrb[0].mxu0 %v4248
      %v4438 = vpop.f32.mrb[0].mxu0
      %v4439 = vadd.f32 0.0, %v4438
      %v4440 = vpop.f32.mrb[0].mxu0
      %4441 = vmatprep.mubr.f32.mxu0 0.0
      %4442 = vmatmul.mubr.f32.gmra.mrb[0].mxu0 %v4250
      %v4443 = vpop.f32.mrb[0].mxu0
      %v4444 = vadd.f32 0.0, %v4443
      %v4445 = vpop.f32.mrb[0].mxu0
      %4446 = vmatprep.mubr.f32.mxu0 0.0
      %4447 = vmatmul.mubr.f32.gmra.mrb[0].mxu0 %v4252
      %v4448 = vpop.f32.mrb[0].mxu0
      %v4449 = vadd.f32 0.0, %v4448
      %v4450 = vpop.f32.mrb[0].mxu0
      %4451 = vmatprep.mubr.f32.mxu0 0.0
      %4452 = vmatmul.mubr.f32.gmra.mrb[0].mxu0 %v4254
      %v4453 = vpop.f32.mrb[0].mxu0
      %v4454 = vadd.f32 0.0, %v4453
      %v4455 = vpop.f32.mrb[0].mxu0
      %4456 = vmatprep.mubr.f32.mxu0 0.0
      %4457 = vmatmul.mubr.f32.gmra.mrb[0].mxu0 %v4256
      %v4458 = vpop.f32.mrb[0].mxu0
      %v4459 = vadd.f32 0.0, %v4458
      %v4460 = vpop.f32.mrb[0].mxu0
      %4461 = vmatprep.mubr.f32.mxu0 0.0
      %4462 = vmatmul.mubr.f32.gmra.mrb[0].mxu0 %v4258
      %v4463 = vpop.f32.mrb[0].mxu0
      %v4464 = vadd.f32 0.0, %v4463
      %v4465 = vpop.f32.mrb[0].mxu0
      %4466 = vmatprep.mubr.f32.mxu0 0.0
      %4467 = vmatmul.mubr.f32.gmra.mrb[0].mxu0 %v4260
      %v4468 = vpop.f32.mrb[0].mxu0
      %v4469 = vadd.f32 0.0, %v4468
      %v4470 = vpop.f32.mrb[0].mxu0
      %4471 = vmatprep.mubr.f32.mxu0 0.0
      %4472 = vmatmul.mubr.f32.gmra.mrb[0].mxu0 %v4262
      %v4473 = vpop.f32.mrb[0].mxu0
      %v4474 = vadd.f32 0.0, %v4473
      %v4475 = vpop.f32.mrb[0].mxu0
      %4476 = vmatprep.mubr.f32.mxu0 0.0
      %4477 = vmatmul.mubr.f32.gmra.mrb[0].mxu0 %v4264
      %v4478 = vpop.f32.mrb[0].mxu0
      %v4479 = vadd.f32 0.0, %v4478
      %v4480 = vpop.f32.mrb[0].mxu0
      %4481 = vmatprep.mubr.f32.mxu0 0.0
      %4482 = vmatmul.mubr.f32.gmra.mrb[0].mxu0 %v4266
      %v4483 = vpop.f32.mrb[0].mxu0
      %v4484 = vadd.f32 0.0, %v4483
      %v4485 = vpop.f32.mrb[0].mxu0
      %4486 = vmatprep.mubr.f32.mxu0 0.0
      %4487 = vmatmul.mubr.f32.gmra.mrb[0].mxu0 %v4268
      %v4488 = vpop.f32.mrb[0].mxu0
      %v4489 = vadd.f32 0.0, %v4488
      %v4490 = vpop.f32.mrb[0].mxu0
      %4491 = vmatprep.mubr.f32.mxu0 0.0
      %4492 = vmatmul.mubr.f32.gmra.mrb[0].mxu0 %v4270
      %v4493 = vpop.f32.mrb[0].mxu0
      %v4494 = vadd.f32 0.0, %v4493
      %v4495 = vpop.f32.mrb[0].mxu0
      %4496 = vmatprep.mubr.f32.mxu0 0.0
      %4497 = vmatmul.mubr.f32.gmra.mrb[0].mxu0 %v4272
      %v4498 = vpop.f32.mrb[0].mxu0
      %v4499 = vadd.f32 0.0, %v4498
      %v4500 = vpop.f32.mrb[0].mxu0
      %4501 = vdwg.mxu0
      %v4502 = vadd.f32 %v3986, %v4344
      %v4503 = vadd.f32 %v3991, %v4349
      %v4504 = vadd.f32 %v3996, %v4354
      %v4505 = vadd.f32 %v4001, %v4359
      %v4506 = vadd.f32 %v4006, %v4364
      %v4507 = vadd.f32 %v4011, %v4369
      %v4508 = vadd.f32 %v4016, %v4374
      %v4509 = vadd.f32 %v4021, %v4379
      %v4510 = vadd.f32 %v4026, %v4384
      %v4511 = vadd.f32 %v4031, %v4389
      %v4512 = vadd.f32 %v4036, %v4394
      %v4513 = vadd.f32 %v4041, %v4399
      %v4514 = vadd.f32 %v4046, %v4404
      %v4515 = vadd.f32 %v4051, %v4409
      %v4516 = vadd.f32 %v4056, %v4414
      %v4517 = vadd.f32 %v4061, %v4419
      %v4518 = vadd.f32 %v4066, %v4424
      %v4519 = vadd.f32 %v4071, %v4429
      %v4520 = vadd.f32 %v4076, %v4434
      %v4521 = vadd.f32 %v4081, %v4439
      %v4522 = vadd.f32 %v4086, %v4444
      %v4523 = vadd.f32 %v4091, %v4449
      %v4524 = vadd.f32 %v4096, %v4454
      %v4525 = vadd.f32 %v4101, %v4459
      %v4526 = vadd.f32 %v4106, %v4464
      %v4527 = vadd.f32 %v4111, %v4469
      %v4528 = vadd.f32 %v4116, %v4474
      %v4529 = vadd.f32 %v4121, %v4479
      %v4530 = vadd.f32 %v4126, %v4484
      %v4531 = vadd.f32 %v4131, %v4489
      %v4532 = vadd.f32 %v4136, %v4494
      %v4533 = vadd.f32 %v4141, %v4499
      %s4534 = scalar_lea.vmem %s6, 6
      %v4535 = vld [vmem:[%s4534] sm:$0x3]
      %v4537 = vsel %vm3623, %v4535, 0
      %4539 = vmatprep.subr.mxu0 0.0
      %4540 = vmatpush1.msra.mxu0 %v4537
      %4541 = vmatprep.subr.mxu0 0.0
      %4542 = vmatpush1.msra.mxu0 0.0
      %4543 = vmatprep.subr.mxu0 0.0
      %4544 = vmatpush1.msra.mxu0 0.0
      %4545 = vmatprep.subr.mxu0 0.0
      %4546 = vmatpush1.msra.mxu0 0.0
      %4547 = vmatprep.subr.mxu0 0.0
      %4548 = vmatpush1.msra.mxu0 0.0
      %4549 = vmatprep.subr.mxu0 0.0
      %4550 = vmatpush1.msra.mxu0 0.0
      %4551 = vmatprep.subr.mxu0 0.0
      %4552 = vmatpush1.msra.mxu0 0.0
      %4553 = vmatprep.subr.mxu0 0.0
      %4554 = vmatpush1.msra.mxu0 0.0
      %4555 = vmatprep.subr.mxu0 0.0
      %4556 = vmatpush1.msra.mxu0 0.0
      %4557 = vmatprep.subr.mxu0 0.0
      %4558 = vmatpush1.msra.mxu0 0.0
      %4559 = vmatprep.subr.mxu0 0.0
      %4560 = vmatpush1.msra.mxu0 0.0
      %4561 = vmatprep.subr.mxu0 0.0
      %4562 = vmatpush1.msra.mxu0 0.0
      %4563 = vmatprep.subr.mxu0 0.0
      %4564 = vmatpush1.msra.mxu0 0.0
      %4565 = vmatprep.subr.mxu0 0.0
      %4566 = vmatpush1.msra.mxu0 0.0
      %4567 = vmatprep.subr.mxu0 0.0
      %4568 = vmatpush1.msra.mxu0 0.0
      %4569 = vmatprep.subr.mxu0 0.0
      %4570 = vmatpush1.msra.mxu0 0.0
      %4571 = vmatprep.subr.mxu0 0.0
      %4572 = vmatpush1.msra.mxu0 0.0
      %4573 = vmatprep.subr.mxu0 0.0
      %4574 = vmatpush1.msra.mxu0 0.0
      %4575 = vmatprep.subr.mxu0 0.0
      %4576 = vmatpush1.msra.mxu0 0.0
      %4577 = vmatprep.subr.mxu0 0.0
      %4578 = vmatpush1.msra.mxu0 0.0
      %4579 = vmatprep.subr.mxu0 0.0
      %4580 = vmatpush1.msra.mxu0 0.0
      %4581 = vmatprep.subr.mxu0 0.0
      %4582 = vmatpush1.msra.mxu0 0.0
      %4583 = vmatprep.subr.mxu0 0.0
      %4584 = vmatpush1.msra.mxu0 0.0
      %4585 = vmatprep.subr.mxu0 0.0
      %4586 = vmatpush1.msra.mxu0 0.0
      %4587 = vmatprep.subr.mxu0 0.0
      %4588 = vmatpush1.msra.mxu0 0.0
      %4589 = vmatprep.subr.mxu0 0.0
      %4590 = vmatpush1.msra.mxu0 0.0
      %4591 = vmatprep.subr.mxu0 0.0
      %4592 = vmatpush1.msra.mxu0 0.0
      %4593 = vmatprep.subr.mxu0 0.0
      %4594 = vmatpush1.msra.mxu0 0.0
      %4595 = vmatprep.subr.mxu0 0.0
      %4596 = vmatpush1.msra.mxu0 0.0
      %4597 = vmatprep.subr.mxu0 0.0
      %4598 = vmatpush1.msra.mxu0 0.0
      %4599 = vmatprep.subr.mxu0 0.0
      %4600 = vmatpush1.msra.mxu0 0.0
      %4601 = vmatprep.subr.mxu0 0.0
      %4602 = vmatpush1.msra.mxu0 0.0
      %4603 = vmatprep.mubr.f32.mxu0 0.0
      %4604 = vmatmul.mubr.f32.gmra.mrb[0].mxu0 %v3856
      %v4605 = vpop.f32.mrb[0].mxu0
      %v4606 = vadd.f32 0.0, %v4605
      %v4607 = vpop.f32.mrb[0].mxu0
      %4608 = vmatprep.mubr.f32.mxu0 0.0
      %4609 = vmatmul.mubr.f32.gmra.mrb[0].mxu0 %v3858
      %v4610 = vpop.f32.mrb[0].mxu0
      %v4611 = vadd.f32 0.0, %v4610
      %v4612 = vpop.f32.mrb[0].mxu0
      %4613 = vmatprep.mubr.f32.mxu0 0.0
      %4614 = vmatmul.mubr.f32.gmra.mrb[0].mxu0 %v3860
      %v4615 = vpop.f32.mrb[0].mxu0
      %v4616 = vadd.f32 0.0, %v4615
      %v4617 = vpop.f32.mrb[0].mxu0
      %4618 = vmatprep.mubr.f32.mxu0 0.0
      %4619 = vmatmul.mubr.f32.gmra.mrb[0].mxu0 %v3862
      %v4620 = vpop.f32.mrb[0].mxu0
      %v4621 = vadd.f32 0.0, %v4620
      %v4622 = vpop.f32.mrb[0].mxu0
      %4623 = vmatprep.mubr.f32.mxu0 0.0
      %4624 = vmatmul.mubr.f32.gmra.mrb[0].mxu0 %v3864
      %v4625 = vpop.f32.mrb[0].mxu0
      %v4626 = vadd.f32 0.0, %v4625
      %v4627 = vpop.f32.mrb[0].mxu0
      %4628 = vmatprep.mubr.f32.mxu0 0.0
      %4629 = vmatmul.mubr.f32.gmra.mrb[0].mxu0 %v3866
      %v4630 = vpop.f32.mrb[0].mxu0
      %v4631 = vadd.f32 0.0, %v4630
      %v4632 = vpop.f32.mrb[0].mxu0
      %4633 = vmatprep.mubr.f32.mxu0 0.0
      %4634 = vmatmul.mubr.f32.gmra.mrb[0].mxu0 %v3868
      %v4635 = vpop.f32.mrb[0].mxu0
      %v4636 = vadd.f32 0.0, %v4635
      %v4637 = vpop.f32.mrb[0].mxu0
      %4638 = vmatprep.mubr.f32.mxu0 0.0
      %4639 = vmatmul.mubr.f32.gmra.mrb[0].mxu0 %v3870
      %v4640 = vpop.f32.mrb[0].mxu0
      %v4641 = vadd.f32 0.0, %v4640
      %v4642 = vpop.f32.mrb[0].mxu0
      %4643 = vmatprep.mubr.f32.mxu0 0.0
      %4644 = vmatmul.mubr.f32.gmra.mrb[0].mxu0 %v3872
      %v4645 = vpop.f32.mrb[0].mxu0
      %v4646 = vadd.f32 0.0, %v4645
      %v4647 = vpop.f32.mrb[0].mxu0
      %4648 = vmatprep.mubr.f32.mxu0 0.0
      %4649 = vmatmul.mubr.f32.gmra.mrb[0].mxu0 %v3874
      %v4650 = vpop.f32.mrb[0].mxu0
      %v4651 = vadd.f32 0.0, %v4650
      %v4652 = vpop.f32.mrb[0].mxu0
      %4653 = vmatprep.mubr.f32.mxu0 0.0
      %4654 = vmatmul.mubr.f32.gmra.mrb[0].mxu0 %v3876
      %v4655 = vpop.f32.mrb[0].mxu0
      %v4656 = vadd.f32 0.0, %v4655
      %v4657 = vpop.f32.mrb[0].mxu0
      %4658 = vmatprep.mubr.f32.mxu0 0.0
      %4659 = vmatmul.mubr.f32.gmra.mrb[0].mxu0 %v3878
      %v4660 = vpop.f32.mrb[0].mxu0
      %v4661 = vadd.f32 0.0, %v4660
      %v4662 = vpop.f32.mrb[0].mxu0
      %4663 = vmatprep.mubr.f32.mxu0 0.0
      %4664 = vmatmul.mubr.f32.gmra.mrb[0].mxu0 %v3880
      %v4665 = vpop.f32.mrb[0].mxu0
      %v4666 = vadd.f32 0.0, %v4665
      %v4667 = vpop.f32.mrb[0].mxu0
      %4668 = vmatprep.mubr.f32.mxu0 0.0
      %4669 = vmatmul.mubr.f32.gmra.mrb[0].mxu0 %v3882
      %v4670 = vpop.f32.mrb[0].mxu0
      %v4671 = vadd.f32 0.0, %v4670
      %v4672 = vpop.f32.mrb[0].mxu0
      %4673 = vmatprep.mubr.f32.mxu0 0.0
      %4674 = vmatmul.mubr.f32.gmra.mrb[0].mxu0 %v3884
      %v4675 = vpop.f32.mrb[0].mxu0
      %v4676 = vadd.f32 0.0, %v4675
      %v4677 = vpop.f32.mrb[0].mxu0
      %4678 = vmatprep.mubr.f32.mxu0 0.0
      %4679 = vmatmul.mubr.f32.gmra.mrb[0].mxu0 %v3886
      %v4680 = vpop.f32.mrb[0].mxu0
      %v4681 = vadd.f32 0.0, %v4680
      %v4682 = vpop.f32.mrb[0].mxu0
      %4683 = vmatprep.mubr.f32.mxu0 0.0
      %4684 = vmatmul.mubr.f32.gmra.mrb[0].mxu0 %v3888
      %v4685 = vpop.f32.mrb[0].mxu0
      %v4686 = vadd.f32 0.0, %v4685
      %v4687 = vpop.f32.mrb[0].mxu0
      %4688 = vmatprep.mubr.f32.mxu0 0.0
      %4689 = vmatmul.mubr.f32.gmra.mrb[0].mxu0 %v3890
      %v4690 = vpop.f32.mrb[0].mxu0
      %v4691 = vadd.f32 0.0, %v4690
      %v4692 = vpop.f32.mrb[0].mxu0
      %4693 = vmatprep.mubr.f32.mxu0 0.0
      %4694 = vmatmul.mubr.f32.gmra.mrb[0].mxu0 %v3892
      %v4695 = vpop.f32.mrb[0].mxu0
      %v4696 = vadd.f32 0.0, %v4695
      %v4697 = vpop.f32.mrb[0].mxu0
      %4698 = vmatprep.mubr.f32.mxu0 0.0
      %4699 = vmatmul.mubr.f32.gmra.mrb[0].mxu0 %v3894
      %v4700 = vpop.f32.mrb[0].mxu0
      %v4701 = vadd.f32 0.0, %v4700
      %v4702 = vpop.f32.mrb[0].mxu0
      %4703 = vmatprep.mubr.f32.mxu0 0.0
      %4704 = vmatmul.mubr.f32.gmra.mrb[0].mxu0 %v3896
      %v4705 = vpop.f32.mrb[0].mxu0
      %v4706 = vadd.f32 0.0, %v4705
      %v4707 = vpop.f32.mrb[0].mxu0
      %4708 = vmatprep.mubr.f32.mxu0 0.0
      %4709 = vmatmul.mubr.f32.gmra.mrb[0].mxu0 %v3898
      %v4710 = vpop.f32.mrb[0].mxu0
      %v4711 = vadd.f32 0.0, %v4710
      %v4712 = vpop.f32.mrb[0].mxu0
      %4713 = vmatprep.mubr.f32.mxu0 0.0
      %4714 = vmatmul.mubr.f32.gmra.mrb[0].mxu0 %v3900
      %v4715 = vpop.f32.mrb[0].mxu0
      %v4716 = vadd.f32 0.0, %v4715
      %v4717 = vpop.f32.mrb[0].mxu0
      %4718 = vmatprep.mubr.f32.mxu0 0.0
      %4719 = vmatmul.mubr.f32.gmra.mrb[0].mxu0 %v3902
      %v4720 = vpop.f32.mrb[0].mxu0
      %v4721 = vadd.f32 0.0, %v4720
      %v4722 = vpop.f32.mrb[0].mxu0
      %4723 = vmatprep.mubr.f32.mxu0 0.0
      %4724 = vmatmul.mubr.f32.gmra.mrb[0].mxu0 %v3904
      %v4725 = vpop.f32.mrb[0].mxu0
      %v4726 = vadd.f32 0.0, %v4725
      %v4727 = vpop.f32.mrb[0].mxu0
      %4728 = vmatprep.mubr.f32.mxu0 0.0
      %4729 = vmatmul.mubr.f32.gmra.mrb[0].mxu0 %v3906
      %v4730 = vpop.f32.mrb[0].mxu0
      %v4731 = vadd.f32 0.0, %v4730
      %v4732 = vpop.f32.mrb[0].mxu0
      %4733 = vmatprep.mubr.f32.mxu0 0.0
      %4734 = vmatmul.mubr.f32.gmra.mrb[0].mxu0 %v3908
      %v4735 = vpop.f32.mrb[0].mxu0
      %v4736 = vadd.f32 0.0, %v4735
      %v4737 = vpop.f32.mrb[0].mxu0
      %4738 = vmatprep.mubr.f32.mxu0 0.0
      %4739 = vmatmul.mubr.f32.gmra.mrb[0].mxu0 %v3910
      %v4740 = vpop.f32.mrb[0].mxu0
      %v4741 = vadd.f32 0.0, %v4740
      %v4742 = vpop.f32.mrb[0].mxu0
      %4743 = vmatprep.mubr.f32.mxu0 0.0
      %4744 = vmatmul.mubr.f32.gmra.mrb[0].mxu0 %v3912
      %v4745 = vpop.f32.mrb[0].mxu0
      %v4746 = vadd.f32 0.0, %v4745
      %v4747 = vpop.f32.mrb[0].mxu0
      %4748 = vmatprep.mubr.f32.mxu0 0.0
      %4749 = vmatmul.mubr.f32.gmra.mrb[0].mxu0 %v3914
      %v4750 = vpop.f32.mrb[0].mxu0
      %v4751 = vadd.f32 0.0, %v4750
      %v4752 = vpop.f32.mrb[0].mxu0
      %4753 = vmatprep.mubr.f32.mxu0 0.0
      %4754 = vmatmul.mubr.f32.gmra.mrb[0].mxu0 %v3852
      %v4755 = vpop.f32.mrb[0].mxu0
      %v4756 = vadd.f32 0.0, %v4755
      %v4757 = vpop.f32.mrb[0].mxu0
      %4758 = vmatprep.mubr.f32.mxu0 0.0
      %4759 = vmatmul.mubr.f32.gmra.mrb[0].mxu0 %v3854
      %v4760 = vpop.f32.mrb[0].mxu0
      %v4761 = vadd.f32 0.0, %v4760
      %v4762 = vpop.f32.mrb[0].mxu0
      %4763 = vdwg.mxu0
      %v4764 = vadd.f32 %v4502, %v4606
      %v4765 = vadd.f32 %v4503, %v4611
      %v4766 = vadd.f32 %v4504, %v4616
      %v4767 = vadd.f32 %v4505, %v4621
      %v4768 = vadd.f32 %v4506, %v4626
      %v4769 = vadd.f32 %v4507, %v4631
      %v4770 = vadd.f32 %v4508, %v4636
      %v4771 = vadd.f32 %v4509, %v4641
      %v4772 = vadd.f32 %v4510, %v4646
      %v4773 = vadd.f32 %v4511, %v4651
      %v4774 = vadd.f32 %v4512, %v4656
      %v4775 = vadd.f32 %v4513, %v4661
      %v4776 = vadd.f32 %v4514, %v4666
      %v4777 = vadd.f32 %v4515, %v4671
      %v4778 = vadd.f32 %v4516, %v4676
      %v4779 = vadd.f32 %v4517, %v4681
      %v4780 = vadd.f32 %v4518, %v4686
      %v4781 = vadd.f32 %v4519, %v4691
      %v4782 = vadd.f32 %v4520, %v4696
      %v4783 = vadd.f32 %v4521, %v4701
      %v4784 = vadd.f32 %v4522, %v4706
      %v4785 = vadd.f32 %v4523, %v4711
      %v4786 = vadd.f32 %v4524, %v4716
      %v4787 = vadd.f32 %v4525, %v4721
      %v4788 = vadd.f32 %v4526, %v4726
      %v4789 = vadd.f32 %v4527, %v4731
      %v4790 = vadd.f32 %v4528, %v4736
      %v4791 = vadd.f32 %v4529, %v4741
      %v4792 = vadd.f32 %v4530, %v4746
      %v4793 = vadd.f32 %v4531, %v4751
      %v4794 = vadd.f32 %v4532, %v4756
      %v4795 = vadd.f32 %v4533, %v4761
      %s4796 = scalar_lea.vmem %s6, 8
      %v4797 = vld [vmem:[%s4796] sm:$0x3]
      %v4799 = vsel %vm3623, %v4797, 0
      %4801 = vmatprep.subr.mxu0 0.0
      %4802 = vmatpush1.msra.mxu0 %v4799
      %4803 = vmatprep.subr.mxu0 0.0
      %4804 = vmatpush1.msra.mxu0 0.0
      %4805 = vmatprep.subr.mxu0 0.0
      %4806 = vmatpush1.msra.mxu0 0.0
      %4807 = vmatprep.subr.mxu0 0.0
      %4808 = vmatpush1.msra.mxu0 0.0
      %4809 = vmatprep.subr.mxu0 0.0
      %4810 = vmatpush1.msra.mxu0 0.0
      %4811 = vmatprep.subr.mxu0 0.0
      %4812 = vmatpush1.msra.mxu0 0.0
      %4813 = vmatprep.subr.mxu0 0.0
      %4814 = vmatpush1.msra.mxu0 0.0
      %4815 = vmatprep.subr.mxu0 0.0
      %4816 = vmatpush1.msra.mxu0 0.0
      %4817 = vmatprep.subr.mxu0 0.0
      %4818 = vmatpush1.msra.mxu0 0.0
      %4819 = vmatprep.subr.mxu0 0.0
      %4820 = vmatpush1.msra.mxu0 0.0
      %4821 = vmatprep.subr.mxu0 0.0
      %4822 = vmatpush1.msra.mxu0 0.0
      %4823 = vmatprep.subr.mxu0 0.0
      %4824 = vmatpush1.msra.mxu0 0.0
      %4825 = vmatprep.subr.mxu0 0.0
      %4826 = vmatpush1.msra.mxu0 0.0
      %4827 = vmatprep.subr.mxu0 0.0
      %4828 = vmatpush1.msra.mxu0 0.0
      %4829 = vmatprep.subr.mxu0 0.0
      %4830 = vmatpush1.msra.mxu0 0.0
      %4831 = vmatprep.subr.mxu0 0.0
      %4832 = vmatpush1.msra.mxu0 0.0
      %4833 = vmatprep.subr.mxu0 0.0
      %4834 = vmatpush1.msra.mxu0 0.0
      %4835 = vmatprep.subr.mxu0 0.0
      %4836 = vmatpush1.msra.mxu0 0.0
      %4837 = vmatprep.subr.mxu0 0.0
      %4838 = vmatpush1.msra.mxu0 0.0
      %4839 = vmatprep.subr.mxu0 0.0
      %4840 = vmatpush1.msra.mxu0 0.0
      %4841 = vmatprep.subr.mxu0 0.0
      %4842 = vmatpush1.msra.mxu0 0.0
      %4843 = vmatprep.subr.mxu0 0.0
      %4844 = vmatpush1.msra.mxu0 0.0
      %4845 = vmatprep.subr.mxu0 0.0
      %4846 = vmatpush1.msra.mxu0 0.0
      %4847 = vmatprep.subr.mxu0 0.0
      %4848 = vmatpush1.msra.mxu0 0.0
      %4849 = vmatprep.subr.mxu0 0.0
      %4850 = vmatpush1.msra.mxu0 0.0
      %4851 = vmatprep.subr.mxu0 0.0
      %4852 = vmatpush1.msra.mxu0 0.0
      %4853 = vmatprep.subr.mxu0 0.0
      %4854 = vmatpush1.msra.mxu0 0.0
      %4855 = vmatprep.subr.mxu0 0.0
      %4856 = vmatpush1.msra.mxu0 0.0
      %4857 = vmatprep.subr.mxu0 0.0
      %4858 = vmatpush1.msra.mxu0 0.0
      %4859 = vmatprep.subr.mxu0 0.0
      %4860 = vmatpush1.msra.mxu0 0.0
      %4861 = vmatprep.subr.mxu0 0.0
      %4862 = vmatpush1.msra.mxu0 0.0
      %4863 = vmatprep.subr.mxu0 0.0
      %4864 = vmatpush1.msra.mxu0 0.0
      %4865 = vmatprep.mubr.f32.mxu0 0.0
      %4866 = vmatmul.mubr.f32.gmra.mrb[0].mxu0 %v3563
      %v4867 = vpop.f32.mrb[0].mxu0
      %v4868 = vadd.f32 0.0, %v4867
      %v4869 = vpop.f32.mrb[0].mxu0
      %4870 = vmatprep.mubr.f32.mxu0 0.0
      %4871 = vmatmul.mubr.f32.gmra.mrb[0].mxu0 %v3565
      %v4872 = vpop.f32.mrb[0].mxu0
      %v4873 = vadd.f32 0.0, %v4872
      %v4874 = vpop.f32.mrb[0].mxu0
      %4875 = vmatprep.mubr.f32.mxu0 0.0
      %4876 = vmatmul.mubr.f32.gmra.mrb[0].mxu0 %v3567
      %v4877 = vpop.f32.mrb[0].mxu0
      %v4878 = vadd.f32 0.0, %v4877
      %v4879 = vpop.f32.mrb[0].mxu0
      %4880 = vmatprep.mubr.f32.mxu0 0.0
      %4881 = vmatmul.mubr.f32.gmra.mrb[0].mxu0 %v3569
      %v4882 = vpop.f32.mrb[0].mxu0
      %v4883 = vadd.f32 0.0, %v4882
      %v4884 = vpop.f32.mrb[0].mxu0
      %4885 = vmatprep.mubr.f32.mxu0 0.0
      %4886 = vmatmul.mubr.f32.gmra.mrb[0].mxu0 %v3571
      %v4887 = vpop.f32.mrb[0].mxu0
      %v4888 = vadd.f32 0.0, %v4887
      %v4889 = vpop.f32.mrb[0].mxu0
      %4890 = vmatprep.mubr.f32.mxu0 0.0
      %4891 = vmatmul.mubr.f32.gmra.mrb[0].mxu0 %v3573
      %v4892 = vpop.f32.mrb[0].mxu0
      %v4893 = vadd.f32 0.0, %v4892
      %v4894 = vpop.f32.mrb[0].mxu0
      %4895 = vmatprep.mubr.f32.mxu0 0.0
      %4896 = vmatmul.mubr.f32.gmra.mrb[0].mxu0 %v3575
      %v4897 = vpop.f32.mrb[0].mxu0
      %v4898 = vadd.f32 0.0, %v4897
      %v4899 = vpop.f32.mrb[0].mxu0
      %4900 = vmatprep.mubr.f32.mxu0 0.0
      %4901 = vmatmul.mubr.f32.gmra.mrb[0].mxu0 %v3577
      %v4902 = vpop.f32.mrb[0].mxu0
      %v4903 = vadd.f32 0.0, %v4902
      %v4904 = vpop.f32.mrb[0].mxu0
      %4905 = vmatprep.mubr.f32.mxu0 0.0
      %4906 = vmatmul.mubr.f32.gmra.mrb[0].mxu0 %v3579
      %v4907 = vpop.f32.mrb[0].mxu0
      %v4908 = vadd.f32 0.0, %v4907
      %v4909 = vpop.f32.mrb[0].mxu0
      %4910 = vmatprep.mubr.f32.mxu0 0.0
      %4911 = vmatmul.mubr.f32.gmra.mrb[0].mxu0 %v3581
      %v4912 = vpop.f32.mrb[0].mxu0
      %v4913 = vadd.f32 0.0, %v4912
      %v4914 = vpop.f32.mrb[0].mxu0
      %4915 = vmatprep.mubr.f32.mxu0 0.0
      %4916 = vmatmul.mubr.f32.gmra.mrb[0].mxu0 %v3583
      %v4917 = vpop.f32.mrb[0].mxu0
      %v4918 = vadd.f32 0.0, %v4917
      %v4919 = vpop.f32.mrb[0].mxu0
      %4920 = vmatprep.mubr.f32.mxu0 0.0
      %4921 = vmatmul.mubr.f32.gmra.mrb[0].mxu0 %v3585
      %v4922 = vpop.f32.mrb[0].mxu0
      %v4923 = vadd.f32 0.0, %v4922
      %v4924 = vpop.f32.mrb[0].mxu0
      %4925 = vmatprep.mubr.f32.mxu0 0.0
      %4926 = vmatmul.mubr.f32.gmra.mrb[0].mxu0 %v3587
      %v4927 = vpop.f32.mrb[0].mxu0
      %v4928 = vadd.f32 0.0, %v4927
      %v4929 = vpop.f32.mrb[0].mxu0
      %4930 = vmatprep.mubr.f32.mxu0 0.0
      %4931 = vmatmul.mubr.f32.gmra.mrb[0].mxu0 %v3589
      %v4932 = vpop.f32.mrb[0].mxu0
      %v4933 = vadd.f32 0.0, %v4932
      %v4934 = vpop.f32.mrb[0].mxu0
      %4935 = vmatprep.mubr.f32.mxu0 0.0
      %4936 = vmatmul.mubr.f32.gmra.mrb[0].mxu0 %v3591
      %v4937 = vpop.f32.mrb[0].mxu0
      %v4938 = vadd.f32 0.0, %v4937
      %v4939 = vpop.f32.mrb[0].mxu0
      %4940 = vmatprep.mubr.f32.mxu0 0.0
      %4941 = vmatmul.mubr.f32.gmra.mrb[0].mxu0 %v3593
      %v4942 = vpop.f32.mrb[0].mxu0
      %v4943 = vadd.f32 0.0, %v4942
      %v4944 = vpop.f32.mrb[0].mxu0
      %4945 = vmatprep.mubr.f32.mxu0 0.0
      %4946 = vmatmul.mubr.f32.gmra.mrb[0].mxu0 %v3595
      %v4947 = vpop.f32.mrb[0].mxu0
      %v4948 = vadd.f32 0.0, %v4947
      %v4949 = vpop.f32.mrb[0].mxu0
      %4950 = vmatprep.mubr.f32.mxu0 0.0
      %4951 = vmatmul.mubr.f32.gmra.mrb[0].mxu0 %v3597
      %v4952 = vpop.f32.mrb[0].mxu0
      %v4953 = vadd.f32 0.0, %v4952
      %v4954 = vpop.f32.mrb[0].mxu0
      %4955 = vmatprep.mubr.f32.mxu0 0.0
      %4956 = vmatmul.mubr.f32.gmra.mrb[0].mxu0 %v3599
      %v4957 = vpop.f32.mrb[0].mxu0
      %v4958 = vadd.f32 0.0, %v4957
      %v4959 = vpop.f32.mrb[0].mxu0
      %4960 = vmatprep.mubr.f32.mxu0 0.0
      %4961 = vmatmul.mubr.f32.gmra.mrb[0].mxu0 %v3601
      %v4962 = vpop.f32.mrb[0].mxu0
      %v4963 = vadd.f32 0.0, %v4962
      %v4964 = vpop.f32.mrb[0].mxu0
      %4965 = vmatprep.mubr.f32.mxu0 0.0
      %4966 = vmatmul.mubr.f32.gmra.mrb[0].mxu0 %v3603
      %v4967 = vpop.f32.mrb[0].mxu0
      %v4968 = vadd.f32 0.0, %v4967
      %v4969 = vpop.f32.mrb[0].mxu0
      %4970 = vmatprep.mubr.f32.mxu0 0.0
      %4971 = vmatmul.mubr.f32.gmra.mrb[0].mxu0 %v3605
      %v4972 = vpop.f32.mrb[0].mxu0
      %v4973 = vadd.f32 0.0, %v4972
      %v4974 = vpop.f32.mrb[0].mxu0
      %4975 = vmatprep.mubr.f32.mxu0 0.0
      %4976 = vmatmul.mubr.f32.gmra.mrb[0].mxu0 %v3607
      %v4977 = vpop.f32.mrb[0].mxu0
      %v4978 = vadd.f32 0.0, %v4977
      %v4979 = vpop.f32.mrb[0].mxu0
      %4980 = vmatprep.mubr.f32.mxu0 0.0
      %4981 = vmatmul.mubr.f32.gmra.mrb[0].mxu0 %v3609
      %v4982 = vpop.f32.mrb[0].mxu0
      %v4983 = vadd.f32 0.0, %v4982
      %v4984 = vpop.f32.mrb[0].mxu0
      %4985 = vmatprep.mubr.f32.mxu0 0.0
      %4986 = vmatmul.mubr.f32.gmra.mrb[0].mxu0 %v3611
      %v4987 = vpop.f32.mrb[0].mxu0
      %v4988 = vadd.f32 0.0, %v4987
      %v4989 = vpop.f32.mrb[0].mxu0
      %4990 = vmatprep.mubr.f32.mxu0 0.0
      %4991 = vmatmul.mubr.f32.gmra.mrb[0].mxu0 %v3613
      %v4992 = vpop.f32.mrb[0].mxu0
      %v4993 = vadd.f32 0.0, %v4992
      %v4994 = vpop.f32.mrb[0].mxu0
      %4995 = vmatprep.mubr.f32.mxu0 0.0
      %4996 = vmatmul.mubr.f32.gmra.mrb[0].mxu0 %v3615
      %v4997 = vpop.f32.mrb[0].mxu0
      %v4998 = vadd.f32 0.0, %v4997
      %v4999 = vpop.f32.mrb[0].mxu0
      %5000 = vmatprep.mubr.f32.mxu0 0.0
      %5001 = vmatmul.mubr.f32.gmra.mrb[0].mxu0 %v3617
      %v5002 = vpop.f32.mrb[0].mxu0
      %v5003 = vadd.f32 0.0, %v5002
      %v5004 = vpop.f32.mrb[0].mxu0
      %5005 = vmatprep.mubr.f32.mxu0 0.0
      %5006 = vmatmul.mubr.f32.gmra.mrb[0].mxu0 %v3619
      %v5007 = vpop.f32.mrb[0].mxu0
      %v5008 = vadd.f32 0.0, %v5007
      %v5009 = vpop.f32.mrb[0].mxu0
      %5010 = vmatprep.mubr.f32.mxu0 0.0
      %5011 = vmatmul.mubr.f32.gmra.mrb[0].mxu0 %v3621
      %v5012 = vpop.f32.mrb[0].mxu0
      %v5013 = vadd.f32 0.0, %v5012
      %v5014 = vpop.f32.mrb[0].mxu0
      %5015 = vmatprep.mubr.f32.mxu0 0.0
      %5016 = vmatmul.mubr.f32.gmra.mrb[0].mxu0 %v3559
      %v5017 = vpop.f32.mrb[0].mxu0
      %v5018 = vadd.f32 0.0, %v5017
      %v5019 = vpop.f32.mrb[0].mxu0
      %5020 = vmatprep.mubr.f32.mxu0 0.0
      %5021 = vmatmul.mubr.f32.gmra.mrb[0].mxu0 %v3561
      %v5022 = vpop.f32.mrb[0].mxu0
      %v5023 = vadd.f32 0.0, %v5022
      %v5024 = vpop.f32.mrb[0].mxu0
      %5025 = vdwg.mxu0
      %v5026 = vadd.f32 %v4764, %v4868
      %v5027 = vadd.f32 %v4765, %v4873
      %v5028 = vadd.f32 %v4766, %v4878
      %v5029 = vadd.f32 %v4767, %v4883
      %v5030 = vadd.f32 %v4768, %v4888
      %v5031 = vadd.f32 %v4769, %v4893
      %v5032 = vadd.f32 %v4770, %v4898
      %v5033 = vadd.f32 %v4771, %v4903
      %v5034 = vadd.f32 %v4772, %v4908
      %v5035 = vadd.f32 %v4773, %v4913
      %v5036 = vadd.f32 %v4774, %v4918
      %v5037 = vadd.f32 %v4775, %v4923
      %v5038 = vadd.f32 %v4776, %v4928
      %v5039 = vadd.f32 %v4777, %v4933
      %v5040 = vadd.f32 %v4778, %v4938
      %v5041 = vadd.f32 %v4779, %v4943
      %v5042 = vadd.f32 %v4780, %v4948
      %v5043 = vadd.f32 %v4781, %v4953
      %v5044 = vadd.f32 %v4782, %v4958
      %v5045 = vadd.f32 %v4783, %v4963
      %v5046 = vadd.f32 %v4784, %v4968
      %v5047 = vadd.f32 %v4785, %v4973
      %v5048 = vadd.f32 %v4786, %v4978
      %v5049 = vadd.f32 %v4787, %v4983
      %v5050 = vadd.f32 %v4788, %v4988
      %v5051 = vadd.f32 %v4789, %v4993
      %v5052 = vadd.f32 %v4790, %v4998
      %v5053 = vadd.f32 %v4791, %v5003
      %v5054 = vadd.f32 %v4792, %v5008
      %v5055 = vadd.f32 %v4793, %v5013
      %v5056 = vadd.f32 %v4794, %v5018
      %v5057 = vadd.f32 %v4795, %v5023
      %s5058 = scalar_lea.vmem %s6, 10
      %v5059 = vld [vmem:[%s5058] sm:$0x3]
      %v5061 = vsel %vm3623, %v5059, 0
      %5063 = vmatprep.subr.mxu0 0.0
      %5064 = vmatpush1.msra.mxu0 %v5061
      %5065 = vmatprep.subr.mxu0 0.0
      %5066 = vmatpush1.msra.mxu0 0.0
      %5067 = vmatprep.subr.mxu0 0.0
      %5068 = vmatpush1.msra.mxu0 0.0
      %5069 = vmatprep.subr.mxu0 0.0
      %5070 = vmatpush1.msra.mxu0 0.0
      %5071 = vmatprep.subr.mxu0 0.0
      %5072 = vmatpush1.msra.mxu0 0.0
      %5073 = vmatprep.subr.mxu0 0.0
      %5074 = vmatpush1.msra.mxu0 0.0
      %5075 = vmatprep.subr.mxu0 0.0
      %5076 = vmatpush1.msra.mxu0 0.0
      %5077 = vmatprep.subr.mxu0 0.0
      %5078 = vmatpush1.msra.mxu0 0.0
      %5079 = vmatprep.subr.mxu0 0.0
      %5080 = vmatpush1.msra.mxu0 0.0
      %5081 = vmatprep.subr.mxu0 0.0
      %5082 = vmatpush1.msra.mxu0 0.0
      %5083 = vmatprep.subr.mxu0 0.0
      %5084 = vmatpush1.msra.mxu0 0.0
      %5085 = vmatprep.subr.mxu0 0.0
      %5086 = vmatpush1.msra.mxu0 0.0
      %5087 = vmatprep.subr.mxu0 0.0
      %5088 = vmatpush1.msra.mxu0 0.0
      %5089 = vmatprep.subr.mxu0 0.0
      %5090 = vmatpush1.msra.mxu0 0.0
      %5091 = vmatprep.subr.mxu0 0.0
      %5092 = vmatpush1.msra.mxu0 0.0
      %5093 = vmatprep.subr.mxu0 0.0
      %5094 = vmatpush1.msra.mxu0 0.0
      %5095 = vmatprep.subr.mxu0 0.0
      %5096 = vmatpush1.msra.mxu0 0.0
      %5097 = vmatprep.subr.mxu0 0.0
      %5098 = vmatpush1.msra.mxu0 0.0
      %5099 = vmatprep.subr.mxu0 0.0
      %5100 = vmatpush1.msra.mxu0 0.0
      %5101 = vmatprep.subr.mxu0 0.0
      %5102 = vmatpush1.msra.mxu0 0.0
      %5103 = vmatprep.subr.mxu0 0.0
      %5104 = vmatpush1.msra.mxu0 0.0
      %5105 = vmatprep.subr.mxu0 0.0
      %5106 = vmatpush1.msra.mxu0 0.0
      %5107 = vmatprep.subr.mxu0 0.0
      %5108 = vmatpush1.msra.mxu0 0.0
      %5109 = vmatprep.subr.mxu0 0.0
      %5110 = vmatpush1.msra.mxu0 0.0
      %5111 = vmatprep.subr.mxu0 0.0
      %5112 = vmatpush1.msra.mxu0 0.0
      %5113 = vmatprep.subr.mxu0 0.0
      %5114 = vmatpush1.msra.mxu0 0.0
      %5115 = vmatprep.subr.mxu0 0.0
      %5116 = vmatpush1.msra.mxu0 0.0
      %5117 = vmatprep.subr.mxu0 0.0
      %5118 = vmatpush1.msra.mxu0 0.0
      %5119 = vmatprep.subr.mxu0 0.0
      %5120 = vmatpush1.msra.mxu0 0.0
      %5121 = vmatprep.subr.mxu0 0.0
      %5122 = vmatpush1.msra.mxu0 0.0
      %5123 = vmatprep.subr.mxu0 0.0
      %5124 = vmatpush1.msra.mxu0 0.0
      %5125 = vmatprep.subr.mxu0 0.0
      %5126 = vmatpush1.msra.mxu0 0.0
      %5127 = vmatprep.mubr.f32.mxu0 0.0
      %5128 = vmatmul.mubr.f32.gmra.mrb[0].mxu0 %v4214
      %v5129 = vpop.f32.mrb[0].mxu0
      %v5130 = vadd.f32 0.0, %v5129
      %v5131 = vpop.f32.mrb[0].mxu0
      %5132 = vmatprep.mubr.f32.mxu0 0.0
      %5133 = vmatmul.mubr.f32.gmra.mrb[0].mxu0 %v4216
      %v5134 = vpop.f32.mrb[0].mxu0
      %v5135 = vadd.f32 0.0, %v5134
      %v5136 = vpop.f32.mrb[0].mxu0
      %5137 = vmatprep.mubr.f32.mxu0 0.0
      %5138 = vmatmul.mubr.f32.gmra.mrb[0].mxu0 %v4218
      %v5139 = vpop.f32.mrb[0].mxu0
      %v5140 = vadd.f32 0.0, %v5139
      %v5141 = vpop.f32.mrb[0].mxu0
      %5142 = vmatprep.mubr.f32.mxu0 0.0
      %5143 = vmatmul.mubr.f32.gmra.mrb[0].mxu0 %v4220
      %v5144 = vpop.f32.mrb[0].mxu0
      %v5145 = vadd.f32 0.0, %v5144
      %v5146 = vpop.f32.mrb[0].mxu0
      %5147 = vmatprep.mubr.f32.mxu0 0.0
      %5148 = vmatmul.mubr.f32.gmra.mrb[0].mxu0 %v4222
      %v5149 = vpop.f32.mrb[0].mxu0
      %v5150 = vadd.f32 0.0, %v5149
      %v5151 = vpop.f32.mrb[0].mxu0
      %5152 = vmatprep.mubr.f32.mxu0 0.0
      %5153 = vmatmul.mubr.f32.gmra.mrb[0].mxu0 %v4224
      %v5154 = vpop.f32.mrb[0].mxu0
      %v5155 = vadd.f32 0.0, %v5154
      %v5156 = vpop.f32.mrb[0].mxu0
      %5157 = vmatprep.mubr.f32.mxu0 0.0
      %5158 = vmatmul.mubr.f32.gmra.mrb[0].mxu0 %v4226
      %v5159 = vpop.f32.mrb[0].mxu0
      %v5160 = vadd.f32 0.0, %v5159
      %v5161 = vpop.f32.mrb[0].mxu0
      %5162 = vmatprep.mubr.f32.mxu0 0.0
      %5163 = vmatmul.mubr.f32.gmra.mrb[0].mxu0 %v4228
      %v5164 = vpop.f32.mrb[0].mxu0
      %v5165 = vadd.f32 0.0, %v5164
      %v5166 = vpop.f32.mrb[0].mxu0
      %5167 = vmatprep.mubr.f32.mxu0 0.0
      %5168 = vmatmul.mubr.f32.gmra.mrb[0].mxu0 %v4230
      %v5169 = vpop.f32.mrb[0].mxu0
      %v5170 = vadd.f32 0.0, %v5169
      %v5171 = vpop.f32.mrb[0].mxu0
      %5172 = vmatprep.mubr.f32.mxu0 0.0
      %5173 = vmatmul.mubr.f32.gmra.mrb[0].mxu0 %v4232
      %v5174 = vpop.f32.mrb[0].mxu0
      %v5175 = vadd.f32 0.0, %v5174
      %v5176 = vpop.f32.mrb[0].mxu0
      %5177 = vmatprep.mubr.f32.mxu0 0.0
      %5178 = vmatmul.mubr.f32.gmra.mrb[0].mxu0 %v4234
      %v5179 = vpop.f32.mrb[0].mxu0
      %v5180 = vadd.f32 0.0, %v5179
      %v5181 = vpop.f32.mrb[0].mxu0
      %5182 = vmatprep.mubr.f32.mxu0 0.0
      %5183 = vmatmul.mubr.f32.gmra.mrb[0].mxu0 %v4236
      %v5184 = vpop.f32.mrb[0].mxu0
      %v5185 = vadd.f32 0.0, %v5184
      %v5186 = vpop.f32.mrb[0].mxu0
      %5187 = vmatprep.mubr.f32.mxu0 0.0
      %5188 = vmatmul.mubr.f32.gmra.mrb[0].mxu0 %v4238
      %v5189 = vpop.f32.mrb[0].mxu0
      %v5190 = vadd.f32 0.0, %v5189
      %v5191 = vpop.f32.mrb[0].mxu0
      %5192 = vmatprep.mubr.f32.mxu0 0.0
      %5193 = vmatmul.mubr.f32.gmra.mrb[0].mxu0 %v4240
      %v5194 = vpop.f32.mrb[0].mxu0
      %v5195 = vadd.f32 0.0, %v5194
      %v5196 = vpop.f32.mrb[0].mxu0
      %5197 = vmatprep.mubr.f32.mxu0 0.0
      %5198 = vmatmul.mubr.f32.gmra.mrb[0].mxu0 %v4242
      %v5199 = vpop.f32.mrb[0].mxu0
      %v5200 = vadd.f32 0.0, %v5199
      %v5201 = vpop.f32.mrb[0].mxu0
      %5202 = vmatprep.mubr.f32.mxu0 0.0
      %5203 = vmatmul.mubr.f32.gmra.mrb[0].mxu0 %v4244
      %v5204 = vpop.f32.mrb[0].mxu0
      %v5205 = vadd.f32 0.0, %v5204
      %v5206 = vpop.f32.mrb[0].mxu0
      %5207 = vmatprep.mubr.f32.mxu0 0.0
      %5208 = vmatmul.mubr.f32.gmra.mrb[0].mxu0 %v4246
      %v5209 = vpop.f32.mrb[0].mxu0
      %v5210 = vadd.f32 0.0, %v5209
      %v5211 = vpop.f32.mrb[0].mxu0
      %5212 = vmatprep.mubr.f32.mxu0 0.0
      %5213 = vmatmul.mubr.f32.gmra.mrb[0].mxu0 %v4248
      %v5214 = vpop.f32.mrb[0].mxu0
      %v5215 = vadd.f32 0.0, %v5214
      %v5216 = vpop.f32.mrb[0].mxu0
      %5217 = vmatprep.mubr.f32.mxu0 0.0
      %5218 = vmatmul.mubr.f32.gmra.mrb[0].mxu0 %v4250
      %v5219 = vpop.f32.mrb[0].mxu0
      %v5220 = vadd.f32 0.0, %v5219
      %v5221 = vpop.f32.mrb[0].mxu0
      %5222 = vmatprep.mubr.f32.mxu0 0.0
      %5223 = vmatmul.mubr.f32.gmra.mrb[0].mxu0 %v4252
      %v5224 = vpop.f32.mrb[0].mxu0
      %v5225 = vadd.f32 0.0, %v5224
      %v5226 = vpop.f32.mrb[0].mxu0
      %5227 = vmatprep.mubr.f32.mxu0 0.0
      %5228 = vmatmul.mubr.f32.gmra.mrb[0].mxu0 %v4254
      %v5229 = vpop.f32.mrb[0].mxu0
      %v5230 = vadd.f32 0.0, %v5229
      %v5231 = vpop.f32.mrb[0].mxu0
      %5232 = vmatprep.mubr.f32.mxu0 0.0
      %5233 = vmatmul.mubr.f32.gmra.mrb[0].mxu0 %v4256
      %v5234 = vpop.f32.mrb[0].mxu0
      %v5235 = vadd.f32 0.0, %v5234
      %v5236 = vpop.f32.mrb[0].mxu0
      %5237 = vmatprep.mubr.f32.mxu0 0.0
      %5238 = vmatmul.mubr.f32.gmra.mrb[0].mxu0 %v4258
      %v5239 = vpop.f32.mrb[0].mxu0
      %v5240 = vadd.f32 0.0, %v5239
      %v5241 = vpop.f32.mrb[0].mxu0
      %5242 = vmatprep.mubr.f32.mxu0 0.0
      %5243 = vmatmul.mubr.f32.gmra.mrb[0].mxu0 %v4260
      %v5244 = vpop.f32.mrb[0].mxu0
      %v5245 = vadd.f32 0.0, %v5244
      %v5246 = vpop.f32.mrb[0].mxu0
      %5247 = vmatprep.mubr.f32.mxu0 0.0
      %5248 = vmatmul.mubr.f32.gmra.mrb[0].mxu0 %v4262
      %v5249 = vpop.f32.mrb[0].mxu0
      %v5250 = vadd.f32 0.0, %v5249
      %v5251 = vpop.f32.mrb[0].mxu0
      %5252 = vmatprep.mubr.f32.mxu0 0.0
      %5253 = vmatmul.mubr.f32.gmra.mrb[0].mxu0 %v4264
      %v5254 = vpop.f32.mrb[0].mxu0
      %v5255 = vadd.f32 0.0, %v5254
      %v5256 = vpop.f32.mrb[0].mxu0
      %5257 = vmatprep.mubr.f32.mxu0 0.0
      %5258 = vmatmul.mubr.f32.gmra.mrb[0].mxu0 %v4266
      %v5259 = vpop.f32.mrb[0].mxu0
      %v5260 = vadd.f32 0.0, %v5259
      %v5261 = vpop.f32.mrb[0].mxu0
      %5262 = vmatprep.mubr.f32.mxu0 0.0
      %5263 = vmatmul.mubr.f32.gmra.mrb[0].mxu0 %v4268
      %v5264 = vpop.f32.mrb[0].mxu0
      %v5265 = vadd.f32 0.0, %v5264
      %v5266 = vpop.f32.mrb[0].mxu0
      %5267 = vmatprep.mubr.f32.mxu0 0.0
      %5268 = vmatmul.mubr.f32.gmra.mrb[0].mxu0 %v4270
      %v5269 = vpop.f32.mrb[0].mxu0
      %v5270 = vadd.f32 0.0, %v5269
      %v5271 = vpop.f32.mrb[0].mxu0
      %5272 = vmatprep.mubr.f32.mxu0 0.0
      %5273 = vmatmul.mubr.f32.gmra.mrb[0].mxu0 %v4272
      %v5274 = vpop.f32.mrb[0].mxu0
      %v5275 = vadd.f32 0.0, %v5274
      %v5276 = vpop.f32.mrb[0].mxu0
      %5277 = vmatprep.mubr.f32.mxu0 0.0
      %5278 = vmatmul.mubr.f32.gmra.mrb[0].mxu0 %v4210
      %v5279 = vpop.f32.mrb[0].mxu0
      %v5280 = vadd.f32 0.0, %v5279
      %v5281 = vpop.f32.mrb[0].mxu0
      %5282 = vmatprep.mubr.f32.mxu0 0.0
      %5283 = vmatmul.mubr.f32.gmra.mrb[0].mxu0 %v4212
      %v5284 = vpop.f32.mrb[0].mxu0
      %v5285 = vadd.f32 0.0, %v5284
      %v5286 = vpop.f32.mrb[0].mxu0
      %5287 = vdwg.mxu0
      %v5288 = vadd.f32 %v5026, %v5130
      %v5289 = vadd.f32 %v5027, %v5135
      %v5290 = vadd.f32 %v5028, %v5140
      %v5291 = vadd.f32 %v5029, %v5145
      %v5292 = vadd.f32 %v5030, %v5150
      %v5293 = vadd.f32 %v5031, %v5155
      %v5294 = vadd.f32 %v5032, %v5160
      %v5295 = vadd.f32 %v5033, %v5165
      %v5296 = vadd.f32 %v5034, %v5170
      %v5297 = vadd.f32 %v5035, %v5175
      %v5298 = vadd.f32 %v5036, %v5180
      %v5299 = vadd.f32 %v5037, %v5185
      %v5300 = vadd.f32 %v5038, %v5190
      %v5301 = vadd.f32 %v5039, %v5195
      %v5302 = vadd.f32 %v5040, %v5200
      %v5303 = vadd.f32 %v5041, %v5205
      %v5304 = vadd.f32 %v5042, %v5210
      %v5305 = vadd.f32 %v5043, %v5215
      %v5306 = vadd.f32 %v5044, %v5220
      %v5307 = vadd.f32 %v5045, %v5225
      %v5308 = vadd.f32 %v5046, %v5230
      %v5309 = vadd.f32 %v5047, %v5235
      %v5310 = vadd.f32 %v5048, %v5240
      %v5311 = vadd.f32 %v5049, %v5245
      %v5312 = vadd.f32 %v5050, %v5250
      %v5313 = vadd.f32 %v5051, %v5255
      %v5314 = vadd.f32 %v5052, %v5260
      %v5315 = vadd.f32 %v5053, %v5265
      %v5316 = vadd.f32 %v5054, %v5270
      %v5317 = vadd.f32 %v5055, %v5275
      %v5318 = vadd.f32 %v5056, %v5280
      %v5319 = vadd.f32 %v5057, %v5285
      %s5320 = scalar_lea.vmem %s6, 12
      %v5321 = vld [vmem:[%s5320] sm:$0x3]
      %v5323 = vsel %vm3623, %v5321, 0
      %5325 = vmatprep.subr.mxu0 0.0
      %5326 = vmatpush1.msra.mxu0 %v5323
      %5327 = vmatprep.subr.mxu0 0.0
      %5328 = vmatpush1.msra.mxu0 0.0
      %5329 = vmatprep.subr.mxu0 0.0
      %5330 = vmatpush1.msra.mxu0 0.0
      %5331 = vmatprep.subr.mxu0 0.0
      %5332 = vmatpush1.msra.mxu0 0.0
      %5333 = vmatprep.subr.mxu0 0.0
      %5334 = vmatpush1.msra.mxu0 0.0
      %5335 = vmatprep.subr.mxu0 0.0
      %5336 = vmatpush1.msra.mxu0 0.0
      %5337 = vmatprep.subr.mxu0 0.0
      %5338 = vmatpush1.msra.mxu0 0.0
      %5339 = vmatprep.subr.mxu0 0.0
      %5340 = vmatpush1.msra.mxu0 0.0
      %5341 = vmatprep.subr.mxu0 0.0
      %5342 = vmatpush1.msra.mxu0 0.0
      %5343 = vmatprep.subr.mxu0 0.0
      %5344 = vmatpush1.msra.mxu0 0.0
      %5345 = vmatprep.subr.mxu0 0.0
      %5346 = vmatpush1.msra.mxu0 0.0
      %5347 = vmatprep.subr.mxu0 0.0
      %5348 = vmatpush1.msra.mxu0 0.0
      %5349 = vmatprep.subr.mxu0 0.0
      %5350 = vmatpush1.msra.mxu0 0.0
      %5351 = vmatprep.subr.mxu0 0.0
      %5352 = vmatpush1.msra.mxu0 0.0
      %5353 = vmatprep.subr.mxu0 0.0
      %5354 = vmatpush1.msra.mxu0 0.0
      %5355 = vmatprep.subr.mxu0 0.0
      %5356 = vmatpush1.msra.mxu0 0.0
      %5357 = vmatprep.subr.mxu0 0.0
      %5358 = vmatpush1.msra.mxu0 0.0
      %5359 = vmatprep.subr.mxu0 0.0
      %5360 = vmatpush1.msra.mxu0 0.0
      %5361 = vmatprep.subr.mxu0 0.0
      %5362 = vmatpush1.msra.mxu0 0.0
      %5363 = vmatprep.subr.mxu0 0.0
      %5364 = vmatpush1.msra.mxu0 0.0
      %5365 = vmatprep.subr.mxu0 0.0
      %5366 = vmatpush1.msra.mxu0 0.0
      %5367 = vmatprep.subr.mxu0 0.0
      %5368 = vmatpush1.msra.mxu0 0.0
      %5369 = vmatprep.subr.mxu0 0.0
      %5370 = vmatpush1.msra.mxu0 0.0
      %5371 = vmatprep.subr.mxu0 0.0
      %5372 = vmatpush1.msra.mxu0 0.0
      %5373 = vmatprep.subr.mxu0 0.0
      %5374 = vmatpush1.msra.mxu0 0.0
      %5375 = vmatprep.subr.mxu0 0.0
      %5376 = vmatpush1.msra.mxu0 0.0
      %5377 = vmatprep.subr.mxu0 0.0
      %5378 = vmatpush1.msra.mxu0 0.0
      %5379 = vmatprep.subr.mxu0 0.0
      %5380 = vmatpush1.msra.mxu0 0.0
      %5381 = vmatprep.subr.mxu0 0.0
      %5382 = vmatpush1.msra.mxu0 0.0
      %5383 = vmatprep.subr.mxu0 0.0
      %5384 = vmatpush1.msra.mxu0 0.0
      %5385 = vmatprep.subr.mxu0 0.0
      %5386 = vmatpush1.msra.mxu0 0.0
      %5387 = vmatprep.subr.mxu0 0.0
      %5388 = vmatpush1.msra.mxu0 0.0
      %5389 = vmatprep.mubr.f32.mxu0 0.0
      %5390 = vmatmul.mubr.f32.gmra.mrb[0].mxu0 %v3860
      %v5391 = vpop.f32.mrb[0].mxu0
      %v5392 = vadd.f32 0.0, %v5391
      %v5393 = vpop.f32.mrb[0].mxu0
      %5394 = vmatprep.mubr.f32.mxu0 0.0
      %5395 = vmatmul.mubr.f32.gmra.mrb[0].mxu0 %v3862
      %v5396 = vpop.f32.mrb[0].mxu0
      %v5397 = vadd.f32 0.0, %v5396
      %v5398 = vpop.f32.mrb[0].mxu0
      %5399 = vmatprep.mubr.f32.mxu0 0.0
      %5400 = vmatmul.mubr.f32.gmra.mrb[0].mxu0 %v3864
      %v5401 = vpop.f32.mrb[0].mxu0
      %v5402 = vadd.f32 0.0, %v5401
      %v5403 = vpop.f32.mrb[0].mxu0
      %5404 = vmatprep.mubr.f32.mxu0 0.0
      %5405 = vmatmul.mubr.f32.gmra.mrb[0].mxu0 %v3866
      %v5406 = vpop.f32.mrb[0].mxu0
      %v5407 = vadd.f32 0.0, %v5406
      %v5408 = vpop.f32.mrb[0].mxu0
      %5409 = vmatprep.mubr.f32.mxu0 0.0
      %5410 = vmatmul.mubr.f32.gmra.mrb[0].mxu0 %v3868
      %v5411 = vpop.f32.mrb[0].mxu0
      %v5412 = vadd.f32 0.0, %v5411
      %v5413 = vpop.f32.mrb[0].mxu0
      %5414 = vmatprep.mubr.f32.mxu0 0.0
      %5415 = vmatmul.mubr.f32.gmra.mrb[0].mxu0 %v3870
      %v5416 = vpop.f32.mrb[0].mxu0
      %v5417 = vadd.f32 0.0, %v5416
      %v5418 = vpop.f32.mrb[0].mxu0
      %5419 = vmatprep.mubr.f32.mxu0 0.0
      %5420 = vmatmul.mubr.f32.gmra.mrb[0].mxu0 %v3872
      %v5421 = vpop.f32.mrb[0].mxu0
      %v5422 = vadd.f32 0.0, %v5421
      %v5423 = vpop.f32.mrb[0].mxu0
      %5424 = vmatprep.mubr.f32.mxu0 0.0
      %5425 = vmatmul.mubr.f32.gmra.mrb[0].mxu0 %v3874
      %v5426 = vpop.f32.mrb[0].mxu0
      %v5427 = vadd.f32 0.0, %v5426
      %v5428 = vpop.f32.mrb[0].mxu0
      %5429 = vmatprep.mubr.f32.mxu0 0.0
      %5430 = vmatmul.mubr.f32.gmra.mrb[0].mxu0 %v3876
      %v5431 = vpop.f32.mrb[0].mxu0
      %v5432 = vadd.f32 0.0, %v5431
      %v5433 = vpop.f32.mrb[0].mxu0
      %5434 = vmatprep.mubr.f32.mxu0 0.0
      %5435 = vmatmul.mubr.f32.gmra.mrb[0].mxu0 %v3878
      %v5436 = vpop.f32.mrb[0].mxu0
      %v5437 = vadd.f32 0.0, %v5436
      %v5438 = vpop.f32.mrb[0].mxu0
      %5439 = vmatprep.mubr.f32.mxu0 0.0
      %5440 = vmatmul.mubr.f32.gmra.mrb[0].mxu0 %v3880
      %v5441 = vpop.f32.mrb[0].mxu0
      %v5442 = vadd.f32 0.0, %v5441
      %v5443 = vpop.f32.mrb[0].mxu0
      %5444 = vmatprep.mubr.f32.mxu0 0.0
      %5445 = vmatmul.mubr.f32.gmra.mrb[0].mxu0 %v3882
      %v5446 = vpop.f32.mrb[0].mxu0
      %v5447 = vadd.f32 0.0, %v5446
      %v5448 = vpop.f32.mrb[0].mxu0
      %5449 = vmatprep.mubr.f32.mxu0 0.0
      %5450 = vmatmul.mubr.f32.gmra.mrb[0].mxu0 %v3884
      %v5451 = vpop.f32.mrb[0].mxu0
      %v5452 = vadd.f32 0.0, %v5451
      %v5453 = vpop.f32.mrb[0].mxu0
      %5454 = vmatprep.mubr.f32.mxu0 0.0
      %5455 = vmatmul.mubr.f32.gmra.mrb[0].mxu0 %v3886
      %v5456 = vpop.f32.mrb[0].mxu0
      %v5457 = vadd.f32 0.0, %v5456
      %v5458 = vpop.f32.mrb[0].mxu0
      %5459 = vmatprep.mubr.f32.mxu0 0.0
      %5460 = vmatmul.mubr.f32.gmra.mrb[0].mxu0 %v3888
      %v5461 = vpop.f32.mrb[0].mxu0
      %v5462 = vadd.f32 0.0, %v5461
      %v5463 = vpop.f32.mrb[0].mxu0
      %5464 = vmatprep.mubr.f32.mxu0 0.0
      %5465 = vmatmul.mubr.f32.gmra.mrb[0].mxu0 %v3890
      %v5466 = vpop.f32.mrb[0].mxu0
      %v5467 = vadd.f32 0.0, %v5466
      %v5468 = vpop.f32.mrb[0].mxu0
      %5469 = vmatprep.mubr.f32.mxu0 0.0
      %5470 = vmatmul.mubr.f32.gmra.mrb[0].mxu0 %v3892
      %v5471 = vpop.f32.mrb[0].mxu0
      %v5472 = vadd.f32 0.0, %v5471
      %v5473 = vpop.f32.mrb[0].mxu0
      %5474 = vmatprep.mubr.f32.mxu0 0.0
      %5475 = vmatmul.mubr.f32.gmra.mrb[0].mxu0 %v3894
      %v5476 = vpop.f32.mrb[0].mxu0
      %v5477 = vadd.f32 0.0, %v5476
      %v5478 = vpop.f32.mrb[0].mxu0
      %5479 = vmatprep.mubr.f32.mxu0 0.0
      %5480 = vmatmul.mubr.f32.gmra.mrb[0].mxu0 %v3896
      %v5481 = vpop.f32.mrb[0].mxu0
      %v5482 = vadd.f32 0.0, %v5481
      %v5483 = vpop.f32.mrb[0].mxu0
      %5484 = vmatprep.mubr.f32.mxu0 0.0
      %5485 = vmatmul.mubr.f32.gmra.mrb[0].mxu0 %v3898
      %v5486 = vpop.f32.mrb[0].mxu0
      %v5487 = vadd.f32 0.0, %v5486
      %v5488 = vpop.f32.mrb[0].mxu0
      %5489 = vmatprep.mubr.f32.mxu0 0.0
      %5490 = vmatmul.mubr.f32.gmra.mrb[0].mxu0 %v3900
      %v5491 = vpop.f32.mrb[0].mxu0
      %v5492 = vadd.f32 0.0, %v5491
      %v5493 = vpop.f32.mrb[0].mxu0
      %5494 = vmatprep.mubr.f32.mxu0 0.0
      %5495 = vmatmul.mubr.f32.gmra.mrb[0].mxu0 %v3902
      %v5496 = vpop.f32.mrb[0].mxu0
      %v5497 = vadd.f32 0.0, %v5496
      %v5498 = vpop.f32.mrb[0].mxu0
      %5499 = vmatprep.mubr.f32.mxu0 0.0
      %5500 = vmatmul.mubr.f32.gmra.mrb[0].mxu0 %v3904
      %v5501 = vpop.f32.mrb[0].mxu0
      %v5502 = vadd.f32 0.0, %v5501
      %v5503 = vpop.f32.mrb[0].mxu0
      %5504 = vmatprep.mubr.f32.mxu0 0.0
      %5505 = vmatmul.mubr.f32.gmra.mrb[0].mxu0 %v3906
      %v5506 = vpop.f32.mrb[0].mxu0
      %v5507 = vadd.f32 0.0, %v5506
      %v5508 = vpop.f32.mrb[0].mxu0
      %5509 = vmatprep.mubr.f32.mxu0 0.0
      %5510 = vmatmul.mubr.f32.gmra.mrb[0].mxu0 %v3908
      %v5511 = vpop.f32.mrb[0].mxu0
      %v5512 = vadd.f32 0.0, %v5511
      %v5513 = vpop.f32.mrb[0].mxu0
      %5514 = vmatprep.mubr.f32.mxu0 0.0
      %5515 = vmatmul.mubr.f32.gmra.mrb[0].mxu0 %v3910
      %v5516 = vpop.f32.mrb[0].mxu0
      %v5517 = vadd.f32 0.0, %v5516
      %v5518 = vpop.f32.mrb[0].mxu0
      %5519 = vmatprep.mubr.f32.mxu0 0.0
      %5520 = vmatmul.mubr.f32.gmra.mrb[0].mxu0 %v3912
      %v5521 = vpop.f32.mrb[0].mxu0
      %v5522 = vadd.f32 0.0, %v5521
      %v5523 = vpop.f32.mrb[0].mxu0
      %5524 = vmatprep.mubr.f32.mxu0 0.0
      %5525 = vmatmul.mubr.f32.gmra.mrb[0].mxu0 %v3914
      %v5526 = vpop.f32.mrb[0].mxu0
      %v5527 = vadd.f32 0.0, %v5526
      %v5528 = vpop.f32.mrb[0].mxu0
      %5529 = vmatprep.mubr.f32.mxu0 0.0
      %5530 = vmatmul.mubr.f32.gmra.mrb[0].mxu0 %v3852
      %v5531 = vpop.f32.mrb[0].mxu0
      %v5532 = vadd.f32 0.0, %v5531
      %v5533 = vpop.f32.mrb[0].mxu0
      %5534 = vmatprep.mubr.f32.mxu0 0.0
      %5535 = vmatmul.mubr.f32.gmra.mrb[0].mxu0 %v3854
      %v5536 = vpop.f32.mrb[0].mxu0
      %v5537 = vadd.f32 0.0, %v5536
      %v5538 = vpop.f32.mrb[0].mxu0
      %5539 = vmatprep.mubr.f32.mxu0 0.0
      %5540 = vmatmul.mubr.f32.gmra.mrb[0].mxu0 %v3856
      %v5541 = vpop.f32.mrb[0].mxu0
      %v5542 = vadd.f32 0.0, %v5541
      %v5543 = vpop.f32.mrb[0].mxu0
      %5544 = vmatprep.mubr.f32.mxu0 0.0
      %5545 = vmatmul.mubr.f32.gmra.mrb[0].mxu0 %v3858
      %v5546 = vpop.f32.mrb[0].mxu0
      %v5547 = vadd.f32 0.0, %v5546
      %v5548 = vpop.f32.mrb[0].mxu0
      %5549 = vdwg.mxu0
      %v5550 = vadd.f32 %v5288, %v5392
      %v5551 = vadd.f32 %v5289, %v5397
      %v5552 = vadd.f32 %v5290, %v5402
      %v5553 = vadd.f32 %v5291, %v5407
      %v5554 = vadd.f32 %v5292, %v5412
      %v5555 = vadd.f32 %v5293, %v5417
      %v5556 = vadd.f32 %v5294, %v5422
      %v5557 = vadd.f32 %v5295, %v5427
      %v5558 = vadd.f32 %v5296, %v5432
      %v5559 = vadd.f32 %v5297, %v5437
      %v5560 = vadd.f32 %v5298, %v5442
      %v5561 = vadd.f32 %v5299, %v5447
      %v5562 = vadd.f32 %v5300, %v5452
      %v5563 = vadd.f32 %v5301, %v5457
      %v5564 = vadd.f32 %v5302, %v5462
      %v5565 = vadd.f32 %v5303, %v5467
      %v5566 = vadd.f32 %v5304, %v5472
      %v5567 = vadd.f32 %v5305, %v5477
      %v5568 = vadd.f32 %v5306, %v5482
      %v5569 = vadd.f32 %v5307, %v5487
      %v5570 = vadd.f32 %v5308, %v5492
      %v5571 = vadd.f32 %v5309, %v5497
      %v5572 = vadd.f32 %v5310, %v5502
      %v5573 = vadd.f32 %v5311, %v5507
      %v5574 = vadd.f32 %v5312, %v5512
      %v5575 = vadd.f32 %v5313, %v5517
      %v5576 = vadd.f32 %v5314, %v5522
      %v5577 = vadd.f32 %v5315, %v5527
      %v5578 = vadd.f32 %v5316, %v5532
      %v5579 = vadd.f32 %v5317, %v5537
      %v5580 = vadd.f32 %v5318, %v5542
      %v5581 = vadd.f32 %v5319, %v5547
      %s5582 = scalar_lea.vmem %s6, 14
      %v5583 = vld [vmem:[%s5582] sm:$0x3]
      %v5585 = vsel %vm3623, %v5583, 0
      %5587 = vmatprep.subr.mxu0 0.0
      %5588 = vmatpush1.msra.mxu0 %v5585
      %5589 = vmatprep.subr.mxu0 0.0
      %5590 = vmatpush1.msra.mxu0 0.0
      %5591 = vmatprep.subr.mxu0 0.0
      %5592 = vmatpush1.msra.mxu0 0.0
      %5593 = vmatprep.subr.mxu0 0.0
      %5594 = vmatpush1.msra.mxu0 0.0
      %5595 = vmatprep.subr.mxu0 0.0
      %5596 = vmatpush1.msra.mxu0 0.0
      %5597 = vmatprep.subr.mxu0 0.0
      %5598 = vmatpush1.msra.mxu0 0.0
      %5599 = vmatprep.subr.mxu0 0.0
      %5600 = vmatpush1.msra.mxu0 0.0
      %5601 = vmatprep.subr.mxu0 0.0
      %5602 = vmatpush1.msra.mxu0 0.0
      %5603 = vmatprep.subr.mxu0 0.0
      %5604 = vmatpush1.msra.mxu0 0.0
      %5605 = vmatprep.subr.mxu0 0.0
      %5606 = vmatpush1.msra.mxu0 0.0
      %5607 = vmatprep.subr.mxu0 0.0
      %5608 = vmatpush1.msra.mxu0 0.0
      %5609 = vmatprep.subr.mxu0 0.0
      %5610 = vmatpush1.msra.mxu0 0.0
      %5611 = vmatprep.subr.mxu0 0.0
      %5612 = vmatpush1.msra.mxu0 0.0
      %5613 = vmatprep.subr.mxu0 0.0
      %5614 = vmatpush1.msra.mxu0 0.0
      %5615 = vmatprep.subr.mxu0 0.0
      %5616 = vmatpush1.msra.mxu0 0.0
      %5617 = vmatprep.subr.mxu0 0.0
      %5618 = vmatpush1.msra.mxu0 0.0
      %5619 = vmatprep.subr.mxu0 0.0
      %5620 = vmatpush1.msra.mxu0 0.0
      %5621 = vmatprep.subr.mxu0 0.0
      %5622 = vmatpush1.msra.mxu0 0.0
      %5623 = vmatprep.subr.mxu0 0.0
      %5624 = vmatpush1.msra.mxu0 0.0
      %5625 = vmatprep.subr.mxu0 0.0
      %5626 = vmatpush1.msra.mxu0 0.0
      %5627 = vmatprep.subr.mxu0 0.0
      %5628 = vmatpush1.msra.mxu0 0.0
      %5629 = vmatprep.subr.mxu0 0.0
      %5630 = vmatpush1.msra.mxu0 0.0
      %5631 = vmatprep.subr.mxu0 0.0
      %5632 = vmatpush1.msra.mxu0 0.0
      %5633 = vmatprep.subr.mxu0 0.0
      %5634 = vmatpush1.msra.mxu0 0.0
      %5635 = vmatprep.subr.mxu0 0.0
      %5636 = vmatpush1.msra.mxu0 0.0
      %5637 = vmatprep.subr.mxu0 0.0
      %5638 = vmatpush1.msra.mxu0 0.0
      %5639 = vmatprep.subr.mxu0 0.0
      %5640 = vmatpush1.msra.mxu0 0.0
      %5641 = vmatprep.subr.mxu0 0.0
      %5642 = vmatpush1.msra.mxu0 0.0
      %5643 = vmatprep.subr.mxu0 0.0
      %5644 = vmatpush1.msra.mxu0 0.0
      %5645 = vmatprep.subr.mxu0 0.0
      %5646 = vmatpush1.msra.mxu0 0.0
      %5647 = vmatprep.subr.mxu0 0.0
      %5648 = vmatpush1.msra.mxu0 0.0
      %5649 = vmatprep.subr.mxu0 0.0
      %5650 = vmatpush1.msra.mxu0 0.0
      %5651 = vmatprep.mubr.f32.mxu0 0.0
      %5652 = vmatmul.mubr.f32.gmra.mrb[0].mxu0 %v3567
      %v5653 = vpop.f32.mrb[0].mxu0
      %v5654 = vadd.f32 0.0, %v5653
      %v5655 = vpop.f32.mrb[0].mxu0
      %5656 = vmatprep.mubr.f32.mxu0 0.0
      %5657 = vmatmul.mubr.f32.gmra.mrb[0].mxu0 %v3569
      %v5658 = vpop.f32.mrb[0].mxu0
      %v5659 = vadd.f32 0.0, %v5658
      %v5660 = vpop.f32.mrb[0].mxu0
      %5661 = vmatprep.mubr.f32.mxu0 0.0
      %5662 = vmatmul.mubr.f32.gmra.mrb[0].mxu0 %v3571
      %v5663 = vpop.f32.mrb[0].mxu0
      %v5664 = vadd.f32 0.0, %v5663
      %v5665 = vpop.f32.mrb[0].mxu0
      %5666 = vmatprep.mubr.f32.mxu0 0.0
      %5667 = vmatmul.mubr.f32.gmra.mrb[0].mxu0 %v3573
      %v5668 = vpop.f32.mrb[0].mxu0
      %v5669 = vadd.f32 0.0, %v5668
      %v5670 = vpop.f32.mrb[0].mxu0
      %5671 = vmatprep.mubr.f32.mxu0 0.0
      %5672 = vmatmul.mubr.f32.gmra.mrb[0].mxu0 %v3575
      %v5673 = vpop.f32.mrb[0].mxu0
      %v5674 = vadd.f32 0.0, %v5673
      %v5675 = vpop.f32.mrb[0].mxu0
      %5676 = vmatprep.mubr.f32.mxu0 0.0
      %5677 = vmatmul.mubr.f32.gmra.mrb[0].mxu0 %v3577
      %v5678 = vpop.f32.mrb[0].mxu0
      %v5679 = vadd.f32 0.0, %v5678
      %v5680 = vpop.f32.mrb[0].mxu0
      %5681 = vmatprep.mubr.f32.mxu0 0.0
      %5682 = vmatmul.mubr.f32.gmra.mrb[0].mxu0 %v3579
      %v5683 = vpop.f32.mrb[0].mxu0
      %v5684 = vadd.f32 0.0, %v5683
      %v5685 = vpop.f32.mrb[0].mxu0
      %5686 = vmatprep.mubr.f32.mxu0 0.0
      %5687 = vmatmul.mubr.f32.gmra.mrb[0].mxu0 %v3581
      %v5688 = vpop.f32.mrb[0].mxu0
      %v5689 = vadd.f32 0.0, %v5688
      %v5690 = vpop.f32.mrb[0].mxu0
      %5691 = vmatprep.mubr.f32.mxu0 0.0
      %5692 = vmatmul.mubr.f32.gmra.mrb[0].mxu0 %v3583
      %v5693 = vpop.f32.mrb[0].mxu0
      %v5694 = vadd.f32 0.0, %v5693
      %v5695 = vpop.f32.mrb[0].mxu0
      %5696 = vmatprep.mubr.f32.mxu0 0.0
      %5697 = vmatmul.mubr.f32.gmra.mrb[0].mxu0 %v3585
      %v5698 = vpop.f32.mrb[0].mxu0
      %v5699 = vadd.f32 0.0, %v5698
      %v5700 = vpop.f32.mrb[0].mxu0
      %5701 = vmatprep.mubr.f32.mxu0 0.0
      %5702 = vmatmul.mubr.f32.gmra.mrb[0].mxu0 %v3587
      %v5703 = vpop.f32.mrb[0].mxu0
      %v5704 = vadd.f32 0.0, %v5703
      %v5705 = vpop.f32.mrb[0].mxu0
      %5706 = vmatprep.mubr.f32.mxu0 0.0
      %5707 = vmatmul.mubr.f32.gmra.mrb[0].mxu0 %v3589
      %v5708 = vpop.f32.mrb[0].mxu0
      %v5709 = vadd.f32 0.0, %v5708
      %v5710 = vpop.f32.mrb[0].mxu0
      %5711 = vmatprep.mubr.f32.mxu0 0.0
      %5712 = vmatmul.mubr.f32.gmra.mrb[0].mxu0 %v3591
      %v5713 = vpop.f32.mrb[0].mxu0
      %v5714 = vadd.f32 0.0, %v5713
      %v5715 = vpop.f32.mrb[0].mxu0
      %5716 = vmatprep.mubr.f32.mxu0 0.0
      %5717 = vmatmul.mubr.f32.gmra.mrb[0].mxu0 %v3593
      %v5718 = vpop.f32.mrb[0].mxu0
      %v5719 = vadd.f32 0.0, %v5718
      %v5720 = vpop.f32.mrb[0].mxu0
      %5721 = vmatprep.mubr.f32.mxu0 0.0
      %5722 = vmatmul.mubr.f32.gmra.mrb[0].mxu0 %v3595
      %v5723 = vpop.f32.mrb[0].mxu0
      %v5724 = vadd.f32 0.0, %v5723
      %v5725 = vpop.f32.mrb[0].mxu0
      %5726 = vmatprep.mubr.f32.mxu0 0.0
      %5727 = vmatmul.mubr.f32.gmra.mrb[0].mxu0 %v3597
      %v5728 = vpop.f32.mrb[0].mxu0
      %v5729 = vadd.f32 0.0, %v5728
      %v5730 = vpop.f32.mrb[0].mxu0
      %5731 = vmatprep.mubr.f32.mxu0 0.0
      %5732 = vmatmul.mubr.f32.gmra.mrb[0].mxu0 %v3599
      %v5733 = vpop.f32.mrb[0].mxu0
      %v5734 = vadd.f32 0.0, %v5733
      %v5735 = vpop.f32.mrb[0].mxu0
      %5736 = vmatprep.mubr.f32.mxu0 0.0
      %5737 = vmatmul.mubr.f32.gmra.mrb[0].mxu0 %v3601
      %v5738 = vpop.f32.mrb[0].mxu0
      %v5739 = vadd.f32 0.0, %v5738
      %v5740 = vpop.f32.mrb[0].mxu0
      %5741 = vmatprep.mubr.f32.mxu0 0.0
      %5742 = vmatmul.mubr.f32.gmra.mrb[0].mxu0 %v3603
      %v5743 = vpop.f32.mrb[0].mxu0
      %v5744 = vadd.f32 0.0, %v5743
      %v5745 = vpop.f32.mrb[0].mxu0
      %5746 = vmatprep.mubr.f32.mxu0 0.0
      %5747 = vmatmul.mubr.f32.gmra.mrb[0].mxu0 %v3605
      %v5748 = vpop.f32.mrb[0].mxu0
      %v5749 = vadd.f32 0.0, %v5748
      %v5750 = vpop.f32.mrb[0].mxu0
      %5751 = vmatprep.mubr.f32.mxu0 0.0
      %5752 = vmatmul.mubr.f32.gmra.mrb[0].mxu0 %v3607
      %v5753 = vpop.f32.mrb[0].mxu0
      %v5754 = vadd.f32 0.0, %v5753
      %v5755 = vpop.f32.mrb[0].mxu0
      %5756 = vmatprep.mubr.f32.mxu0 0.0
      %5757 = vmatmul.mubr.f32.gmra.mrb[0].mxu0 %v3609
      %v5758 = vpop.f32.mrb[0].mxu0
      %v5759 = vadd.f32 0.0, %v5758
      %v5760 = vpop.f32.mrb[0].mxu0
      %5761 = vmatprep.mubr.f32.mxu0 0.0
      %5762 = vmatmul.mubr.f32.gmra.mrb[0].mxu0 %v3611
      %v5763 = vpop.f32.mrb[0].mxu0
      %v5764 = vadd.f32 0.0, %v5763
      %v5765 = vpop.f32.mrb[0].mxu0
      %5766 = vmatprep.mubr.f32.mxu0 0.0
      %5767 = vmatmul.mubr.f32.gmra.mrb[0].mxu0 %v3613
      %v5768 = vpop.f32.mrb[0].mxu0
      %v5769 = vadd.f32 0.0, %v5768
      %v5770 = vpop.f32.mrb[0].mxu0
      %5771 = vmatprep.mubr.f32.mxu0 0.0
      %5772 = vmatmul.mubr.f32.gmra.mrb[0].mxu0 %v3615
      %v5773 = vpop.f32.mrb[0].mxu0
      %v5774 = vadd.f32 0.0, %v5773
      %v5775 = vpop.f32.mrb[0].mxu0
      %5776 = vmatprep.mubr.f32.mxu0 0.0
      %5777 = vmatmul.mubr.f32.gmra.mrb[0].mxu0 %v3617
      %v5778 = vpop.f32.mrb[0].mxu0
      %v5779 = vadd.f32 0.0, %v5778
      %v5780 = vpop.f32.mrb[0].mxu0
      %5781 = vmatprep.mubr.f32.mxu0 0.0
      %5782 = vmatmul.mubr.f32.gmra.mrb[0].mxu0 %v3619
      %v5783 = vpop.f32.mrb[0].mxu0
      %v5784 = vadd.f32 0.0, %v5783
      %v5785 = vpop.f32.mrb[0].mxu0
      %5786 = vmatprep.mubr.f32.mxu0 0.0
      %5787 = vmatmul.mubr.f32.gmra.mrb[0].mxu0 %v3621
      %v5788 = vpop.f32.mrb[0].mxu0
      %v5789 = vadd.f32 0.0, %v5788
      %v5790 = vpop.f32.mrb[0].mxu0
      %5791 = vmatprep.mubr.f32.mxu0 0.0
      %5792 = vmatmul.mubr.f32.gmra.mrb[0].mxu0 %v3559
      %v5793 = vpop.f32.mrb[0].mxu0
      %v5794 = vadd.f32 0.0, %v5793
      %v5795 = vpop.f32.mrb[0].mxu0
      %5796 = vmatprep.mubr.f32.mxu0 0.0
      %5797 = vmatmul.mubr.f32.gmra.mrb[0].mxu0 %v3561
      %v5798 = vpop.f32.mrb[0].mxu0
      %v5799 = vadd.f32 0.0, %v5798
      %v5800 = vpop.f32.mrb[0].mxu0
      %5801 = vmatprep.mubr.f32.mxu0 0.0
      %5802 = vmatmul.mubr.f32.gmra.mrb[0].mxu0 %v3563
      %v5803 = vpop.f32.mrb[0].mxu0
      %v5804 = vadd.f32 0.0, %v5803
      %v5805 = vpop.f32.mrb[0].mxu0
      %5806 = vmatprep.mubr.f32.mxu0 0.0
      %5807 = vmatmul.mubr.f32.gmra.mrb[0].mxu0 %v3565
      %v5808 = vpop.f32.mrb[0].mxu0
      %v5809 = vadd.f32 0.0, %v5808
      %v5810 = vpop.f32.mrb[0].mxu0
      %5811 = vdwg.mxu0
      %v5812 = vadd.f32 %v5550, %v5654
      %v5813 = vadd.f32 %v5551, %v5659
      %v5814 = vadd.f32 %v5552, %v5664
      %v5815 = vadd.f32 %v5553, %v5669
      %v5816 = vadd.f32 %v5554, %v5674
      %v5817 = vadd.f32 %v5555, %v5679
      %v5818 = vadd.f32 %v5556, %v5684
      %v5819 = vadd.f32 %v5557, %v5689
      %v5820 = vadd.f32 %v5558, %v5694
      %v5821 = vadd.f32 %v5559, %v5699
      %v5822 = vadd.f32 %v5560, %v5704
      %v5823 = vadd.f32 %v5561, %v5709
      %v5824 = vadd.f32 %v5562, %v5714
      %v5825 = vadd.f32 %v5563, %v5719
      %v5826 = vadd.f32 %v5564, %v5724
      %v5827 = vadd.f32 %v5565, %v5729
      %v5828 = vadd.f32 %v5566, %v5734
      %v5829 = vadd.f32 %v5567, %v5739
      %v5830 = vadd.f32 %v5568, %v5744
      %v5831 = vadd.f32 %v5569, %v5749
      %v5832 = vadd.f32 %v5570, %v5754
      %v5833 = vadd.f32 %v5571, %v5759
      %v5834 = vadd.f32 %v5572, %v5764
      %v5835 = vadd.f32 %v5573, %v5769
      %v5836 = vadd.f32 %v5574, %v5774
      %v5837 = vadd.f32 %v5575, %v5779
      %v5838 = vadd.f32 %v5576, %v5784
      %v5839 = vadd.f32 %v5577, %v5789
      %v5840 = vadd.f32 %v5578, %v5794
      %v5841 = vadd.f32 %v5579, %v5799
      %v5842 = vadd.f32 %v5580, %v5804
      %v5843 = vadd.f32 %v5581, %v5809
      %s5844 = scalar_lea.vmem %s6, 16
      %v5845 = vld [vmem:[%s5844] sm:$0x3]
      %v5847 = vsel %vm3623, %v5845, 0
      %5849 = vmatprep.subr.mxu0 0.0
      %5850 = vmatpush1.msra.mxu0 %v5847
      %5851 = vmatprep.subr.mxu0 0.0
      %5852 = vmatpush1.msra.mxu0 0.0
      %5853 = vmatprep.subr.mxu0 0.0
      %5854 = vmatpush1.msra.mxu0 0.0
      %5855 = vmatprep.subr.mxu0 0.0
      %5856 = vmatpush1.msra.mxu0 0.0
      %5857 = vmatprep.subr.mxu0 0.0
      %5858 = vmatpush1.msra.mxu0 0.0
      %5859 = vmatprep.subr.mxu0 0.0
      %5860 = vmatpush1.msra.mxu0 0.0
      %5861 = vmatprep.subr.mxu0 0.0
      %5862 = vmatpush1.msra.mxu0 0.0
      %5863 = vmatprep.subr.mxu0 0.0
      %5864 = vmatpush1.msra.mxu0 0.0
      %5865 = vmatprep.subr.mxu0 0.0
      %5866 = vmatpush1.msra.mxu0 0.0
      %5867 = vmatprep.subr.mxu0 0.0
      %5868 = vmatpush1.msra.mxu0 0.0
      %5869 = vmatprep.subr.mxu0 0.0
      %5870 = vmatpush1.msra.mxu0 0.0
      %5871 = vmatprep.subr.mxu0 0.0
      %5872 = vmatpush1.msra.mxu0 0.0
      %5873 = vmatprep.subr.mxu0 0.0
      %5874 = vmatpush1.msra.mxu0 0.0
      %5875 = vmatprep.subr.mxu0 0.0
      %5876 = vmatpush1.msra.mxu0 0.0
      %5877 = vmatprep.subr.mxu0 0.0
      %5878 = vmatpush1.msra.mxu0 0.0
      %5879 = vmatprep.subr.mxu0 0.0
      %5880 = vmatpush1.msra.mxu0 0.0
      %5881 = vmatprep.subr.mxu0 0.0
      %5882 = vmatpush1.msra.mxu0 0.0
      %5883 = vmatprep.subr.mxu0 0.0
      %5884 = vmatpush1.msra.mxu0 0.0
      %5885 = vmatprep.subr.mxu0 0.0
      %5886 = vmatpush1.msra.mxu0 0.0
      %5887 = vmatprep.subr.mxu0 0.0
      %5888 = vmatpush1.msra.mxu0 0.0
      %5889 = vmatprep.subr.mxu0 0.0
      %5890 = vmatpush1.msra.mxu0 0.0
      %5891 = vmatprep.subr.mxu0 0.0
      %5892 = vmatpush1.msra.mxu0 0.0
      %5893 = vmatprep.subr.mxu0 0.0
      %5894 = vmatpush1.msra.mxu0 0.0
      %5895 = vmatprep.subr.mxu0 0.0
      %5896 = vmatpush1.msra.mxu0 0.0
      %5897 = vmatprep.subr.mxu0 0.0
      %5898 = vmatpush1.msra.mxu0 0.0
      %5899 = vmatprep.subr.mxu0 0.0
      %5900 = vmatpush1.msra.mxu0 0.0
      %5901 = vmatprep.subr.mxu0 0.0
      %5902 = vmatpush1.msra.mxu0 0.0
      %5903 = vmatprep.subr.mxu0 0.0
      %5904 = vmatpush1.msra.mxu0 0.0
      %5905 = vmatprep.subr.mxu0 0.0
      %5906 = vmatpush1.msra.mxu0 0.0
      %5907 = vmatprep.subr.mxu0 0.0
      %5908 = vmatpush1.msra.mxu0 0.0
      %5909 = vmatprep.subr.mxu0 0.0
      %5910 = vmatpush1.msra.mxu0 0.0
      %5911 = vmatprep.subr.mxu0 0.0
      %5912 = vmatpush1.msra.mxu0 0.0
      %5913 = vmatprep.mubr.f32.mxu0 0.0
      %5914 = vmatmul.mubr.f32.gmra.mrb[0].mxu0 %v4218
      %v5915 = vpop.f32.mrb[0].mxu0
      %v5916 = vadd.f32 0.0, %v5915
      %v5917 = vpop.f32.mrb[0].mxu0
      %5918 = vmatprep.mubr.f32.mxu0 0.0
      %5919 = vmatmul.mubr.f32.gmra.mrb[0].mxu0 %v4220
      %v5920 = vpop.f32.mrb[0].mxu0
      %v5921 = vadd.f32 0.0, %v5920
      %v5922 = vpop.f32.mrb[0].mxu0
      %5923 = vmatprep.mubr.f32.mxu0 0.0
      %5924 = vmatmul.mubr.f32.gmra.mrb[0].mxu0 %v4222
      %v5925 = vpop.f32.mrb[0].mxu0
      %v5926 = vadd.f32 0.0, %v5925
      %v5927 = vpop.f32.mrb[0].mxu0
      %5928 = vmatprep.mubr.f32.mxu0 0.0
      %5929 = vmatmul.mubr.f32.gmra.mrb[0].mxu0 %v4224
      %v5930 = vpop.f32.mrb[0].mxu0
      %v5931 = vadd.f32 0.0, %v5930
      %v5932 = vpop.f32.mrb[0].mxu0
      %5933 = vmatprep.mubr.f32.mxu0 0.0
      %5934 = vmatmul.mubr.f32.gmra.mrb[0].mxu0 %v4226
      %v5935 = vpop.f32.mrb[0].mxu0
      %v5936 = vadd.f32 0.0, %v5935
      %v5937 = vpop.f32.mrb[0].mxu0
      %5938 = vmatprep.mubr.f32.mxu0 0.0
      %5939 = vmatmul.mubr.f32.gmra.mrb[0].mxu0 %v4228
      %v5940 = vpop.f32.mrb[0].mxu0
      %v5941 = vadd.f32 0.0, %v5940
      %v5942 = vpop.f32.mrb[0].mxu0
      %5943 = vmatprep.mubr.f32.mxu0 0.0
      %5944 = vmatmul.mubr.f32.gmra.mrb[0].mxu0 %v4230
      %v5945 = vpop.f32.mrb[0].mxu0
      %v5946 = vadd.f32 0.0, %v5945
      %v5947 = vpop.f32.mrb[0].mxu0
      %5948 = vmatprep.mubr.f32.mxu0 0.0
      %5949 = vmatmul.mubr.f32.gmra.mrb[0].mxu0 %v4232
      %v5950 = vpop.f32.mrb[0].mxu0
      %v5951 = vadd.f32 0.0, %v5950
      %v5952 = vpop.f32.mrb[0].mxu0
      %5953 = vmatprep.mubr.f32.mxu0 0.0
      %5954 = vmatmul.mubr.f32.gmra.mrb[0].mxu0 %v4234
      %v5955 = vpop.f32.mrb[0].mxu0
      %v5956 = vadd.f32 0.0, %v5955
      %v5957 = vpop.f32.mrb[0].mxu0
      %5958 = vmatprep.mubr.f32.mxu0 0.0
      %5959 = vmatmul.mubr.f32.gmra.mrb[0].mxu0 %v4236
      %v5960 = vpop.f32.mrb[0].mxu0
      %v5961 = vadd.f32 0.0, %v5960
      %v5962 = vpop.f32.mrb[0].mxu0
      %5963 = vmatprep.mubr.f32.mxu0 0.0
      %5964 = vmatmul.mubr.f32.gmra.mrb[0].mxu0 %v4238
      %v5965 = vpop.f32.mrb[0].mxu0
      %v5966 = vadd.f32 0.0, %v5965
      %v5967 = vpop.f32.mrb[0].mxu0
      %5968 = vmatprep.mubr.f32.mxu0 0.0
      %5969 = vmatmul.mubr.f32.gmra.mrb[0].mxu0 %v4240
      %v5970 = vpop.f32.mrb[0].mxu0
      %v5971 = vadd.f32 0.0, %v5970
      %v5972 = vpop.f32.mrb[0].mxu0
      %5973 = vmatprep.mubr.f32.mxu0 0.0
      %5974 = vmatmul.mubr.f32.gmra.mrb[0].mxu0 %v4242
      %v5975 = vpop.f32.mrb[0].mxu0
      %v5976 = vadd.f32 0.0, %v5975
      %v5977 = vpop.f32.mrb[0].mxu0
      %5978 = vmatprep.mubr.f32.mxu0 0.0
      %5979 = vmatmul.mubr.f32.gmra.mrb[0].mxu0 %v4244
      %v5980 = vpop.f32.mrb[0].mxu0
      %v5981 = vadd.f32 0.0, %v5980
      %v5982 = vpop.f32.mrb[0].mxu0
      %5983 = vmatprep.mubr.f32.mxu0 0.0
      %5984 = vmatmul.mubr.f32.gmra.mrb[0].mxu0 %v4246
      %v5985 = vpop.f32.mrb[0].mxu0
      %v5986 = vadd.f32 0.0, %v5985
      %v5987 = vpop.f32.mrb[0].mxu0
      %5988 = vmatprep.mubr.f32.mxu0 0.0
      %5989 = vmatmul.mubr.f32.gmra.mrb[0].mxu0 %v4248
      %v5990 = vpop.f32.mrb[0].mxu0
      %v5991 = vadd.f32 0.0, %v5990
      %v5992 = vpop.f32.mrb[0].mxu0
      %5993 = vmatprep.mubr.f32.mxu0 0.0
      %5994 = vmatmul.mubr.f32.gmra.mrb[0].mxu0 %v4250
      %v5995 = vpop.f32.mrb[0].mxu0
      %v5996 = vadd.f32 0.0, %v5995
      %v5997 = vpop.f32.mrb[0].mxu0
      %5998 = vmatprep.mubr.f32.mxu0 0.0
      %5999 = vmatmul.mubr.f32.gmra.mrb[0].mxu0 %v4252
      %v6000 = vpop.f32.mrb[0].mxu0
      %v6001 = vadd.f32 0.0, %v6000
      %v6002 = vpop.f32.mrb[0].mxu0
      %6003 = vmatprep.mubr.f32.mxu0 0.0
      %6004 = vmatmul.mubr.f32.gmra.mrb[0].mxu0 %v4254
      %v6005 = vpop.f32.mrb[0].mxu0
      %v6006 = vadd.f32 0.0, %v6005
      %v6007 = vpop.f32.mrb[0].mxu0
      %6008 = vmatprep.mubr.f32.mxu0 0.0
      %6009 = vmatmul.mubr.f32.gmra.mrb[0].mxu0 %v4256
      %v6010 = vpop.f32.mrb[0].mxu0
      %v6011 = vadd.f32 0.0, %v6010
      %v6012 = vpop.f32.mrb[0].mxu0
      %6013 = vmatprep.mubr.f32.mxu0 0.0
      %6014 = vmatmul.mubr.f32.gmra.mrb[0].mxu0 %v4258
      %v6015 = vpop.f32.mrb[0].mxu0
      %v6016 = vadd.f32 0.0, %v6015
      %v6017 = vpop.f32.mrb[0].mxu0
      %6018 = vmatprep.mubr.f32.mxu0 0.0
      %6019 = vmatmul.mubr.f32.gmra.mrb[0].mxu0 %v4260
      %v6020 = vpop.f32.mrb[0].mxu0
      %v6021 = vadd.f32 0.0, %v6020
      %v6022 = vpop.f32.mrb[0].mxu0
      %6023 = vmatprep.mubr.f32.mxu0 0.0
      %6024 = vmatmul.mubr.f32.gmra.mrb[0].mxu0 %v4262
      %v6025 = vpop.f32.mrb[0].mxu0
      %v6026 = vadd.f32 0.0, %v6025
      %v6027 = vpop.f32.mrb[0].mxu0
      %6028 = vmatprep.mubr.f32.mxu0 0.0
      %6029 = vmatmul.mubr.f32.gmra.mrb[0].mxu0 %v4264
      %v6030 = vpop.f32.mrb[0].mxu0
      %v6031 = vadd.f32 0.0, %v6030
      %v6032 = vpop.f32.mrb[0].mxu0
      %6033 = vmatprep.mubr.f32.mxu0 0.0
      %6034 = vmatmul.mubr.f32.gmra.mrb[0].mxu0 %v4266
      %v6035 = vpop.f32.mrb[0].mxu0
      %v6036 = vadd.f32 0.0, %v6035
      %v6037 = vpop.f32.mrb[0].mxu0
      %6038 = vmatprep.mubr.f32.mxu0 0.0
      %6039 = vmatmul.mubr.f32.gmra.mrb[0].mxu0 %v4268
      %v6040 = vpop.f32.mrb[0].mxu0
      %v6041 = vadd.f32 0.0, %v6040
      %v6042 = vpop.f32.mrb[0].mxu0
      %6043 = vmatprep.mubr.f32.mxu0 0.0
      %6044 = vmatmul.mubr.f32.gmra.mrb[0].mxu0 %v4270
      %v6045 = vpop.f32.mrb[0].mxu0
      %v6046 = vadd.f32 0.0, %v6045
      %v6047 = vpop.f32.mrb[0].mxu0
      %6048 = vmatprep.mubr.f32.mxu0 0.0
      %6049 = vmatmul.mubr.f32.gmra.mrb[0].mxu0 %v4272
      %v6050 = vpop.f32.mrb[0].mxu0
      %v6051 = vadd.f32 0.0, %v6050
      %v6052 = vpop.f32.mrb[0].mxu0
      %6053 = vmatprep.mubr.f32.mxu0 0.0
      %6054 = vmatmul.mubr.f32.gmra.mrb[0].mxu0 %v4210
      %v6055 = vpop.f32.mrb[0].mxu0
      %v6056 = vadd.f32 0.0, %v6055
      %v6057 = vpop.f32.mrb[0].mxu0
      %6058 = vmatprep.mubr.f32.mxu0 0.0
      %6059 = vmatmul.mubr.f32.gmra.mrb[0].mxu0 %v4212
      %v6060 = vpop.f32.mrb[0].mxu0
      %v6061 = vadd.f32 0.0, %v6060
      %v6062 = vpop.f32.mrb[0].mxu0
      %6063 = vmatprep.mubr.f32.mxu0 0.0
      %6064 = vmatmul.mubr.f32.gmra.mrb[0].mxu0 %v4214
      %v6065 = vpop.f32.mrb[0].mxu0
      %v6066 = vadd.f32 0.0, %v6065
      %v6067 = vpop.f32.mrb[0].mxu0
      %6068 = vmatprep.mubr.f32.mxu0 0.0
      %6069 = vmatmul.mubr.f32.gmra.mrb[0].mxu0 %v4216
      %v6070 = vpop.f32.mrb[0].mxu0
      %v6071 = vadd.f32 0.0, %v6070
      %v6072 = vpop.f32.mrb[0].mxu0
      %6073 = vdwg.mxu0
      %v6074 = vadd.f32 %v5812, %v5916
      %v6075 = vadd.f32 %v5813, %v5921
      %v6076 = vadd.f32 %v5814, %v5926
      %v6077 = vadd.f32 %v5815, %v5931
      %v6078 = vadd.f32 %v5816, %v5936
      %v6079 = vadd.f32 %v5817, %v5941
      %v6080 = vadd.f32 %v5818, %v5946
      %v6081 = vadd.f32 %v5819, %v5951
      %v6082 = vadd.f32 %v5820, %v5956
      %v6083 = vadd.f32 %v5821, %v5961
      %v6084 = vadd.f32 %v5822, %v5966
      %v6085 = vadd.f32 %v5823, %v5971
      %v6086 = vadd.f32 %v5824, %v5976
      %v6087 = vadd.f32 %v5825, %v5981
      %v6088 = vadd.f32 %v5826, %v5986
      %v6089 = vadd.f32 %v5827, %v5991
      %v6090 = vadd.f32 %v5828, %v5996
      %v6091 = vadd.f32 %v5829, %v6001
      %v6092 = vadd.f32 %v5830, %v6006
      %v6093 = vadd.f32 %v5831, %v6011
      %v6094 = vadd.f32 %v5832, %v6016
      %v6095 = vadd.f32 %v5833, %v6021
      %v6096 = vadd.f32 %v5834, %v6026
      %v6097 = vadd.f32 %v5835, %v6031
      %v6098 = vadd.f32 %v5836, %v6036
      %v6099 = vadd.f32 %v5837, %v6041
      %v6100 = vadd.f32 %v5838, %v6046
      %v6101 = vadd.f32 %v5839, %v6051
      %v6102 = vadd.f32 %v5840, %v6056
      %v6103 = vadd.f32 %v5841, %v6061
      %v6104 = vadd.f32 %v5842, %v6066
      %v6105 = vadd.f32 %v5843, %v6071
      %v6106 = vld [vmem:[%s7] sm:$0x3]
      %v6107 = vld [vmem:[%s8] sm:$0x1]
      %v6109 = vlaneseq
      %v6110 = vshrl.u32 %v6109, 7
      %v6111 = vsub.s32 0, %v6110
      %v6112 = vrot.slane %v6107, %v6111
      %v6115 = vsel %vm3558, %v6074, 0
      %v6118 = vsel %vm3558, %v6075, 0
      %v6121 = vsel %vm3558, %v6076, 0
      %v6124 = vsel %vm3558, %v6077, 0
      %v6127 = vsel %vm3558, %v6078, 0
      %v6130 = vsel %vm3558, %v6079, 0
      %v6133 = vsel %vm3558, %v6080, 0
      %v6136 = vsel %vm3558, %v6081, 0
      %v6139 = vsel %vm3558, %v6082, 0
      %v6142 = vsel %vm3558, %v6083, 0
      %v6145 = vsel %vm3558, %v6084, 0
      %v6148 = vsel %vm3558, %v6085, 0
      %v6151 = vsel %vm3558, %v6086, 0
      %v6154 = vsel %vm3558, %v6087, 0
      %v6157 = vsel %vm3558, %v6088, 0
      %v6160 = vsel %vm3558, %v6089, 0
      %v6163 = vsel %vm3558, %v6090, 0
      %v6166 = vsel %vm3558, %v6091, 0
      %v6169 = vsel %vm3558, %v6092, 0
      %v6172 = vsel %vm3558, %v6093, 0
      %v6175 = vsel %vm3558, %v6094, 0
      %v6178 = vsel %vm3558, %v6095, 0
      %v6181 = vsel %vm3558, %v6096, 0
      %v6184 = vsel %vm3558, %v6097, 0
      %v6187 = vsel %vm3558, %v6098, 0
      %v6190 = vsel %vm3558, %v6099, 0
      %v6193 = vsel %vm3558, %v6100, 0
      %v6196 = vsel %vm3558, %v6101, 0
      %v6199 = vsel %vm3558, %v6102, 0
      %v6202 = vsel %vm3558, %v6103, 0
      %v6205 = vsel %vm3558, %v6104, 0
      %v6208 = vsel %vm3558, %v6105, 0
      %v6211 = vsel %vm3623, %v6106, 0
      %6213 = vmatprep.subr.mxu0 0.0
      %6214 = vmatpush1.msra.mxu0 %v6211
      %6215 = vmatprep.subr.mxu0 0.0
      %6216 = vmatpush1.msra.mxu0 0.0
      %6217 = vmatprep.subr.mxu0 0.0
      %6218 = vmatpush1.msra.mxu0 0.0
      %6219 = vmatprep.subr.mxu0 0.0
      %6220 = vmatpush1.msra.mxu0 0.0
      %6221 = vmatprep.subr.mxu0 0.0
      %6222 = vmatpush1.msra.mxu0 0.0
      %6223 = vmatprep.subr.mxu0 0.0
      %6224 = vmatpush1.msra.mxu0 0.0
      %6225 = vmatprep.subr.mxu0 0.0
      %6226 = vmatpush1.msra.mxu0 0.0
      %6227 = vmatprep.subr.mxu0 0.0
      %6228 = vmatpush1.msra.mxu0 0.0
      %6229 = vmatprep.subr.mxu0 0.0
      %6230 = vmatpush1.msra.mxu0 0.0
      %6231 = vmatprep.subr.mxu0 0.0
      %6232 = vmatpush1.msra.mxu0 0.0
      %6233 = vmatprep.subr.mxu0 0.0
      %6234 = vmatpush1.msra.mxu0 0.0
      %6235 = vmatprep.subr.mxu0 0.0
      %6236 = vmatpush1.msra.mxu0 0.0
      %6237 = vmatprep.subr.mxu0 0.0
      %6238 = vmatpush1.msra.mxu0 0.0
      %6239 = vmatprep.subr.mxu0 0.0
      %6240 = vmatpush1.msra.mxu0 0.0
      %6241 = vmatprep.subr.mxu0 0.0
      %6242 = vmatpush1.msra.mxu0 0.0
      %6243 = vmatprep.subr.mxu0 0.0
      %6244 = vmatpush1.msra.mxu0 0.0
      %6245 = vmatprep.subr.mxu0 0.0
      %6246 = vmatpush1.msra.mxu0 0.0
      %6247 = vmatprep.subr.mxu0 0.0
      %6248 = vmatpush1.msra.mxu0 0.0
      %6249 = vmatprep.subr.mxu0 0.0
      %6250 = vmatpush1.msra.mxu0 0.0
      %6251 = vmatprep.subr.mxu0 0.0
      %6252 = vmatpush1.msra.mxu0 0.0
      %6253 = vmatprep.subr.mxu0 0.0
      %6254 = vmatpush1.msra.mxu0 0.0
      %6255 = vmatprep.subr.mxu0 0.0
      %6256 = vmatpush1.msra.mxu0 0.0
      %6257 = vmatprep.subr.mxu0 0.0
      %6258 = vmatpush1.msra.mxu0 0.0
      %6259 = vmatprep.subr.mxu0 0.0
      %6260 = vmatpush1.msra.mxu0 0.0
      %6261 = vmatprep.subr.mxu0 0.0
      %6262 = vmatpush1.msra.mxu0 0.0
      %6263 = vmatprep.subr.mxu0 0.0
      %6264 = vmatpush1.msra.mxu0 0.0
      %6265 = vmatprep.subr.mxu0 0.0
      %6266 = vmatpush1.msra.mxu0 0.0
      %6267 = vmatprep.subr.mxu0 0.0
      %6268 = vmatpush1.msra.mxu0 0.0
      %6269 = vmatprep.subr.mxu0 0.0
      %6270 = vmatpush1.msra.mxu0 0.0
      %6271 = vmatprep.subr.mxu0 0.0
      %6272 = vmatpush1.msra.mxu0 0.0
      %6273 = vmatprep.subr.mxu0 0.0
      %6274 = vmatpush1.msra.mxu0 0.0
      %6275 = vmatprep.subr.mxu0 0.0
      %6276 = vmatpush1.msra.mxu0 0.0
      %6277 = vmatprep.mubr.f32.mxu0 0.0
      %6278 = vmatmul.mubr.f32.gmra.mrb[0].mxu0 %v6115
      %v6279 = vpop.f32.mrb[0].mxu0
      %v6280 = vadd.f32 %v6112, %v6279
      %v6281 = vpop.f32.mrb[0].mxu0
      %6282 = vmatprep.mubr.f32.mxu0 0.0
      %6283 = vmatmul.mubr.f32.gmra.mrb[0].mxu0 %v6118
      %v6284 = vpop.f32.mrb[0].mxu0
      %v6285 = vadd.f32 %v6112, %v6284
      %v6286 = vpop.f32.mrb[0].mxu0
      %6287 = vmatprep.mubr.f32.mxu0 0.0
      %6288 = vmatmul.mubr.f32.gmra.mrb[0].mxu0 %v6121
      %v6289 = vpop.f32.mrb[0].mxu0
      %v6290 = vadd.f32 %v6112, %v6289
      %v6291 = vpop.f32.mrb[0].mxu0
      %6292 = vmatprep.mubr.f32.mxu0 0.0
      %6293 = vmatmul.mubr.f32.gmra.mrb[0].mxu0 %v6124
      %v6294 = vpop.f32.mrb[0].mxu0
      %v6295 = vadd.f32 %v6112, %v6294
      %v6296 = vpop.f32.mrb[0].mxu0
      %6297 = vmatprep.mubr.f32.mxu0 0.0
      %6298 = vmatmul.mubr.f32.gmra.mrb[0].mxu0 %v6127
      %v6299 = vpop.f32.mrb[0].mxu0
      %v6300 = vadd.f32 %v6112, %v6299
      %v6301 = vpop.f32.mrb[0].mxu0
      %6302 = vmatprep.mubr.f32.mxu0 0.0
      %6303 = vmatmul.mubr.f32.gmra.mrb[0].mxu0 %v6130
      %v6304 = vpop.f32.mrb[0].mxu0
      %v6305 = vadd.f32 %v6112, %v6304
      %v6306 = vpop.f32.mrb[0].mxu0
      %6307 = vmatprep.mubr.f32.mxu0 0.0
      %6308 = vmatmul.mubr.f32.gmra.mrb[0].mxu0 %v6133
      %v6309 = vpop.f32.mrb[0].mxu0
      %v6310 = vadd.f32 %v6112, %v6309
      %v6311 = vpop.f32.mrb[0].mxu0
      %6312 = vmatprep.mubr.f32.mxu0 0.0
      %6313 = vmatmul.mubr.f32.gmra.mrb[0].mxu0 %v6136
      %v6314 = vpop.f32.mrb[0].mxu0
      %v6315 = vadd.f32 %v6112, %v6314
      %v6316 = vpop.f32.mrb[0].mxu0
      %6317 = vmatprep.mubr.f32.mxu0 0.0
      %6318 = vmatmul.mubr.f32.gmra.mrb[0].mxu0 %v6139
      %v6319 = vpop.f32.mrb[0].mxu0
      %v6320 = vadd.f32 %v6112, %v6319
      %v6321 = vpop.f32.mrb[0].mxu0
      %6322 = vmatprep.mubr.f32.mxu0 0.0
      %6323 = vmatmul.mubr.f32.gmra.mrb[0].mxu0 %v6142
      %v6324 = vpop.f32.mrb[0].mxu0
      %v6325 = vadd.f32 %v6112, %v6324
      %v6326 = vpop.f32.mrb[0].mxu0
      %6327 = vmatprep.mubr.f32.mxu0 0.0
      %6328 = vmatmul.mubr.f32.gmra.mrb[0].mxu0 %v6145
      %v6329 = vpop.f32.mrb[0].mxu0
      %v6330 = vadd.f32 %v6112, %v6329
      %v6331 = vpop.f32.mrb[0].mxu0
      %6332 = vmatprep.mubr.f32.mxu0 0.0
      %6333 = vmatmul.mubr.f32.gmra.mrb[0].mxu0 %v6148
      %v6334 = vpop.f32.mrb[0].mxu0
      %v6335 = vadd.f32 %v6112, %v6334
      %v6336 = vpop.f32.mrb[0].mxu0
      %6337 = vmatprep.mubr.f32.mxu0 0.0
      %6338 = vmatmul.mubr.f32.gmra.mrb[0].mxu0 %v6151
      %v6339 = vpop.f32.mrb[0].mxu0
      %v6340 = vadd.f32 %v6112, %v6339
      %v6341 = vpop.f32.mrb[0].mxu0
      %6342 = vmatprep.mubr.f32.mxu0 0.0
      %6343 = vmatmul.mubr.f32.gmra.mrb[0].mxu0 %v6154
      %v6344 = vpop.f32.mrb[0].mxu0
      %v6345 = vadd.f32 %v6112, %v6344
      %v6346 = vpop.f32.mrb[0].mxu0
      %6347 = vmatprep.mubr.f32.mxu0 0.0
      %6348 = vmatmul.mubr.f32.gmra.mrb[0].mxu0 %v6157
      %v6349 = vpop.f32.mrb[0].mxu0
      %v6350 = vadd.f32 %v6112, %v6349
      %v6351 = vpop.f32.mrb[0].mxu0
      %6352 = vmatprep.mubr.f32.mxu0 0.0
      %6353 = vmatmul.mubr.f32.gmra.mrb[0].mxu0 %v6160
      %v6354 = vpop.f32.mrb[0].mxu0
      %v6355 = vadd.f32 %v6112, %v6354
      %v6356 = vpop.f32.mrb[0].mxu0
      %6357 = vmatprep.mubr.f32.mxu0 0.0
      %6358 = vmatmul.mubr.f32.gmra.mrb[0].mxu0 %v6163
      %v6359 = vpop.f32.mrb[0].mxu0
      %v6360 = vadd.f32 %v6112, %v6359
      %v6361 = vpop.f32.mrb[0].mxu0
      %6362 = vmatprep.mubr.f32.mxu0 0.0
      %6363 = vmatmul.mubr.f32.gmra.mrb[0].mxu0 %v6166
      %v6364 = vpop.f32.mrb[0].mxu0
      %v6365 = vadd.f32 %v6112, %v6364
      %v6366 = vpop.f32.mrb[0].mxu0
      %6367 = vmatprep.mubr.f32.mxu0 0.0
      %6368 = vmatmul.mubr.f32.gmra.mrb[0].mxu0 %v6169
      %v6369 = vpop.f32.mrb[0].mxu0
      %v6370 = vadd.f32 %v6112, %v6369
      %v6371 = vpop.f32.mrb[0].mxu0
      %6372 = vmatprep.mubr.f32.mxu0 0.0
      %6373 = vmatmul.mubr.f32.gmra.mrb[0].mxu0 %v6172
      %v6374 = vpop.f32.mrb[0].mxu0
      %v6375 = vadd.f32 %v6112, %v6374
      %v6376 = vpop.f32.mrb[0].mxu0
      %6377 = vmatprep.mubr.f32.mxu0 0.0
      %6378 = vmatmul.mubr.f32.gmra.mrb[0].mxu0 %v6175
      %v6379 = vpop.f32.mrb[0].mxu0
      %v6380 = vadd.f32 %v6112, %v6379
      %v6381 = vpop.f32.mrb[0].mxu0
      %6382 = vmatprep.mubr.f32.mxu0 0.0
      %6383 = vmatmul.mubr.f32.gmra.mrb[0].mxu0 %v6178
      %v6384 = vpop.f32.mrb[0].mxu0
      %v6385 = vadd.f32 %v6112, %v6384
      %v6386 = vpop.f32.mrb[0].mxu0
      %6387 = vmatprep.mubr.f32.mxu0 0.0
      %6388 = vmatmul.mubr.f32.gmra.mrb[0].mxu0 %v6181
      %v6389 = vpop.f32.mrb[0].mxu0
      %v6390 = vadd.f32 %v6112, %v6389
      %v6391 = vpop.f32.mrb[0].mxu0
      %6392 = vmatprep.mubr.f32.mxu0 0.0
      %6393 = vmatmul.mubr.f32.gmra.mrb[0].mxu0 %v6184
      %v6394 = vpop.f32.mrb[0].mxu0
      %v6395 = vadd.f32 %v6112, %v6394
      %v6396 = vpop.f32.mrb[0].mxu0
      %6397 = vmatprep.mubr.f32.mxu0 0.0
      %6398 = vmatmul.mubr.f32.gmra.mrb[0].mxu0 %v6187
      %v6399 = vpop.f32.mrb[0].mxu0
      %v6400 = vadd.f32 %v6112, %v6399
      %v6401 = vpop.f32.mrb[0].mxu0
      %6402 = vmatprep.mubr.f32.mxu0 0.0
      %6403 = vmatmul.mubr.f32.gmra.mrb[0].mxu0 %v6190
      %v6404 = vpop.f32.mrb[0].mxu0
      %v6405 = vadd.f32 %v6112, %v6404
      %v6406 = vpop.f32.mrb[0].mxu0
      %6407 = vmatprep.mubr.f32.mxu0 0.0
      %6408 = vmatmul.mubr.f32.gmra.mrb[0].mxu0 %v6193
      %v6409 = vpop.f32.mrb[0].mxu0
      %v6410 = vadd.f32 %v6112, %v6409
      %v6411 = vpop.f32.mrb[0].mxu0
      %6412 = vmatprep.mubr.f32.mxu0 0.0
      %6413 = vmatmul.mubr.f32.gmra.mrb[0].mxu0 %v6196
      %v6414 = vpop.f32.mrb[0].mxu0
      %v6415 = vadd.f32 %v6112, %v6414
      %v6416 = vpop.f32.mrb[0].mxu0
      %6417 = vmatprep.mubr.f32.mxu0 0.0
      %6418 = vmatmul.mubr.f32.gmra.mrb[0].mxu0 %v6199
      %v6419 = vpop.f32.mrb[0].mxu0
      %v6420 = vadd.f32 %v6112, %v6419
      %v6421 = vpop.f32.mrb[0].mxu0
      %6422 = vmatprep.mubr.f32.mxu0 0.0
      %6423 = vmatmul.mubr.f32.gmra.mrb[0].mxu0 %v6202
      %v6424 = vpop.f32.mrb[0].mxu0
      %v6425 = vadd.f32 %v6112, %v6424
      %v6426 = vpop.f32.mrb[0].mxu0
      %6427 = vmatprep.mubr.f32.mxu0 0.0
      %6428 = vmatmul.mubr.f32.gmra.mrb[0].mxu0 %v6205
      %v6429 = vpop.f32.mrb[0].mxu0
      %v6430 = vadd.f32 %v6112, %v6429
      %v6431 = vpop.f32.mrb[0].mxu0
      %6432 = vmatprep.mubr.f32.mxu0 0.0
      %6433 = vmatmul.mubr.f32.gmra.mrb[0].mxu0 %v6208
      %v6434 = vpop.f32.mrb[0].mxu0
      %v6435 = vadd.f32 %v6112, %v6434
      %v6436 = vpop.f32.mrb[0].mxu0
      %6437 = vdwg.mxu0
      %v6438 = vadd.f32 %v6280, %v333
      %v6439 = vadd.f32 %v6285, %v334
      %v6440 = vadd.f32 %v6290, %v335
      %v6441 = vadd.f32 %v6295, %v336
      %v6442 = vadd.f32 %v6300, %v337
      %v6443 = vadd.f32 %v6305, %v338
      %v6444 = vadd.f32 %v6310, %v339
      %v6445 = vadd.f32 %v6315, %v340
      %v6446 = vadd.f32 %v6320, %v341
      %v6447 = vadd.f32 %v6325, %v342
      %v6448 = vadd.f32 %v6330, %v343
      %v6449 = vadd.f32 %v6335, %v344
      %v6450 = vadd.f32 %v6340, %v345
      %v6451 = vadd.f32 %v6345, %v346
      %v6452 = vadd.f32 %v6350, %v347
      %v6453 = vadd.f32 %v6355, %v348
      %v6454 = vadd.f32 %v6360, %v349
      %v6455 = vadd.f32 %v6365, %v350
      %v6456 = vadd.f32 %v6370, %v351
      %v6457 = vadd.f32 %v6375, %v352
      %v6458 = vadd.f32 %v6380, %v353
      %v6459 = vadd.f32 %v6385, %v354
      %v6460 = vadd.f32 %v6390, %v355
      %v6461 = vadd.f32 %v6395, %v356
      %v6462 = vadd.f32 %v6400, %v357
      %v6463 = vadd.f32 %v6405, %v358
      %v6464 = vadd.f32 %v6410, %v359
      %v6465 = vadd.f32 %v6415, %v360
      %v6466 = vadd.f32 %v6420, %v361
      %v6467 = vadd.f32 %v6425, %v362
      %v6468 = vadd.f32 %v6430, %v363
      %v6469 = vadd.f32 %v6435, %v364
      %6470 = vst.msk [vmem:[%s332] sm:$0xff] %vm688, %v6438
      %6471 = vst.msk [vmem:[%s332 + $0x8] sm:$0xff] %vm688, %v6439
      %6472 = vst.msk [vmem:[%s332 + $0x10] sm:$0xff] %vm688, %v6440
      %6473 = vst.msk [vmem:[%s332 + $0x18] sm:$0xff] %vm688, %v6441
      %6474 = vst.msk [vmem:[%s332 + $0x20] sm:$0xff] %vm688, %v6442
      %6475 = vst.msk [vmem:[%s332 + $0x28] sm:$0xff] %vm688, %v6443
      %6476 = vst.msk [vmem:[%s332 + $0x30] sm:$0xff] %vm688, %v6444
      %6477 = vst.msk [vmem:[%s332 + $0x38] sm:$0xff] %vm688, %v6445
      %6478 = vst.msk [vmem:[%s332 + $0x40] sm:$0xff] %vm688, %v6446
      %6479 = vst.msk [vmem:[%s332 + $0x48] sm:$0xff] %vm688, %v6447
      %6480 = vst.msk [vmem:[%s332 + $0x50] sm:$0xff] %vm688, %v6448
      %6481 = vst.msk [vmem:[%s332 + $0x58] sm:$0xff] %vm688, %v6449
      %6482 = vst.msk [vmem:[%s332 + $0x60] sm:$0xff] %vm688, %v6450
      %6483 = vst.msk [vmem:[%s332 + $0x68] sm:$0xff] %vm688, %v6451
      %6484 = vst.msk [vmem:[%s332 + $0x70] sm:$0xff] %vm688, %v6452
      %6485 = vst.msk [vmem:[%s332 + $0x78] sm:$0xff] %vm688, %v6453
      %6486 = vst.msk [vmem:[%s332 + $0x80] sm:$0xff] %vm688, %v6454
      %6487 = vst.msk [vmem:[%s332 + $0x88] sm:$0xff] %vm688, %v6455
      %6488 = vst.msk [vmem:[%s332 + $0x90] sm:$0xff] %vm688, %v6456
      %6489 = vst.msk [vmem:[%s332 + $0x98] sm:$0xff] %vm688, %v6457
      %6490 = vst.msk [vmem:[%s332 + $0xa0] sm:$0xff] %vm688, %v6458
      %6491 = vst.msk [vmem:[%s332 + $0xa8] sm:$0xff] %vm688, %v6459
      %6492 = vst.msk [vmem:[%s332 + $0xb0] sm:$0xff] %vm688, %v6460
      %6493 = vst.msk [vmem:[%s332 + $0xb8] sm:$0xff] %vm688, %v6461
      %6494 = vst.msk [vmem:[%s332 + $0xc0] sm:$0xff] %vm688, %v6462
      %6495 = vst.msk [vmem:[%s332 + $0xc8] sm:$0xff] %vm688, %v6463
      %6496 = vst.msk [vmem:[%s332 + $0xd0] sm:$0xff] %vm688, %v6464
      %6497 = vst.msk [vmem:[%s332 + $0xd8] sm:$0xff] %vm688, %v6465
      %6498 = vst.msk [vmem:[%s332 + $0xe0] sm:$0xff] %vm688, %v6466
      %6499 = vst.msk [vmem:[%s332 + $0xe8] sm:$0xff] %vm688, %v6467
      %6500 = vst.msk [vmem:[%s332 + $0xf0] sm:$0xff] %vm688, %v6468
      %6501 = vst.msk [vmem:[%s332 + $0xf8] sm:$0xff] %vm688, %v6469
      %p6502 = scmp.lt.s32.totalorder %s20, 1
      %s6503 = scalar_select %p6502, %s20, 1
      %s6504 = smul.addr %s6503, 32
      %s6505 = smul.addr %s6504, 8
      %s6506 = scalar_lea.vmem %s9, %s6505
      // Predicated region
      $region57: #{tpu_custom_call.1} parent=55 // pred_check
        %p6507 = pneg %p232
      $region58: #{tpu_custom_call.1} parent=55 // pred_check_branch
        %6509 = sbr.rel (%p6507) target = $region60
      $region59: #{tpu_custom_call.1} parent=55 // pred_region
        _
      $region60: #{tpu_custom_call.1} parent=55 // pred_fallthru
        _
    $region56: #{tpu_custom_call.1} parent=5 // pred_fallthru
      _
    %p6510 = scmp.le.s32.totalorder 2, %s15
    // Predicated region
    $region61: #{tpu_custom_call.1} parent=5 // pred_check
      %p6511 = pneg %p6510
    $region62: #{tpu_custom_call.1} parent=5 // pred_check_branch
      %6513 = sbr.rel (%p6511) target = $region64
    $region63: #{tpu_custom_call.1} parent=5 // pred_region
      %s6514 = ssub.s32 %s15, 2
      // Predicated region
      $region65: #{tpu_custom_call.1} parent=63 // pred_check
        %p6515 = pneg %p238
      $region66: #{tpu_custom_call.1} parent=63 // pred_check_branch
        %6517 = sbr.rel (%p6515) target = $region68
      $region67: #{tpu_custom_call.1} parent=63 // pred_region
        %p6518 = scmp.lt.s32.totalorder %s21, 1
        %s6519 = scalar_select %p6518, %s21, 1
        %s6520 = smul.addr %s6519, 32
        %s6521 = smul.addr %s6520, 8
        %s6522 = scalar_lea.vmem %s9, %s6521
      $region68: #{tpu_custom_call.1} parent=63 // pred_fallthru
        _
    $region64: #{tpu_custom_call.1} parent=5 // pred_fallthru
      _
  $region6: #{tpu_custom_call.1} parent=0 // loop_footer
    %s19 = sadd.s32 1, %s15
  $region7: #{tpu_custom_call.1} parent=0 // loop_footer_branch
    %14 = sbr.rel target = $region3
  $region8: #{tpu_custom_call.1} parent=0 // loop_exit
    _

</llo_original>
